<compile_context>
chip_gen: v7x
topology: tpu7x:2x2x1
jax: 0.10.0
libtpu: 0.0.40
codegen_flags: <defaults>
</compile_context>

<pallas_src>
import jax
import jax.numpy as jnp
from jax import lax
from jax.experimental import pallas as pl
from jax.experimental.pallas import tpu as pltpu


# ----------------------------------------------------------------------------
# small helpers
# ----------------------------------------------------------------------------
def _round_up(x, m):
    return (x + m - 1) // m * m


def _largest_divisor_leq(n, cap):
    for d in range(min(n, cap), 0, -1):
        if n % d == 0:
            return d
    return n


def _pad_segments(a, axis, segs):
    """Split `a` along `axis` into segments of the given real sizes and
    zero-pad each segment to its padded size (real data first in each slot)."""
    chunks, start = [], 0
    for real, padded in segs:
        sl = lax.slice_in_dim(a, start, start + real, axis=axis)
        pad = [(0, 0)] * a.ndim
        pad[axis] = (0, padded - real)
        chunks.append(jnp.pad(sl, pad))
        start += real
    return chunks[0] if len(chunks) == 1 else jnp.concatenate(chunks, axis=axis)


# ----------------------------------------------------------------------------
# Pallas kernels: one grid step = (direction d, time-chunk c)
# ----------------------------------------------------------------------------
def _bigru_kernel(x_ref, wih_ref, whh_ref, bih_ref, bhh_ref, out_ref,
                  h_scr, gi_scr):
    """Bidirectional GRU, PyTorch gate order (r, z, n).

    x_ref   : (Tc, B, E)   bf16 time-major chunk (mirrored chunk for d=1)
    wih_ref : (1, E, 3H)   bf16      whh_ref : (1, H, 3H) bf16
    bih_ref : (1, 1, 3H)   f32       bhh_ref : (1, 1, 3H) f32
    out_ref : (Tc, B, H)   bf16  -> block (chunk, 0, d) of (T, B, 2H) output
    h_scr   : (B, H)       f32 hidden-state carry across chunks
    gi_scr  : (Tc, B, 3H)  f32 hoisted input projections for this chunk
    """
    Tc, B, E = x_ref.shape
    _, H, _ = whh_ref.shape
    d = pl.program_id(0)

    @pl.when(pl.program_id(1) == 0)          # first chunk of each direction
    def _():
        h_scr[...] = jnp.zeros_like(h_scr)

    # Hoisted input projection: one well-shaped GEMM for the whole chunk.
    gi = jnp.dot(x_ref[...].reshape(Tc * B, E), wih_ref[0],
                 preferred_element_type=jnp.float32)
    gi_scr[...] = gi.reshape(Tc, B, 3 * H) + bih_ref[...]

    whh = whh_ref[0]
    bhh = bhh_ref[0]                          # (1, 3H), broadcasts over B

    def step(i, h):
        t = i + d * (Tc - 1 - 2 * i)          # fwd: i   bwd: Tc-1-i
        gx = gi_scr[t]                        # (B, 3H) f32
        gh = jnp.dot(h.astype(whh.dtype), whh,
                     preferred_element_type=jnp.float32) + bhh
        r = jax.nn.sigmoid(gx[:, 0 * H:1 * H] + gh[:, 0 * H:1 * H])
        z = jax.nn.sigmoid(gx[:, 1 * H:2 * H] + gh[:, 1 * H:2 * H])
        n = jnp.tanh(gx[:, 2 * H:3 * H] + r * gh[:, 2 * H:3 * H])
        h_new = (1.0 - z) * n + z * h
        out_ref[t] = h_new.astype(out_ref.dtype)
        return h_new

    unroll = True if Tc <= 16 else 4
    h_scr[...] = lax.fori_loop(0, Tc, step, h_scr[...], unroll=unroll)


def _bilstm_kernel(x_ref, wih_ref, whh_ref, b_ref, out_ref,
                   h_scr, c_scr, gi_scr):
    """Bidirectional LSTM, PyTorch gate order (i, f, g, o); b = bih + bhh.

    x_ref   : (Tc, B, E)   bf16      wih_ref : (1, E, 4H) bf16
    whh_ref : (1, H, 4H)   bf16      b_ref   : (1, 1, 4H) f32
    out_ref : (Tc, B, H)   bf16
    h_scr/c_scr : (B, H) f32 carries;  gi_scr : (Tc, B, 4H) f32
    """
    Tc, B, E = x_ref.shape
    _, H, _ = whh_ref.shape
    d = pl.program_id(0)

    @pl.when(pl.program_id(1) == 0)
    def _():
        h_scr[...] = jnp.zeros_like(h_scr)
        c_scr[...] = jnp.zeros_like(c_scr)

    gi = jnp.dot(x_ref[...].reshape(Tc * B, E), wih_ref[0],
                 preferred_element_type=jnp.float32)
    gi_scr[...] = gi.reshape(Tc, B, 4 * H) + b_ref[...]

    whh = whh_ref[0]

    def step(i, carry):
        h, c = carry
        t = i + d * (Tc - 1 - 2 * i)
        g = gi_scr[t] + jnp.dot(h.astype(whh.dtype), whh,
                                preferred_element_type=jnp.float32)
        i_g = jax.nn.sigmoid(g[:, 0 * H:1 * H])
        f_g = jax.nn.sigmoid(g[:, 1 * H:2 * H])
        g_g = jnp.tanh(g[:, 2 * H:3 * H])
        o_g = jax.nn.sigmoid(g[:, 3 * H:4 * H])
        c_new = f_g * c + i_g * g_g
        h_new = o_g * jnp.tanh(c_new)
        out_ref[t] = h_new.astype(out_ref.dtype)
        return h_new, c_new

    unroll = True if Tc <= 16 else 4
    h_fin, c_fin = lax.fori_loop(0, Tc, step, (h_scr[...], c_scr[...]),
                                 unroll=unroll)
    h_scr[...] = h_fin
    c_scr[...] = c_fin


# ----------------------------------------------------------------------------
# fused bidirectional layer wrapper
# ----------------------------------------------------------------------------
def _bidir_rnn(kernel, x, wih2, whh2, biases, hidden_pad, gates,
               chunk_target=128):
    """x: (T, B_pad, F_pad) bf16 time-major -> (T, B_pad, 2*hidden_pad) bf16."""
    T, B, F = x.shape
    Tc = _largest_divisor_leq(T, chunk_target)
    nc = T // Tc
    GH = gates * hidden_pad

    def mirrored(d, c):                       # fwd: c    bwd: nc-1-c
        return c + d * (nc - 1 - 2 * c)

    x_spec = pl.BlockSpec((Tc, B, F), lambda d, c: (mirrored(d, c), 0, 0))
    out_spec = pl.BlockSpec((Tc, B, hidden_pad),
                            lambda d, c: (mirrored(d, c), 0, d))

    def w_spec(shape):
        return pl.BlockSpec(shape, lambda d, c: (d, 0, 0))

    scratch = [pltpu.VMEM((B, hidden_pad), jnp.float32)]          # h carry
    if gates == 4:
        scratch.append(pltpu.VMEM((B, hidden_pad), jnp.float32))  # c carry
    scratch.append(pltpu.VMEM((Tc, B, GH), jnp.float32))          # chunk x@Wih

    return pl.pallas_call(
        kernel,
        grid=(2, nc),
        in_specs=[x_spec,
                  w_spec((1, F, GH)),
                  w_spec((1, hidden_pad, GH))]
                 + [w_spec((1, 1, GH))] * len(biases),
        out_specs=out_spec,
        out_shape=jax.ShapeDtypeStruct((T, B, 2 * hidden_pad), jnp.bfloat16),
        scratch_shapes=scratch,
        compiler_params=pltpu.CompilerParams(
            dimension_semantics=("parallel", "arbitrary"),
            vmem_limit_bytes=48 * 1024 * 1024),
    )(x, wih2, whh2, *biases)


# ----------------------------------------------------------------------------
# parameters: PyTorch-layout init + padded/stacked device form
# ----------------------------------------------------------------------------
def _uniform(key, shape, k):
    return jax.random.uniform(key, shape, jnp.float32, minval=-k, maxval=k)


def init_params(key, vocab, embedding_size, hidden_size, num_layers):
    """PyTorch-style params; weights already transposed to (in, gates*H)."""
    n_keys = 1 + 16 * num_layers + 2
    keys = iter(jax.random.split(key, n_keys))
    k = 1.0 / (hidden_size ** 0.5)

    def rnn_dir(in_size, gates):
        return {
            "wih": _uniform(next(keys), (in_size, gates * hidden_size), k),
            "whh": _uniform(next(keys), (hidden_size, gates * hidden_size), k),
            "bih": _uniform(next(keys), (gates * hidden_size,), k),
            "bhh": _uniform(next(keys), (gates * hidden_size,), k),
        }

    params = {"embedding": jax.random.normal(
        next(keys), (vocab, embedding_size), jnp.float32)}

    gru, lstm = [], []
    for layer in range(num_layers):
        in_size = embedding_size if layer == 0 else 2 * hidden_size
        gru.append({"fwd": rnn_dir(in_size, 3), "bwd": rnn_dir(in_size, 3)})
    for _layer in range(num_layers):
        lstm.append({"fwd": rnn_dir(2 * hidden_size, 4),
                     "bwd": rnn_dir(2 * hidden_size, 4)})
    params["gru"], params["lstm"] = gru, lstm

    kl = 1.0 / ((2 * hidden_size) ** 0.5)
    params["linear_w"] = _uniform(next(keys), (2 * hidden_size, 1), kl)
    params["linear_b"] = _uniform(next(keys), (1,), kl)
    return params


def prepare_params(raw, embedding_size, hidden_size):
    """Pad to lane/sublane-aligned shapes, stack the two directions, cast MXU
    operands to bf16 and pre-fold the LSTM bias (bih + bhh)."""
    E, H = embedding_size, hidden_size
    E_pad, H_pad = _round_up(E, 128), _round_up(H, 128)

    def pad_dir(p, in_segs, gates):
        col = [(H, H_pad)] * gates
        wih = _pad_segments(_pad_segments(p["wih"], 0, in_segs), 1, col)
        whh = _pad_segments(_pad_segments(p["whh"], 0, [(H, H_pad)]), 1, col)
        bih = _pad_segments(p["bih"][None, :], 1, col)
        bhh = _pad_segments(p["bhh"][None, :], 1, col)
        return wih, whh, bih, bhh

    dev = {"embedding": _pad_segments(raw["embedding"], 1, [(E, E_pad)])}

    gru = []
    for li, layer in enumerate(raw["gru"]):
        segs = [(E, E_pad)] if li == 0 else [(H, H_pad), (H, H_pad)]
        f = pad_dir(layer["fwd"], segs, 3)
        b = pad_dir(layer["bwd"], segs, 3)
        gru.append((
            jnp.stack([f[0], b[0]]).astype(jnp.bfloat16),   # (2, in_pad, 3H_pad)
            jnp.stack([f[1], b[1]]).astype(jnp.bfloat16),   # (2, H_pad, 3H_pad)
            jnp.stack([f[2], b[2]]),                        # (2, 1, 3H_pad) bih
            jnp.stack([f[3], b[3]]),                        # (2, 1, 3H_pad) bhh
        ))
    dev["gru"] = gru

    lstm = []
    for layer in raw["lstm"]:
        segs = [(H, H_pad), (H, H_pad)]
        f = pad_dir(layer["fwd"], segs, 4)
        b = pad_dir(layer["bwd"], segs, 4)
        lstm.append((
            jnp.stack([f[0], b[0]]).astype(jnp.bfloat16),
            jnp.stack([f[1], b[1]]).astype(jnp.bfloat16),
            jnp.stack([f[2] + f[3], b[2] + b[3]]),          # folded bias
        ))
    dev["lstm"] = lstm

    dev["linear_w"] = _pad_segments(raw["linear_w"], 0,
                                    [(H, H_pad), (H, H_pad)])
    dev["linear_b"] = raw["linear_b"]
    return dev


# ----------------------------------------------------------------------------
# full forward pass (eval mode: dropout is identity)
# ----------------------------------------------------------------------------
@jax.jit
def rnn_forward(X, params):
    B, T = X.shape
    H_pad = params["gru"][0][1].shape[1]            # whh2: (2, H_pad, 3*H_pad)
    B_pad = _round_up(B, 16)                        # bf16 sublane tile

    # Embedding gather (XLA) -> time-major once, bf16 activations.
    X_pad = jnp.zeros((B_pad, T), X.dtype).at[:B, :].set(X)
    x = params["embedding"][X_pad]                  # (B_pad, T, E_pad) f32
    x = jnp.transpose(x, (1, 0, 2)).astype(jnp.bfloat16)

    for wih2, whh2, bih2, bhh2 in params["gru"]:
        x = _bidir_rnn(_bigru_kernel, x, wih2, whh2, (bih2, bhh2), H_pad, 3)
    # nn.Dropout: identity in eval mode
    for wih2, whh2, b2 in params["lstm"]:
        x = _bidir_rnn(_bilstm_kernel, x, wih2, whh2, (b2,), H_pad, 4)
    # nn.Dropout: identity in eval mode
    # TODO(synk): training-mode dropout (stateful PRNG masks) not emitted.

    # out[:, -1, :] -> last timestep of the time-major stack; tiny Linear +
    # Sigmoid is left to XLA (padded weight rows are zero, so padding is inert).
    last = x[T - 1].astype(jnp.float32)             # (B_pad, 2*H_pad)
    out = jax.nn.sigmoid(last @ params["linear_w"] + params["linear_b"])
    return out[:B]


# ----------------------------------------------------------------------------
if __name__ == "__main__":
    B, T = 2, 8
    VOCAB, EMBED, HIDDEN, NUM_LAYERS = 32, 16, 32, 1
    # drop_out value irrelevant in eval mode.

    key = jax.random.PRNGKey(0)
    k_tok, k_par = jax.random.split(key)

    X = jax.random.randint(k_tok, (B, T), 0, VOCAB, dtype=jnp.int32)
    raw = init_params(k_par, VOCAB, EMBED, HIDDEN, NUM_LAYERS)
    params = prepare_params(raw, EMBED, HIDDEN)

    out = rnn_forward(X, params)
    jax.block_until_ready(out)
    assert out.shape == (B, 1) and out.dtype == jnp.float32
    print("KERNEL_OK")
</pallas_src>

<mosaic_0001>
module attributes {stable_mosaic.version = 11 : i64} {
  func.func @_bilstm_kernel(%arg0: i32, %arg1: i32, %arg2: memref<8x16x256xbf16, #tpu.memory_space<vmem>>, %arg3: memref<1x256x512xbf16, #tpu.memory_space<vmem>>, %arg4: memref<1x128x512xbf16, #tpu.memory_space<vmem>>, %arg5: memref<1x1x512xf32, #tpu.memory_space<vmem>>, %arg6: memref<8x16x128xbf16, #tpu.memory_space<vmem>>, %arg7: memref<16x128xf32, #tpu.memory_space<vmem>>, %arg8: memref<16x128xf32, #tpu.memory_space<vmem>>, %arg9: memref<8x16x512xf32, #tpu.memory_space<vmem>>) attributes {dimension_semantics = [#tpu.dimension_semantics<parallel>, #tpu.dimension_semantics<arbitrary>], iteration_bounds = array<i64: 2, 1>, scalar_prefetch = 0 : i64, scratch_operands = 3 : i64, tpu.core_type = #tpu.core_type<tc>, window_params = [{transform_indices = @transform_0, window_bounds = array<i64: 8, 16, 256>}, {transform_indices = @transform_1, window_bounds = array<i64: 1, 256, 512>}, {transform_indices = @transform_2, window_bounds = array<i64: 1, 128, 512>}, {transform_indices = @transform_3, window_bounds = array<i64: 1, 1, 512>}, {transform_indices = @transform_4, window_bounds = array<i64: 8, 16, 128>}]} {
    %c0_i32 = arith.constant 0 : i32
    %0 = arith.cmpi eq, %arg1, %c0_i32 : i32
    %1 = arith.extui %0 : i1 to i32
    %c0_i32_0 = arith.constant 0 : i32
    %2 = arith.cmpi ne, %1, %c0_i32_0 : i32
    scf.if %2 {
      %cst_104 = arith.constant 0.000000e+00 : f32
      %339 = vector.broadcast %cst_104 : f32 to vector<16x128xf32>
      %c0_105 = arith.constant 0 : index
      %c0_106 = arith.constant 0 : index
      %340 = vector.load %arg7[%c0_105, %c0_106] : memref<16x128xf32, #tpu.memory_space<vmem>>, vector<16x128xf32>
      tpu.vector_store %arg7[%c0_105, %c0_106], %339 {strides = array<i32>} : memref<16x128xf32, #tpu.memory_space<vmem>>, vector<16x128xf32>,
      %cst_107 = arith.constant 0.000000e+00 : f32
      %341 = vector.broadcast %cst_107 : f32 to vector<16x128xf32>
      %c0_108 = arith.constant 0 : index
      %c0_109 = arith.constant 0 : index
      %342 = vector.load %arg8[%c0_108, %c0_109] : memref<16x128xf32, #tpu.memory_space<vmem>>, vector<16x128xf32>
      tpu.vector_store %arg8[%c0_108, %c0_109], %341 {strides = array<i32>} : memref<16x128xf32, #tpu.memory_space<vmem>>, vector<16x128xf32>,
    } else {
    }
    %c0 = arith.constant 0 : index
    %c0_1 = arith.constant 0 : index
    %c0_2 = arith.constant 0 : index
    %3 = vector.load %arg2[%c0, %c0_1, %c0_2] : memref<8x16x256xbf16, #tpu.memory_space<vmem>>, vector<8x16x256xbf16>
    %4 = vector.shape_cast %3 : vector<8x16x256xbf16> to vector<128x256xbf16>
    %c0_3 = arith.constant 0 : index
    %c0_4 = arith.constant 0 : index
    %c0_5 = arith.constant 0 : index
    %5 = vector.load %arg3[%c0_3, %c0_4, %c0_5] : memref<1x256x512xbf16, #tpu.memory_space<vmem>>, vector<1x256x512xbf16>
    %6 = vector.shape_cast %5 : vector<1x256x512xbf16> to vector<256x512xbf16>
    %cst = arith.constant dense<0.000000e+00> : vector<128x512xf32>
    %7 = tpu.matmul %4, %6, %cst {dimension_numbers = #tpu.dot_dimension_numbers<[1], [0], [0], [1], [0, 0, 1, 1], [], []>} : vector<128x256xbf16>, vector<256x512xbf16>, vector<128x512xf32> -> vector<128x512xf32>
    %8 = vector.shape_cast %7 : vector<128x512xf32> to vector<8x16x512xf32>
    %c0_6 = arith.constant 0 : index
    %c0_7 = arith.constant 0 : index
    %c0_8 = arith.constant 0 : index
    %9 = vector.load %arg5[%c0_6, %c0_7, %c0_8] : memref<1x1x512xf32, #tpu.memory_space<vmem>>, vector<1x1x512xf32>
    %10 = vector.broadcast %9 : vector<1x1x512xf32> to vector<8x16x512xf32>
    %11 = arith.addf %8, %10 : vector<8x16x512xf32>
    %c0_9 = arith.constant 0 : index
    %c0_10 = arith.constant 0 : index
    %c0_11 = arith.constant 0 : index
    %12 = vector.load %arg9[%c0_9, %c0_10, %c0_11] : memref<8x16x512xf32, #tpu.memory_space<vmem>>, vector<8x16x512xf32>
    tpu.vector_store %arg9[%c0_9, %c0_10, %c0_11], %11 {strides = array<i32>} : memref<8x16x512xf32, #tpu.memory_space<vmem>>, vector<8x16x512xf32>,
    %c0_12 = arith.constant 0 : index
    %c0_13 = arith.constant 0 : index
    %c0_14 = arith.constant 0 : index
    %13 = vector.load %arg4[%c0_12, %c0_13, %c0_14] : memref<1x128x512xbf16, #tpu.memory_space<vmem>>, vector<1x128x512xbf16>
    %14 = vector.shape_cast %13 : vector<1x128x512xbf16> to vector<128x512xbf16>
    %c0_15 = arith.constant 0 : index
    %c0_16 = arith.constant 0 : index
    %15 = vector.load %arg7[%c0_15, %c0_16] : memref<16x128xf32, #tpu.memory_space<vmem>>, vector<16x128xf32>
    %c0_17 = arith.constant 0 : index
    %c0_18 = arith.constant 0 : index
    %16 = vector.load %arg8[%c0_17, %c0_18] : memref<16x128xf32, #tpu.memory_space<vmem>>, vector<16x128xf32>
    %c0_i32_19 = arith.constant 0 : i32
    %c2_i32 = arith.constant 2 : i32
    %17 = arith.muli %c2_i32, %c0_i32_19 : i32
    %c7_i32 = arith.constant 7 : i32
    %18 = arith.subi %c7_i32, %17 : i32
    %19 = arith.muli %arg0, %18 : i32
    %20 = arith.addi %c0_i32_19, %19 : i32
    %21 = arith.index_cast %20 : i32 to index
    %c0_20 = arith.constant 0 : index
    %c0_21 = arith.constant 0 : index
    %22 = vector.load %arg9[%21, %c0_20, %c0_21] : memref<8x16x512xf32, #tpu.memory_space<vmem>>, vector<1x16x512xf32>
    %23 = vector.shape_cast %22 : vector<1x16x512xf32> to vector<16x512xf32>
    %24 = arith.truncf %15 : vector<16x128xf32> to vector<16x128xbf16>
    %cst_22 = arith.constant dense<0.000000e+00> : vector<16x512xf32>
    %25 = tpu.matmul %24, %14, %cst_22 {dimension_numbers = #tpu.dot_dimension_numbers<[1], [0], [0], [1], [0, 0, 1, 1], [], []>} : vector<16x128xbf16>, vector<128x512xbf16>, vector<16x512xf32> -> vector<16x512xf32>
    %26 = arith.addf %23, %25 : vector<16x512xf32>
    %27 = vector.extract_strided_slice %26 {offsets = [0, 0], sizes = [16, 128], strides = [1, 1]} : vector<16x512xf32> to vector<16x128xf32>
    %28 = arith.negf %27 : vector<16x128xf32>
    %29 = math.exp %28 : vector<16x128xf32>
    %cst_23 = arith.constant 1.000000e+00 : f32
    %30 = vector.broadcast %cst_23 : f32 to vector<16x128xf32>
    %31 = arith.addf %30, %29 : vector<16x128xf32>
    %32 = arith.divf %30, %31 : vector<16x128xf32>
    %33 = vector.extract_strided_slice %26 {offsets = [0, 128], sizes = [16, 128], strides = [1, 1]} : vector<16x512xf32> to vector<16x128xf32>
    %34 = arith.negf %33 : vector<16x128xf32>
    %35 = math.exp %34 : vector<16x128xf32>
    %cst_24 = arith.constant 1.000000e+00 : f32
    %36 = vector.broadcast %cst_24 : f32 to vector<16x128xf32>
    %37 = arith.addf %36, %35 : vector<16x128xf32>
    %38 = arith.divf %36, %37 : vector<16x128xf32>
    %39 = vector.extract_strided_slice %26 {offsets = [0, 256], sizes = [16, 128], strides = [1, 1]} : vector<16x512xf32> to vector<16x128xf32>
    %40 = math.tanh %39 : vector<16x128xf32>
    %41 = vector.extract_strided_slice %26 {offsets = [0, 384], sizes = [16, 128], strides = [1, 1]} : vector<16x512xf32> to vector<16x128xf32>
    %42 = arith.negf %41 : vector<16x128xf32>
    %43 = math.exp %42 : vector<16x128xf32>
    %cst_25 = arith.constant 1.000000e+00 : f32
    %44 = vector.broadcast %cst_25 : f32 to vector<16x128xf32>
    %45 = arith.addf %44, %43 : vector<16x128xf32>
    %46 = arith.divf %44, %45 : vector<16x128xf32>
    %47 = arith.mulf %38, %16 : vector<16x128xf32>
    %48 = arith.mulf %32, %40 : vector<16x128xf32>
    %49 = arith.addf %47, %48 : vector<16x128xf32>
    %50 = math.tanh %49 : vector<16x128xf32>
    %51 = arith.mulf %46, %50 : vector<16x128xf32>
    %52 = arith.truncf %51 : vector<16x128xf32> to vector<16x128xbf16>
    %53 = arith.index_cast %20 : i32 to index
    %c0_26 = arith.constant 0 : index
    %c0_27 = arith.constant 0 : index
    %54 = vector.load %arg6[%53, %c0_26, %c0_27] : memref<8x16x128xbf16, #tpu.memory_space<vmem>>, vector<1x16x128xbf16>
    %55 = vector.shape_cast %54 : vector<1x16x128xbf16> to vector<16x128xbf16>
    %56 = vector.shape_cast %52 : vector<16x128xbf16> to vector<1x16x128xbf16>
    tpu.vector_store %arg6[%53, %c0_26, %c0_27], %56 {strides = array<i32>} : memref<8x16x128xbf16, #tpu.memory_space<vmem>>, vector<1x16x128xbf16>,
    %c1_i32 = arith.constant 1 : i32
    %c2_i32_28 = arith.constant 2 : i32
    %57 = arith.muli %c2_i32_28, %c1_i32 : i32
    %c7_i32_29 = arith.constant 7 : i32
    %58 = arith.subi %c7_i32_29, %57 : i32
    %59 = arith.muli %arg0, %58 : i32
    %60 = arith.addi %c1_i32, %59 : i32
    %61 = arith.index_cast %60 : i32 to index
    %c0_30 = arith.constant 0 : index
    %c0_31 = arith.constant 0 : index
    %62 = vector.load %arg9[%61, %c0_30, %c0_31] : memref<8x16x512xf32, #tpu.memory_space<vmem>>, vector<1x16x512xf32>
    %63 = vector.shape_cast %62 : vector<1x16x512xf32> to vector<16x512xf32>
    %64 = arith.truncf %51 : vector<16x128xf32> to vector<16x128xbf16>
    %cst_32 = arith.constant dense<0.000000e+00> : vector<16x512xf32>
    %65 = tpu.matmul %64, %14, %cst_32 {dimension_numbers = #tpu.dot_dimension_numbers<[1], [0], [0], [1], [0, 0, 1, 1], [], []>} : vector<16x128xbf16>, vector<128x512xbf16>, vector<16x512xf32> -> vector<16x512xf32>
    %66 = arith.addf %63, %65 : vector<16x512xf32>
    %67 = vector.extract_strided_slice %66 {offsets = [0, 0], sizes = [16, 128], strides = [1, 1]} : vector<16x512xf32> to vector<16x128xf32>
    %68 = arith.negf %67 : vector<16x128xf32>
    %69 = math.exp %68 : vector<16x128xf32>
    %cst_33 = arith.constant 1.000000e+00 : f32
    %70 = vector.broadcast %cst_33 : f32 to vector<16x128xf32>
    %71 = arith.addf %70, %69 : vector<16x128xf32>
    %72 = arith.divf %70, %71 : vector<16x128xf32>
    %73 = vector.extract_strided_slice %66 {offsets = [0, 128], sizes = [16, 128], strides = [1, 1]} : vector<16x512xf32> to vector<16x128xf32>
    %74 = arith.negf %73 : vector<16x128xf32>
    %75 = math.exp %74 : vector<16x128xf32>
    %cst_34 = arith.constant 1.000000e+00 : f32
    %76 = vector.broadcast %cst_34 : f32 to vector<16x128xf32>
    %77 = arith.addf %76, %75 : vector<16x128xf32>
    %78 = arith.divf %76, %77 : vector<16x128xf32>
    %79 = vector.extract_strided_slice %66 {offsets = [0, 256], sizes = [16, 128], strides = [1, 1]} : vector<16x512xf32> to vector<16x128xf32>
    %80 = math.tanh %79 : vector<16x128xf32>
    %81 = vector.extract_strided_slice %66 {offsets = [0, 384], sizes = [16, 128], strides = [1, 1]} : vector<16x512xf32> to vector<16x128xf32>
    %82 = arith.negf %81 : vector<16x128xf32>
    %83 = math.exp %82 : vector<16x128xf32>
    %cst_35 = arith.constant 1.000000e+00 : f32
    %84 = vector.broadcast %cst_35 : f32 to vector<16x128xf32>
    %85 = arith.addf %84, %83 : vector<16x128xf32>
    %86 = arith.divf %84, %85 : vector<16x128xf32>
    %87 = arith.mulf %78, %49 : vector<16x128xf32>
    %88 = arith.mulf %72, %80 : vector<16x128xf32>
    %89 = arith.addf %87, %88 : vector<16x128xf32>
    %90 = math.tanh %89 : vector<16x128xf32>
    %91 = arith.mulf %86, %90 : vector<16x128xf32>
    %92 = arith.truncf %91 : vector<16x128xf32> to vector<16x128xbf16>
    %93 = arith.index_cast %60 : i32 to index
    %c0_36 = arith.constant 0 : index
    %c0_37 = arith.constant 0 : index
    %94 = vector.load %arg6[%93, %c0_36, %c0_37] : memref<8x16x128xbf16, #tpu.memory_space<vmem>>, vector<1x16x128xbf16>
    %95 = vector.shape_cast %94 : vector<1x16x128xbf16> to vector<16x128xbf16>
    %96 = vector.shape_cast %92 : vector<16x128xbf16> to vector<1x16x128xbf16>
    tpu.vector_store %arg6[%93, %c0_36, %c0_37], %96 {strides = array<i32>} : memref<8x16x128xbf16, #tpu.memory_space<vmem>>, vector<1x16x128xbf16>,
    %c2_i32_38 = arith.constant 2 : i32
    %c2_i32_39 = arith.constant 2 : i32
    %97 = arith.muli %c2_i32_39, %c2_i32_38 : i32
    %c7_i32_40 = arith.constant 7 : i32
    %98 = arith.subi %c7_i32_40, %97 : i32
    %99 = arith.muli %arg0, %98 : i32
    %100 = arith.addi %c2_i32_38, %99 : i32
    %101 = arith.index_cast %100 : i32 to index
    %c0_41 = arith.constant 0 : index
    %c0_42 = arith.constant 0 : index
    %102 = vector.load %arg9[%101, %c0_41, %c0_42] : memref<8x16x512xf32, #tpu.memory_space<vmem>>, vector<1x16x512xf32>
    %103 = vector.shape_cast %102 : vector<1x16x512xf32> to vector<16x512xf32>
    %104 = arith.truncf %91 : vector<16x128xf32> to vector<16x128xbf16>
    %cst_43 = arith.constant dense<0.000000e+00> : vector<16x512xf32>
    %105 = tpu.matmul %104, %14, %cst_43 {dimension_numbers = #tpu.dot_dimension_numbers<[1], [0], [0], [1], [0, 0, 1, 1], [], []>} : vector<16x128xbf16>, vector<128x512xbf16>, vector<16x512xf32> -> vector<16x512xf32>
    %106 = arith.addf %103, %105 : vector<16x512xf32>
    %107 = vector.extract_strided_slice %106 {offsets = [0, 0], sizes = [16, 128], strides = [1, 1]} : vector<16x512xf32> to vector<16x128xf32>
    %108 = arith.negf %107 : vector<16x128xf32>
    %109 = math.exp %108 : vector<16x128xf32>
    %cst_44 = arith.constant 1.000000e+00 : f32
    %110 = vector.broadcast %cst_44 : f32 to vector<16x128xf32>
    %111 = arith.addf %110, %109 : vector<16x128xf32>
    %112 = arith.divf %110, %111 : vector<16x128xf32>
    %113 = vector.extract_strided_slice %106 {offsets = [0, 128], sizes = [16, 128], strides = [1, 1]} : vector<16x512xf32> to vector<16x128xf32>
    %114 = arith.negf %113 : vector<16x128xf32>
    %115 = math.exp %114 : vector<16x128xf32>
    %cst_45 = arith.constant 1.000000e+00 : f32
    %116 = vector.broadcast %cst_45 : f32 to vector<16x128xf32>
    %117 = arith.addf %116, %115 : vector<16x128xf32>
    %118 = arith.divf %116, %117 : vector<16x128xf32>
    %119 = vector.extract_strided_slice %106 {offsets = [0, 256], sizes = [16, 128], strides = [1, 1]} : vector<16x512xf32> to vector<16x128xf32>
    %120 = math.tanh %119 : vector<16x128xf32>
    %121 = vector.extract_strided_slice %106 {offsets = [0, 384], sizes = [16, 128], strides = [1, 1]} : vector<16x512xf32> to vector<16x128xf32>
    %122 = arith.negf %121 : vector<16x128xf32>
    %123 = math.exp %122 : vector<16x128xf32>
    %cst_46 = arith.constant 1.000000e+00 : f32
    %124 = vector.broadcast %cst_46 : f32 to vector<16x128xf32>
    %125 = arith.addf %124, %123 : vector<16x128xf32>
    %126 = arith.divf %124, %125 : vector<16x128xf32>
    %127 = arith.mulf %118, %89 : vector<16x128xf32>
    %128 = arith.mulf %112, %120 : vector<16x128xf32>
    %129 = arith.addf %127, %128 : vector<16x128xf32>
    %130 = math.tanh %129 : vector<16x128xf32>
    %131 = arith.mulf %126, %130 : vector<16x128xf32>
    %132 = arith.truncf %131 : vector<16x128xf32> to vector<16x128xbf16>
    %133 = arith.index_cast %100 : i32 to index
    %c0_47 = arith.constant 0 : index
    %c0_48 = arith.constant 0 : index
    %134 = vector.load %arg6[%133, %c0_47, %c0_48] : memref<8x16x128xbf16, #tpu.memory_space<vmem>>, vector<1x16x128xbf16>
    %135 = vector.shape_cast %134 : vector<1x16x128xbf16> to vector<16x128xbf16>
    %136 = vector.shape_cast %132 : vector<16x128xbf16> to vector<1x16x128xbf16>
    tpu.vector_store %arg6[%133, %c0_47, %c0_48], %136 {strides = array<i32>} : memref<8x16x128xbf16, #tpu.memory_space<vmem>>, vector<1x16x128xbf16>,
    %c3_i32 = arith.constant 3 : i32
    %c2_i32_49 = arith.constant 2 : i32
    %137 = arith.muli %c2_i32_49, %c3_i32 : i32
    %c7_i32_50 = arith.constant 7 : i32
    %138 = arith.subi %c7_i32_50, %137 : i32
    %139 = arith.muli %arg0, %138 : i32
    %140 = arith.addi %c3_i32, %139 : i32
    %141 = arith.index_cast %140 : i32 to index
    %c0_51 = arith.constant 0 : index
    %c0_52 = arith.constant 0 : index
    %142 = vector.load %arg9[%141, %c0_51, %c0_52] : memref<8x16x512xf32, #tpu.memory_space<vmem>>, vector<1x16x512xf32>
    %143 = vector.shape_cast %142 : vector<1x16x512xf32> to vector<16x512xf32>
    %144 = arith.truncf %131 : vector<16x128xf32> to vector<16x128xbf16>
    %cst_53 = arith.constant dense<0.000000e+00> : vector<16x512xf32>
    %145 = tpu.matmul %144, %14, %cst_53 {dimension_numbers = #tpu.dot_dimension_numbers<[1], [0], [0], [1], [0, 0, 1, 1], [], []>} : vector<16x128xbf16>, vector<128x512xbf16>, vector<16x512xf32> -> vector<16x512xf32>
    %146 = arith.addf %143, %145 : vector<16x512xf32>
    %147 = vector.extract_strided_slice %146 {offsets = [0, 0], sizes = [16, 128], strides = [1, 1]} : vector<16x512xf32> to vector<16x128xf32>
    %148 = arith.negf %147 : vector<16x128xf32>
    %149 = math.exp %148 : vector<16x128xf32>
    %cst_54 = arith.constant 1.000000e+00 : f32
    %150 = vector.broadcast %cst_54 : f32 to vector<16x128xf32>
    %151 = arith.addf %150, %149 : vector<16x128xf32>
    %152 = arith.divf %150, %151 : vector<16x128xf32>
    %153 = vector.extract_strided_slice %146 {offsets = [0, 128], sizes = [16, 128], strides = [1, 1]} : vector<16x512xf32> to vector<16x128xf32>
    %154 = arith.negf %153 : vector<16x128xf32>
    %155 = math.exp %154 : vector<16x128xf32>
    %cst_55 = arith.constant 1.000000e+00 : f32
    %156 = vector.broadcast %cst_55 : f32 to vector<16x128xf32>
    %157 = arith.addf %156, %155 : vector<16x128xf32>
    %158 = arith.divf %156, %157 : vector<16x128xf32>
    %159 = vector.extract_strided_slice %146 {offsets = [0, 256], sizes = [16, 128], strides = [1, 1]} : vector<16x512xf32> to vector<16x128xf32>
    %160 = math.tanh %159 : vector<16x128xf32>
    %161 = vector.extract_strided_slice %146 {offsets = [0, 384], sizes = [16, 128], strides = [1, 1]} : vector<16x512xf32> to vector<16x128xf32>
    %162 = arith.negf %161 : vector<16x128xf32>
    %163 = math.exp %162 : vector<16x128xf32>
    %cst_56 = arith.constant 1.000000e+00 : f32
    %164 = vector.broadcast %cst_56 : f32 to vector<16x128xf32>
    %165 = arith.addf %164, %163 : vector<16x128xf32>
    %166 = arith.divf %164, %165 : vector<16x128xf32>
    %167 = arith.mulf %158, %129 : vector<16x128xf32>
    %168 = arith.mulf %152, %160 : vector<16x128xf32>
    %169 = arith.addf %167, %168 : vector<16x128xf32>
    %170 = math.tanh %169 : vector<16x128xf32>
    %171 = arith.mulf %166, %170 : vector<16x128xf32>
    %172 = arith.truncf %171 : vector<16x128xf32> to vector<16x128xbf16>
    %173 = arith.index_cast %140 : i32 to index
    %c0_57 = arith.constant 0 : index
    %c0_58 = arith.constant 0 : index
    %174 = vector.load %arg6[%173, %c0_57, %c0_58] : memref<8x16x128xbf16, #tpu.memory_space<vmem>>, vector<1x16x128xbf16>
    %175 = vector.shape_cast %174 : vector<1x16x128xbf16> to vector<16x128xbf16>
    %176 = vector.shape_cast %172 : vector<16x128xbf16> to vector<1x16x128xbf16>
    tpu.vector_store %arg6[%173, %c0_57, %c0_58], %176 {strides = array<i32>} : memref<8x16x128xbf16, #tpu.memory_space<vmem>>, vector<1x16x128xbf16>,
    %c4_i32 = arith.constant 4 : i32
    %c2_i32_59 = arith.constant 2 : i32
    %177 = arith.muli %c2_i32_59, %c4_i32 : i32
    %c7_i32_60 = arith.constant 7 : i32
    %178 = arith.subi %c7_i32_60, %177 : i32
    %179 = arith.muli %arg0, %178 : i32
    %180 = arith.addi %c4_i32, %179 : i32
    %181 = arith.index_cast %180 : i32 to index
    %c0_61 = arith.constant 0 : index
    %c0_62 = arith.constant 0 : index
    %182 = vector.load %arg9[%181, %c0_61, %c0_62] : memref<8x16x512xf32, #tpu.memory_space<vmem>>, vector<1x16x512xf32>
    %183 = vector.shape_cast %182 : vector<1x16x512xf32> to vector<16x512xf32>
    %184 = arith.truncf %171 : vector<16x128xf32> to vector<16x128xbf16>
    %cst_63 = arith.constant dense<0.000000e+00> : vector<16x512xf32>
    %185 = tpu.matmul %184, %14, %cst_63 {dimension_numbers = #tpu.dot_dimension_numbers<[1], [0], [0], [1], [0, 0, 1, 1], [], []>} : vector<16x128xbf16>, vector<128x512xbf16>, vector<16x512xf32> -> vector<16x512xf32>
    %186 = arith.addf %183, %185 : vector<16x512xf32>
    %187 = vector.extract_strided_slice %186 {offsets = [0, 0], sizes = [16, 128], strides = [1, 1]} : vector<16x512xf32> to vector<16x128xf32>
    %188 = arith.negf %187 : vector<16x128xf32>
    %189 = math.exp %188 : vector<16x128xf32>
    %cst_64 = arith.constant 1.000000e+00 : f32
    %190 = vector.broadcast %cst_64 : f32 to vector<16x128xf32>
    %191 = arith.addf %190, %189 : vector<16x128xf32>
    %192 = arith.divf %190, %191 : vector<16x128xf32>
    %193 = vector.extract_strided_slice %186 {offsets = [0, 128], sizes = [16, 128], strides = [1, 1]} : vector<16x512xf32> to vector<16x128xf32>
    %194 = arith.negf %193 : vector<16x128xf32>
    %195 = math.exp %194 : vector<16x128xf32>
    %cst_65 = arith.constant 1.000000e+00 : f32
    %196 = vector.broadcast %cst_65 : f32 to vector<16x128xf32>
    %197 = arith.addf %196, %195 : vector<16x128xf32>
    %198 = arith.divf %196, %197 : vector<16x128xf32>
    %199 = vector.extract_strided_slice %186 {offsets = [0, 256], sizes = [16, 128], strides = [1, 1]} : vector<16x512xf32> to vector<16x128xf32>
    %200 = math.tanh %199 : vector<16x128xf32>
    %201 = vector.extract_strided_slice %186 {offsets = [0, 384], sizes = [16, 128], strides = [1, 1]} : vector<16x512xf32> to vector<16x128xf32>
    %202 = arith.negf %201 : vector<16x128xf32>
    %203 = math.exp %202 : vector<16x128xf32>
    %cst_66 = arith.constant 1.000000e+00 : f32
    %204 = vector.broadcast %cst_66 : f32 to vector<16x128xf32>
    %205 = arith.addf %204, %203 : vector<16x128xf32>
    %206 = arith.divf %204, %205 : vector<16x128xf32>
    %207 = arith.mulf %198, %169 : vector<16x128xf32>
    %208 = arith.mulf %192, %200 : vector<16x128xf32>
    %209 = arith.addf %207, %208 : vector<16x128xf32>
    %210 = math.tanh %209 : vector<16x128xf32>
    %211 = arith.mulf %206, %210 : vector<16x128xf32>
    %212 = arith.truncf %211 : vector<16x128xf32> to vector<16x128xbf16>
    %213 = arith.index_cast %180 : i32 to index
    %c0_67 = arith.constant 0 : index
    %c0_68 = arith.constant 0 : index
    %214 = vector.load %arg6[%213, %c0_67, %c0_68] : memref<8x16x128xbf16, #tpu.memory_space<vmem>>, vector<1x16x128xbf16>
    %215 = vector.shape_cast %214 : vector<1x16x128xbf16> to vector<16x128xbf16>
    %216 = vector.shape_cast %212 : vector<16x128xbf16> to vector<1x16x128xbf16>
    tpu.vector_store %arg6[%213, %c0_67, %c0_68], %216 {strides = array<i32>} : memref<8x16x128xbf16, #tpu.memory_space<vmem>>, vector<1x16x128xbf16>,
    %c5_i32 = arith.constant 5 : i32
    %c2_i32_69 = arith.constant 2 : i32
    %217 = arith.muli %c2_i32_69, %c5_i32 : i32
    %c7_i32_70 = arith.constant 7 : i32
    %218 = arith.subi %c7_i32_70, %217 : i32
    %219 = arith.muli %arg0, %218 : i32
    %220 = arith.addi %c5_i32, %219 : i32
    %221 = arith.index_cast %220 : i32 to index
    %c0_71 = arith.constant 0 : index
    %c0_72 = arith.constant 0 : index
    %222 = vector.load %arg9[%221, %c0_71, %c0_72] : memref<8x16x512xf32, #tpu.memory_space<vmem>>, vector<1x16x512xf32>
    %223 = vector.shape_cast %222 : vector<1x16x512xf32> to vector<16x512xf32>
    %224 = arith.truncf %211 : vector<16x128xf32> to vector<16x128xbf16>
    %cst_73 = arith.constant dense<0.000000e+00> : vector<16x512xf32>
    %225 = tpu.matmul %224, %14, %cst_73 {dimension_numbers = #tpu.dot_dimension_numbers<[1], [0], [0], [1], [0, 0, 1, 1], [], []>} : vector<16x128xbf16>, vector<128x512xbf16>, vector<16x512xf32> -> vector<16x512xf32>
    %226 = arith.addf %223, %225 : vector<16x512xf32>
    %227 = vector.extract_strided_slice %226 {offsets = [0, 0], sizes = [16, 128], strides = [1, 1]} : vector<16x512xf32> to vector<16x128xf32>
    %228 = arith.negf %227 : vector<16x128xf32>
    %229 = math.exp %228 : vector<16x128xf32>
    %cst_74 = arith.constant 1.000000e+00 : f32
    %230 = vector.broadcast %cst_74 : f32 to vector<16x128xf32>
    %231 = arith.addf %230, %229 : vector<16x128xf32>
    %232 = arith.divf %230, %231 : vector<16x128xf32>
    %233 = vector.extract_strided_slice %226 {offsets = [0, 128], sizes = [16, 128], strides = [1, 1]} : vector<16x512xf32> to vector<16x128xf32>
    %234 = arith.negf %233 : vector<16x128xf32>
    %235 = math.exp %234 : vector<16x128xf32>
    %cst_75 = arith.constant 1.000000e+00 : f32
    %236 = vector.broadcast %cst_75 : f32 to vector<16x128xf32>
    %237 = arith.addf %236, %235 : vector<16x128xf32>
    %238 = arith.divf %236, %237 : vector<16x128xf32>
    %239 = vector.extract_strided_slice %226 {offsets = [0, 256], sizes = [16, 128], strides = [1, 1]} : vector<16x512xf32> to vector<16x128xf32>
    %240 = math.tanh %239 : vector<16x128xf32>
    %241 = vector.extract_strided_slice %226 {offsets = [0, 384], sizes = [16, 128], strides = [1, 1]} : vector<16x512xf32> to vector<16x128xf32>
    %242 = arith.negf %241 : vector<16x128xf32>
    %243 = math.exp %242 : vector<16x128xf32>
    %cst_76 = arith.constant 1.000000e+00 : f32
    %244 = vector.broadcast %cst_76 : f32 to vector<16x128xf32>
    %245 = arith.addf %244, %243 : vector<16x128xf32>
    %246 = arith.divf %244, %245 : vector<16x128xf32>
    %247 = arith.mulf %238, %209 : vector<16x128xf32>
    %248 = arith.mulf %232, %240 : vector<16x128xf32>
    %249 = arith.addf %247, %248 : vector<16x128xf32>
    %250 = math.tanh %249 : vector<16x128xf32>
    %251 = arith.mulf %246, %250 : vector<16x128xf32>
    %252 = arith.truncf %251 : vector<16x128xf32> to vector<16x128xbf16>
    %253 = arith.index_cast %220 : i32 to index
    %c0_77 = arith.constant 0 : index
    %c0_78 = arith.constant 0 : index
    %254 = vector.load %arg6[%253, %c0_77, %c0_78] : memref<8x16x128xbf16, #tpu.memory_space<vmem>>, vector<1x16x128xbf16>
    %255 = vector.shape_cast %254 : vector<1x16x128xbf16> to vector<16x128xbf16>
    %256 = vector.shape_cast %252 : vector<16x128xbf16> to vector<1x16x128xbf16>
    tpu.vector_store %arg6[%253, %c0_77, %c0_78], %256 {strides = array<i32>} : memref<8x16x128xbf16, #tpu.memory_space<vmem>>, vector<1x16x128xbf16>,
    %c6_i32 = arith.constant 6 : i32
    %c2_i32_79 = arith.constant 2 : i32
    %257 = arith.muli %c2_i32_79, %c6_i32 : i32
    %c7_i32_80 = arith.constant 7 : i32
    %258 = arith.subi %c7_i32_80, %257 : i32
    %259 = arith.muli %arg0, %258 : i32
    %260 = arith.addi %c6_i32, %259 : i32
    %261 = arith.index_cast %260 : i32 to index
    %c0_81 = arith.constant 0 : index
    %c0_82 = arith.constant 0 : index
    %262 = vector.load %arg9[%261, %c0_81, %c0_82] : memref<8x16x512xf32, #tpu.memory_space<vmem>>, vector<1x16x512xf32>
    %263 = vector.shape_cast %262 : vector<1x16x512xf32> to vector<16x512xf32>
    %264 = arith.truncf %251 : vector<16x128xf32> to vector<16x128xbf16>
    %cst_83 = arith.constant dense<0.000000e+00> : vector<16x512xf32>
    %265 = tpu.matmul %264, %14, %cst_83 {dimension_numbers = #tpu.dot_dimension_numbers<[1], [0], [0], [1], [0, 0, 1, 1], [], []>} : vector<16x128xbf16>, vector<128x512xbf16>, vector<16x512xf32> -> vector<16x512xf32>
    %266 = arith.addf %263, %265 : vector<16x512xf32>
    %267 = vector.extract_strided_slice %266 {offsets = [0, 0], sizes = [16, 128], strides = [1, 1]} : vector<16x512xf32> to vector<16x128xf32>
    %268 = arith.negf %267 : vector<16x128xf32>
    %269 = math.exp %268 : vector<16x128xf32>
    %cst_84 = arith.constant 1.000000e+00 : f32
    %270 = vector.broadcast %cst_84 : f32 to vector<16x128xf32>
    %271 = arith.addf %270, %269 : vector<16x128xf32>
    %272 = arith.divf %270, %271 : vector<16x128xf32>
    %273 = vector.extract_strided_slice %266 {offsets = [0, 128], sizes = [16, 128], strides = [1, 1]} : vector<16x512xf32> to vector<16x128xf32>
    %274 = arith.negf %273 : vector<16x128xf32>
    %275 = math.exp %274 : vector<16x128xf32>
    %cst_85 = arith.constant 1.000000e+00 : f32
    %276 = vector.broadcast %cst_85 : f32 to vector<16x128xf32>
    %277 = arith.addf %276, %275 : vector<16x128xf32>
    %278 = arith.divf %276, %277 : vector<16x128xf32>
    %279 = vector.extract_strided_slice %266 {offsets = [0, 256], sizes = [16, 128], strides = [1, 1]} : vector<16x512xf32> to vector<16x128xf32>
    %280 = math.tanh %279 : vector<16x128xf32>
    %281 = vector.extract_strided_slice %266 {offsets = [0, 384], sizes = [16, 128], strides = [1, 1]} : vector<16x512xf32> to vector<16x128xf32>
    %282 = arith.negf %281 : vector<16x128xf32>
    %283 = math.exp %282 : vector<16x128xf32>
    %cst_86 = arith.constant 1.000000e+00 : f32
    %284 = vector.broadcast %cst_86 : f32 to vector<16x128xf32>
    %285 = arith.addf %284, %283 : vector<16x128xf32>
    %286 = arith.divf %284, %285 : vector<16x128xf32>
    %287 = arith.mulf %278, %249 : vector<16x128xf32>
    %288 = arith.mulf %272, %280 : vector<16x128xf32>
    %289 = arith.addf %287, %288 : vector<16x128xf32>
    %290 = math.tanh %289 : vector<16x128xf32>
    %291 = arith.mulf %286, %290 : vector<16x128xf32>
    %292 = arith.truncf %291 : vector<16x128xf32> to vector<16x128xbf16>
    %293 = arith.index_cast %260 : i32 to index
    %c0_87 = arith.constant 0 : index
    %c0_88 = arith.constant 0 : index
    %294 = vector.load %arg6[%293, %c0_87, %c0_88] : memref<8x16x128xbf16, #tpu.memory_space<vmem>>, vector<1x16x128xbf16>
    %295 = vector.shape_cast %294 : vector<1x16x128xbf16> to vector<16x128xbf16>
    %296 = vector.shape_cast %292 : vector<16x128xbf16> to vector<1x16x128xbf16>
    tpu.vector_store %arg6[%293, %c0_87, %c0_88], %296 {strides = array<i32>} : memref<8x16x128xbf16, #tpu.memory_space<vmem>>, vector<1x16x128xbf16>,
    %c7_i32_89 = arith.constant 7 : i32
    %c2_i32_90 = arith.constant 2 : i32
    %297 = arith.muli %c2_i32_90, %c7_i32_89 : i32
    %c7_i32_91 = arith.constant 7 : i32
    %298 = arith.subi %c7_i32_91, %297 : i32
    %299 = arith.muli %arg0, %298 : i32
    %300 = arith.addi %c7_i32_89, %299 : i32
    %301 = arith.index_cast %300 : i32 to index
    %c0_92 = arith.constant 0 : index
    %c0_93 = arith.constant 0 : index
    %302 = vector.load %arg9[%301, %c0_92, %c0_93] : memref<8x16x512xf32, #tpu.memory_space<vmem>>, vector<1x16x512xf32>
    %303 = vector.shape_cast %302 : vector<1x16x512xf32> to vector<16x512xf32>
    %304 = arith.truncf %291 : vector<16x128xf32> to vector<16x128xbf16>
    %cst_94 = arith.constant dense<0.000000e+00> : vector<16x512xf32>
    %305 = tpu.matmul %304, %14, %cst_94 {dimension_numbers = #tpu.dot_dimension_numbers<[1], [0], [0], [1], [0, 0, 1, 1], [], []>} : vector<16x128xbf16>, vector<128x512xbf16>, vector<16x512xf32> -> vector<16x512xf32>
    %306 = arith.addf %303, %305 : vector<16x512xf32>
    %307 = vector.extract_strided_slice %306 {offsets = [0, 0], sizes = [16, 128], strides = [1, 1]} : vector<16x512xf32> to vector<16x128xf32>
    %308 = arith.negf %307 : vector<16x128xf32>
    %309 = math.exp %308 : vector<16x128xf32>
    %cst_95 = arith.constant 1.000000e+00 : f32
    %310 = vector.broadcast %cst_95 : f32 to vector<16x128xf32>
    %311 = arith.addf %310, %309 : vector<16x128xf32>
    %312 = arith.divf %310, %311 : vector<16x128xf32>
    %313 = vector.extract_strided_slice %306 {offsets = [0, 128], sizes = [16, 128], strides = [1, 1]} : vector<16x512xf32> to vector<16x128xf32>
    %314 = arith.negf %313 : vector<16x128xf32>
    %315 = math.exp %314 : vector<16x128xf32>
    %cst_96 = arith.constant 1.000000e+00 : f32
    %316 = vector.broadcast %cst_96 : f32 to vector<16x128xf32>
    %317 = arith.addf %316, %315 : vector<16x128xf32>
    %318 = arith.divf %316, %317 : vector<16x128xf32>
    %319 = vector.extract_strided_slice %306 {offsets = [0, 256], sizes = [16, 128], strides = [1, 1]} : vector<16x512xf32> to vector<16x128xf32>
    %320 = math.tanh %319 : vector<16x128xf32>
    %321 = vector.extract_strided_slice %306 {offsets = [0, 384], sizes = [16, 128], strides = [1, 1]} : vector<16x512xf32> to vector<16x128xf32>
    %322 = arith.negf %321 : vector<16x128xf32>
    %323 = math.exp %322 : vector<16x128xf32>
    %cst_97 = arith.constant 1.000000e+00 : f32
    %324 = vector.broadcast %cst_97 : f32 to vector<16x128xf32>
    %325 = arith.addf %324, %323 : vector<16x128xf32>
    %326 = arith.divf %324, %325 : vector<16x128xf32>
    %327 = arith.mulf %318, %289 : vector<16x128xf32>
    %328 = arith.mulf %312, %320 : vector<16x128xf32>
    %329 = arith.addf %327, %328 : vector<16x128xf32>
    %330 = math.tanh %329 : vector<16x128xf32>
    %331 = arith.mulf %326, %330 : vector<16x128xf32>
    %332 = arith.truncf %331 : vector<16x128xf32> to vector<16x128xbf16>
    %333 = arith.index_cast %300 : i32 to index
    %c0_98 = arith.constant 0 : index
    %c0_99 = arith.constant 0 : index
    %334 = vector.load %arg6[%333, %c0_98, %c0_99] : memref<8x16x128xbf16, #tpu.memory_space<vmem>>, vector<1x16x128xbf16>
    %335 = vector.shape_cast %334 : vector<1x16x128xbf16> to vector<16x128xbf16>
    %336 = vector.shape_cast %332 : vector<16x128xbf16> to vector<1x16x128xbf16>
    tpu.vector_store %arg6[%333, %c0_98, %c0_99], %336 {strides = array<i32>} : memref<8x16x128xbf16, #tpu.memory_space<vmem>>, vector<1x16x128xbf16>,
    %c8_i32 = arith.constant 8 : i32
    %c0_100 = arith.constant 0 : index
    %c0_101 = arith.constant 0 : index
    %337 = vector.load %arg7[%c0_100, %c0_101] : memref<16x128xf32, #tpu.memory_space<vmem>>, vector<16x128xf32>
    tpu.vector_store %arg7[%c0_100, %c0_101], %331 {strides = array<i32>} : memref<16x128xf32, #tpu.memory_space<vmem>>, vector<16x128xf32>,
    %c0_102 = arith.constant 0 : index
    %c0_103 = arith.constant 0 : index
    %338 = vector.load %arg8[%c0_102, %c0_103] : memref<16x128xf32, #tpu.memory_space<vmem>>, vector<16x128xf32>
    tpu.vector_store %arg8[%c0_102, %c0_103], %329 {strides = array<i32>} : memref<16x128xf32, #tpu.memory_space<vmem>>, vector<16x128xf32>,
    return
  }
  func.func @transform_0(%arg0: i32, %arg1: i32) -> (i32, i32, i32) {
    %c2_i32 = arith.constant 2 : i32
    %0 = arith.muli %c2_i32, %arg1 : i32
    %c0_i32 = arith.constant 0 : i32
    %1 = arith.subi %c0_i32, %0 : i32
    %2 = arith.muli %arg0, %1 : i32
    %3 = arith.addi %arg1, %2 : i32
    %c0_i32_0 = arith.constant 0 : i32
    %c0_i32_1 = arith.constant 0 : i32
    %c0_i32_2 = arith.constant 0 : i32
    return %3, %c0_i32_0, %c0_i32_1 : i32, i32, i32
  }
  func.func @transform_1(%arg0: i32, %arg1: i32) -> (i32, i32, i32) {
    %c0_i32 = arith.constant 0 : i32
    %c0_i32_0 = arith.constant 0 : i32
    %c0_i32_1 = arith.constant 0 : i32
    return %arg0, %c0_i32, %c0_i32_0 : i32, i32, i32
  }
  func.func @transform_2(%arg0: i32, %arg1: i32) -> (i32, i32, i32) {
    %c0_i32 = arith.constant 0 : i32
    %c0_i32_0 = arith.constant 0 : i32
    %c0_i32_1 = arith.constant 0 : i32
    return %arg0, %c0_i32, %c0_i32_0 : i32, i32, i32
  }
  func.func @transform_3(%arg0: i32, %arg1: i32) -> (i32, i32, i32) {
    %c0_i32 = arith.constant 0 : i32
    %c0_i32_0 = arith.constant 0 : i32
    %c0_i32_1 = arith.constant 0 : i32
    return %arg0, %c0_i32, %c0_i32_0 : i32, i32, i32
  }
  func.func @transform_4(%arg0: i32, %arg1: i32) -> (i32, i32, i32) {
    %c2_i32 = arith.constant 2 : i32
    %0 = arith.muli %c2_i32, %arg1 : i32
    %c0_i32 = arith.constant 0 : i32
    %1 = arith.subi %c0_i32, %0 : i32
    %2 = arith.muli %arg0, %1 : i32
    %3 = arith.addi %arg1, %2 : i32
    %c0_i32_0 = arith.constant 0 : i32
    %c0_i32_1 = arith.constant 0 : i32
    return %3, %c0_i32_0, %arg0 : i32, i32, i32
  }
}

module attributes {stable_mosaic.version = 11 : i64} {
  func.func @_bigru_kernel(%arg0: i32, %arg1: i32, %arg2: memref<8x16x128xbf16, #tpu.memory_space<vmem>>, %arg3: memref<1x128x384xbf16, #tpu.memory_space<vmem>>, %arg4: memref<1x128x384xbf16, #tpu.memory_space<vmem>>, %arg5: memref<1x1x384xf32, #tpu.memory_space<vmem>>, %arg6: memref<1x1x384xf32, #tpu.memory_space<vmem>>, %arg7: memref<8x16x128xbf16, #tpu.memory_space<vmem>>, %arg8: memref<16x128xf32, #tpu.memory_space<vmem>>, %arg9: memref<8x16x384xf32, #tpu.memory_space<vmem>>) attributes {dimension_semantics = [#tpu.dimension_semantics<parallel>, #tpu.dimension_semantics<arbitrary>], iteration_bounds = array<i64: 2, 1>, scalar_prefetch = 0 : i64, scratch_operands = 2 : i64, tpu.core_type = #tpu.core_type<tc>, window_params = [{transform_indices = @transform_0, window_bounds = array<i64: 8, 16, 128>}, {transform_indices = @transform_1, window_bounds = array<i64: 1, 128, 384>}, {transform_indices = @transform_2, window_bounds = array<i64: 1, 128, 384>}, {transform_indices = @transform_3, window_bounds = array<i64: 1, 1, 384>}, {transform_indices = @transform_4, window_bounds = array<i64: 1, 1, 384>}, {transform_indices = @transform_5, window_bounds = array<i64: 8, 16, 128>}]} {
    %c0_i32 = arith.constant 0 : i32
    %0 = arith.cmpi eq, %arg1, %c0_i32 : i32
    %1 = arith.extui %0 : i1 to i32
    %c0_i32_0 = arith.constant 0 : i32
    %2 = arith.cmpi ne, %1, %c0_i32_0 : i32
    scf.if %2 {
      %cst_103 = arith.constant 0.000000e+00 : f32
      %355 = vector.broadcast %cst_103 : f32 to vector<16x128xf32>
      %c0_104 = arith.constant 0 : index
      %c0_105 = arith.constant 0 : index
      %356 = vector.load %arg8[%c0_104, %c0_105] : memref<16x128xf32, #tpu.memory_space<vmem>>, vector<16x128xf32>
      tpu.vector_store %arg8[%c0_104, %c0_105], %355 {strides = array<i32>} : memref<16x128xf32, #tpu.memory_space<vmem>>, vector<16x128xf32>,
    } else {
    }
    %c0 = arith.constant 0 : index
    %c0_1 = arith.constant 0 : index
    %c0_2 = arith.constant 0 : index
    %3 = vector.load %arg2[%c0, %c0_1, %c0_2] : memref<8x16x128xbf16, #tpu.memory_space<vmem>>, vector<8x16x128xbf16>
    %4 = vector.shape_cast %3 : vector<8x16x128xbf16> to vector<128x128xbf16>
    %c0_3 = arith.constant 0 : index
    %c0_4 = arith.constant 0 : index
    %c0_5 = arith.constant 0 : index
    %5 = vector.load %arg3[%c0_3, %c0_4, %c0_5] : memref<1x128x384xbf16, #tpu.memory_space<vmem>>, vector<1x128x384xbf16>
    %6 = vector.shape_cast %5 : vector<1x128x384xbf16> to vector<128x384xbf16>
    %cst = arith.constant dense<0.000000e+00> : vector<128x384xf32>
    %7 = tpu.matmul %4, %6, %cst {dimension_numbers = #tpu.dot_dimension_numbers<[1], [0], [0], [1], [0, 0, 1, 1], [], []>} : vector<128x128xbf16>, vector<128x384xbf16>, vector<128x384xf32> -> vector<128x384xf32>
    %8 = vector.shape_cast %7 : vector<128x384xf32> to vector<8x16x384xf32>
    %c0_6 = arith.constant 0 : index
    %c0_7 = arith.constant 0 : index
    %c0_8 = arith.constant 0 : index
    %9 = vector.load %arg5[%c0_6, %c0_7, %c0_8] : memref<1x1x384xf32, #tpu.memory_space<vmem>>, vector<1x1x384xf32>
    %10 = vector.broadcast %9 : vector<1x1x384xf32> to vector<8x16x384xf32>
    %11 = arith.addf %8, %10 : vector<8x16x384xf32>
    %c0_9 = arith.constant 0 : index
    %c0_10 = arith.constant 0 : index
    %c0_11 = arith.constant 0 : index
    %12 = vector.load %arg9[%c0_9, %c0_10, %c0_11] : memref<8x16x384xf32, #tpu.memory_space<vmem>>, vector<8x16x384xf32>
    tpu.vector_store %arg9[%c0_9, %c0_10, %c0_11], %11 {strides = array<i32>} : memref<8x16x384xf32, #tpu.memory_space<vmem>>, vector<8x16x384xf32>,
    %c0_12 = arith.constant 0 : index
    %c0_13 = arith.constant 0 : index
    %c0_14 = arith.constant 0 : index
    %13 = vector.load %arg4[%c0_12, %c0_13, %c0_14] : memref<1x128x384xbf16, #tpu.memory_space<vmem>>, vector<1x128x384xbf16>
    %14 = vector.shape_cast %13 : vector<1x128x384xbf16> to vector<128x384xbf16>
    %c0_15 = arith.constant 0 : index
    %c0_16 = arith.constant 0 : index
    %c0_17 = arith.constant 0 : index
    %15 = vector.load %arg6[%c0_15, %c0_16, %c0_17] : memref<1x1x384xf32, #tpu.memory_space<vmem>>, vector<1x1x384xf32>
    %16 = vector.shape_cast %15 : vector<1x1x384xf32> to vector<1x384xf32>
    %c0_18 = arith.constant 0 : index
    %c0_19 = arith.constant 0 : index
    %17 = vector.load %arg8[%c0_18, %c0_19] : memref<16x128xf32, #tpu.memory_space<vmem>>, vector<16x128xf32>
    %c0_i32_20 = arith.constant 0 : i32
    %c2_i32 = arith.constant 2 : i32
    %18 = arith.muli %c2_i32, %c0_i32_20 : i32
    %c7_i32 = arith.constant 7 : i32
    %19 = arith.subi %c7_i32, %18 : i32
    %20 = arith.muli %arg0, %19 : i32
    %21 = arith.addi %c0_i32_20, %20 : i32
    %22 = arith.index_cast %21 : i32 to index
    %c0_21 = arith.constant 0 : index
    %c0_22 = arith.constant 0 : index
    %23 = vector.load %arg9[%22, %c0_21, %c0_22] : memref<8x16x384xf32, #tpu.memory_space<vmem>>, vector<1x16x384xf32>
    %24 = vector.shape_cast %23 : vector<1x16x384xf32> to vector<16x384xf32>
    %25 = arith.truncf %17 : vector<16x128xf32> to vector<16x128xbf16>
    %cst_23 = arith.constant dense<0.000000e+00> : vector<16x384xf32>
    %26 = tpu.matmul %25, %14, %cst_23 {dimension_numbers = #tpu.dot_dimension_numbers<[1], [0], [0], [1], [0, 0, 1, 1], [], []>} : vector<16x128xbf16>, vector<128x384xbf16>, vector<16x384xf32> -> vector<16x384xf32>
    %27 = vector.broadcast %16 : vector<1x384xf32> to vector<16x384xf32>
    %28 = arith.addf %26, %27 : vector<16x384xf32>
    %29 = vector.extract_strided_slice %24 {offsets = [0, 0], sizes = [16, 128], strides = [1, 1]} : vector<16x384xf32> to vector<16x128xf32>
    %30 = vector.extract_strided_slice %28 {offsets = [0, 0], sizes = [16, 128], strides = [1, 1]} : vector<16x384xf32> to vector<16x128xf32>
    %31 = arith.addf %29, %30 : vector<16x128xf32>
    %32 = arith.negf %31 : vector<16x128xf32>
    %33 = math.exp %32 : vector<16x128xf32>
    %cst_24 = arith.constant 1.000000e+00 : f32
    %34 = vector.broadcast %cst_24 : f32 to vector<16x128xf32>
    %35 = arith.addf %34, %33 : vector<16x128xf32>
    %36 = arith.divf %34, %35 : vector<16x128xf32>
    %37 = vector.extract_strided_slice %24 {offsets = [0, 128], sizes = [16, 128], strides = [1, 1]} : vector<16x384xf32> to vector<16x128xf32>
    %38 = vector.extract_strided_slice %28 {offsets = [0, 128], sizes = [16, 128], strides = [1, 1]} : vector<16x384xf32> to vector<16x128xf32>
    %39 = arith.addf %37, %38 : vector<16x128xf32>
    %40 = arith.negf %39 : vector<16x128xf32>
    %41 = math.exp %40 : vector<16x128xf32>
    %cst_25 = arith.constant 1.000000e+00 : f32
    %42 = vector.broadcast %cst_25 : f32 to vector<16x128xf32>
    %43 = arith.addf %42, %41 : vector<16x128xf32>
    %44 = arith.divf %42, %43 : vector<16x128xf32>
    %45 = vector.extract_strided_slice %24 {offsets = [0, 256], sizes = [16, 128], strides = [1, 1]} : vector<16x384xf32> to vector<16x128xf32>
    %46 = vector.extract_strided_slice %28 {offsets = [0, 256], sizes = [16, 128], strides = [1, 1]} : vector<16x384xf32> to vector<16x128xf32>
    %47 = arith.mulf %36, %46 : vector<16x128xf32>
    %48 = arith.addf %45, %47 : vector<16x128xf32>
    %49 = math.tanh %48 : vector<16x128xf32>
    %cst_26 = arith.constant 1.000000e+00 : f32
    %50 = vector.broadcast %cst_26 : f32 to vector<16x128xf32>
    %51 = arith.subf %50, %44 : vector<16x128xf32>
    %52 = arith.mulf %51, %49 : vector<16x128xf32>
    %53 = arith.mulf %44, %17 : vector<16x128xf32>
    %54 = arith.addf %52, %53 : vector<16x128xf32>
    %55 = arith.truncf %54 : vector<16x128xf32> to vector<16x128xbf16>
    %56 = arith.index_cast %21 : i32 to index
    %c0_27 = arith.constant 0 : index
    %c0_28 = arith.constant 0 : index
    %57 = vector.load %arg7[%56, %c0_27, %c0_28] : memref<8x16x128xbf16, #tpu.memory_space<vmem>>, vector<1x16x128xbf16>
    %58 = vector.shape_cast %57 : vector<1x16x128xbf16> to vector<16x128xbf16>
    %59 = vector.shape_cast %55 : vector<16x128xbf16> to vector<1x16x128xbf16>
    tpu.vector_store %arg7[%56, %c0_27, %c0_28], %59 {strides = array<i32>} : memref<8x16x128xbf16, #tpu.memory_space<vmem>>, vector<1x16x128xbf16>,
    %c1_i32 = arith.constant 1 : i32
    %c2_i32_29 = arith.constant 2 : i32
    %60 = arith.muli %c2_i32_29, %c1_i32 : i32
    %c7_i32_30 = arith.constant 7 : i32
    %61 = arith.subi %c7_i32_30, %60 : i32
    %62 = arith.muli %arg0, %61 : i32
    %63 = arith.addi %c1_i32, %62 : i32
    %64 = arith.index_cast %63 : i32 to index
    %c0_31 = arith.constant 0 : index
    %c0_32 = arith.constant 0 : index
    %65 = vector.load %arg9[%64, %c0_31, %c0_32] : memref<8x16x384xf32, #tpu.memory_space<vmem>>, vector<1x16x384xf32>
    %66 = vector.shape_cast %65 : vector<1x16x384xf32> to vector<16x384xf32>
    %67 = arith.truncf %54 : vector<16x128xf32> to vector<16x128xbf16>
    %cst_33 = arith.constant dense<0.000000e+00> : vector<16x384xf32>
    %68 = tpu.matmul %67, %14, %cst_33 {dimension_numbers = #tpu.dot_dimension_numbers<[1], [0], [0], [1], [0, 0, 1, 1], [], []>} : vector<16x128xbf16>, vector<128x384xbf16>, vector<16x384xf32> -> vector<16x384xf32>
    %69 = vector.broadcast %16 : vector<1x384xf32> to vector<16x384xf32>
    %70 = arith.addf %68, %69 : vector<16x384xf32>
    %71 = vector.extract_strided_slice %66 {offsets = [0, 0], sizes = [16, 128], strides = [1, 1]} : vector<16x384xf32> to vector<16x128xf32>
    %72 = vector.extract_strided_slice %70 {offsets = [0, 0], sizes = [16, 128], strides = [1, 1]} : vector<16x384xf32> to vector<16x128xf32>
    %73 = arith.addf %71, %72 : vector<16x128xf32>
    %74 = arith.negf %73 : vector<16x128xf32>
    %75 = math.exp %74 : vector<16x128xf32>
    %cst_34 = arith.constant 1.000000e+00 : f32
    %76 = vector.broadcast %cst_34 : f32 to vector<16x128xf32>
    %77 = arith.addf %76, %75 : vector<16x128xf32>
    %78 = arith.divf %76, %77 : vector<16x128xf32>
    %79 = vector.extract_strided_slice %66 {offsets = [0, 128], sizes = [16, 128], strides = [1, 1]} : vector<16x384xf32> to vector<16x128xf32>
    %80 = vector.extract_strided_slice %70 {offsets = [0, 128], sizes = [16, 128], strides = [1, 1]} : vector<16x384xf32> to vector<16x128xf32>
    %81 = arith.addf %79, %80 : vector<16x128xf32>
    %82 = arith.negf %81 : vector<16x128xf32>
    %83 = math.exp %82 : vector<16x128xf32>
    %cst_35 = arith.constant 1.000000e+00 : f32
    %84 = vector.broadcast %cst_35 : f32 to vector<16x128xf32>
    %85 = arith.addf %84, %83 : vector<16x128xf32>
    %86 = arith.divf %84, %85 : vector<16x128xf32>
    %87 = vector.extract_strided_slice %66 {offsets = [0, 256], sizes = [16, 128], strides = [1, 1]} : vector<16x384xf32> to vector<16x128xf32>
    %88 = vector.extract_strided_slice %70 {offsets = [0, 256], sizes = [16, 128], strides = [1, 1]} : vector<16x384xf32> to vector<16x128xf32>
    %89 = arith.mulf %78, %88 : vector<16x128xf32>
    %90 = arith.addf %87, %89 : vector<16x128xf32>
    %91 = math.tanh %90 : vector<16x128xf32>
    %cst_36 = arith.constant 1.000000e+00 : f32
    %92 = vector.broadcast %cst_36 : f32 to vector<16x128xf32>
    %93 = arith.subf %92, %86 : vector<16x128xf32>
    %94 = arith.mulf %93, %91 : vector<16x128xf32>
    %95 = arith.mulf %86, %54 : vector<16x128xf32>
    %96 = arith.addf %94, %95 : vector<16x128xf32>
    %97 = arith.truncf %96 : vector<16x128xf32> to vector<16x128xbf16>
    %98 = arith.index_cast %63 : i32 to index
    %c0_37 = arith.constant 0 : index
    %c0_38 = arith.constant 0 : index
    %99 = vector.load %arg7[%98, %c0_37, %c0_38] : memref<8x16x128xbf16, #tpu.memory_space<vmem>>, vector<1x16x128xbf16>
    %100 = vector.shape_cast %99 : vector<1x16x128xbf16> to vector<16x128xbf16>
    %101 = vector.shape_cast %97 : vector<16x128xbf16> to vector<1x16x128xbf16>
    tpu.vector_store %arg7[%98, %c0_37, %c0_38], %101 {strides = array<i32>} : memref<8x16x128xbf16, #tpu.memory_space<vmem>>, vector<1x16x128xbf16>,
    %c2_i32_39 = arith.constant 2 : i32
    %c2_i32_40 = arith.constant 2 : i32
    %102 = arith.muli %c2_i32_40, %c2_i32_39 : i32
    %c7_i32_41 = arith.constant 7 : i32
    %103 = arith.subi %c7_i32_41, %102 : i32
    %104 = arith.muli %arg0, %103 : i32
    %105 = arith.addi %c2_i32_39, %104 : i32
    %106 = arith.index_cast %105 : i32 to index
    %c0_42 = arith.constant 0 : index
    %c0_43 = arith.constant 0 : index
    %107 = vector.load %arg9[%106, %c0_42, %c0_43] : memref<8x16x384xf32, #tpu.memory_space<vmem>>, vector<1x16x384xf32>
    %108 = vector.shape_cast %107 : vector<1x16x384xf32> to vector<16x384xf32>
    %109 = arith.truncf %96 : vector<16x128xf32> to vector<16x128xbf16>
    %cst_44 = arith.constant dense<0.000000e+00> : vector<16x384xf32>
    %110 = tpu.matmul %109, %14, %cst_44 {dimension_numbers = #tpu.dot_dimension_numbers<[1], [0], [0], [1], [0, 0, 1, 1], [], []>} : vector<16x128xbf16>, vector<128x384xbf16>, vector<16x384xf32> -> vector<16x384xf32>
    %111 = vector.broadcast %16 : vector<1x384xf32> to vector<16x384xf32>
    %112 = arith.addf %110, %111 : vector<16x384xf32>
    %113 = vector.extract_strided_slice %108 {offsets = [0, 0], sizes = [16, 128], strides = [1, 1]} : vector<16x384xf32> to vector<16x128xf32>
    %114 = vector.extract_strided_slice %112 {offsets = [0, 0], sizes = [16, 128], strides = [1, 1]} : vector<16x384xf32> to vector<16x128xf32>
    %115 = arith.addf %113, %114 : vector<16x128xf32>
    %116 = arith.negf %115 : vector<16x128xf32>
    %117 = math.exp %116 : vector<16x128xf32>
    %cst_45 = arith.constant 1.000000e+00 : f32
    %118 = vector.broadcast %cst_45 : f32 to vector<16x128xf32>
    %119 = arith.addf %118, %117 : vector<16x128xf32>
    %120 = arith.divf %118, %119 : vector<16x128xf32>
    %121 = vector.extract_strided_slice %108 {offsets = [0, 128], sizes = [16, 128], strides = [1, 1]} : vector<16x384xf32> to vector<16x128xf32>
    %122 = vector.extract_strided_slice %112 {offsets = [0, 128], sizes = [16, 128], strides = [1, 1]} : vector<16x384xf32> to vector<16x128xf32>
    %123 = arith.addf %121, %122 : vector<16x128xf32>
    %124 = arith.negf %123 : vector<16x128xf32>
    %125 = math.exp %124 : vector<16x128xf32>
    %cst_46 = arith.constant 1.000000e+00 : f32
    %126 = vector.broadcast %cst_46 : f32 to vector<16x128xf32>
    %127 = arith.addf %126, %125 : vector<16x128xf32>
    %128 = arith.divf %126, %127 : vector<16x128xf32>
    %129 = vector.extract_strided_slice %108 {offsets = [0, 256], sizes = [16, 128], strides = [1, 1]} : vector<16x384xf32> to vector<16x128xf32>
    %130 = vector.extract_strided_slice %112 {offsets = [0, 256], sizes = [16, 128], strides = [1, 1]} : vector<16x384xf32> to vector<16x128xf32>
    %131 = arith.mulf %120, %130 : vector<16x128xf32>
    %132 = arith.addf %129, %131 : vector<16x128xf32>
    %133 = math.tanh %132 : vector<16x128xf32>
    %cst_47 = arith.constant 1.000000e+00 : f32
    %134 = vector.broadcast %cst_47 : f32 to vector<16x128xf32>
    %135 = arith.subf %134, %128 : vector<16x128xf32>
    %136 = arith.mulf %135, %133 : vector<16x128xf32>
    %137 = arith.mulf %128, %96 : vector<16x128xf32>
    %138 = arith.addf %136, %137 : vector<16x128xf32>
    %139 = arith.truncf %138 : vector<16x128xf32> to vector<16x128xbf16>
    %140 = arith.index_cast %105 : i32 to index
    %c0_48 = arith.constant 0 : index
    %c0_49 = arith.constant 0 : index
    %141 = vector.load %arg7[%140, %c0_48, %c0_49] : memref<8x16x128xbf16, #tpu.memory_space<vmem>>, vector<1x16x128xbf16>
    %142 = vector.shape_cast %141 : vector<1x16x128xbf16> to vector<16x128xbf16>
    %143 = vector.shape_cast %139 : vector<16x128xbf16> to vector<1x16x128xbf16>
    tpu.vector_store %arg7[%140, %c0_48, %c0_49], %143 {strides = array<i32>} : memref<8x16x128xbf16, #tpu.memory_space<vmem>>, vector<1x16x128xbf16>,
    %c3_i32 = arith.constant 3 : i32
    %c2_i32_50 = arith.constant 2 : i32
    %144 = arith.muli %c2_i32_50, %c3_i32 : i32
    %c7_i32_51 = arith.constant 7 : i32
    %145 = arith.subi %c7_i32_51, %144 : i32
    %146 = arith.muli %arg0, %145 : i32
    %147 = arith.addi %c3_i32, %146 : i32
    %148 = arith.index_cast %147 : i32 to index
    %c0_52 = arith.constant 0 : index
    %c0_53 = arith.constant 0 : index
    %149 = vector.load %arg9[%148, %c0_52, %c0_53] : memref<8x16x384xf32, #tpu.memory_space<vmem>>, vector<1x16x384xf32>
    %150 = vector.shape_cast %149 : vector<1x16x384xf32> to vector<16x384xf32>
    %151 = arith.truncf %138 : vector<16x128xf32> to vector<16x128xbf16>
    %cst_54 = arith.constant dense<0.000000e+00> : vector<16x384xf32>
    %152 = tpu.matmul %151, %14, %cst_54 {dimension_numbers = #tpu.dot_dimension_numbers<[1], [0], [0], [1], [0, 0, 1, 1], [], []>} : vector<16x128xbf16>, vector<128x384xbf16>, vector<16x384xf32> -> vector<16x384xf32>
    %153 = vector.broadcast %16 : vector<1x384xf32> to vector<16x384xf32>
    %154 = arith.addf %152, %153 : vector<16x384xf32>
    %155 = vector.extract_strided_slice %150 {offsets = [0, 0], sizes = [16, 128], strides = [1, 1]} : vector<16x384xf32> to vector<16x128xf32>
    %156 = vector.extract_strided_slice %154 {offsets = [0, 0], sizes = [16, 128], strides = [1, 1]} : vector<16x384xf32> to vector<16x128xf32>
    %157 = arith.addf %155, %156 : vector<16x128xf32>
    %158 = arith.negf %157 : vector<16x128xf32>
    %159 = math.exp %158 : vector<16x128xf32>
    %cst_55 = arith.constant 1.000000e+00 : f32
    %160 = vector.broadcast %cst_55 : f32 to vector<16x128xf32>
    %161 = arith.addf %160, %159 : vector<16x128xf32>
    %162 = arith.divf %160, %161 : vector<16x128xf32>
    %163 = vector.extract_strided_slice %150 {offsets = [0, 128], sizes = [16, 128], strides = [1, 1]} : vector<16x384xf32> to vector<16x128xf32>
    %164 = vector.extract_strided_slice %154 {offsets = [0, 128], sizes = [16, 128], strides = [1, 1]} : vector<16x384xf32> to vector<16x128xf32>
    %165 = arith.addf %163, %164 : vector<16x128xf32>
    %166 = arith.negf %165 : vector<16x128xf32>
    %167 = math.exp %166 : vector<16x128xf32>
    %cst_56 = arith.constant 1.000000e+00 : f32
    %168 = vector.broadcast %cst_56 : f32 to vector<16x128xf32>
    %169 = arith.addf %168, %167 : vector<16x128xf32>
    %170 = arith.divf %168, %169 : vector<16x128xf32>
    %171 = vector.extract_strided_slice %150 {offsets = [0, 256], sizes = [16, 128], strides = [1, 1]} : vector<16x384xf32> to vector<16x128xf32>
    %172 = vector.extract_strided_slice %154 {offsets = [0, 256], sizes = [16, 128], strides = [1, 1]} : vector<16x384xf32> to vector<16x128xf32>
    %173 = arith.mulf %162, %172 : vector<16x128xf32>
    %174 = arith.addf %171, %173 : vector<16x128xf32>
    %175 = math.tanh %174 : vector<16x128xf32>
    %cst_57 = arith.constant 1.000000e+00 : f32
    %176 = vector.broadcast %cst_57 : f32 to vector<16x128xf32>
    %177 = arith.subf %176, %170 : vector<16x128xf32>
    %178 = arith.mulf %177, %175 : vector<16x128xf32>
    %179 = arith.mulf %170, %138 : vector<16x128xf32>
    %180 = arith.addf %178, %179 : vector<16x128xf32>
    %181 = arith.truncf %180 : vector<16x128xf32> to vector<16x128xbf16>
    %182 = arith.index_cast %147 : i32 to index
    %c0_58 = arith.constant 0 : index
    %c0_59 = arith.constant 0 : index
    %183 = vector.load %arg7[%182, %c0_58, %c0_59] : memref<8x16x128xbf16, #tpu.memory_space<vmem>>, vector<1x16x128xbf16>
    %184 = vector.shape_cast %183 : vector<1x16x128xbf16> to vector<16x128xbf16>
    %185 = vector.shape_cast %181 : vector<16x128xbf16> to vector<1x16x128xbf16>
    tpu.vector_store %arg7[%182, %c0_58, %c0_59], %185 {strides = array<i32>} : memref<8x16x128xbf16, #tpu.memory_space<vmem>>, vector<1x16x128xbf16>,
    %c4_i32 = arith.constant 4 : i32
    %c2_i32_60 = arith.constant 2 : i32
    %186 = arith.muli %c2_i32_60, %c4_i32 : i32
    %c7_i32_61 = arith.constant 7 : i32
    %187 = arith.subi %c7_i32_61, %186 : i32
    %188 = arith.muli %arg0, %187 : i32
    %189 = arith.addi %c4_i32, %188 : i32
    %190 = arith.index_cast %189 : i32 to index
    %c0_62 = arith.constant 0 : index
    %c0_63 = arith.constant 0 : index
    %191 = vector.load %arg9[%190, %c0_62, %c0_63] : memref<8x16x384xf32, #tpu.memory_space<vmem>>, vector<1x16x384xf32>
    %192 = vector.shape_cast %191 : vector<1x16x384xf32> to vector<16x384xf32>
    %193 = arith.truncf %180 : vector<16x128xf32> to vector<16x128xbf16>
    %cst_64 = arith.constant dense<0.000000e+00> : vector<16x384xf32>
    %194 = tpu.matmul %193, %14, %cst_64 {dimension_numbers = #tpu.dot_dimension_numbers<[1], [0], [0], [1], [0, 0, 1, 1], [], []>} : vector<16x128xbf16>, vector<128x384xbf16>, vector<16x384xf32> -> vector<16x384xf32>
    %195 = vector.broadcast %16 : vector<1x384xf32> to vector<16x384xf32>
    %196 = arith.addf %194, %195 : vector<16x384xf32>
    %197 = vector.extract_strided_slice %192 {offsets = [0, 0], sizes = [16, 128], strides = [1, 1]} : vector<16x384xf32> to vector<16x128xf32>
    %198 = vector.extract_strided_slice %196 {offsets = [0, 0], sizes = [16, 128], strides = [1, 1]} : vector<16x384xf32> to vector<16x128xf32>
    %199 = arith.addf %197, %198 : vector<16x128xf32>
    %200 = arith.negf %199 : vector<16x128xf32>
    %201 = math.exp %200 : vector<16x128xf32>
    %cst_65 = arith.constant 1.000000e+00 : f32
    %202 = vector.broadcast %cst_65 : f32 to vector<16x128xf32>
    %203 = arith.addf %202, %201 : vector<16x128xf32>
    %204 = arith.divf %202, %203 : vector<16x128xf32>
    %205 = vector.extract_strided_slice %192 {offsets = [0, 128], sizes = [16, 128], strides = [1, 1]} : vector<16x384xf32> to vector<16x128xf32>
    %206 = vector.extract_strided_slice %196 {offsets = [0, 128], sizes = [16, 128], strides = [1, 1]} : vector<16x384xf32> to vector<16x128xf32>
    %207 = arith.addf %205, %206 : vector<16x128xf32>
    %208 = arith.negf %207 : vector<16x128xf32>
    %209 = math.exp %208 : vector<16x128xf32>
    %cst_66 = arith.constant 1.000000e+00 : f32
    %210 = vector.broadcast %cst_66 : f32 to vector<16x128xf32>
    %211 = arith.addf %210, %209 : vector<16x128xf32>
    %212 = arith.divf %210, %211 : vector<16x128xf32>
    %213 = vector.extract_strided_slice %192 {offsets = [0, 256], sizes = [16, 128], strides = [1, 1]} : vector<16x384xf32> to vector<16x128xf32>
    %214 = vector.extract_strided_slice %196 {offsets = [0, 256], sizes = [16, 128], strides = [1, 1]} : vector<16x384xf32> to vector<16x128xf32>
    %215 = arith.mulf %204, %214 : vector<16x128xf32>
    %216 = arith.addf %213, %215 : vector<16x128xf32>
    %217 = math.tanh %216 : vector<16x128xf32>
    %cst_67 = arith.constant 1.000000e+00 : f32
    %218 = vector.broadcast %cst_67 : f32 to vector<16x128xf32>
    %219 = arith.subf %218, %212 : vector<16x128xf32>
    %220 = arith.mulf %219, %217 : vector<16x128xf32>
    %221 = arith.mulf %212, %180 : vector<16x128xf32>
    %222 = arith.addf %220, %221 : vector<16x128xf32>
    %223 = arith.truncf %222 : vector<16x128xf32> to vector<16x128xbf16>
    %224 = arith.index_cast %189 : i32 to index
    %c0_68 = arith.constant 0 : index
    %c0_69 = arith.constant 0 : index
    %225 = vector.load %arg7[%224, %c0_68, %c0_69] : memref<8x16x128xbf16, #tpu.memory_space<vmem>>, vector<1x16x128xbf16>
    %226 = vector.shape_cast %225 : vector<1x16x128xbf16> to vector<16x128xbf16>
    %227 = vector.shape_cast %223 : vector<16x128xbf16> to vector<1x16x128xbf16>
    tpu.vector_store %arg7[%224, %c0_68, %c0_69], %227 {strides = array<i32>} : memref<8x16x128xbf16, #tpu.memory_space<vmem>>, vector<1x16x128xbf16>,
    %c5_i32 = arith.constant 5 : i32
    %c2_i32_70 = arith.constant 2 : i32
    %228 = arith.muli %c2_i32_70, %c5_i32 : i32
    %c7_i32_71 = arith.constant 7 : i32
    %229 = arith.subi %c7_i32_71, %228 : i32
    %230 = arith.muli %arg0, %229 : i32
    %231 = arith.addi %c5_i32, %230 : i32
    %232 = arith.index_cast %231 : i32 to index
    %c0_72 = arith.constant 0 : index
    %c0_73 = arith.constant 0 : index
    %233 = vector.load %arg9[%232, %c0_72, %c0_73] : memref<8x16x384xf32, #tpu.memory_space<vmem>>, vector<1x16x384xf32>
    %234 = vector.shape_cast %233 : vector<1x16x384xf32> to vector<16x384xf32>
    %235 = arith.truncf %222 : vector<16x128xf32> to vector<16x128xbf16>
    %cst_74 = arith.constant dense<0.000000e+00> : vector<16x384xf32>
    %236 = tpu.matmul %235, %14, %cst_74 {dimension_numbers = #tpu.dot_dimension_numbers<[1], [0], [0], [1], [0, 0, 1, 1], [], []>} : vector<16x128xbf16>, vector<128x384xbf16>, vector<16x384xf32> -> vector<16x384xf32>
    %237 = vector.broadcast %16 : vector<1x384xf32> to vector<16x384xf32>
    %238 = arith.addf %236, %237 : vector<16x384xf32>
    %239 = vector.extract_strided_slice %234 {offsets = [0, 0], sizes = [16, 128], strides = [1, 1]} : vector<16x384xf32> to vector<16x128xf32>
    %240 = vector.extract_strided_slice %238 {offsets = [0, 0], sizes = [16, 128], strides = [1, 1]} : vector<16x384xf32> to vector<16x128xf32>
    %241 = arith.addf %239, %240 : vector<16x128xf32>
    %242 = arith.negf %241 : vector<16x128xf32>
    %243 = math.exp %242 : vector<16x128xf32>
    %cst_75 = arith.constant 1.000000e+00 : f32
    %244 = vector.broadcast %cst_75 : f32 to vector<16x128xf32>
    %245 = arith.addf %244, %243 : vector<16x128xf32>
    %246 = arith.divf %244, %245 : vector<16x128xf32>
    %247 = vector.extract_strided_slice %234 {offsets = [0, 128], sizes = [16, 128], strides = [1, 1]} : vector<16x384xf32> to vector<16x128xf32>
    %248 = vector.extract_strided_slice %238 {offsets = [0, 128], sizes = [16, 128], strides = [1, 1]} : vector<16x384xf32> to vector<16x128xf32>
    %249 = arith.addf %247, %248 : vector<16x128xf32>
    %250 = arith.negf %249 : vector<16x128xf32>
    %251 = math.exp %250 : vector<16x128xf32>
    %cst_76 = arith.constant 1.000000e+00 : f32
    %252 = vector.broadcast %cst_76 : f32 to vector<16x128xf32>
    %253 = arith.addf %252, %251 : vector<16x128xf32>
    %254 = arith.divf %252, %253 : vector<16x128xf32>
    %255 = vector.extract_strided_slice %234 {offsets = [0, 256], sizes = [16, 128], strides = [1, 1]} : vector<16x384xf32> to vector<16x128xf32>
    %256 = vector.extract_strided_slice %238 {offsets = [0, 256], sizes = [16, 128], strides = [1, 1]} : vector<16x384xf32> to vector<16x128xf32>
    %257 = arith.mulf %246, %256 : vector<16x128xf32>
    %258 = arith.addf %255, %257 : vector<16x128xf32>
    %259 = math.tanh %258 : vector<16x128xf32>
    %cst_77 = arith.constant 1.000000e+00 : f32
    %260 = vector.broadcast %cst_77 : f32 to vector<16x128xf32>
    %261 = arith.subf %260, %254 : vector<16x128xf32>
    %262 = arith.mulf %261, %259 : vector<16x128xf32>
    %263 = arith.mulf %254, %222 : vector<16x128xf32>
    %264 = arith.addf %262, %263 : vector<16x128xf32>
    %265 = arith.truncf %264 : vector<16x128xf32> to vector<16x128xbf16>
    %266 = arith.index_cast %231 : i32 to index
    %c0_78 = arith.constant 0 : index
    %c0_79 = arith.constant 0 : index
    %267 = vector.load %arg7[%266, %c0_78, %c0_79] : memref<8x16x128xbf16, #tpu.memory_space<vmem>>, vector<1x16x128xbf16>
    %268 = vector.shape_cast %267 : vector<1x16x128xbf16> to vector<16x128xbf16>
    %269 = vector.shape_cast %265 : vector<16x128xbf16> to vector<1x16x128xbf16>
    tpu.vector_store %arg7[%266, %c0_78, %c0_79], %269 {strides = array<i32>} : memref<8x16x128xbf16, #tpu.memory_space<vmem>>, vector<1x16x128xbf16>,
    %c6_i32 = arith.constant 6 : i32
    %c2_i32_80 = arith.constant 2 : i32
    %270 = arith.muli %c2_i32_80, %c6_i32 : i32
    %c7_i32_81 = arith.constant 7 : i32
    %271 = arith.subi %c7_i32_81, %270 : i32
    %272 = arith.muli %arg0, %271 : i32
    %273 = arith.addi %c6_i32, %272 : i32
    %274 = arith.index_cast %273 : i32 to index
    %c0_82 = arith.constant 0 : index
    %c0_83 = arith.constant 0 : index
    %275 = vector.load %arg9[%274, %c0_82, %c0_83] : memref<8x16x384xf32, #tpu.memory_space<vmem>>, vector<1x16x384xf32>
    %276 = vector.shape_cast %275 : vector<1x16x384xf32> to vector<16x384xf32>
    %277 = arith.truncf %264 : vector<16x128xf32> to vector<16x128xbf16>
    %cst_84 = arith.constant dense<0.000000e+00> : vector<16x384xf32>
    %278 = tpu.matmul %277, %14, %cst_84 {dimension_numbers = #tpu.dot_dimension_numbers<[1], [0], [0], [1], [0, 0, 1, 1], [], []>} : vector<16x128xbf16>, vector<128x384xbf16>, vector<16x384xf32> -> vector<16x384xf32>
    %279 = vector.broadcast %16 : vector<1x384xf32> to vector<16x384xf32>
    %280 = arith.addf %278, %279 : vector<16x384xf32>
    %281 = vector.extract_strided_slice %276 {offsets = [0, 0], sizes = [16, 128], strides = [1, 1]} : vector<16x384xf32> to vector<16x128xf32>
    %282 = vector.extract_strided_slice %280 {offsets = [0, 0], sizes = [16, 128], strides = [1, 1]} : vector<16x384xf32> to vector<16x128xf32>
    %283 = arith.addf %281, %282 : vector<16x128xf32>
    %284 = arith.negf %283 : vector<16x128xf32>
    %285 = math.exp %284 : vector<16x128xf32>
    %cst_85 = arith.constant 1.000000e+00 : f32
    %286 = vector.broadcast %cst_85 : f32 to vector<16x128xf32>
    %287 = arith.addf %286, %285 : vector<16x128xf32>
    %288 = arith.divf %286, %287 : vector<16x128xf32>
    %289 = vector.extract_strided_slice %276 {offsets = [0, 128], sizes = [16, 128], strides = [1, 1]} : vector<16x384xf32> to vector<16x128xf32>
    %290 = vector.extract_strided_slice %280 {offsets = [0, 128], sizes = [16, 128], strides = [1, 1]} : vector<16x384xf32> to vector<16x128xf32>
    %291 = arith.addf %289, %290 : vector<16x128xf32>
    %292 = arith.negf %291 : vector<16x128xf32>
    %293 = math.exp %292 : vector<16x128xf32>
    %cst_86 = arith.constant 1.000000e+00 : f32
    %294 = vector.broadcast %cst_86 : f32 to vector<16x128xf32>
    %295 = arith.addf %294, %293 : vector<16x128xf32>
    %296 = arith.divf %294, %295 : vector<16x128xf32>
    %297 = vector.extract_strided_slice %276 {offsets = [0, 256], sizes = [16, 128], strides = [1, 1]} : vector<16x384xf32> to vector<16x128xf32>
    %298 = vector.extract_strided_slice %280 {offsets = [0, 256], sizes = [16, 128], strides = [1, 1]} : vector<16x384xf32> to vector<16x128xf32>
    %299 = arith.mulf %288, %298 : vector<16x128xf32>
    %300 = arith.addf %297, %299 : vector<16x128xf32>
    %301 = math.tanh %300 : vector<16x128xf32>
    %cst_87 = arith.constant 1.000000e+00 : f32
    %302 = vector.broadcast %cst_87 : f32 to vector<16x128xf32>
    %303 = arith.subf %302, %296 : vector<16x128xf32>
    %304 = arith.mulf %303, %301 : vector<16x128xf32>
    %305 = arith.mulf %296, %264 : vector<16x128xf32>
    %306 = arith.addf %304, %305 : vector<16x128xf32>
    %307 = arith.truncf %306 : vector<16x128xf32> to vector<16x128xbf16>
    %308 = arith.index_cast %273 : i32 to index
    %c0_88 = arith.constant 0 : index
    %c0_89 = arith.constant 0 : index
    %309 = vector.load %arg7[%308, %c0_88, %c0_89] : memref<8x16x128xbf16, #tpu.memory_space<vmem>>, vector<1x16x128xbf16>
    %310 = vector.shape_cast %309 : vector<1x16x128xbf16> to vector<16x128xbf16>
    %311 = vector.shape_cast %307 : vector<16x128xbf16> to vector<1x16x128xbf16>
    tpu.vector_store %arg7[%308, %c0_88, %c0_89], %311 {strides = array<i32>} : memref<8x16x128xbf16, #tpu.memory_space<vmem>>, vector<1x16x128xbf16>,
    %c7_i32_90 = arith.constant 7 : i32
    %c2_i32_91 = arith.constant 2 : i32
    %312 = arith.muli %c2_i32_91, %c7_i32_90 : i32
    %c7_i32_92 = arith.constant 7 : i32
    %313 = arith.subi %c7_i32_92, %312 : i32
    %314 = arith.muli %arg0, %313 : i32
    %315 = arith.addi %c7_i32_90, %314 : i32
    %316 = arith.index_cast %315 : i32 to index
    %c0_93 = arith.constant 0 : index
    %c0_94 = arith.constant 0 : index
    %317 = vector.load %arg9[%316, %c0_93, %c0_94] : memref<8x16x384xf32, #tpu.memory_space<vmem>>, vector<1x16x384xf32>
    %318 = vector.shape_cast %317 : vector<1x16x384xf32> to vector<16x384xf32>
    %319 = arith.truncf %306 : vector<16x128xf32> to vector<16x128xbf16>
    %cst_95 = arith.constant dense<0.000000e+00> : vector<16x384xf32>
    %320 = tpu.matmul %319, %14, %cst_95 {dimension_numbers = #tpu.dot_dimension_numbers<[1], [0], [0], [1], [0, 0, 1, 1], [], []>} : vector<16x128xbf16>, vector<128x384xbf16>, vector<16x384xf32> -> vector<16x384xf32>
    %321 = vector.broadcast %16 : vector<1x384xf32> to vector<16x384xf32>
    %322 = arith.addf %320, %321 : vector<16x384xf32>
    %323 = vector.extract_strided_slice %318 {offsets = [0, 0], sizes = [16, 128], strides = [1, 1]} : vector<16x384xf32> to vector<16x128xf32>
    %324 = vector.extract_strided_slice %322 {offsets = [0, 0], sizes = [16, 128], strides = [1, 1]} : vector<16x384xf32> to vector<16x128xf32>
    %325 = arith.addf %323, %324 : vector<16x128xf32>
    %326 = arith.negf %325 : vector<16x128xf32>
    %327 = math.exp %326 : vector<16x128xf32>
    %cst_96 = arith.constant 1.000000e+00 : f32
    %328 = vector.broadcast %cst_96 : f32 to vector<16x128xf32>
    %329 = arith.addf %328, %327 : vector<16x128xf32>
    %330 = arith.divf %328, %329 : vector<16x128xf32>
    %331 = vector.extract_strided_slice %318 {offsets = [0, 128], sizes = [16, 128], strides = [1, 1]} : vector<16x384xf32> to vector<16x128xf32>
    %332 = vector.extract_strided_slice %322 {offsets = [0, 128], sizes = [16, 128], strides = [1, 1]} : vector<16x384xf32> to vector<16x128xf32>
    %333 = arith.addf %331, %332 : vector<16x128xf32>
    %334 = arith.negf %333 : vector<16x128xf32>
    %335 = math.exp %334 : vector<16x128xf32>
    %cst_97 = arith.constant 1.000000e+00 : f32
    %336 = vector.broadcast %cst_97 : f32 to vector<16x128xf32>
    %337 = arith.addf %336, %335 : vector<16x128xf32>
    %338 = arith.divf %336, %337 : vector<16x128xf32>
    %339 = vector.extract_strided_slice %318 {offsets = [0, 256], sizes = [16, 128], strides = [1, 1]} : vector<16x384xf32> to vector<16x128xf32>
    %340 = vector.extract_strided_slice %322 {offsets = [0, 256], sizes = [16, 128], strides = [1, 1]} : vector<16x384xf32> to vector<16x128xf32>
    %341 = arith.mulf %330, %340 : vector<16x128xf32>
    %342 = arith.addf %339, %341 : vector<16x128xf32>
    %343 = math.tanh %342 : vector<16x128xf32>
    %cst_98 = arith.constant 1.000000e+00 : f32
    %344 = vector.broadcast %cst_98 : f32 to vector<16x128xf32>
    %345 = arith.subf %344, %338 : vector<16x128xf32>
    %346 = arith.mulf %345, %343 : vector<16x128xf32>
    %347 = arith.mulf %338, %306 : vector<16x128xf32>
    %348 = arith.addf %346, %347 : vector<16x128xf32>
    %349 = arith.truncf %348 : vector<16x128xf32> to vector<16x128xbf16>
    %350 = arith.index_cast %315 : i32 to index
    %c0_99 = arith.constant 0 : index
    %c0_100 = arith.constant 0 : index
    %351 = vector.load %arg7[%350, %c0_99, %c0_100] : memref<8x16x128xbf16, #tpu.memory_space<vmem>>, vector<1x16x128xbf16>
    %352 = vector.shape_cast %351 : vector<1x16x128xbf16> to vector<16x128xbf16>
    %353 = vector.shape_cast %349 : vector<16x128xbf16> to vector<1x16x128xbf16>
    tpu.vector_store %arg7[%350, %c0_99, %c0_100], %353 {strides = array<i32>} : memref<8x16x128xbf16, #tpu.memory_space<vmem>>, vector<1x16x128xbf16>,
    %c8_i32 = arith.constant 8 : i32
    %c0_101 = arith.constant 0 : index
    %c0_102 = arith.constant 0 : index
    %354 = vector.load %arg8[%c0_101, %c0_102] : memref<16x128xf32, #tpu.memory_space<vmem>>, vector<16x128xf32>
    tpu.vector_store %arg8[%c0_101, %c0_102], %348 {strides = array<i32>} : memref<16x128xf32, #tpu.memory_space<vmem>>, vector<16x128xf32>,
    return
  }
  func.func @transform_0(%arg0: i32, %arg1: i32) -> (i32, i32, i32) {
    %c2_i32 = arith.constant 2 : i32
    %0 = arith.muli %c2_i32, %arg1 : i32
    %c0_i32 = arith.constant 0 : i32
    %1 = arith.subi %c0_i32, %0 : i32
    %2 = arith.muli %arg0, %1 : i32
    %3 = arith.addi %arg1, %2 : i32
    %c0_i32_0 = arith.constant 0 : i32
    %c0_i32_1 = arith.constant 0 : i32
    %c0_i32_2 = arith.constant 0 : i32
    return %3, %c0_i32_0, %c0_i32_1 : i32, i32, i32
  }
  func.func @transform_1(%arg0: i32, %arg1: i32) -> (i32, i32, i32) {
    %c0_i32 = arith.constant 0 : i32
    %c0_i32_0 = arith.constant 0 : i32
    %c0_i32_1 = arith.constant 0 : i32
    return %arg0, %c0_i32, %c0_i32_0 : i32, i32, i32
  }
  func.func @transform_2(%arg0: i32, %arg1: i32) -> (i32, i32, i32) {
    %c0_i32 = arith.constant 0 : i32
    %c0_i32_0 = arith.constant 0 : i32
    %c0_i32_1 = arith.constant 0 : i32
    return %arg0, %c0_i32, %c0_i32_0 : i32, i32, i32
  }
  func.func @transform_3(%arg0: i32, %arg1: i32) -> (i32, i32, i32) {
    %c0_i32 = arith.constant 0 : i32
    %c0_i32_0 = arith.constant 0 : i32
    %c0_i32_1 = arith.constant 0 : i32
    return %arg0, %c0_i32, %c0_i32_0 : i32, i32, i32
  }
  func.func @transform_4(%arg0: i32, %arg1: i32) -> (i32, i32, i32) {
    %c0_i32 = arith.constant 0 : i32
    %c0_i32_0 = arith.constant 0 : i32
    %c0_i32_1 = arith.constant 0 : i32
    return %arg0, %c0_i32, %c0_i32_0 : i32, i32, i32
  }
  func.func @transform_5(%arg0: i32, %arg1: i32) -> (i32, i32, i32) {
    %c2_i32 = arith.constant 2 : i32
    %0 = arith.muli %c2_i32, %arg1 : i32
    %c0_i32 = arith.constant 0 : i32
    %1 = arith.subi %c0_i32, %0 : i32
    %2 = arith.muli %arg0, %1 : i32
    %3 = arith.addi %arg1, %2 : i32
    %c0_i32_0 = arith.constant 0 : i32
    %c0_i32_1 = arith.constant 0 : i32
    return %3, %c0_i32_0, %arg0 : i32, i32, i32
  }
}

</mosaic_0001>

<llo_original>
// kernel: rnn_forward.2
$region0: #{rnn_forward.2}
  #allocation0 [shape = 'u32[]', space=smem, size = 0x4, offset = 0x4, fixed_abs, tag = 'smem constant byte address 0x4 - core index']
  #allocation1 [shape = 'u32[144,128]{1,0:T(1,128)}', space=vmem, size = 0x12000, scoped, tag = 'internal scratch']
  #allocation2 [shape = 'f32[16,128]{1,0:T(8,128)}', space=vmem, size = 0x2000, scoped, tag = 'scratch operand']
  #allocation3 [shape = 'f32[8,16,384]{2,1,0:T(8,128)}', space=vmem, size = 0x30000, scoped, tag = 'scratch operand']
  %s0 = inlined_call_operand.vmem [shape: bf16[8,16,128], index: 0, kind: input, shape index: {}]
  %s1 = inlined_call_operand.hbm [shape: bf16[2,128,384], index: 1, kind: input, shape index: {}]
  %s2 = inlined_call_operand.hbm [shape: bf16[2,128,384], index: 2, kind: input, shape index: {}]
  %s3 = inlined_call_operand.vmem [shape: f32[2,1,384], index: 3, kind: input, shape index: {}]
  %s4 = inlined_call_operand.hbm [shape: f32[2,1,384], index: 4, kind: input, shape index: {}]
  %s5 = inlined_call_operand.vmem [shape: bf16[8,16,256], index: 5, kind: output, shape index: {}]
  %s6 = sld [smem:[#allocation0]]
  $region106: #{rnn_forward.2} parent=0
    _
  %s8 = ssub.s32 1, %s6
  %s9 = scalar_select 0, %s8, %s6
  $region1: #{rnn_forward.2} parent=0
    #allocation4 [shape = 'u8[196608]{0}', space=vmem, size = 0x30000, scoped, tag = 'input window, operand 1']
    #allocation5 [shape = 's32[2]{0}', space=sflag, size = 0x8, scoped, tag = 'scoped memory for rnn_forward.2']
    #allocation6 [shape = 'u8[196608]{0}', space=vmem, size = 0x30000, scoped, tag = 'input window, operand 2']
    #allocation7 [shape = 's32[2]{0}', space=sflag, size = 0x8, scoped, tag = 'scoped memory for rnn_forward.2']
    #allocation8 [shape = 'u8[3072]{0}', space=vmem, size = 0xc00, scoped, tag = 'input window, operand 4']
    #allocation9 [shape = 'u8[65536]{0}', space=vmem, size = 0x10000, scoped, tag = 'output window, operand 0']
    %10 = vsyncpa [#allocation5], 0
    %s11 = scalar_lea.sflag [#allocation5], 1
    %12 = vsyncpa %s11, 0
    %13 = vsyncpa [#allocation7], 0
    %s14 = scalar_lea.sflag [#allocation7], 1
    %15 = vsyncpa %s14, 0
    loop: start=0, step=1, limit=4
    $region2: #{rnn_forward.2} parent=1 // loop_pre_header
      _
    $region3: #{rnn_forward.2} parent=1 // loop_header
      %s17 = sphi 0, %s21
      %p18 = scmp.ge.s32.totalorder %s17, 4
      %s24 = sphi 0, %s36
      %s25 = sphi 0, %s32
      %s26 = sphi 0, %s24
      %s27 = sphi 0, %s25
      %s28 = sphi 0, %s26
      %s29 = sphi 0, %s27
      %s47 = sphi 0, %s49
      %s50 = sphi 0, %s47
      %s51 = sphi 0, %s50
      %s67 = sphi 0, %s51
      %s73 = sphi 0, %s75
      %s76 = sphi 0, %s73
      %s77 = sphi 0, %s76
      %s93 = sphi 0, %s77
      %s99 = sphi 0, %s101
      %s102 = sphi 0, %s99
      %s103 = sphi 0, %s102
      %s119 = sphi 0, %s103
      %s125 = sphi 0, %s127
      %s128 = sphi 0, %s125
      %s129 = sphi 0, %s128
      %s145 = sphi 0, %s129
      %s151 = sphi 0, %s153
      %s154 = sphi 0, %s151
      %s155 = sphi 0, %s154
      %s171 = sphi 0, %s155
      %s187 = sphi 0, %s189
      %s190 = sphi 0, %s187
      %s191 = sphi 0, %s190
      %s207 = sphi 0, %s191
    $region4: #{rnn_forward.2} parent=1 // loop_header_branch
      %20 = sbr.rel (%p18) target = $region8
    $region5: #{rnn_forward.2} parent=1 // loop_body
      %s22 = ssub.s32 %s17, 1
      %s23 = ssub.s32 %s17, 2
      %s30 = sadd.s32 1, %s25
      %p31 = scmp.ge.s32.totalorder %s30, 1
      %s32 = scalar_select %p31, 0, %s30
      %s33 = sadd.s32 1, %s24
      %s34 = scalar_select %p31, %s33, %s24
      %p35 = scmp.ge.s32.totalorder %s34, 2
      %s36 = scalar_select %p35, 0, %s34
      %s37 = smul.u32 %s25, 2
      %s38 = ssub.s32 0, %s37
      %s39 = smul.u32 %s24, %s38
      %s40 = sadd.s32 %s25, %s39
      %s41 = smul.u32 %s32, 2
      %s42 = ssub.s32 0, %s41
      %s43 = smul.u32 %s36, %s42
      %s44 = sadd.s32 %s32, %s43
      %s45 = ssub.s32 %s40, %s44
      %p46 = scmp.eq.s32.totalorder %s45, 0
      %s48 = sadd.s32 %s47, 1
      %s49 = scalar_select %p46, %s47, %s48
      %p52 = pneg %p46
      %p53 = scmp.eq.s32.totalorder %s17, 1
      %p54 = por %p52, %p53
      %p55 = scmp.ne.s32.totalorder %s47, %s50
      %p56 = scmp.eq.s32.totalorder %s17, 0
      %p57 = por %p55, %p56
      %p58 = scmp.ne.s32.totalorder %s47, %s50
      %p59 = scmp.eq.s32.totalorder %s22, 1
      %p60 = por %p58, %p59
      %p61 = scmp.ne.s32.totalorder %s50, %s51
      %p62 = scmp.eq.s32.totalorder %s22, 0
      %p63 = por %p61, %p62
      %p64 = scmp.ne.s32.totalorder %s50, %s51
      %p65 = scmp.eq.s32.totalorder %s23, 1
      %p66 = por %p64, %p65
      %p68 = scmp.ne.s32.totalorder %s51, %s67
      %p69 = scmp.eq.s32.totalorder %s23, 0
      %p70 = por %p68, %p69
      %s71 = ssub.s32 %s24, %s36
      %p72 = scmp.eq.s32.totalorder %s71, 0
      %s74 = sadd.s32 %s73, 1
      %s75 = scalar_select %p72, %s73, %s74
      %p78 = pneg %p72
      %p79 = scmp.eq.s32.totalorder %s17, 1
      %p80 = por %p78, %p79
      %p81 = scmp.ne.s32.totalorder %s73, %s76
      %p82 = scmp.eq.s32.totalorder %s17, 0
      %p83 = por %p81, %p82
      %p84 = scmp.ne.s32.totalorder %s73, %s76
      %p85 = scmp.eq.s32.totalorder %s22, 1
      %p86 = por %p84, %p85
      %p87 = scmp.ne.s32.totalorder %s76, %s77
      %p88 = scmp.eq.s32.totalorder %s22, 0
      %p89 = por %p87, %p88
      %p90 = scmp.ne.s32.totalorder %s76, %s77
      %p91 = scmp.eq.s32.totalorder %s23, 1
      %p92 = por %p90, %p91
      %p94 = scmp.ne.s32.totalorder %s77, %s93
      %p95 = scmp.eq.s32.totalorder %s23, 0
      %p96 = por %p94, %p95
      %s97 = ssub.s32 %s24, %s36
      %p98 = scmp.eq.s32.totalorder %s97, 0
      %s100 = sadd.s32 %s99, 1
      %s101 = scalar_select %p98, %s99, %s100
      %p104 = pneg %p98
      %p105 = scmp.eq.s32.totalorder %s17, 1
      %p106 = por %p104, %p105
      %p107 = scmp.ne.s32.totalorder %s99, %s102
      %p108 = scmp.eq.s32.totalorder %s17, 0
      %p109 = por %p107, %p108
      %p110 = scmp.ne.s32.totalorder %s99, %s102
      %p111 = scmp.eq.s32.totalorder %s22, 1
      %p112 = por %p110, %p111
      %p113 = scmp.ne.s32.totalorder %s102, %s103
      %p114 = scmp.eq.s32.totalorder %s22, 0
      %p115 = por %p113, %p114
      %p116 = scmp.ne.s32.totalorder %s102, %s103
      %p117 = scmp.eq.s32.totalorder %s23, 1
      %p118 = por %p116, %p117
      %p120 = scmp.ne.s32.totalorder %s103, %s119
      %p121 = scmp.eq.s32.totalorder %s23, 0
      %p122 = por %p120, %p121
      %s123 = ssub.s32 %s24, %s36
      %p124 = scmp.eq.s32.totalorder %s123, 0
      %s126 = sadd.s32 %s125, 1
      %s127 = scalar_select %p124, %s125, %s126
      %p130 = pneg %p124
      %p131 = scmp.eq.s32.totalorder %s17, 1
      %p132 = por %p130, %p131
      %p133 = scmp.ne.s32.totalorder %s125, %s128
      %p134 = scmp.eq.s32.totalorder %s17, 0
      %p135 = por %p133, %p134
      %p136 = scmp.ne.s32.totalorder %s125, %s128
      %p137 = scmp.eq.s32.totalorder %s22, 1
      %p138 = por %p136, %p137
      %p139 = scmp.ne.s32.totalorder %s128, %s129
      %p140 = scmp.eq.s32.totalorder %s22, 0
      %p141 = por %p139, %p140
      %p142 = scmp.ne.s32.totalorder %s128, %s129
      %p143 = scmp.eq.s32.totalorder %s23, 1
      %p144 = por %p142, %p143
      %p146 = scmp.ne.s32.totalorder %s129, %s145
      %p147 = scmp.eq.s32.totalorder %s23, 0
      %p148 = por %p146, %p147
      %s149 = ssub.s32 %s24, %s36
      %p150 = scmp.eq.s32.totalorder %s149, 0
      %s152 = sadd.s32 %s151, 1
      %s153 = scalar_select %p150, %s151, %s152
      %p156 = pneg %p150
      %p157 = scmp.eq.s32.totalorder %s17, 1
      %p158 = por %p156, %p157
      %p159 = scmp.ne.s32.totalorder %s151, %s154
      %p160 = scmp.eq.s32.totalorder %s17, 0
      %p161 = por %p159, %p160
      %p162 = scmp.ne.s32.totalorder %s151, %s154
      %p163 = scmp.eq.s32.totalorder %s22, 1
      %p164 = por %p162, %p163
      %p165 = scmp.ne.s32.totalorder %s154, %s155
      %p166 = scmp.eq.s32.totalorder %s22, 0
      %p167 = por %p165, %p166
      %p168 = scmp.ne.s32.totalorder %s154, %s155
      %p169 = scmp.eq.s32.totalorder %s23, 1
      %p170 = por %p168, %p169
      %p172 = scmp.ne.s32.totalorder %s155, %s171
      %p173 = scmp.eq.s32.totalorder %s23, 0
      %p174 = por %p172, %p173
      %s175 = smul.u32 %s25, 2
      %s176 = ssub.s32 0, %s175
      %s177 = smul.u32 %s24, %s176
      %s178 = sadd.s32 %s25, %s177
      %s179 = smul.u32 %s32, 2
      %s180 = ssub.s32 0, %s179
      %s181 = smul.u32 %s36, %s180
      %s182 = sadd.s32 %s32, %s181
      %s183 = ssub.s32 %s178, %s182
      %s184 = ssub.s32 %s24, %s36
      %s185 = sor.u32 %s183, %s184
      %p186 = scmp.eq.s32.totalorder %s185, 0
      %s188 = sadd.s32 %s187, 1
      %s189 = scalar_select %p186, %s187, %s188
      %p192 = pneg %p186
      %p193 = scmp.eq.s32.totalorder %s17, 1
      %p194 = por %p192, %p193
      %p195 = scmp.ne.s32.totalorder %s187, %s190
      %p196 = scmp.eq.s32.totalorder %s17, 0
      %p197 = por %p195, %p196
      %p198 = scmp.ne.s32.totalorder %s187, %s190
      %p199 = scmp.eq.s32.totalorder %s22, 1
      %p200 = por %p198, %p199
      %p201 = scmp.ne.s32.totalorder %s190, %s191
      %p202 = scmp.eq.s32.totalorder %s22, 0
      %p203 = por %p201, %p202
      %p204 = scmp.ne.s32.totalorder %s190, %s191
      %p205 = scmp.eq.s32.totalorder %s23, 1
      %p206 = por %p204, %p205
      %p208 = scmp.ne.s32.totalorder %s191, %s207
      %p209 = scmp.eq.s32.totalorder %s23, 0
      %p210 = por %p208, %p209
      %p211 = scmp.le.s32.totalorder 1, %s17
      %p212 = scmp.lt.s32.totalorder %s17, 3
      %p213 = pnand %p211, %p212
      %p214 = pneg %p213
      // Predicated region
      $region9: #{rnn_forward.2} parent=5 // pred_check
        _
      $region10: #{rnn_forward.2} parent=5 // pred_check_branch
        %216 = sbr.rel (%p213) target = $region12
      $region11: #{rnn_forward.2} parent=5 // pred_region
        %s217 = ssub.s32 %s17, 1
      $region12: #{rnn_forward.2} parent=5 // pred_fallthru
        _
      %p218 = scmp.lt.s32.totalorder %s17, 2
      // Predicated region
      $region13: #{rnn_forward.2} parent=5 // pred_check
        %p219 = pneg %p218
      $region14: #{rnn_forward.2} parent=5 // pred_check_branch
        %221 = sbr.rel (%p219) target = $region16
      $region15: #{rnn_forward.2} parent=5 // pred_region
        // Predicated region
        $region17: #{rnn_forward.2} parent=15 // pred_check
          %p222 = pneg %p57
        $region18: #{rnn_forward.2} parent=15 // pred_check_branch
          %224 = sbr.rel (%p222) target = $region20
        $region19: #{rnn_forward.2} parent=15 // pred_region
          %s225 = smul.u32 %s25, 2
          %s226 = ssub.s32 0, %s225
          %s227 = smul.u32 %s24, %s226
          %s228 = sadd.s32 %s25, %s227
          %s229 = smul.u32 8, %s228
          %p230 = scmp.lt.s32.totalorder %s229, 7
          %s231 = scalar_select %p230, %s229, 7
          %s232 = smul.addr %s231, 2
          %s233 = smul.addr %s232, 4
          %s234 = scalar_lea.vmem %s0, %s233
          %s235 = smul.u32 %s25, 2
          %s236 = ssub.s32 0, %s235
          %s237 = smul.u32 %s24, %s236
          %s238 = sadd.s32 %s25, %s237
          %s239 = smul.u32 8, %s238
        $region20: #{rnn_forward.2} parent=15 // pred_fallthru
          _
        // Predicated region
        $region21: #{rnn_forward.2} parent=15 // pred_check
          %p240 = pneg %p83
        $region22: #{rnn_forward.2} parent=15 // pred_check_branch
          %242 = sbr.rel (%p240) target = $region24
        $region23: #{rnn_forward.2} parent=15 // pred_region
          %s243 = sand.u32 %s73, 1
          %s244 = scalar_lea.sflag [#allocation5], %s243
          %s245 = sand.u32 %s73, 1
          %s246 = smul.addr %s245, 192
          %s247 = scalar_lea.vmem [#allocation4], %s246
          %s249 = ssub.s32 3072, 3072
          %250 = vsyncadd %s244, %s249
          %s251 = smul.addr %s24, 48
          %s252 = smul.addr %s251, 64
          %s253 = scalar_lea.hbm %s1, %s252
          %s254 = sshll.u32 %s247, 4
          %s255 = int_to_ptr.vmem [resolvable:$true] %s254
          %260 = dma.hbm_to_vmem [thread:$0]  %s253, 3072, %s255, %s244, 192, 192, 12
        $region24: #{rnn_forward.2} parent=15 // pred_fallthru
          _
        // Predicated region
        $region25: #{rnn_forward.2} parent=15 // pred_check
          %p261 = pneg %p109
        $region26: #{rnn_forward.2} parent=15 // pred_check_branch
          %263 = sbr.rel (%p261) target = $region28
        $region27: #{rnn_forward.2} parent=15 // pred_region
          %s264 = sand.u32 %s17, 1
          %s265 = scalar_lea.sflag [#allocation7], %s264
          %s266 = sand.u32 %s99, 1
          %s267 = smul.addr %s266, 192
          %s268 = scalar_lea.vmem [#allocation6], %s267
          %s270 = ssub.s32 3072, 3072
          %271 = vsyncadd %s265, %s270
          %s272 = smul.addr %s24, 48
          %s273 = smul.addr %s272, 64
          %s274 = scalar_lea.hbm %s2, %s273
          %s275 = sshll.u32 %s268, 4
          %s276 = int_to_ptr.vmem [resolvable:$true] %s275
          %281 = dma.hbm_to_vmem [thread:$0]  %s274, 3072, %s276, %s265, 192, 192, 12
        $region28: #{rnn_forward.2} parent=15 // pred_fallthru
          _
        // Predicated region
        $region29: #{rnn_forward.2} parent=15 // pred_check
          %p282 = pneg %p135
        $region30: #{rnn_forward.2} parent=15 // pred_check_branch
          %284 = sbr.rel (%p282) target = $region32
        $region31: #{rnn_forward.2} parent=15 // pred_region
          %p285 = scmp.lt.s32.totalorder %s24, 1
          %s286 = scalar_select %p285, %s24, 1
          %s287 = smul.addr %s286, 3
          %s288 = scalar_lea.vmem %s3, %s287
        $region32: #{rnn_forward.2} parent=15 // pred_fallthru
          _
        // Predicated region
        $region33: #{rnn_forward.2} parent=15 // pred_check
          %p289 = pneg %p161
        $region34: #{rnn_forward.2} parent=15 // pred_check_branch
          %291 = sbr.rel (%p289) target = $region36
        $region35: #{rnn_forward.2} parent=15 // pred_region
          %s292 = sand.u32 %s17, 1
          %s293 = scalar_lea.sflag [#allocation7], %s292
          %s294 = sand.u32 %s151, 1
          %s295 = smul.addr %s294, 3
          %s296 = scalar_lea.vmem [#allocation8], %s295
          %s298 = ssub.s32 48, 48
          %299 = vsyncadd %s293, %s298
          %s300 = smul.addr %s24, 3
          %s301 = smul.addr %s300, 16
          %s302 = scalar_lea.hbm %s4, %s301
          %s304 = sshll.u32 %s296, 4
          %s305 = int_to_ptr.vmem [resolvable:$true] %s304
          %307 = dma.hbm_to_vmem [thread:$0]  %s302, 48, %s305, %s293
        $region36: #{rnn_forward.2} parent=15 // pred_fallthru
          _
      $region16: #{rnn_forward.2} parent=5 // pred_fallthru
        _
      %p308 = scmp.le.s32.totalorder 1, %s17
      %p309 = scmp.lt.s32.totalorder %s17, 3
      %p310 = pnand %p308, %p309
      %p311 = pneg %p310
      // Predicated region
      $region37: #{rnn_forward.2} parent=5 // pred_check
        _
      $region38: #{rnn_forward.2} parent=5 // pred_check_branch
        %313 = sbr.rel (%p310) target = $region40
      $region39: #{rnn_forward.2} parent=5 // pred_region
        %s314 = ssub.s32 %s17, 1
        %s315 = sand.u32 %s76, 1
        %s316 = scalar_lea.sflag [#allocation5], %s315
        %s317 = sand.u32 %s76, 1
        %s318 = smul.addr %s317, 192
        %s319 = scalar_lea.vmem [#allocation4], %s318
        // Predicated region
        $region41: #{rnn_forward.2} parent=39 // pred_check
          %p320 = pneg %p89
        $region42: #{rnn_forward.2} parent=39 // pred_check_branch
          %322 = sbr.rel (%p320) target = $region44
        $region43: #{rnn_forward.2} parent=39 // pred_region
          %323 = dma.done %s316, 3072
        $region44: #{rnn_forward.2} parent=39 // pred_fallthru
          _
        %s324 = sand.u32 %s22, 1
        %s325 = scalar_lea.sflag [#allocation7], %s324
        %s326 = sand.u32 %s102, 1
        %s327 = smul.addr %s326, 192
        %s328 = scalar_lea.vmem [#allocation6], %s327
        // Predicated region
        $region45: #{rnn_forward.2} parent=39 // pred_check
          %p329 = pneg %p115
        $region46: #{rnn_forward.2} parent=39 // pred_check_branch
          %331 = sbr.rel (%p329) target = $region48
        $region47: #{rnn_forward.2} parent=39 // pred_region
          %332 = dma.done %s325, 3072
        $region48: #{rnn_forward.2} parent=39 // pred_fallthru
          _
        %s333 = sand.u32 %s22, 1
        %s334 = scalar_lea.sflag [#allocation7], %s333
        %s335 = sand.u32 %s154, 1
        %s336 = smul.addr %s335, 3
        %s337 = scalar_lea.vmem [#allocation8], %s336
        // Predicated region
        $region49: #{rnn_forward.2} parent=39 // pred_check
          %p338 = pneg %p167
        $region50: #{rnn_forward.2} parent=39 // pred_check_branch
          %340 = sbr.rel (%p338) target = $region52
        $region51: #{rnn_forward.2} parent=39 // pred_region
          %341 = dma.done %s334, 48
        $region52: #{rnn_forward.2} parent=39 // pred_fallthru
          _
        %s342 = smul.u32 %s27, 2
        %s343 = ssub.s32 0, %s342
        %s344 = smul.u32 %s26, %s343
        %s345 = sadd.s32 %s27, %s344
        %s346 = smul.u32 8, %s345
        %p347 = scmp.lt.s32.totalorder %s346, 7
        %s348 = scalar_select %p347, %s346, 7
        %s349 = smul.addr %s348, 2
        %s350 = smul.addr %s349, 4
        %s351 = scalar_lea.vmem %s0, %s350
        %p352 = pneg %p63
        %p353 = pneg %p60
        %s354 = sand.u32 %s76, 1
        %s355 = scalar_lea.sflag [#allocation5], %s354
        %s356 = sand.u32 %s76, 1
        %s357 = smul.addr %s356, 192
        %s358 = scalar_lea.vmem [#allocation4], %s357
        %p359 = pneg %p89
        %p360 = pneg %p86
        %s361 = sand.u32 %s22, 1
        %s362 = scalar_lea.sflag [#allocation7], %s361
        %s363 = sand.u32 %s102, 1
        %s364 = smul.addr %s363, 192
        %s365 = scalar_lea.vmem [#allocation6], %s364
        %p366 = pneg %p115
        %p367 = pneg %p112
        %p368 = scmp.lt.s32.totalorder %s26, 1
        %s369 = scalar_select %p368, %s26, 1
        %s370 = smul.addr %s369, 3
        %s371 = scalar_lea.vmem %s3, %s370
        %p372 = pneg %p141
        %p373 = pneg %p138
        %s374 = sand.u32 %s22, 1
        %s375 = scalar_lea.sflag [#allocation7], %s374
        %s376 = sand.u32 %s154, 1
        %s377 = smul.addr %s376, 3
        %s378 = scalar_lea.vmem [#allocation8], %s377
        %p379 = pneg %p167
        %p380 = pneg %p164
        %p381 = pneg %p203
        %p382 = pneg %p200
        %s383 = sand.u32 %s190, 1
        %s384 = sand.u32 %s190, 1
        %s385 = smul.addr %s384, 64
        %s386 = scalar_lea.vmem [#allocation9], %s385
        %s387 = smul.u32 %s27, 2
        %s388 = ssub.s32 0, %s387
        %s389 = smul.u32 %s26, %s388
        %s390 = sadd.s32 %s27, %s389
        %s391 = smul.u32 8, %s390
        %p392 = scmp.lt.s32.totalorder %s391, 7
        %s393 = scalar_select %p392, %s391, 7
        %s394 = smul.addr %s393, 2
        %s395 = smul.addr %s394, 4
        %s396 = scalar_lea.vmem %s0, %s395
        %s397 = smul.u32 %s27, 2
        %s398 = ssub.s32 0, %s397
        %s399 = smul.u32 %s26, %s398
        %s400 = sadd.s32 %s27, %s399
        %s401 = smul.u32 8, %s400
        %p402 = scmp.lt.s32.totalorder %s26, 1
        %s403 = scalar_select %p402, %s26, 1
        %s404 = smul.addr %s403, 3
        %s405 = scalar_lea.vmem %s3, %s404
        %s406 = smul.u32 %s27, 2
        %s407 = ssub.s32 0, %s406
        %s408 = smul.u32 %s26, %s407
        %s409 = sadd.s32 %s27, %s408
        %s410 = smul.u32 8, %s409
        %p412 = scmp.eq.s32.totalorder %s27, 0
        // Predicated region
        $region53: #{rnn_forward.2} parent=39 // pred_check
          %p413 = pneg %p412
        $region54: #{rnn_forward.2} parent=39 // pred_check_branch
          %415 = sbr.rel (%p413) target = $region56
        $region55: #{rnn_forward.2} parent=39 // pred_region
          %416 = vst [vmem:[#allocation2] sm:$0xff] 0.0
          %417 = vst [vmem:[#allocation2 + $0x8] sm:$0xff] 0.0
        $region56: #{rnn_forward.2} parent=39 // pred_fallthru
          _
        %v418 = vld [vmem:[%s396] sm:$0xf]
        %v419 = vld [vmem:[%s396 + $0x4] sm:$0xf]
        %v420 = vld [vmem:[%s396 + $0x8] sm:$0xf]
        %v421 = vld [vmem:[%s396 + $0xc] sm:$0xf]
        %v422 = vld [vmem:[%s396 + $0x10] sm:$0xf]
        %v423 = vld [vmem:[%s396 + $0x14] sm:$0xf]
        %v424 = vld [vmem:[%s396 + $0x18] sm:$0xf]
        %v425 = vld [vmem:[%s396 + $0x1c] sm:$0xf]
        %v426 = vld [vmem:[%s396 + $0x20] sm:$0xf]
        %v427 = vld [vmem:[%s396 + $0x24] sm:$0xf]
        %v428 = vld [vmem:[%s396 + $0x28] sm:$0xf]
        %v429 = vld [vmem:[%s396 + $0x2c] sm:$0xf]
        %v430 = vld [vmem:[%s396 + $0x30] sm:$0xf]
        %v431 = vld [vmem:[%s396 + $0x34] sm:$0xf]
        %v432 = vld [vmem:[%s396 + $0x38] sm:$0xf]
        %v433 = vld [vmem:[%s396 + $0x3c] sm:$0xf]
        %v434 = vld [vmem:[%s319] sm:$0xff]
        %v435 = vld [vmem:[%s319 + $0x8] sm:$0xf]
        %v436 = vld [vmem:[%s319 + $0xc] sm:$0xff]
        %v437 = vld [vmem:[%s319 + $0x14] sm:$0xf]
        %v438 = vld [vmem:[%s319 + $0x18] sm:$0xff]
        %v439 = vld [vmem:[%s319 + $0x20] sm:$0xf]
        %v440 = vld [vmem:[%s319 + $0x24] sm:$0xff]
        %v441 = vld [vmem:[%s319 + $0x2c] sm:$0xf]
        %v442 = vld [vmem:[%s319 + $0x30] sm:$0xff]
        %v443 = vld [vmem:[%s319 + $0x38] sm:$0xf]
        %v444 = vld [vmem:[%s319 + $0x3c] sm:$0xff]
        %v445 = vld [vmem:[%s319 + $0x44] sm:$0xf]
        %v446 = vld [vmem:[%s319 + $0x48] sm:$0xff]
        %v447 = vld [vmem:[%s319 + $0x50] sm:$0xf]
        %v448 = vld [vmem:[%s319 + $0x54] sm:$0xff]
        %v449 = vld [vmem:[%s319 + $0x5c] sm:$0xf]
        %v450 = vld [vmem:[%s319 + $0x60] sm:$0xff]
        %v451 = vld [vmem:[%s319 + $0x68] sm:$0xf]
        %v452 = vld [vmem:[%s319 + $0x6c] sm:$0xff]
        %v453 = vld [vmem:[%s319 + $0x74] sm:$0xf]
        %v454 = vld [vmem:[%s319 + $0x78] sm:$0xff]
        %v455 = vld [vmem:[%s319 + $0x80] sm:$0xf]
        %v456 = vld [vmem:[%s319 + $0x84] sm:$0xff]
        %v457 = vld [vmem:[%s319 + $0x8c] sm:$0xf]
        %v458 = vld [vmem:[%s319 + $0x90] sm:$0xff]
        %v459 = vld [vmem:[%s319 + $0x98] sm:$0xf]
        %v460 = vld [vmem:[%s319 + $0x9c] sm:$0xff]
        %v461 = vld [vmem:[%s319 + $0xa4] sm:$0xf]
        %v462 = vld [vmem:[%s319 + $0xa8] sm:$0xff]
        %v463 = vld [vmem:[%s319 + $0xb0] sm:$0xf]
        %v464 = vld [vmem:[%s319 + $0xb4] sm:$0xff]
        %v465 = vld [vmem:[%s319 + $0xbc] sm:$0xf]
        %v482 = vunpack.c.l.b16 %v418
        %v483 = vunpack.c.l.b16 %v419
        %v484 = vunpack.c.l.b16 %v420
        %v485 = vunpack.c.l.b16 %v421
        %v486 = vunpack.c.l.b16 %v422
        %v487 = vunpack.c.l.b16 %v423
        %v488 = vunpack.c.l.b16 %v424
        %v489 = vunpack.c.l.b16 %v425
        %v490 = vunpack.c.l.b16 %v426
        %v491 = vunpack.c.l.b16 %v427
        %v492 = vunpack.c.l.b16 %v428
        %v493 = vunpack.c.l.b16 %v429
        %v494 = vunpack.c.l.b16 %v430
        %v495 = vunpack.c.l.b16 %v431
        %v496 = vunpack.c.l.b16 %v432
        %v497 = vunpack.c.l.b16 %v433
        %v498 = vpack.c.b16 %v483, %v482
        %v499 = vpack.c.b16 %v485, %v484
        %v500 = vpack.c.b16 %v487, %v486
        %v501 = vpack.c.b16 %v489, %v488
        %v502 = vpack.c.b16 %v491, %v490
        %v503 = vpack.c.b16 %v493, %v492
        %v504 = vpack.c.b16 %v495, %v494
        %v505 = vpack.c.b16 %v497, %v496
        %v546 = vunpack.c.l.b16 %v434
        %v547 = vunpack.c.h.b16 %v434
        %v548 = vunpack.c.l.b16 %v435
        %v549 = vunpack.c.l.b16 %v436
        %v550 = vunpack.c.h.b16 %v436
        %v551 = vunpack.c.l.b16 %v437
        %v552 = vunpack.c.l.b16 %v438
        %v553 = vunpack.c.h.b16 %v438
        %v554 = vunpack.c.l.b16 %v439
        %v555 = vunpack.c.l.b16 %v440
        %v556 = vunpack.c.h.b16 %v440
        %v557 = vunpack.c.l.b16 %v441
        %v558 = vunpack.c.l.b16 %v442
        %v559 = vunpack.c.h.b16 %v442
        %v560 = vunpack.c.l.b16 %v443
        %v561 = vunpack.c.l.b16 %v444
        %v562 = vunpack.c.h.b16 %v444
        %v563 = vunpack.c.l.b16 %v445
        %v564 = vunpack.c.l.b16 %v446
        %v565 = vunpack.c.h.b16 %v446
        %v566 = vunpack.c.l.b16 %v447
        %v567 = vunpack.c.l.b16 %v448
        %v568 = vunpack.c.h.b16 %v448
        %v569 = vunpack.c.l.b16 %v449
        %v570 = vunpack.c.l.b16 %v450
        %v571 = vunpack.c.h.b16 %v450
        %v572 = vunpack.c.l.b16 %v451
        %v573 = vunpack.c.l.b16 %v452
        %v574 = vunpack.c.h.b16 %v452
        %v575 = vunpack.c.l.b16 %v453
        %v576 = vunpack.c.l.b16 %v454
        %v577 = vunpack.c.h.b16 %v454
        %v578 = vunpack.c.l.b16 %v455
        %v579 = vunpack.c.l.b16 %v456
        %v580 = vunpack.c.h.b16 %v456
        %v581 = vunpack.c.l.b16 %v457
        %v582 = vunpack.c.l.b16 %v458
        %v583 = vunpack.c.h.b16 %v458
        %v584 = vunpack.c.l.b16 %v459
        %v585 = vunpack.c.l.b16 %v460
        %v586 = vunpack.c.h.b16 %v460
        %v587 = vunpack.c.l.b16 %v461
        %v588 = vunpack.c.l.b16 %v462
        %v589 = vunpack.c.h.b16 %v462
        %v590 = vunpack.c.l.b16 %v463
        %v591 = vunpack.c.l.b16 %v464
        %v592 = vunpack.c.h.b16 %v464
        %v593 = vunpack.c.l.b16 %v465
        %v594 = vpack.c.b16 %v549, %v546
        %v595 = vpack.c.b16 %v550, %v547
        %v596 = vpack.c.b16 %v551, %v548
        %v597 = vpack.c.b16 %v555, %v552
        %v598 = vpack.c.b16 %v556, %v553
        %v599 = vpack.c.b16 %v557, %v554
        %v600 = vpack.c.b16 %v561, %v558
        %v601 = vpack.c.b16 %v562, %v559
        %v602 = vpack.c.b16 %v563, %v560
        %v603 = vpack.c.b16 %v567, %v564
        %v604 = vpack.c.b16 %v568, %v565
        %v605 = vpack.c.b16 %v569, %v566
        %v606 = vpack.c.b16 %v573, %v570
        %v607 = vpack.c.b16 %v574, %v571
        %v608 = vpack.c.b16 %v575, %v572
        %v609 = vpack.c.b16 %v579, %v576
        %v610 = vpack.c.b16 %v580, %v577
        %v611 = vpack.c.b16 %v581, %v578
        %v612 = vpack.c.b16 %v585, %v582
        %v613 = vpack.c.b16 %v586, %v583
        %v614 = vpack.c.b16 %v587, %v584
        %v615 = vpack.c.b16 %v591, %v588
        %v616 = vpack.c.b16 %v592, %v589
        %v617 = vpack.c.b16 %v593, %v590
        %642 = vmatprep.subr.bf16.mxu0 %v595
        %643 = vmatpush1.bf16.msra.mxu0 %v594
        %644 = vmatprep.subr.bf16.mxu0 %v598
        %645 = vmatpush1.bf16.msra.mxu0 %v597
        %646 = vmatprep.subr.bf16.mxu0 %v601
        %647 = vmatpush1.bf16.msra.mxu0 %v600
        %648 = vmatprep.subr.bf16.mxu0 %v604
        %649 = vmatpush1.bf16.msra.mxu0 %v603
        %650 = vmatprep.subr.bf16.mxu0 %v607
        %651 = vmatpush1.bf16.msra.mxu0 %v606
        %652 = vmatprep.subr.bf16.mxu0 %v610
        %653 = vmatpush1.bf16.msra.mxu0 %v609
        %654 = vmatprep.subr.bf16.mxu0 %v613
        %655 = vmatpush1.bf16.msra.mxu0 %v612
        %656 = vmatprep.subr.bf16.mxu0 %v616
        %657 = vmatpush1.bf16.msra.mxu0 %v615
        %658 = vmatprep.subr.bf16.mxu0 0
        %659 = vmatpush1.bf16.msra.mxu0 0
        %660 = vmatprep.subr.bf16.mxu0 0
        %661 = vmatpush1.bf16.msra.mxu0 0
        %662 = vmatprep.subr.bf16.mxu0 0
        %663 = vmatpush1.bf16.msra.mxu0 0
        %664 = vmatprep.subr.bf16.mxu0 0
        %665 = vmatpush1.bf16.msra.mxu0 0
        %666 = vmatprep.subr.bf16.mxu0 0
        %667 = vmatpush1.bf16.msra.mxu0 0
        %668 = vmatprep.subr.bf16.mxu0 0
        %669 = vmatpush1.bf16.msra.mxu0 0
        %670 = vmatprep.subr.bf16.mxu0 0
        %671 = vmatpush1.bf16.msra.mxu0 0
        %672 = vmatprep.subr.bf16.mxu0 0
        %673 = vmatpush1.bf16.msra.mxu0 0
        %674 = vmatprep.mubr.bf16.mxu0 0
        %675 = vmatmul.mubr.bf16.gmra.mrb[0].mxu0 %v498
        %v676 = vpop.f32.mrb[0].mxu0
        %v677 = vadd.f32 0.0, %v676
        %v678 = vpop.f32.mrb[0].mxu0
        %v679 = vadd.f32 0.0, %v678
        %v680 = vpop.f32.mrb[0].mxu0
        %v681 = vadd.f32 0.0, %v680
        %v682 = vpop.f32.mrb[0].mxu0
        %v683 = vadd.f32 0.0, %v682
        %684 = vmatprep.mubr.bf16.mxu0 0
        %685 = vmatmul.mubr.bf16.gmra.mrb[0].mxu0 %v499
        %v686 = vpop.f32.mrb[0].mxu0
        %v687 = vadd.f32 0.0, %v686
        %v688 = vpop.f32.mrb[0].mxu0
        %v689 = vadd.f32 0.0, %v688
        %v690 = vpop.f32.mrb[0].mxu0
        %v691 = vadd.f32 0.0, %v690
        %v692 = vpop.f32.mrb[0].mxu0
        %v693 = vadd.f32 0.0, %v692
        %694 = vmatprep.mubr.bf16.mxu0 0
        %695 = vmatmul.mubr.bf16.gmra.mrb[0].mxu0 %v500
        %v696 = vpop.f32.mrb[0].mxu0
        %v697 = vadd.f32 0.0, %v696
        %v698 = vpop.f32.mrb[0].mxu0
        %v699 = vadd.f32 0.0, %v698
        %v700 = vpop.f32.mrb[0].mxu0
        %v701 = vadd.f32 0.0, %v700
        %v702 = vpop.f32.mrb[0].mxu0
        %v703 = vadd.f32 0.0, %v702
        %704 = vmatprep.mubr.bf16.mxu0 0
        %705 = vmatmul.mubr.bf16.gmra.mrb[0].mxu0 %v501
        %v706 = vpop.f32.mrb[0].mxu0
        %v707 = vadd.f32 0.0, %v706
        %v708 = vpop.f32.mrb[0].mxu0
        %v709 = vadd.f32 0.0, %v708
        %v710 = vpop.f32.mrb[0].mxu0
        %v711 = vadd.f32 0.0, %v710
        %v712 = vpop.f32.mrb[0].mxu0
        %v713 = vadd.f32 0.0, %v712
        %714 = vmatprep.mubr.bf16.mxu0 0
        %715 = vmatmul.mubr.bf16.gmra.mrb[0].mxu0 %v502
        %v716 = vpop.f32.mrb[0].mxu0
        %v717 = vadd.f32 0.0, %v716
        %v718 = vpop.f32.mrb[0].mxu0
        %v719 = vadd.f32 0.0, %v718
        %v720 = vpop.f32.mrb[0].mxu0
        %v721 = vadd.f32 0.0, %v720
        %v722 = vpop.f32.mrb[0].mxu0
        %v723 = vadd.f32 0.0, %v722
        %724 = vmatprep.mubr.bf16.mxu0 0
        %725 = vmatmul.mubr.bf16.gmra.mrb[0].mxu0 %v503
        %v726 = vpop.f32.mrb[0].mxu0
        %v727 = vadd.f32 0.0, %v726
        %v728 = vpop.f32.mrb[0].mxu0
        %v729 = vadd.f32 0.0, %v728
        %v730 = vpop.f32.mrb[0].mxu0
        %v731 = vadd.f32 0.0, %v730
        %v732 = vpop.f32.mrb[0].mxu0
        %v733 = vadd.f32 0.0, %v732
        %734 = vmatprep.mubr.bf16.mxu0 0
        %735 = vmatmul.mubr.bf16.gmra.mrb[0].mxu0 %v504
        %v736 = vpop.f32.mrb[0].mxu0
        %v737 = vadd.f32 0.0, %v736
        %v738 = vpop.f32.mrb[0].mxu0
        %v739 = vadd.f32 0.0, %v738
        %v740 = vpop.f32.mrb[0].mxu0
        %v741 = vadd.f32 0.0, %v740
        %v742 = vpop.f32.mrb[0].mxu0
        %v743 = vadd.f32 0.0, %v742
        %744 = vmatprep.mubr.bf16.mxu0 0
        %745 = vmatmul.mubr.bf16.gmra.mrb[0].mxu0 %v505
        %v746 = vpop.f32.mrb[0].mxu0
        %v747 = vadd.f32 0.0, %v746
        %v748 = vpop.f32.mrb[0].mxu0
        %v749 = vadd.f32 0.0, %v748
        %v750 = vpop.f32.mrb[0].mxu0
        %v751 = vadd.f32 0.0, %v750
        %v752 = vpop.f32.mrb[0].mxu0
        %v753 = vadd.f32 0.0, %v752
        %754 = vdwg.mxu0
        %755 = vmatprep.subr.bf16.mxu0 0
        %756 = vmatpush1.bf16.msra.mxu0 %v596
        %757 = vmatprep.subr.bf16.mxu0 0
        %758 = vmatpush1.bf16.msra.mxu0 %v599
        %759 = vmatprep.subr.bf16.mxu0 0
        %760 = vmatpush1.bf16.msra.mxu0 %v602
        %761 = vmatprep.subr.bf16.mxu0 0
        %762 = vmatpush1.bf16.msra.mxu0 %v605
        %763 = vmatprep.subr.bf16.mxu0 0
        %764 = vmatpush1.bf16.msra.mxu0 %v608
        %765 = vmatprep.subr.bf16.mxu0 0
        %766 = vmatpush1.bf16.msra.mxu0 %v611
        %767 = vmatprep.subr.bf16.mxu0 0
        %768 = vmatpush1.bf16.msra.mxu0 %v614
        %769 = vmatprep.subr.bf16.mxu0 0
        %770 = vmatpush1.bf16.msra.mxu0 %v617
        %771 = vmatprep.subr.bf16.mxu0 0
        %772 = vmatpush1.bf16.msra.mxu0 0
        %773 = vmatprep.subr.bf16.mxu0 0
        %774 = vmatpush1.bf16.msra.mxu0 0
        %775 = vmatprep.subr.bf16.mxu0 0
        %776 = vmatpush1.bf16.msra.mxu0 0
        %777 = vmatprep.subr.bf16.mxu0 0
        %778 = vmatpush1.bf16.msra.mxu0 0
        %779 = vmatprep.subr.bf16.mxu0 0
        %780 = vmatpush1.bf16.msra.mxu0 0
        %781 = vmatprep.subr.bf16.mxu0 0
        %782 = vmatpush1.bf16.msra.mxu0 0
        %783 = vmatprep.subr.bf16.mxu0 0
        %784 = vmatpush1.bf16.msra.mxu0 0
        %785 = vmatprep.subr.bf16.mxu0 0
        %786 = vmatpush1.bf16.msra.mxu0 0
        %787 = vmatprep.mubr.bf16.mxu0 0
        %788 = vmatmul.mubr.bf16.gmra.mrb[0].mxu0 %v498
        %v789 = vpop.f32.mrb[0].mxu0
        %v790 = vadd.f32 0.0, %v789
        %v791 = vpop.f32.mrb[0].mxu0
        %v792 = vpop.f32.mrb[0].mxu0
        %v793 = vadd.f32 0.0, %v792
        %v794 = vpop.f32.mrb[0].mxu0
        %795 = vmatprep.mubr.bf16.mxu0 0
        %796 = vmatmul.mubr.bf16.gmra.mrb[0].mxu0 %v499
        %v797 = vpop.f32.mrb[0].mxu0
        %v798 = vadd.f32 0.0, %v797
        %v799 = vpop.f32.mrb[0].mxu0
        %v800 = vpop.f32.mrb[0].mxu0
        %v801 = vadd.f32 0.0, %v800
        %v802 = vpop.f32.mrb[0].mxu0
        %803 = vmatprep.mubr.bf16.mxu0 0
        %804 = vmatmul.mubr.bf16.gmra.mrb[0].mxu0 %v500
        %v805 = vpop.f32.mrb[0].mxu0
        %v806 = vadd.f32 0.0, %v805
        %v807 = vpop.f32.mrb[0].mxu0
        %v808 = vpop.f32.mrb[0].mxu0
        %v809 = vadd.f32 0.0, %v808
        %v810 = vpop.f32.mrb[0].mxu0
        %811 = vmatprep.mubr.bf16.mxu0 0
        %812 = vmatmul.mubr.bf16.gmra.mrb[0].mxu0 %v501
        %v813 = vpop.f32.mrb[0].mxu0
        %v814 = vadd.f32 0.0, %v813
        %v815 = vpop.f32.mrb[0].mxu0
        %v816 = vpop.f32.mrb[0].mxu0
        %v817 = vadd.f32 0.0, %v816
        %v818 = vpop.f32.mrb[0].mxu0
        %819 = vmatprep.mubr.bf16.mxu0 0
        %820 = vmatmul.mubr.bf16.gmra.mrb[0].mxu0 %v502
        %v821 = vpop.f32.mrb[0].mxu0
        %v822 = vadd.f32 0.0, %v821
        %v823 = vpop.f32.mrb[0].mxu0
        %v824 = vpop.f32.mrb[0].mxu0
        %v825 = vadd.f32 0.0, %v824
        %v826 = vpop.f32.mrb[0].mxu0
        %827 = vmatprep.mubr.bf16.mxu0 0
        %828 = vmatmul.mubr.bf16.gmra.mrb[0].mxu0 %v503
        %v829 = vpop.f32.mrb[0].mxu0
        %v830 = vadd.f32 0.0, %v829
        %v831 = vpop.f32.mrb[0].mxu0
        %v832 = vpop.f32.mrb[0].mxu0
        %v833 = vadd.f32 0.0, %v832
        %v834 = vpop.f32.mrb[0].mxu0
        %835 = vmatprep.mubr.bf16.mxu0 0
        %836 = vmatmul.mubr.bf16.gmra.mrb[0].mxu0 %v504
        %v837 = vpop.f32.mrb[0].mxu0
        %v838 = vadd.f32 0.0, %v837
        %v839 = vpop.f32.mrb[0].mxu0
        %v840 = vpop.f32.mrb[0].mxu0
        %v841 = vadd.f32 0.0, %v840
        %v842 = vpop.f32.mrb[0].mxu0
        %843 = vmatprep.mubr.bf16.mxu0 0
        %844 = vmatmul.mubr.bf16.gmra.mrb[0].mxu0 %v505
        %v845 = vpop.f32.mrb[0].mxu0
        %v846 = vadd.f32 0.0, %v845
        %v847 = vpop.f32.mrb[0].mxu0
        %v848 = vpop.f32.mrb[0].mxu0
        %v849 = vadd.f32 0.0, %v848
        %v850 = vpop.f32.mrb[0].mxu0
        %851 = vdwg.mxu0
        %v852 = vld [vmem:[%s405] sm:$0x7]
        %v854 = vlaneseq
        %v855 = vshrl.u32 %v854, 7
        %v856 = vsub.s32 0, %v855
        %v857 = vrot.slane %v852, %v856
        %v858 = vlaneseq
        %v859 = vshrl.u32 %v858, 7
        %v860 = vsub.s32 1, %v859
        %v861 = vrot.slane %v852, %v860
        %v862 = vlaneseq
        %v863 = vshrl.u32 %v862, 7
        %v864 = vsub.s32 2, %v863
        %v865 = vrot.slane %v852, %v864
        %v869 = vadd.f32 %v677, %v857
        %v870 = vadd.f32 %v679, %v861
        %v871 = vadd.f32 %v790, %v865
        %v872 = vadd.f32 %v681, %v857
        %v873 = vadd.f32 %v683, %v861
        %v874 = vadd.f32 %v793, %v865
        %v875 = vadd.f32 %v687, %v857
        %v876 = vadd.f32 %v689, %v861
        %v877 = vadd.f32 %v798, %v865
        %v878 = vadd.f32 %v691, %v857
        %v879 = vadd.f32 %v693, %v861
        %v880 = vadd.f32 %v801, %v865
        %v881 = vadd.f32 %v697, %v857
        %v882 = vadd.f32 %v699, %v861
        %v883 = vadd.f32 %v806, %v865
        %v884 = vadd.f32 %v701, %v857
        %v885 = vadd.f32 %v703, %v861
        %v886 = vadd.f32 %v809, %v865
        %v887 = vadd.f32 %v707, %v857
        %v888 = vadd.f32 %v709, %v861
        %v889 = vadd.f32 %v814, %v865
        %v890 = vadd.f32 %v711, %v857
        %v891 = vadd.f32 %v713, %v861
        %v892 = vadd.f32 %v817, %v865
        %v893 = vadd.f32 %v717, %v857
        %v894 = vadd.f32 %v719, %v861
        %v895 = vadd.f32 %v822, %v865
        %v896 = vadd.f32 %v721, %v857
        %v897 = vadd.f32 %v723, %v861
        %v898 = vadd.f32 %v825, %v865
        %v899 = vadd.f32 %v727, %v857
        %v900 = vadd.f32 %v729, %v861
        %v901 = vadd.f32 %v830, %v865
        %v902 = vadd.f32 %v731, %v857
        %v903 = vadd.f32 %v733, %v861
        %v904 = vadd.f32 %v833, %v865
        %v905 = vadd.f32 %v737, %v857
        %v906 = vadd.f32 %v739, %v861
        %v907 = vadd.f32 %v838, %v865
        %v908 = vadd.f32 %v741, %v857
        %v909 = vadd.f32 %v743, %v861
        %v910 = vadd.f32 %v841, %v865
        %v911 = vadd.f32 %v747, %v857
        %v912 = vadd.f32 %v749, %v861
        %v913 = vadd.f32 %v846, %v865
        %v914 = vadd.f32 %v751, %v857
        %v915 = vadd.f32 %v753, %v861
        %v916 = vadd.f32 %v849, %v865
        %917 = vst [vmem:[#allocation3] sm:$0xff] %v869
        %918 = vst [vmem:[#allocation3 + $0x8] sm:$0xff] %v870
        %919 = vst [vmem:[#allocation3 + $0x10] sm:$0xff] %v871
        %920 = vst [vmem:[#allocation3 + $0x18] sm:$0xff] %v872
        %921 = vst [vmem:[#allocation3 + $0x20] sm:$0xff] %v873
        %922 = vst [vmem:[#allocation3 + $0x28] sm:$0xff] %v874
        %923 = vst [vmem:[#allocation3 + $0x30] sm:$0xff] %v875
        %924 = vst [vmem:[#allocation3 + $0x38] sm:$0xff] %v876
        %925 = vst [vmem:[#allocation3 + $0x40] sm:$0xff] %v877
        %926 = vst [vmem:[#allocation3 + $0x48] sm:$0xff] %v878
        %927 = vst [vmem:[#allocation3 + $0x50] sm:$0xff] %v879
        %928 = vst [vmem:[#allocation3 + $0x58] sm:$0xff] %v880
        %929 = vst [vmem:[#allocation3 + $0x60] sm:$0xff] %v881
        %930 = vst [vmem:[#allocation3 + $0x68] sm:$0xff] %v882
        %931 = vst [vmem:[#allocation3 + $0x70] sm:$0xff] %v883
        %932 = vst [vmem:[#allocation3 + $0x78] sm:$0xff] %v884
        %933 = vst [vmem:[#allocation3 + $0x80] sm:$0xff] %v885
        %934 = vst [vmem:[#allocation3 + $0x88] sm:$0xff] %v886
        %935 = vst [vmem:[#allocation3 + $0x90] sm:$0xff] %v887
        %936 = vst [vmem:[#allocation3 + $0x98] sm:$0xff] %v888
        %937 = vst [vmem:[#allocation3 + $0xa0] sm:$0xff] %v889
        %938 = vst [vmem:[#allocation3 + $0xa8] sm:$0xff] %v890
        %939 = vst [vmem:[#allocation3 + $0xb0] sm:$0xff] %v891
        %940 = vst [vmem:[#allocation3 + $0xb8] sm:$0xff] %v892
        %941 = vst [vmem:[#allocation3 + $0xc0] sm:$0xff] %v893
        %942 = vst [vmem:[#allocation3 + $0xc8] sm:$0xff] %v894
        %943 = vst [vmem:[#allocation3 + $0xd0] sm:$0xff] %v895
        %944 = vst [vmem:[#allocation3 + $0xd8] sm:$0xff] %v896
        %945 = vst [vmem:[#allocation3 + $0xe0] sm:$0xff] %v897
        %946 = vst [vmem:[#allocation3 + $0xe8] sm:$0xff] %v898
        %947 = vst [vmem:[#allocation3 + $0xf0] sm:$0xff] %v899
        %948 = vst [vmem:[#allocation3 + $0xf8] sm:$0xff] %v900
        %949 = vst [vmem:[#allocation3 + $0x100] sm:$0xff] %v901
        %950 = vst [vmem:[#allocation3 + $0x108] sm:$0xff] %v902
        %951 = vst [vmem:[#allocation3 + $0x110] sm:$0xff] %v903
        %952 = vst [vmem:[#allocation3 + $0x118] sm:$0xff] %v904
        %953 = vst [vmem:[#allocation3 + $0x120] sm:$0xff] %v905
        %954 = vst [vmem:[#allocation3 + $0x128] sm:$0xff] %v906
        %955 = vst [vmem:[#allocation3 + $0x130] sm:$0xff] %v907
        %956 = vst [vmem:[#allocation3 + $0x138] sm:$0xff] %v908
        %957 = vst [vmem:[#allocation3 + $0x140] sm:$0xff] %v909
        %958 = vst [vmem:[#allocation3 + $0x148] sm:$0xff] %v910
        %959 = vst [vmem:[#allocation3 + $0x150] sm:$0xff] %v911
        %960 = vst [vmem:[#allocation3 + $0x158] sm:$0xff] %v912
        %961 = vst [vmem:[#allocation3 + $0x160] sm:$0xff] %v913
        %962 = vst [vmem:[#allocation3 + $0x168] sm:$0xff] %v914
        %963 = vst [vmem:[#allocation3 + $0x170] sm:$0xff] %v915
        %964 = vst [vmem:[#allocation3 + $0x178] sm:$0xff] %v916
        %v965 = vld [vmem:[%s328] sm:$0xff]
        %v966 = vld [vmem:[%s328 + $0x8] sm:$0xf]
        %v967 = vld [vmem:[%s328 + $0xc] sm:$0xff]
        %v968 = vld [vmem:[%s328 + $0x14] sm:$0xf]
        %v969 = vld [vmem:[%s328 + $0x18] sm:$0xff]
        %v970 = vld [vmem:[%s328 + $0x20] sm:$0xf]
        %v971 = vld [vmem:[%s328 + $0x24] sm:$0xff]
        %v972 = vld [vmem:[%s328 + $0x2c] sm:$0xf]
        %v973 = vld [vmem:[%s328 + $0x30] sm:$0xff]
        %v974 = vld [vmem:[%s328 + $0x38] sm:$0xf]
        %v975 = vld [vmem:[%s328 + $0x3c] sm:$0xff]
        %v976 = vld [vmem:[%s328 + $0x44] sm:$0xf]
        %v977 = vld [vmem:[%s328 + $0x48] sm:$0xff]
        %v978 = vld [vmem:[%s328 + $0x50] sm:$0xf]
        %v979 = vld [vmem:[%s328 + $0x54] sm:$0xff]
        %v980 = vld [vmem:[%s328 + $0x5c] sm:$0xf]
        %v981 = vld [vmem:[%s328 + $0x60] sm:$0xff]
        %v982 = vld [vmem:[%s328 + $0x68] sm:$0xf]
        %v983 = vld [vmem:[%s328 + $0x6c] sm:$0xff]
        %v984 = vld [vmem:[%s328 + $0x74] sm:$0xf]
        %v985 = vld [vmem:[%s328 + $0x78] sm:$0xff]
        %v986 = vld [vmem:[%s328 + $0x80] sm:$0xf]
        %v987 = vld [vmem:[%s328 + $0x84] sm:$0xff]
        %v988 = vld [vmem:[%s328 + $0x8c] sm:$0xf]
        %v989 = vld [vmem:[%s328 + $0x90] sm:$0xff]
        %v990 = vld [vmem:[%s328 + $0x98] sm:$0xf]
        %v991 = vld [vmem:[%s328 + $0x9c] sm:$0xff]
        %v992 = vld [vmem:[%s328 + $0xa4] sm:$0xf]
        %v993 = vld [vmem:[%s328 + $0xa8] sm:$0xff]
        %v994 = vld [vmem:[%s328 + $0xb0] sm:$0xf]
        %v995 = vld [vmem:[%s328 + $0xb4] sm:$0xff]
        %v996 = vld [vmem:[%s328 + $0xbc] sm:$0xf]
        %v997 = vld [vmem:[%s337] sm:$0x7]
        %v998 = vld [vmem:[#allocation2] sm:$0xff]
        %v999 = vld [vmem:[#allocation2 + $0x8] sm:$0xff]
        %s1000 = smul.u32 %s26, 7
        %s1001 = smul.u32 %s1000, 6
        %s1002 = smul.addr %s1001, 8
        %s1003 = scalar_lea.vmem [#allocation3], %s1002
        %v1004 = vld [vmem:[%s1003] sm:$0xff]
        %v1005 = vld [vmem:[%s1003 + $0x8] sm:$0xff]
        %v1006 = vld [vmem:[%s1003 + $0x10] sm:$0xff]
        %v1007 = vld [vmem:[%s1003 + $0x18] sm:$0xff]
        %v1008 = vld [vmem:[%s1003 + $0x20] sm:$0xff]
        %v1009 = vld [vmem:[%s1003 + $0x28] sm:$0xff]
        %v1010 = vpack.c.bf16 %v999, %v998
        %v1012 = vlaneseq
        %v1013 = vshrl.u32 %v1012, 7
        %v1014 = vsub.s32 0, %v1013
        %v1015 = vrot.slane %v997, %v1014
        %v1016 = vlaneseq
        %v1017 = vshrl.u32 %v1016, 7
        %v1018 = vsub.s32 1, %v1017
        %v1019 = vrot.slane %v997, %v1018
        %v1020 = vlaneseq
        %v1021 = vshrl.u32 %v1020, 7
        %v1022 = vsub.s32 2, %v1021
        %v1023 = vrot.slane %v997, %v1022
        %v1059 = vunpack.c.l.b16 %v965
        %v1060 = vunpack.c.h.b16 %v965
        %v1061 = vunpack.c.l.b16 %v966
        %v1062 = vunpack.c.l.b16 %v967
        %v1063 = vunpack.c.h.b16 %v967
        %v1064 = vunpack.c.l.b16 %v968
        %v1065 = vunpack.c.l.b16 %v969
        %v1066 = vunpack.c.h.b16 %v969
        %v1067 = vunpack.c.l.b16 %v970
        %v1068 = vunpack.c.l.b16 %v971
        %v1069 = vunpack.c.h.b16 %v971
        %v1070 = vunpack.c.l.b16 %v972
        %v1071 = vunpack.c.l.b16 %v973
        %v1072 = vunpack.c.h.b16 %v973
        %v1073 = vunpack.c.l.b16 %v974
        %v1074 = vunpack.c.l.b16 %v975
        %v1075 = vunpack.c.h.b16 %v975
        %v1076 = vunpack.c.l.b16 %v976
        %v1077 = vunpack.c.l.b16 %v977
        %v1078 = vunpack.c.h.b16 %v977
        %v1079 = vunpack.c.l.b16 %v978
        %v1080 = vunpack.c.l.b16 %v979
        %v1081 = vunpack.c.h.b16 %v979
        %v1082 = vunpack.c.l.b16 %v980
        %v1083 = vunpack.c.l.b16 %v981
        %v1084 = vunpack.c.h.b16 %v981
        %v1085 = vunpack.c.l.b16 %v982
        %v1086 = vunpack.c.l.b16 %v983
        %v1087 = vunpack.c.h.b16 %v983
        %v1088 = vunpack.c.l.b16 %v984
        %v1089 = vunpack.c.l.b16 %v985
        %v1090 = vunpack.c.h.b16 %v985
        %v1091 = vunpack.c.l.b16 %v986
        %v1092 = vunpack.c.l.b16 %v987
        %v1093 = vunpack.c.h.b16 %v987
        %v1094 = vunpack.c.l.b16 %v988
        %v1095 = vunpack.c.l.b16 %v989
        %v1096 = vunpack.c.h.b16 %v989
        %v1097 = vunpack.c.l.b16 %v990
        %v1098 = vunpack.c.l.b16 %v991
        %v1099 = vunpack.c.h.b16 %v991
        %v1100 = vunpack.c.l.b16 %v992
        %v1101 = vunpack.c.l.b16 %v993
        %v1102 = vunpack.c.h.b16 %v993
        %v1103 = vunpack.c.l.b16 %v994
        %v1104 = vunpack.c.l.b16 %v995
        %v1105 = vunpack.c.h.b16 %v995
        %v1106 = vunpack.c.l.b16 %v996
        %v1107 = vpack.c.b16 %v1062, %v1059
        %v1108 = vpack.c.b16 %v1063, %v1060
        %v1109 = vpack.c.b16 %v1064, %v1061
        %v1110 = vpack.c.b16 %v1068, %v1065
        %v1111 = vpack.c.b16 %v1069, %v1066
        %v1112 = vpack.c.b16 %v1070, %v1067
        %v1113 = vpack.c.b16 %v1074, %v1071
        %v1114 = vpack.c.b16 %v1075, %v1072
        %v1115 = vpack.c.b16 %v1076, %v1073
        %v1116 = vpack.c.b16 %v1080, %v1077
        %v1117 = vpack.c.b16 %v1081, %v1078
        %v1118 = vpack.c.b16 %v1082, %v1079
        %v1119 = vpack.c.b16 %v1086, %v1083
        %v1120 = vpack.c.b16 %v1087, %v1084
        %v1121 = vpack.c.b16 %v1088, %v1085
        %v1122 = vpack.c.b16 %v1092, %v1089
        %v1123 = vpack.c.b16 %v1093, %v1090
        %v1124 = vpack.c.b16 %v1094, %v1091
        %v1125 = vpack.c.b16 %v1098, %v1095
        %v1126 = vpack.c.b16 %v1099, %v1096
        %v1127 = vpack.c.b16 %v1100, %v1097
        %v1128 = vpack.c.b16 %v1104, %v1101
        %v1129 = vpack.c.b16 %v1105, %v1102
        %v1130 = vpack.c.b16 %v1106, %v1103
        %1155 = vmatprep.subr.bf16.mxu0 %v1108
        %1156 = vmatpush1.bf16.msra.mxu0 %v1107
        %1157 = vmatprep.subr.bf16.mxu0 %v1111
        %1158 = vmatpush1.bf16.msra.mxu0 %v1110
        %1159 = vmatprep.subr.bf16.mxu0 %v1114
        %1160 = vmatpush1.bf16.msra.mxu0 %v1113
        %1161 = vmatprep.subr.bf16.mxu0 %v1117
        %1162 = vmatpush1.bf16.msra.mxu0 %v1116
        %1163 = vmatprep.subr.bf16.mxu0 %v1120
        %1164 = vmatpush1.bf16.msra.mxu0 %v1119
        %1165 = vmatprep.subr.bf16.mxu0 %v1123
        %1166 = vmatpush1.bf16.msra.mxu0 %v1122
        %1167 = vmatprep.subr.bf16.mxu0 %v1126
        %1168 = vmatpush1.bf16.msra.mxu0 %v1125
        %1169 = vmatprep.subr.bf16.mxu0 %v1129
        %1170 = vmatpush1.bf16.msra.mxu0 %v1128
        %1171 = vmatprep.subr.bf16.mxu0 0
        %1172 = vmatpush1.bf16.msra.mxu0 0
        %1173 = vmatprep.subr.bf16.mxu0 0
        %1174 = vmatpush1.bf16.msra.mxu0 0
        %1175 = vmatprep.subr.bf16.mxu0 0
        %1176 = vmatpush1.bf16.msra.mxu0 0
        %1177 = vmatprep.subr.bf16.mxu0 0
        %1178 = vmatpush1.bf16.msra.mxu0 0
        %1179 = vmatprep.subr.bf16.mxu0 0
        %1180 = vmatpush1.bf16.msra.mxu0 0
        %1181 = vmatprep.subr.bf16.mxu0 0
        %1182 = vmatpush1.bf16.msra.mxu0 0
        %1183 = vmatprep.subr.bf16.mxu0 0
        %1184 = vmatpush1.bf16.msra.mxu0 0
        %1185 = vmatprep.subr.bf16.mxu0 0
        %1186 = vmatpush1.bf16.msra.mxu0 0
        %1187 = vmatprep.mubr.bf16.mxu0 0
        %1188 = vmatmul.mubr.bf16.gmra.mrb[0].mxu0 %v1010
        %v1189 = vpop.f32.mrb[0].mxu0
        %v1190 = vadd.f32 %v1015, %v1189
        %v1191 = vpop.f32.mrb[0].mxu0
        %v1192 = vadd.f32 %v1019, %v1191
        %v1193 = vpop.f32.mrb[0].mxu0
        %v1194 = vadd.f32 %v1015, %v1193
        %v1195 = vpop.f32.mrb[0].mxu0
        %v1196 = vadd.f32 %v1019, %v1195
        %1197 = vdwg.mxu0
        %1198 = vmatprep.subr.bf16.mxu0 0
        %1199 = vmatpush1.bf16.msra.mxu0 %v1109
        %1200 = vmatprep.subr.bf16.mxu0 0
        %1201 = vmatpush1.bf16.msra.mxu0 %v1112
        %1202 = vmatprep.subr.bf16.mxu0 0
        %1203 = vmatpush1.bf16.msra.mxu0 %v1115
        %1204 = vmatprep.subr.bf16.mxu0 0
        %1205 = vmatpush1.bf16.msra.mxu0 %v1118
        %1206 = vmatprep.subr.bf16.mxu0 0
        %1207 = vmatpush1.bf16.msra.mxu0 %v1121
        %1208 = vmatprep.subr.bf16.mxu0 0
        %1209 = vmatpush1.bf16.msra.mxu0 %v1124
        %1210 = vmatprep.subr.bf16.mxu0 0
        %1211 = vmatpush1.bf16.msra.mxu0 %v1127
        %1212 = vmatprep.subr.bf16.mxu0 0
        %1213 = vmatpush1.bf16.msra.mxu0 %v1130
        %1214 = vmatprep.subr.bf16.mxu0 0
        %1215 = vmatpush1.bf16.msra.mxu0 0
        %1216 = vmatprep.subr.bf16.mxu0 0
        %1217 = vmatpush1.bf16.msra.mxu0 0
        %1218 = vmatprep.subr.bf16.mxu0 0
        %1219 = vmatpush1.bf16.msra.mxu0 0
        %1220 = vmatprep.subr.bf16.mxu0 0
        %1221 = vmatpush1.bf16.msra.mxu0 0
        %1222 = vmatprep.subr.bf16.mxu0 0
        %1223 = vmatpush1.bf16.msra.mxu0 0
        %1224 = vmatprep.subr.bf16.mxu0 0
        %1225 = vmatpush1.bf16.msra.mxu0 0
        %1226 = vmatprep.subr.bf16.mxu0 0
        %1227 = vmatpush1.bf16.msra.mxu0 0
        %1228 = vmatprep.subr.bf16.mxu0 0
        %1229 = vmatpush1.bf16.msra.mxu0 0
        %1230 = vmatprep.mubr.bf16.mxu0 0
        %1231 = vmatmul.mubr.bf16.gmra.mrb[0].mxu0 %v1010
        %v1232 = vpop.f32.mrb[0].mxu0
        %v1233 = vadd.f32 %v1023, %v1232
        %v1234 = vpop.f32.mrb[0].mxu0
        %v1235 = vpop.f32.mrb[0].mxu0
        %v1236 = vadd.f32 %v1023, %v1235
        %v1237 = vpop.f32.mrb[0].mxu0
        %1238 = vdwg.mxu0
        %v1239 = vadd.f32 %v1004, %v1190
        %v1240 = vadd.f32 %v1007, %v1194
        %v1241 = vxor.u32 %v1239, 2147483648
        %v1242 = vxor.u32 %v1240, 2147483648
        %v1243 = vmul.f32 %v1241, 1.442695
        %v1244 = vpow.pop %v1243
        %v1245 = vmul.f32 %v1242, 1.442695
        %v1246 = vpow.pop %v1245
        %v1247 = vadd.f32 %v1244, 1.0
        %v1248 = vadd.f32 %v1246, 1.0
        %v1249 = vrcp.pop %v1247
        %v1250 = vmul.f32 1.0, %v1249
        %v1251 = vrcp.pop %v1248
        %v1252 = vmul.f32 1.0, %v1251
        %v1253 = vadd.f32 %v1005, %v1192
        %v1254 = vadd.f32 %v1008, %v1196
        %v1255 = vxor.u32 %v1253, 2147483648
        %v1256 = vxor.u32 %v1254, 2147483648
        %v1257 = vmul.f32 %v1255, 1.442695
        %v1258 = vpow.pop %v1257
        %v1259 = vmul.f32 %v1256, 1.442695
        %v1260 = vpow.pop %v1259
        %v1261 = vadd.f32 %v1258, 1.0
        %v1262 = vadd.f32 %v1260, 1.0
        %v1263 = vrcp.pop %v1261
        %v1264 = vmul.f32 1.0, %v1263
        %v1265 = vrcp.pop %v1262
        %v1266 = vmul.f32 1.0, %v1265
        %v1267 = vmul.f32 %v1250, %v1233
        %v1268 = vmul.f32 %v1252, %v1236
        %v1269 = vadd.f32 %v1006, %v1267
        %v1270 = vadd.f32 %v1009, %v1268
        %v1271 = vtanh.pop %v1269
        %v1272 = vtanh.pop %v1270
        %v1273 = vsub.f32 1.0, %v1264
        %v1274 = vsub.f32 1.0, %v1266
        %v1275 = vmul.f32 %v1273, %v1271
        %v1276 = vmul.f32 %v1274, %v1272
        %v1277 = vmul.f32 %v1264, %v998
        %v1278 = vmul.f32 %v1266, %v999
        %v1279 = vadd.f32 %v1275, %v1277
        %v1280 = vadd.f32 %v1276, %v1278
        %v1281 = vpack.c.bf16 %v1280, %v1279
        %v1283 = vunpack.c.l.b16 %v1281
        %v1284 = vunpack.c.h.b16 %v1281
        %v1285 = vpack.c.b16 %v1283, %v1283
        %v1286 = vpack.c.b16 %v1284, %v1284
        %s1289 = smul.u32 %s1000, 2
        %s1290 = smul.addr %s1289, 4
        %s1291 = scalar_lea.vmem %s386, %s1290 [#allocation9]
        %1292 = vst [vmem:[%s1291] sm:$0xf] %v1285
        %1293 = vst [vmem:[%s1291 + $0x4] sm:$0xf] %v1286
        %s1294 = smul.u32 %s26, 5
        %s1295 = sadd.s32 %s1294, 1
        %s1296 = smul.u32 %s1295, 6
        %s1297 = smul.addr %s1296, 8
        %s1298 = scalar_lea.vmem [#allocation3], %s1297
        %v1299 = vld [vmem:[%s1298] sm:$0xff]
        %v1300 = vld [vmem:[%s1298 + $0x8] sm:$0xff]
        %v1301 = vld [vmem:[%s1298 + $0x10] sm:$0xff]
        %v1302 = vld [vmem:[%s1298 + $0x18] sm:$0xff]
        %v1303 = vld [vmem:[%s1298 + $0x20] sm:$0xff]
        %v1304 = vld [vmem:[%s1298 + $0x28] sm:$0xff]
        %1305 = vmatprep.subr.bf16.mxu0 %v1108
        %1306 = vmatpush1.bf16.msra.mxu0 %v1107
        %1307 = vmatprep.subr.bf16.mxu0 %v1111
        %1308 = vmatpush1.bf16.msra.mxu0 %v1110
        %1309 = vmatprep.subr.bf16.mxu0 %v1114
        %1310 = vmatpush1.bf16.msra.mxu0 %v1113
        %1311 = vmatprep.subr.bf16.mxu0 %v1117
        %1312 = vmatpush1.bf16.msra.mxu0 %v1116
        %1313 = vmatprep.subr.bf16.mxu0 %v1120
        %1314 = vmatpush1.bf16.msra.mxu0 %v1119
        %1315 = vmatprep.subr.bf16.mxu0 %v1123
        %1316 = vmatpush1.bf16.msra.mxu0 %v1122
        %1317 = vmatprep.subr.bf16.mxu0 %v1126
        %1318 = vmatpush1.bf16.msra.mxu0 %v1125
        %1319 = vmatprep.subr.bf16.mxu0 %v1129
        %1320 = vmatpush1.bf16.msra.mxu0 %v1128
        %1321 = vmatprep.subr.bf16.mxu0 0
        %1322 = vmatpush1.bf16.msra.mxu0 0
        %1323 = vmatprep.subr.bf16.mxu0 0
        %1324 = vmatpush1.bf16.msra.mxu0 0
        %1325 = vmatprep.subr.bf16.mxu0 0
        %1326 = vmatpush1.bf16.msra.mxu0 0
        %1327 = vmatprep.subr.bf16.mxu0 0
        %1328 = vmatpush1.bf16.msra.mxu0 0
        %1329 = vmatprep.subr.bf16.mxu0 0
        %1330 = vmatpush1.bf16.msra.mxu0 0
        %1331 = vmatprep.subr.bf16.mxu0 0
        %1332 = vmatpush1.bf16.msra.mxu0 0
        %1333 = vmatprep.subr.bf16.mxu0 0
        %1334 = vmatpush1.bf16.msra.mxu0 0
        %1335 = vmatprep.subr.bf16.mxu0 0
        %1336 = vmatpush1.bf16.msra.mxu0 0
        %1337 = vmatprep.mubr.bf16.mxu0 0
        %1338 = vmatmul.mubr.bf16.gmra.mrb[0].mxu0 %v1281
        %v1339 = vpop.f32.mrb[0].mxu0
        %v1340 = vadd.f32 %v1015, %v1339
        %v1341 = vpop.f32.mrb[0].mxu0
        %v1342 = vadd.f32 %v1019, %v1341
        %v1343 = vpop.f32.mrb[0].mxu0
        %v1344 = vadd.f32 %v1015, %v1343
        %v1345 = vpop.f32.mrb[0].mxu0
        %v1346 = vadd.f32 %v1019, %v1345
        %1347 = vdwg.mxu0
        %1348 = vmatprep.subr.bf16.mxu0 0
        %1349 = vmatpush1.bf16.msra.mxu0 %v1109
        %1350 = vmatprep.subr.bf16.mxu0 0
        %1351 = vmatpush1.bf16.msra.mxu0 %v1112
        %1352 = vmatprep.subr.bf16.mxu0 0
        %1353 = vmatpush1.bf16.msra.mxu0 %v1115
        %1354 = vmatprep.subr.bf16.mxu0 0
        %1355 = vmatpush1.bf16.msra.mxu0 %v1118
        %1356 = vmatprep.subr.bf16.mxu0 0
        %1357 = vmatpush1.bf16.msra.mxu0 %v1121
        %1358 = vmatprep.subr.bf16.mxu0 0
        %1359 = vmatpush1.bf16.msra.mxu0 %v1124
        %1360 = vmatprep.subr.bf16.mxu0 0
        %1361 = vmatpush1.bf16.msra.mxu0 %v1127
        %1362 = vmatprep.subr.bf16.mxu0 0
        %1363 = vmatpush1.bf16.msra.mxu0 %v1130
        %1364 = vmatprep.subr.bf16.mxu0 0
        %1365 = vmatpush1.bf16.msra.mxu0 0
        %1366 = vmatprep.subr.bf16.mxu0 0
        %1367 = vmatpush1.bf16.msra.mxu0 0
        %1368 = vmatprep.subr.bf16.mxu0 0
        %1369 = vmatpush1.bf16.msra.mxu0 0
        %1370 = vmatprep.subr.bf16.mxu0 0
        %1371 = vmatpush1.bf16.msra.mxu0 0
        %1372 = vmatprep.subr.bf16.mxu0 0
        %1373 = vmatpush1.bf16.msra.mxu0 0
        %1374 = vmatprep.subr.bf16.mxu0 0
        %1375 = vmatpush1.bf16.msra.mxu0 0
        %1376 = vmatprep.subr.bf16.mxu0 0
        %1377 = vmatpush1.bf16.msra.mxu0 0
        %1378 = vmatprep.subr.bf16.mxu0 0
        %1379 = vmatpush1.bf16.msra.mxu0 0
        %1380 = vmatprep.mubr.bf16.mxu0 0
        %1381 = vmatmul.mubr.bf16.gmra.mrb[0].mxu0 %v1281
        %v1382 = vpop.f32.mrb[0].mxu0
        %v1383 = vadd.f32 %v1023, %v1382
        %v1384 = vpop.f32.mrb[0].mxu0
        %v1385 = vpop.f32.mrb[0].mxu0
        %v1386 = vadd.f32 %v1023, %v1385
        %v1387 = vpop.f32.mrb[0].mxu0
        %1388 = vdwg.mxu0
        %v1389 = vadd.f32 %v1299, %v1340
        %v1390 = vadd.f32 %v1302, %v1344
        %v1391 = vxor.u32 %v1389, 2147483648
        %v1392 = vxor.u32 %v1390, 2147483648
        %v1393 = vmul.f32 %v1391, 1.442695
        %v1394 = vpow.pop %v1393
        %v1395 = vmul.f32 %v1392, 1.442695
        %v1396 = vpow.pop %v1395
        %v1397 = vadd.f32 %v1394, 1.0
        %v1398 = vadd.f32 %v1396, 1.0
        %v1399 = vrcp.pop %v1397
        %v1400 = vmul.f32 1.0, %v1399
        %v1401 = vrcp.pop %v1398
        %v1402 = vmul.f32 1.0, %v1401
        %v1403 = vadd.f32 %v1300, %v1342
        %v1404 = vadd.f32 %v1303, %v1346
        %v1405 = vxor.u32 %v1403, 2147483648
        %v1406 = vxor.u32 %v1404, 2147483648
        %v1407 = vmul.f32 %v1405, 1.442695
        %v1408 = vpow.pop %v1407
        %v1409 = vmul.f32 %v1406, 1.442695
        %v1410 = vpow.pop %v1409
        %v1411 = vadd.f32 %v1408, 1.0
        %v1412 = vadd.f32 %v1410, 1.0
        %v1413 = vrcp.pop %v1411
        %v1414 = vmul.f32 1.0, %v1413
        %v1415 = vrcp.pop %v1412
        %v1416 = vmul.f32 1.0, %v1415
        %v1417 = vmul.f32 %v1400, %v1383
        %v1418 = vmul.f32 %v1402, %v1386
        %v1419 = vadd.f32 %v1301, %v1417
        %v1420 = vadd.f32 %v1304, %v1418
        %v1421 = vtanh.pop %v1419
        %v1422 = vtanh.pop %v1420
        %v1423 = vsub.f32 1.0, %v1414
        %v1424 = vsub.f32 1.0, %v1416
        %v1425 = vmul.f32 %v1423, %v1421
        %v1426 = vmul.f32 %v1424, %v1422
        %v1427 = vmul.f32 %v1414, %v1279
        %v1428 = vmul.f32 %v1416, %v1280
        %v1429 = vadd.f32 %v1425, %v1427
        %v1430 = vadd.f32 %v1426, %v1428
        %v1431 = vpack.c.bf16 %v1430, %v1429
        %v1433 = vunpack.c.l.b16 %v1431
        %v1434 = vunpack.c.h.b16 %v1431
        %v1435 = vpack.c.b16 %v1433, %v1433
        %v1436 = vpack.c.b16 %v1434, %v1434
        %s1439 = smul.u32 %s1295, 2
        %s1440 = smul.addr %s1439, 4
        %s1441 = scalar_lea.vmem %s386, %s1440 [#allocation9]
        %1442 = vst [vmem:[%s1441] sm:$0xf] %v1435
        %1443 = vst [vmem:[%s1441 + $0x4] sm:$0xf] %v1436
        %s1444 = smul.u32 %s26, 3
        %s1445 = sadd.s32 %s1444, 2
        %s1446 = smul.u32 %s1445, 6
        %s1447 = smul.addr %s1446, 8
        %s1448 = scalar_lea.vmem [#allocation3], %s1447
        %v1449 = vld [vmem:[%s1448] sm:$0xff]
        %v1450 = vld [vmem:[%s1448 + $0x8] sm:$0xff]
        %v1451 = vld [vmem:[%s1448 + $0x10] sm:$0xff]
        %v1452 = vld [vmem:[%s1448 + $0x18] sm:$0xff]
        %v1453 = vld [vmem:[%s1448 + $0x20] sm:$0xff]
        %v1454 = vld [vmem:[%s1448 + $0x28] sm:$0xff]
        %1455 = vmatprep.subr.bf16.mxu0 %v1108
        %1456 = vmatpush1.bf16.msra.mxu0 %v1107
        %1457 = vmatprep.subr.bf16.mxu0 %v1111
        %1458 = vmatpush1.bf16.msra.mxu0 %v1110
        %1459 = vmatprep.subr.bf16.mxu0 %v1114
        %1460 = vmatpush1.bf16.msra.mxu0 %v1113
        %1461 = vmatprep.subr.bf16.mxu0 %v1117
        %1462 = vmatpush1.bf16.msra.mxu0 %v1116
        %1463 = vmatprep.subr.bf16.mxu0 %v1120
        %1464 = vmatpush1.bf16.msra.mxu0 %v1119
        %1465 = vmatprep.subr.bf16.mxu0 %v1123
        %1466 = vmatpush1.bf16.msra.mxu0 %v1122
        %1467 = vmatprep.subr.bf16.mxu0 %v1126
        %1468 = vmatpush1.bf16.msra.mxu0 %v1125
        %1469 = vmatprep.subr.bf16.mxu0 %v1129
        %1470 = vmatpush1.bf16.msra.mxu0 %v1128
        %1471 = vmatprep.subr.bf16.mxu0 0
        %1472 = vmatpush1.bf16.msra.mxu0 0
        %1473 = vmatprep.subr.bf16.mxu0 0
        %1474 = vmatpush1.bf16.msra.mxu0 0
        %1475 = vmatprep.subr.bf16.mxu0 0
        %1476 = vmatpush1.bf16.msra.mxu0 0
        %1477 = vmatprep.subr.bf16.mxu0 0
        %1478 = vmatpush1.bf16.msra.mxu0 0
        %1479 = vmatprep.subr.bf16.mxu0 0
        %1480 = vmatpush1.bf16.msra.mxu0 0
        %1481 = vmatprep.subr.bf16.mxu0 0
        %1482 = vmatpush1.bf16.msra.mxu0 0
        %1483 = vmatprep.subr.bf16.mxu0 0
        %1484 = vmatpush1.bf16.msra.mxu0 0
        %1485 = vmatprep.subr.bf16.mxu0 0
        %1486 = vmatpush1.bf16.msra.mxu0 0
        %1487 = vmatprep.mubr.bf16.mxu0 0
        %1488 = vmatmul.mubr.bf16.gmra.mrb[0].mxu0 %v1431
        %v1489 = vpop.f32.mrb[0].mxu0
        %v1490 = vadd.f32 %v1015, %v1489
        %v1491 = vpop.f32.mrb[0].mxu0
        %v1492 = vadd.f32 %v1019, %v1491
        %v1493 = vpop.f32.mrb[0].mxu0
        %v1494 = vadd.f32 %v1015, %v1493
        %v1495 = vpop.f32.mrb[0].mxu0
        %v1496 = vadd.f32 %v1019, %v1495
        %1497 = vdwg.mxu0
        %1498 = vmatprep.subr.bf16.mxu0 0
        %1499 = vmatpush1.bf16.msra.mxu0 %v1109
        %1500 = vmatprep.subr.bf16.mxu0 0
        %1501 = vmatpush1.bf16.msra.mxu0 %v1112
        %1502 = vmatprep.subr.bf16.mxu0 0
        %1503 = vmatpush1.bf16.msra.mxu0 %v1115
        %1504 = vmatprep.subr.bf16.mxu0 0
        %1505 = vmatpush1.bf16.msra.mxu0 %v1118
        %1506 = vmatprep.subr.bf16.mxu0 0
        %1507 = vmatpush1.bf16.msra.mxu0 %v1121
        %1508 = vmatprep.subr.bf16.mxu0 0
        %1509 = vmatpush1.bf16.msra.mxu0 %v1124
        %1510 = vmatprep.subr.bf16.mxu0 0
        %1511 = vmatpush1.bf16.msra.mxu0 %v1127
        %1512 = vmatprep.subr.bf16.mxu0 0
        %1513 = vmatpush1.bf16.msra.mxu0 %v1130
        %1514 = vmatprep.subr.bf16.mxu0 0
        %1515 = vmatpush1.bf16.msra.mxu0 0
        %1516 = vmatprep.subr.bf16.mxu0 0
        %1517 = vmatpush1.bf16.msra.mxu0 0
        %1518 = vmatprep.subr.bf16.mxu0 0
        %1519 = vmatpush1.bf16.msra.mxu0 0
        %1520 = vmatprep.subr.bf16.mxu0 0
        %1521 = vmatpush1.bf16.msra.mxu0 0
        %1522 = vmatprep.subr.bf16.mxu0 0
        %1523 = vmatpush1.bf16.msra.mxu0 0
        %1524 = vmatprep.subr.bf16.mxu0 0
        %1525 = vmatpush1.bf16.msra.mxu0 0
        %1526 = vmatprep.subr.bf16.mxu0 0
        %1527 = vmatpush1.bf16.msra.mxu0 0
        %1528 = vmatprep.subr.bf16.mxu0 0
        %1529 = vmatpush1.bf16.msra.mxu0 0
        %1530 = vmatprep.mubr.bf16.mxu0 0
        %1531 = vmatmul.mubr.bf16.gmra.mrb[0].mxu0 %v1431
        %v1532 = vpop.f32.mrb[0].mxu0
        %v1533 = vadd.f32 %v1023, %v1532
        %v1534 = vpop.f32.mrb[0].mxu0
        %v1535 = vpop.f32.mrb[0].mxu0
        %v1536 = vadd.f32 %v1023, %v1535
        %v1537 = vpop.f32.mrb[0].mxu0
        %1538 = vdwg.mxu0
        %v1539 = vadd.f32 %v1449, %v1490
        %v1540 = vadd.f32 %v1452, %v1494
        %v1541 = vxor.u32 %v1539, 2147483648
        %v1542 = vxor.u32 %v1540, 2147483648
        %v1543 = vmul.f32 %v1541, 1.442695
        %v1544 = vpow.pop %v1543
        %v1545 = vmul.f32 %v1542, 1.442695
        %v1546 = vpow.pop %v1545
        %v1547 = vadd.f32 %v1544, 1.0
        %v1548 = vadd.f32 %v1546, 1.0
        %v1549 = vrcp.pop %v1547
        %v1550 = vmul.f32 1.0, %v1549
        %v1551 = vrcp.pop %v1548
        %v1552 = vmul.f32 1.0, %v1551
        %v1553 = vadd.f32 %v1450, %v1492
        %v1554 = vadd.f32 %v1453, %v1496
        %v1555 = vxor.u32 %v1553, 2147483648
        %v1556 = vxor.u32 %v1554, 2147483648
        %v1557 = vmul.f32 %v1555, 1.442695
        %v1558 = vpow.pop %v1557
        %v1559 = vmul.f32 %v1556, 1.442695
        %v1560 = vpow.pop %v1559
        %v1561 = vadd.f32 %v1558, 1.0
        %v1562 = vadd.f32 %v1560, 1.0
        %v1563 = vrcp.pop %v1561
        %v1564 = vmul.f32 1.0, %v1563
        %v1565 = vrcp.pop %v1562
        %v1566 = vmul.f32 1.0, %v1565
        %v1567 = vmul.f32 %v1550, %v1533
        %v1568 = vmul.f32 %v1552, %v1536
        %v1569 = vadd.f32 %v1451, %v1567
        %v1570 = vadd.f32 %v1454, %v1568
        %v1571 = vtanh.pop %v1569
        %v1572 = vtanh.pop %v1570
        %v1573 = vsub.f32 1.0, %v1564
        %v1574 = vsub.f32 1.0, %v1566
        %v1575 = vmul.f32 %v1573, %v1571
        %v1576 = vmul.f32 %v1574, %v1572
        %v1577 = vmul.f32 %v1564, %v1429
        %v1578 = vmul.f32 %v1566, %v1430
        %v1579 = vadd.f32 %v1575, %v1577
        %v1580 = vadd.f32 %v1576, %v1578
        %v1581 = vpack.c.bf16 %v1580, %v1579
        %v1583 = vunpack.c.l.b16 %v1581
        %v1584 = vunpack.c.h.b16 %v1581
        %v1585 = vpack.c.b16 %v1583, %v1583
        %v1586 = vpack.c.b16 %v1584, %v1584
        %s1589 = smul.u32 %s1445, 2
        %s1590 = smul.addr %s1589, 4
        %s1591 = scalar_lea.vmem %s386, %s1590 [#allocation9]
        %1592 = vst [vmem:[%s1591] sm:$0xf] %v1585
        %1593 = vst [vmem:[%s1591 + $0x4] sm:$0xf] %v1586
        %s1594 = sadd.s32 %s26, 3
        %s1595 = smul.u32 %s1594, 6
        %s1596 = smul.addr %s1595, 8
        %s1597 = scalar_lea.vmem [#allocation3], %s1596
        %v1598 = vld [vmem:[%s1597] sm:$0xff]
        %v1599 = vld [vmem:[%s1597 + $0x8] sm:$0xff]
        %v1600 = vld [vmem:[%s1597 + $0x10] sm:$0xff]
        %v1601 = vld [vmem:[%s1597 + $0x18] sm:$0xff]
        %v1602 = vld [vmem:[%s1597 + $0x20] sm:$0xff]
        %v1603 = vld [vmem:[%s1597 + $0x28] sm:$0xff]
        %1604 = vmatprep.subr.bf16.mxu0 %v1108
        %1605 = vmatpush1.bf16.msra.mxu0 %v1107
        %1606 = vmatprep.subr.bf16.mxu0 %v1111
        %1607 = vmatpush1.bf16.msra.mxu0 %v1110
        %1608 = vmatprep.subr.bf16.mxu0 %v1114
        %1609 = vmatpush1.bf16.msra.mxu0 %v1113
        %1610 = vmatprep.subr.bf16.mxu0 %v1117
        %1611 = vmatpush1.bf16.msra.mxu0 %v1116
        %1612 = vmatprep.subr.bf16.mxu0 %v1120
        %1613 = vmatpush1.bf16.msra.mxu0 %v1119
        %1614 = vmatprep.subr.bf16.mxu0 %v1123
        %1615 = vmatpush1.bf16.msra.mxu0 %v1122
        %1616 = vmatprep.subr.bf16.mxu0 %v1126
        %1617 = vmatpush1.bf16.msra.mxu0 %v1125
        %1618 = vmatprep.subr.bf16.mxu0 %v1129
        %1619 = vmatpush1.bf16.msra.mxu0 %v1128
        %1620 = vmatprep.subr.bf16.mxu0 0
        %1621 = vmatpush1.bf16.msra.mxu0 0
        %1622 = vmatprep.subr.bf16.mxu0 0
        %1623 = vmatpush1.bf16.msra.mxu0 0
        %1624 = vmatprep.subr.bf16.mxu0 0
        %1625 = vmatpush1.bf16.msra.mxu0 0
        %1626 = vmatprep.subr.bf16.mxu0 0
        %1627 = vmatpush1.bf16.msra.mxu0 0
        %1628 = vmatprep.subr.bf16.mxu0 0
        %1629 = vmatpush1.bf16.msra.mxu0 0
        %1630 = vmatprep.subr.bf16.mxu0 0
        %1631 = vmatpush1.bf16.msra.mxu0 0
        %1632 = vmatprep.subr.bf16.mxu0 0
        %1633 = vmatpush1.bf16.msra.mxu0 0
        %1634 = vmatprep.subr.bf16.mxu0 0
        %1635 = vmatpush1.bf16.msra.mxu0 0
        %1636 = vmatprep.mubr.bf16.mxu0 0
        %1637 = vmatmul.mubr.bf16.gmra.mrb[0].mxu0 %v1581
        %v1638 = vpop.f32.mrb[0].mxu0
        %v1639 = vadd.f32 %v1015, %v1638
        %v1640 = vpop.f32.mrb[0].mxu0
        %v1641 = vadd.f32 %v1019, %v1640
        %v1642 = vpop.f32.mrb[0].mxu0
        %v1643 = vadd.f32 %v1015, %v1642
        %v1644 = vpop.f32.mrb[0].mxu0
        %v1645 = vadd.f32 %v1019, %v1644
        %1646 = vdwg.mxu0
        %1647 = vmatprep.subr.bf16.mxu0 0
        %1648 = vmatpush1.bf16.msra.mxu0 %v1109
        %1649 = vmatprep.subr.bf16.mxu0 0
        %1650 = vmatpush1.bf16.msra.mxu0 %v1112
        %1651 = vmatprep.subr.bf16.mxu0 0
        %1652 = vmatpush1.bf16.msra.mxu0 %v1115
        %1653 = vmatprep.subr.bf16.mxu0 0
        %1654 = vmatpush1.bf16.msra.mxu0 %v1118
        %1655 = vmatprep.subr.bf16.mxu0 0
        %1656 = vmatpush1.bf16.msra.mxu0 %v1121
        %1657 = vmatprep.subr.bf16.mxu0 0
        %1658 = vmatpush1.bf16.msra.mxu0 %v1124
        %1659 = vmatprep.subr.bf16.mxu0 0
        %1660 = vmatpush1.bf16.msra.mxu0 %v1127
        %1661 = vmatprep.subr.bf16.mxu0 0
        %1662 = vmatpush1.bf16.msra.mxu0 %v1130
        %1663 = vmatprep.subr.bf16.mxu0 0
        %1664 = vmatpush1.bf16.msra.mxu0 0
        %1665 = vmatprep.subr.bf16.mxu0 0
        %1666 = vmatpush1.bf16.msra.mxu0 0
        %1667 = vmatprep.subr.bf16.mxu0 0
        %1668 = vmatpush1.bf16.msra.mxu0 0
        %1669 = vmatprep.subr.bf16.mxu0 0
        %1670 = vmatpush1.bf16.msra.mxu0 0
        %1671 = vmatprep.subr.bf16.mxu0 0
        %1672 = vmatpush1.bf16.msra.mxu0 0
        %1673 = vmatprep.subr.bf16.mxu0 0
        %1674 = vmatpush1.bf16.msra.mxu0 0
        %1675 = vmatprep.subr.bf16.mxu0 0
        %1676 = vmatpush1.bf16.msra.mxu0 0
        %1677 = vmatprep.subr.bf16.mxu0 0
        %1678 = vmatpush1.bf16.msra.mxu0 0
        %1679 = vmatprep.mubr.bf16.mxu0 0
        %1680 = vmatmul.mubr.bf16.gmra.mrb[0].mxu0 %v1581
        %v1681 = vpop.f32.mrb[0].mxu0
        %v1682 = vadd.f32 %v1023, %v1681
        %v1683 = vpop.f32.mrb[0].mxu0
        %v1684 = vpop.f32.mrb[0].mxu0
        %v1685 = vadd.f32 %v1023, %v1684
        %v1686 = vpop.f32.mrb[0].mxu0
        %1687 = vdwg.mxu0
        %v1688 = vadd.f32 %v1598, %v1639
        %v1689 = vadd.f32 %v1601, %v1643
        %v1690 = vxor.u32 %v1688, 2147483648
        %v1691 = vxor.u32 %v1689, 2147483648
        %v1692 = vmul.f32 %v1690, 1.442695
        %v1693 = vpow.pop %v1692
        %v1694 = vmul.f32 %v1691, 1.442695
        %v1695 = vpow.pop %v1694
        %v1696 = vadd.f32 %v1693, 1.0
        %v1697 = vadd.f32 %v1695, 1.0
        %v1698 = vrcp.pop %v1696
        %v1699 = vmul.f32 1.0, %v1698
        %v1700 = vrcp.pop %v1697
        %v1701 = vmul.f32 1.0, %v1700
        %v1702 = vadd.f32 %v1599, %v1641
        %v1703 = vadd.f32 %v1602, %v1645
        %v1704 = vxor.u32 %v1702, 2147483648
        %v1705 = vxor.u32 %v1703, 2147483648
        %v1706 = vmul.f32 %v1704, 1.442695
        %v1707 = vpow.pop %v1706
        %v1708 = vmul.f32 %v1705, 1.442695
        %v1709 = vpow.pop %v1708
        %v1710 = vadd.f32 %v1707, 1.0
        %v1711 = vadd.f32 %v1709, 1.0
        %v1712 = vrcp.pop %v1710
        %v1713 = vmul.f32 1.0, %v1712
        %v1714 = vrcp.pop %v1711
        %v1715 = vmul.f32 1.0, %v1714
        %v1716 = vmul.f32 %v1699, %v1682
        %v1717 = vmul.f32 %v1701, %v1685
        %v1718 = vadd.f32 %v1600, %v1716
        %v1719 = vadd.f32 %v1603, %v1717
        %v1720 = vtanh.pop %v1718
        %v1721 = vtanh.pop %v1719
        %v1722 = vsub.f32 1.0, %v1713
        %v1723 = vsub.f32 1.0, %v1715
        %v1724 = vmul.f32 %v1722, %v1720
        %v1725 = vmul.f32 %v1723, %v1721
        %v1726 = vmul.f32 %v1713, %v1579
        %v1727 = vmul.f32 %v1715, %v1580
        %v1728 = vadd.f32 %v1724, %v1726
        %v1729 = vadd.f32 %v1725, %v1727
        %v1730 = vpack.c.bf16 %v1729, %v1728
        %v1732 = vunpack.c.l.b16 %v1730
        %v1733 = vunpack.c.h.b16 %v1730
        %v1734 = vpack.c.b16 %v1732, %v1732
        %v1735 = vpack.c.b16 %v1733, %v1733
        %s1738 = smul.u32 %s1594, 2
        %s1739 = smul.addr %s1738, 4
        %s1740 = scalar_lea.vmem %s386, %s1739 [#allocation9]
        %1741 = vst [vmem:[%s1740] sm:$0xf] %v1734
        %1742 = vst [vmem:[%s1740 + $0x4] sm:$0xf] %v1735
        %s1743 = ssub.s32 4, %s26
        %s1744 = smul.u32 %s1743, 6
        %s1745 = smul.addr %s1744, 8
        %s1746 = scalar_lea.vmem [#allocation3], %s1745
        %v1747 = vld [vmem:[%s1746] sm:$0xff]
        %v1748 = vld [vmem:[%s1746 + $0x8] sm:$0xff]
        %v1749 = vld [vmem:[%s1746 + $0x10] sm:$0xff]
        %v1750 = vld [vmem:[%s1746 + $0x18] sm:$0xff]
        %v1751 = vld [vmem:[%s1746 + $0x20] sm:$0xff]
        %v1752 = vld [vmem:[%s1746 + $0x28] sm:$0xff]
        %1753 = vmatprep.subr.bf16.mxu0 %v1108
        %1754 = vmatpush1.bf16.msra.mxu0 %v1107
        %1755 = vmatprep.subr.bf16.mxu0 %v1111
        %1756 = vmatpush1.bf16.msra.mxu0 %v1110
        %1757 = vmatprep.subr.bf16.mxu0 %v1114
        %1758 = vmatpush1.bf16.msra.mxu0 %v1113
        %1759 = vmatprep.subr.bf16.mxu0 %v1117
        %1760 = vmatpush1.bf16.msra.mxu0 %v1116
        %1761 = vmatprep.subr.bf16.mxu0 %v1120
        %1762 = vmatpush1.bf16.msra.mxu0 %v1119
        %1763 = vmatprep.subr.bf16.mxu0 %v1123
        %1764 = vmatpush1.bf16.msra.mxu0 %v1122
        %1765 = vmatprep.subr.bf16.mxu0 %v1126
        %1766 = vmatpush1.bf16.msra.mxu0 %v1125
        %1767 = vmatprep.subr.bf16.mxu0 %v1129
        %1768 = vmatpush1.bf16.msra.mxu0 %v1128
        %1769 = vmatprep.subr.bf16.mxu0 0
        %1770 = vmatpush1.bf16.msra.mxu0 0
        %1771 = vmatprep.subr.bf16.mxu0 0
        %1772 = vmatpush1.bf16.msra.mxu0 0
        %1773 = vmatprep.subr.bf16.mxu0 0
        %1774 = vmatpush1.bf16.msra.mxu0 0
        %1775 = vmatprep.subr.bf16.mxu0 0
        %1776 = vmatpush1.bf16.msra.mxu0 0
        %1777 = vmatprep.subr.bf16.mxu0 0
        %1778 = vmatpush1.bf16.msra.mxu0 0
        %1779 = vmatprep.subr.bf16.mxu0 0
        %1780 = vmatpush1.bf16.msra.mxu0 0
        %1781 = vmatprep.subr.bf16.mxu0 0
        %1782 = vmatpush1.bf16.msra.mxu0 0
        %1783 = vmatprep.subr.bf16.mxu0 0
        %1784 = vmatpush1.bf16.msra.mxu0 0
        %1785 = vmatprep.mubr.bf16.mxu0 0
        %1786 = vmatmul.mubr.bf16.gmra.mrb[0].mxu0 %v1730
        %v1787 = vpop.f32.mrb[0].mxu0
        %v1788 = vadd.f32 %v1015, %v1787
        %v1789 = vpop.f32.mrb[0].mxu0
        %v1790 = vadd.f32 %v1019, %v1789
        %v1791 = vpop.f32.mrb[0].mxu0
        %v1792 = vadd.f32 %v1015, %v1791
        %v1793 = vpop.f32.mrb[0].mxu0
        %v1794 = vadd.f32 %v1019, %v1793
        %1795 = vdwg.mxu0
        %1796 = vmatprep.subr.bf16.mxu0 0
        %1797 = vmatpush1.bf16.msra.mxu0 %v1109
        %1798 = vmatprep.subr.bf16.mxu0 0
        %1799 = vmatpush1.bf16.msra.mxu0 %v1112
        %1800 = vmatprep.subr.bf16.mxu0 0
        %1801 = vmatpush1.bf16.msra.mxu0 %v1115
        %1802 = vmatprep.subr.bf16.mxu0 0
        %1803 = vmatpush1.bf16.msra.mxu0 %v1118
        %1804 = vmatprep.subr.bf16.mxu0 0
        %1805 = vmatpush1.bf16.msra.mxu0 %v1121
        %1806 = vmatprep.subr.bf16.mxu0 0
        %1807 = vmatpush1.bf16.msra.mxu0 %v1124
        %1808 = vmatprep.subr.bf16.mxu0 0
        %1809 = vmatpush1.bf16.msra.mxu0 %v1127
        %1810 = vmatprep.subr.bf16.mxu0 0
        %1811 = vmatpush1.bf16.msra.mxu0 %v1130
        %1812 = vmatprep.subr.bf16.mxu0 0
        %1813 = vmatpush1.bf16.msra.mxu0 0
        %1814 = vmatprep.subr.bf16.mxu0 0
        %1815 = vmatpush1.bf16.msra.mxu0 0
        %1816 = vmatprep.subr.bf16.mxu0 0
        %1817 = vmatpush1.bf16.msra.mxu0 0
        %1818 = vmatprep.subr.bf16.mxu0 0
        %1819 = vmatpush1.bf16.msra.mxu0 0
        %1820 = vmatprep.subr.bf16.mxu0 0
        %1821 = vmatpush1.bf16.msra.mxu0 0
        %1822 = vmatprep.subr.bf16.mxu0 0
        %1823 = vmatpush1.bf16.msra.mxu0 0
        %1824 = vmatprep.subr.bf16.mxu0 0
        %1825 = vmatpush1.bf16.msra.mxu0 0
        %1826 = vmatprep.subr.bf16.mxu0 0
        %1827 = vmatpush1.bf16.msra.mxu0 0
        %1828 = vmatprep.mubr.bf16.mxu0 0
        %1829 = vmatmul.mubr.bf16.gmra.mrb[0].mxu0 %v1730
        %v1830 = vpop.f32.mrb[0].mxu0
        %v1831 = vadd.f32 %v1023, %v1830
        %v1832 = vpop.f32.mrb[0].mxu0
        %v1833 = vpop.f32.mrb[0].mxu0
        %v1834 = vadd.f32 %v1023, %v1833
        %v1835 = vpop.f32.mrb[0].mxu0
        %1836 = vdwg.mxu0
        %v1837 = vadd.f32 %v1747, %v1788
        %v1838 = vadd.f32 %v1750, %v1792
        %v1839 = vxor.u32 %v1837, 2147483648
        %v1840 = vxor.u32 %v1838, 2147483648
        %v1841 = vmul.f32 %v1839, 1.442695
        %v1842 = vpow.pop %v1841
        %v1843 = vmul.f32 %v1840, 1.442695
        %v1844 = vpow.pop %v1843
        %v1845 = vadd.f32 %v1842, 1.0
        %v1846 = vadd.f32 %v1844, 1.0
        %v1847 = vrcp.pop %v1845
        %v1848 = vmul.f32 1.0, %v1847
        %v1849 = vrcp.pop %v1846
        %v1850 = vmul.f32 1.0, %v1849
        %v1851 = vadd.f32 %v1748, %v1790
        %v1852 = vadd.f32 %v1751, %v1794
        %v1853 = vxor.u32 %v1851, 2147483648
        %v1854 = vxor.u32 %v1852, 2147483648
        %v1855 = vmul.f32 %v1853, 1.442695
        %v1856 = vpow.pop %v1855
        %v1857 = vmul.f32 %v1854, 1.442695
        %v1858 = vpow.pop %v1857
        %v1859 = vadd.f32 %v1856, 1.0
        %v1860 = vadd.f32 %v1858, 1.0
        %v1861 = vrcp.pop %v1859
        %v1862 = vmul.f32 1.0, %v1861
        %v1863 = vrcp.pop %v1860
        %v1864 = vmul.f32 1.0, %v1863
        %v1865 = vmul.f32 %v1848, %v1831
        %v1866 = vmul.f32 %v1850, %v1834
        %v1867 = vadd.f32 %v1749, %v1865
        %v1868 = vadd.f32 %v1752, %v1866
        %v1869 = vtanh.pop %v1867
        %v1870 = vtanh.pop %v1868
        %v1871 = vsub.f32 1.0, %v1862
        %v1872 = vsub.f32 1.0, %v1864
        %v1873 = vmul.f32 %v1871, %v1869
        %v1874 = vmul.f32 %v1872, %v1870
        %v1875 = vmul.f32 %v1862, %v1728
        %v1876 = vmul.f32 %v1864, %v1729
        %v1877 = vadd.f32 %v1873, %v1875
        %v1878 = vadd.f32 %v1874, %v1876
        %v1879 = vpack.c.bf16 %v1878, %v1877
        %v1881 = vunpack.c.l.b16 %v1879
        %v1882 = vunpack.c.h.b16 %v1879
        %v1883 = vpack.c.b16 %v1881, %v1881
        %v1884 = vpack.c.b16 %v1882, %v1882
        %s1887 = smul.u32 %s1743, 2
        %s1888 = smul.addr %s1887, 4
        %s1889 = scalar_lea.vmem %s386, %s1888 [#allocation9]
        %1890 = vst [vmem:[%s1889] sm:$0xf] %v1883
        %1891 = vst [vmem:[%s1889 + $0x4] sm:$0xf] %v1884
        %s1892 = smul.u32 %s26, 4294967293
        %s1893 = sadd.s32 %s1892, 5
        %s1894 = smul.u32 %s1893, 6
        %s1895 = smul.addr %s1894, 8
        %s1896 = scalar_lea.vmem [#allocation3], %s1895
        %v1897 = vld [vmem:[%s1896] sm:$0xff]
        %v1898 = vld [vmem:[%s1896 + $0x8] sm:$0xff]
        %v1899 = vld [vmem:[%s1896 + $0x10] sm:$0xff]
        %v1900 = vld [vmem:[%s1896 + $0x18] sm:$0xff]
        %v1901 = vld [vmem:[%s1896 + $0x20] sm:$0xff]
        %v1902 = vld [vmem:[%s1896 + $0x28] sm:$0xff]
        %1903 = vmatprep.subr.bf16.mxu0 %v1108
        %1904 = vmatpush1.bf16.msra.mxu0 %v1107
        %1905 = vmatprep.subr.bf16.mxu0 %v1111
        %1906 = vmatpush1.bf16.msra.mxu0 %v1110
        %1907 = vmatprep.subr.bf16.mxu0 %v1114
        %1908 = vmatpush1.bf16.msra.mxu0 %v1113
        %1909 = vmatprep.subr.bf16.mxu0 %v1117
        %1910 = vmatpush1.bf16.msra.mxu0 %v1116
        %1911 = vmatprep.subr.bf16.mxu0 %v1120
        %1912 = vmatpush1.bf16.msra.mxu0 %v1119
        %1913 = vmatprep.subr.bf16.mxu0 %v1123
        %1914 = vmatpush1.bf16.msra.mxu0 %v1122
        %1915 = vmatprep.subr.bf16.mxu0 %v1126
        %1916 = vmatpush1.bf16.msra.mxu0 %v1125
        %1917 = vmatprep.subr.bf16.mxu0 %v1129
        %1918 = vmatpush1.bf16.msra.mxu0 %v1128
        %1919 = vmatprep.subr.bf16.mxu0 0
        %1920 = vmatpush1.bf16.msra.mxu0 0
        %1921 = vmatprep.subr.bf16.mxu0 0
        %1922 = vmatpush1.bf16.msra.mxu0 0
        %1923 = vmatprep.subr.bf16.mxu0 0
        %1924 = vmatpush1.bf16.msra.mxu0 0
        %1925 = vmatprep.subr.bf16.mxu0 0
        %1926 = vmatpush1.bf16.msra.mxu0 0
        %1927 = vmatprep.subr.bf16.mxu0 0
        %1928 = vmatpush1.bf16.msra.mxu0 0
        %1929 = vmatprep.subr.bf16.mxu0 0
        %1930 = vmatpush1.bf16.msra.mxu0 0
        %1931 = vmatprep.subr.bf16.mxu0 0
        %1932 = vmatpush1.bf16.msra.mxu0 0
        %1933 = vmatprep.subr.bf16.mxu0 0
        %1934 = vmatpush1.bf16.msra.mxu0 0
        %1935 = vmatprep.mubr.bf16.mxu0 0
        %1936 = vmatmul.mubr.bf16.gmra.mrb[0].mxu0 %v1879
        %v1937 = vpop.f32.mrb[0].mxu0
        %v1938 = vadd.f32 %v1015, %v1937
        %v1939 = vpop.f32.mrb[0].mxu0
        %v1940 = vadd.f32 %v1019, %v1939
        %v1941 = vpop.f32.mrb[0].mxu0
        %v1942 = vadd.f32 %v1015, %v1941
        %v1943 = vpop.f32.mrb[0].mxu0
        %v1944 = vadd.f32 %v1019, %v1943
        %1945 = vdwg.mxu0
        %1946 = vmatprep.subr.bf16.mxu0 0
        %1947 = vmatpush1.bf16.msra.mxu0 %v1109
        %1948 = vmatprep.subr.bf16.mxu0 0
        %1949 = vmatpush1.bf16.msra.mxu0 %v1112
        %1950 = vmatprep.subr.bf16.mxu0 0
        %1951 = vmatpush1.bf16.msra.mxu0 %v1115
        %1952 = vmatprep.subr.bf16.mxu0 0
        %1953 = vmatpush1.bf16.msra.mxu0 %v1118
        %1954 = vmatprep.subr.bf16.mxu0 0
        %1955 = vmatpush1.bf16.msra.mxu0 %v1121
        %1956 = vmatprep.subr.bf16.mxu0 0
        %1957 = vmatpush1.bf16.msra.mxu0 %v1124
        %1958 = vmatprep.subr.bf16.mxu0 0
        %1959 = vmatpush1.bf16.msra.mxu0 %v1127
        %1960 = vmatprep.subr.bf16.mxu0 0
        %1961 = vmatpush1.bf16.msra.mxu0 %v1130
        %1962 = vmatprep.subr.bf16.mxu0 0
        %1963 = vmatpush1.bf16.msra.mxu0 0
        %1964 = vmatprep.subr.bf16.mxu0 0
        %1965 = vmatpush1.bf16.msra.mxu0 0
        %1966 = vmatprep.subr.bf16.mxu0 0
        %1967 = vmatpush1.bf16.msra.mxu0 0
        %1968 = vmatprep.subr.bf16.mxu0 0
        %1969 = vmatpush1.bf16.msra.mxu0 0
        %1970 = vmatprep.subr.bf16.mxu0 0
        %1971 = vmatpush1.bf16.msra.mxu0 0
        %1972 = vmatprep.subr.bf16.mxu0 0
        %1973 = vmatpush1.bf16.msra.mxu0 0
        %1974 = vmatprep.subr.bf16.mxu0 0
        %1975 = vmatpush1.bf16.msra.mxu0 0
        %1976 = vmatprep.subr.bf16.mxu0 0
        %1977 = vmatpush1.bf16.msra.mxu0 0
        %1978 = vmatprep.mubr.bf16.mxu0 0
        %1979 = vmatmul.mubr.bf16.gmra.mrb[0].mxu0 %v1879
        %v1980 = vpop.f32.mrb[0].mxu0
        %v1981 = vadd.f32 %v1023, %v1980
        %v1982 = vpop.f32.mrb[0].mxu0
        %v1983 = vpop.f32.mrb[0].mxu0
        %v1984 = vadd.f32 %v1023, %v1983
        %v1985 = vpop.f32.mrb[0].mxu0
        %1986 = vdwg.mxu0
        %v1987 = vadd.f32 %v1897, %v1938
        %v1988 = vadd.f32 %v1900, %v1942
        %v1989 = vxor.u32 %v1987, 2147483648
        %v1990 = vxor.u32 %v1988, 2147483648
        %v1991 = vmul.f32 %v1989, 1.442695
        %v1992 = vpow.pop %v1991
        %v1993 = vmul.f32 %v1990, 1.442695
        %v1994 = vpow.pop %v1993
        %v1995 = vadd.f32 %v1992, 1.0
        %v1996 = vadd.f32 %v1994, 1.0
        %v1997 = vrcp.pop %v1995
        %v1998 = vmul.f32 1.0, %v1997
        %v1999 = vrcp.pop %v1996
        %v2000 = vmul.f32 1.0, %v1999
        %v2001 = vadd.f32 %v1898, %v1940
        %v2002 = vadd.f32 %v1901, %v1944
        %v2003 = vxor.u32 %v2001, 2147483648
        %v2004 = vxor.u32 %v2002, 2147483648
        %v2005 = vmul.f32 %v2003, 1.442695
        %v2006 = vpow.pop %v2005
        %v2007 = vmul.f32 %v2004, 1.442695
        %v2008 = vpow.pop %v2007
        %v2009 = vadd.f32 %v2006, 1.0
        %v2010 = vadd.f32 %v2008, 1.0
        %v2011 = vrcp.pop %v2009
        %v2012 = vmul.f32 1.0, %v2011
        %v2013 = vrcp.pop %v2010
        %v2014 = vmul.f32 1.0, %v2013
        %v2015 = vmul.f32 %v1998, %v1981
        %v2016 = vmul.f32 %v2000, %v1984
        %v2017 = vadd.f32 %v1899, %v2015
        %v2018 = vadd.f32 %v1902, %v2016
        %v2019 = vtanh.pop %v2017
        %v2020 = vtanh.pop %v2018
        %v2021 = vsub.f32 1.0, %v2012
        %v2022 = vsub.f32 1.0, %v2014
        %v2023 = vmul.f32 %v2021, %v2019
        %v2024 = vmul.f32 %v2022, %v2020
        %v2025 = vmul.f32 %v2012, %v1877
        %v2026 = vmul.f32 %v2014, %v1878
        %v2027 = vadd.f32 %v2023, %v2025
        %v2028 = vadd.f32 %v2024, %v2026
        %v2029 = vpack.c.bf16 %v2028, %v2027
        %v2031 = vunpack.c.l.b16 %v2029
        %v2032 = vunpack.c.h.b16 %v2029
        %v2033 = vpack.c.b16 %v2031, %v2031
        %v2034 = vpack.c.b16 %v2032, %v2032
        %s2037 = smul.u32 %s1893, 2
        %s2038 = smul.addr %s2037, 4
        %s2039 = scalar_lea.vmem %s386, %s2038 [#allocation9]
        %2040 = vst [vmem:[%s2039] sm:$0xf] %v2033
        %2041 = vst [vmem:[%s2039 + $0x4] sm:$0xf] %v2034
        %s2042 = smul.u32 %s26, 4294967291
        %s2043 = sadd.s32 %s2042, 6
        %s2044 = smul.u32 %s2043, 6
        %s2045 = smul.addr %s2044, 8
        %s2046 = scalar_lea.vmem [#allocation3], %s2045
        %v2047 = vld [vmem:[%s2046] sm:$0xff]
        %v2048 = vld [vmem:[%s2046 + $0x8] sm:$0xff]
        %v2049 = vld [vmem:[%s2046 + $0x10] sm:$0xff]
        %v2050 = vld [vmem:[%s2046 + $0x18] sm:$0xff]
        %v2051 = vld [vmem:[%s2046 + $0x20] sm:$0xff]
        %v2052 = vld [vmem:[%s2046 + $0x28] sm:$0xff]
        %2053 = vmatprep.subr.bf16.mxu0 %v1108
        %2054 = vmatpush1.bf16.msra.mxu0 %v1107
        %2055 = vmatprep.subr.bf16.mxu0 %v1111
        %2056 = vmatpush1.bf16.msra.mxu0 %v1110
        %2057 = vmatprep.subr.bf16.mxu0 %v1114
        %2058 = vmatpush1.bf16.msra.mxu0 %v1113
        %2059 = vmatprep.subr.bf16.mxu0 %v1117
        %2060 = vmatpush1.bf16.msra.mxu0 %v1116
        %2061 = vmatprep.subr.bf16.mxu0 %v1120
        %2062 = vmatpush1.bf16.msra.mxu0 %v1119
        %2063 = vmatprep.subr.bf16.mxu0 %v1123
        %2064 = vmatpush1.bf16.msra.mxu0 %v1122
        %2065 = vmatprep.subr.bf16.mxu0 %v1126
        %2066 = vmatpush1.bf16.msra.mxu0 %v1125
        %2067 = vmatprep.subr.bf16.mxu0 %v1129
        %2068 = vmatpush1.bf16.msra.mxu0 %v1128
        %2069 = vmatprep.subr.bf16.mxu0 0
        %2070 = vmatpush1.bf16.msra.mxu0 0
        %2071 = vmatprep.subr.bf16.mxu0 0
        %2072 = vmatpush1.bf16.msra.mxu0 0
        %2073 = vmatprep.subr.bf16.mxu0 0
        %2074 = vmatpush1.bf16.msra.mxu0 0
        %2075 = vmatprep.subr.bf16.mxu0 0
        %2076 = vmatpush1.bf16.msra.mxu0 0
        %2077 = vmatprep.subr.bf16.mxu0 0
        %2078 = vmatpush1.bf16.msra.mxu0 0
        %2079 = vmatprep.subr.bf16.mxu0 0
        %2080 = vmatpush1.bf16.msra.mxu0 0
        %2081 = vmatprep.subr.bf16.mxu0 0
        %2082 = vmatpush1.bf16.msra.mxu0 0
        %2083 = vmatprep.subr.bf16.mxu0 0
        %2084 = vmatpush1.bf16.msra.mxu0 0
        %2085 = vmatprep.mubr.bf16.mxu0 0
        %2086 = vmatmul.mubr.bf16.gmra.mrb[0].mxu0 %v2029
        %v2087 = vpop.f32.mrb[0].mxu0
        %v2088 = vadd.f32 %v1015, %v2087
        %v2089 = vpop.f32.mrb[0].mxu0
        %v2090 = vadd.f32 %v1019, %v2089
        %v2091 = vpop.f32.mrb[0].mxu0
        %v2092 = vadd.f32 %v1015, %v2091
        %v2093 = vpop.f32.mrb[0].mxu0
        %v2094 = vadd.f32 %v1019, %v2093
        %2095 = vdwg.mxu0
        %2096 = vmatprep.subr.bf16.mxu0 0
        %2097 = vmatpush1.bf16.msra.mxu0 %v1109
        %2098 = vmatprep.subr.bf16.mxu0 0
        %2099 = vmatpush1.bf16.msra.mxu0 %v1112
        %2100 = vmatprep.subr.bf16.mxu0 0
        %2101 = vmatpush1.bf16.msra.mxu0 %v1115
        %2102 = vmatprep.subr.bf16.mxu0 0
        %2103 = vmatpush1.bf16.msra.mxu0 %v1118
        %2104 = vmatprep.subr.bf16.mxu0 0
        %2105 = vmatpush1.bf16.msra.mxu0 %v1121
        %2106 = vmatprep.subr.bf16.mxu0 0
        %2107 = vmatpush1.bf16.msra.mxu0 %v1124
        %2108 = vmatprep.subr.bf16.mxu0 0
        %2109 = vmatpush1.bf16.msra.mxu0 %v1127
        %2110 = vmatprep.subr.bf16.mxu0 0
        %2111 = vmatpush1.bf16.msra.mxu0 %v1130
        %2112 = vmatprep.subr.bf16.mxu0 0
        %2113 = vmatpush1.bf16.msra.mxu0 0
        %2114 = vmatprep.subr.bf16.mxu0 0
        %2115 = vmatpush1.bf16.msra.mxu0 0
        %2116 = vmatprep.subr.bf16.mxu0 0
        %2117 = vmatpush1.bf16.msra.mxu0 0
        %2118 = vmatprep.subr.bf16.mxu0 0
        %2119 = vmatpush1.bf16.msra.mxu0 0
        %2120 = vmatprep.subr.bf16.mxu0 0
        %2121 = vmatpush1.bf16.msra.mxu0 0
        %2122 = vmatprep.subr.bf16.mxu0 0
        %2123 = vmatpush1.bf16.msra.mxu0 0
        %2124 = vmatprep.subr.bf16.mxu0 0
        %2125 = vmatpush1.bf16.msra.mxu0 0
        %2126 = vmatprep.subr.bf16.mxu0 0
        %2127 = vmatpush1.bf16.msra.mxu0 0
        %2128 = vmatprep.mubr.bf16.mxu0 0
        %2129 = vmatmul.mubr.bf16.gmra.mrb[0].mxu0 %v2029
        %v2130 = vpop.f32.mrb[0].mxu0
        %v2131 = vadd.f32 %v1023, %v2130
        %v2132 = vpop.f32.mrb[0].mxu0
        %v2133 = vpop.f32.mrb[0].mxu0
        %v2134 = vadd.f32 %v1023, %v2133
        %v2135 = vpop.f32.mrb[0].mxu0
        %2136 = vdwg.mxu0
        %v2137 = vadd.f32 %v2047, %v2088
        %v2138 = vadd.f32 %v2050, %v2092
        %v2139 = vxor.u32 %v2137, 2147483648
        %v2140 = vxor.u32 %v2138, 2147483648
        %v2141 = vmul.f32 %v2139, 1.442695
        %v2142 = vpow.pop %v2141
        %v2143 = vmul.f32 %v2140, 1.442695
        %v2144 = vpow.pop %v2143
        %v2145 = vadd.f32 %v2142, 1.0
        %v2146 = vadd.f32 %v2144, 1.0
        %v2147 = vrcp.pop %v2145
        %v2148 = vmul.f32 1.0, %v2147
        %v2149 = vrcp.pop %v2146
        %v2150 = vmul.f32 1.0, %v2149
        %v2151 = vadd.f32 %v2048, %v2090
        %v2152 = vadd.f32 %v2051, %v2094
        %v2153 = vxor.u32 %v2151, 2147483648
        %v2154 = vxor.u32 %v2152, 2147483648
        %v2155 = vmul.f32 %v2153, 1.442695
        %v2156 = vpow.pop %v2155
        %v2157 = vmul.f32 %v2154, 1.442695
        %v2158 = vpow.pop %v2157
        %v2159 = vadd.f32 %v2156, 1.0
        %v2160 = vadd.f32 %v2158, 1.0
        %v2161 = vrcp.pop %v2159
        %v2162 = vmul.f32 1.0, %v2161
        %v2163 = vrcp.pop %v2160
        %v2164 = vmul.f32 1.0, %v2163
        %v2165 = vmul.f32 %v2148, %v2131
        %v2166 = vmul.f32 %v2150, %v2134
        %v2167 = vadd.f32 %v2049, %v2165
        %v2168 = vadd.f32 %v2052, %v2166
        %v2169 = vtanh.pop %v2167
        %v2170 = vtanh.pop %v2168
        %v2171 = vsub.f32 1.0, %v2162
        %v2172 = vsub.f32 1.0, %v2164
        %v2173 = vmul.f32 %v2171, %v2169
        %v2174 = vmul.f32 %v2172, %v2170
        %v2175 = vmul.f32 %v2162, %v2027
        %v2176 = vmul.f32 %v2164, %v2028
        %v2177 = vadd.f32 %v2173, %v2175
        %v2178 = vadd.f32 %v2174, %v2176
        %v2179 = vpack.c.bf16 %v2178, %v2177
        %v2181 = vunpack.c.l.b16 %v2179
        %v2182 = vunpack.c.h.b16 %v2179
        %v2183 = vpack.c.b16 %v2181, %v2181
        %v2184 = vpack.c.b16 %v2182, %v2182
        %s2187 = smul.u32 %s2043, 2
        %s2188 = smul.addr %s2187, 4
        %s2189 = scalar_lea.vmem %s386, %s2188 [#allocation9]
        %2190 = vst [vmem:[%s2189] sm:$0xf] %v2183
        %2191 = vst [vmem:[%s2189 + $0x4] sm:$0xf] %v2184
        %s2192 = smul.u32 %s26, 4294967289
        %s2193 = sadd.s32 %s2192, 7
        %s2194 = smul.u32 %s2193, 6
        %s2195 = smul.addr %s2194, 8
        %s2196 = scalar_lea.vmem [#allocation3], %s2195
        %v2197 = vld [vmem:[%s2196] sm:$0xff]
        %v2198 = vld [vmem:[%s2196 + $0x8] sm:$0xff]
        %v2199 = vld [vmem:[%s2196 + $0x10] sm:$0xff]
        %v2200 = vld [vmem:[%s2196 + $0x18] sm:$0xff]
        %v2201 = vld [vmem:[%s2196 + $0x20] sm:$0xff]
        %v2202 = vld [vmem:[%s2196 + $0x28] sm:$0xff]
        %2203 = vmatprep.subr.bf16.mxu0 %v1108
        %2204 = vmatpush1.bf16.msra.mxu0 %v1107
        %2205 = vmatprep.subr.bf16.mxu0 %v1111
        %2206 = vmatpush1.bf16.msra.mxu0 %v1110
        %2207 = vmatprep.subr.bf16.mxu0 %v1114
        %2208 = vmatpush1.bf16.msra.mxu0 %v1113
        %2209 = vmatprep.subr.bf16.mxu0 %v1117
        %2210 = vmatpush1.bf16.msra.mxu0 %v1116
        %2211 = vmatprep.subr.bf16.mxu0 %v1120
        %2212 = vmatpush1.bf16.msra.mxu0 %v1119
        %2213 = vmatprep.subr.bf16.mxu0 %v1123
        %2214 = vmatpush1.bf16.msra.mxu0 %v1122
        %2215 = vmatprep.subr.bf16.mxu0 %v1126
        %2216 = vmatpush1.bf16.msra.mxu0 %v1125
        %2217 = vmatprep.subr.bf16.mxu0 %v1129
        %2218 = vmatpush1.bf16.msra.mxu0 %v1128
        %2219 = vmatprep.subr.bf16.mxu0 0
        %2220 = vmatpush1.bf16.msra.mxu0 0
        %2221 = vmatprep.subr.bf16.mxu0 0
        %2222 = vmatpush1.bf16.msra.mxu0 0
        %2223 = vmatprep.subr.bf16.mxu0 0
        %2224 = vmatpush1.bf16.msra.mxu0 0
        %2225 = vmatprep.subr.bf16.mxu0 0
        %2226 = vmatpush1.bf16.msra.mxu0 0
        %2227 = vmatprep.subr.bf16.mxu0 0
        %2228 = vmatpush1.bf16.msra.mxu0 0
        %2229 = vmatprep.subr.bf16.mxu0 0
        %2230 = vmatpush1.bf16.msra.mxu0 0
        %2231 = vmatprep.subr.bf16.mxu0 0
        %2232 = vmatpush1.bf16.msra.mxu0 0
        %2233 = vmatprep.subr.bf16.mxu0 0
        %2234 = vmatpush1.bf16.msra.mxu0 0
        %2235 = vmatprep.mubr.bf16.mxu0 0
        %2236 = vmatmul.mubr.bf16.gmra.mrb[0].mxu0 %v2179
        %v2237 = vpop.f32.mrb[0].mxu0
        %v2238 = vadd.f32 %v1015, %v2237
        %v2239 = vpop.f32.mrb[0].mxu0
        %v2240 = vadd.f32 %v1019, %v2239
        %v2241 = vpop.f32.mrb[0].mxu0
        %v2242 = vadd.f32 %v1015, %v2241
        %v2243 = vpop.f32.mrb[0].mxu0
        %v2244 = vadd.f32 %v1019, %v2243
        %2245 = vdwg.mxu0
        %2246 = vmatprep.subr.bf16.mxu0 0
        %2247 = vmatpush1.bf16.msra.mxu0 %v1109
        %2248 = vmatprep.subr.bf16.mxu0 0
        %2249 = vmatpush1.bf16.msra.mxu0 %v1112
        %2250 = vmatprep.subr.bf16.mxu0 0
        %2251 = vmatpush1.bf16.msra.mxu0 %v1115
        %2252 = vmatprep.subr.bf16.mxu0 0
        %2253 = vmatpush1.bf16.msra.mxu0 %v1118
        %2254 = vmatprep.subr.bf16.mxu0 0
        %2255 = vmatpush1.bf16.msra.mxu0 %v1121
        %2256 = vmatprep.subr.bf16.mxu0 0
        %2257 = vmatpush1.bf16.msra.mxu0 %v1124
        %2258 = vmatprep.subr.bf16.mxu0 0
        %2259 = vmatpush1.bf16.msra.mxu0 %v1127
        %2260 = vmatprep.subr.bf16.mxu0 0
        %2261 = vmatpush1.bf16.msra.mxu0 %v1130
        %2262 = vmatprep.subr.bf16.mxu0 0
        %2263 = vmatpush1.bf16.msra.mxu0 0
        %2264 = vmatprep.subr.bf16.mxu0 0
        %2265 = vmatpush1.bf16.msra.mxu0 0
        %2266 = vmatprep.subr.bf16.mxu0 0
        %2267 = vmatpush1.bf16.msra.mxu0 0
        %2268 = vmatprep.subr.bf16.mxu0 0
        %2269 = vmatpush1.bf16.msra.mxu0 0
        %2270 = vmatprep.subr.bf16.mxu0 0
        %2271 = vmatpush1.bf16.msra.mxu0 0
        %2272 = vmatprep.subr.bf16.mxu0 0
        %2273 = vmatpush1.bf16.msra.mxu0 0
        %2274 = vmatprep.subr.bf16.mxu0 0
        %2275 = vmatpush1.bf16.msra.mxu0 0
        %2276 = vmatprep.subr.bf16.mxu0 0
        %2277 = vmatpush1.bf16.msra.mxu0 0
        %2278 = vmatprep.mubr.bf16.mxu0 0
        %2279 = vmatmul.mubr.bf16.gmra.mrb[0].mxu0 %v2179
        %v2280 = vpop.f32.mrb[0].mxu0
        %v2281 = vadd.f32 %v1023, %v2280
        %v2282 = vpop.f32.mrb[0].mxu0
        %v2283 = vpop.f32.mrb[0].mxu0
        %v2284 = vadd.f32 %v1023, %v2283
        %v2285 = vpop.f32.mrb[0].mxu0
        %2286 = vdwg.mxu0
        %v2287 = vadd.f32 %v2197, %v2238
        %v2288 = vadd.f32 %v2200, %v2242
        %v2289 = vxor.u32 %v2287, 2147483648
        %v2290 = vxor.u32 %v2288, 2147483648
        %v2291 = vmul.f32 %v2289, 1.442695
        %v2292 = vpow.pop %v2291
        %v2293 = vmul.f32 %v2290, 1.442695
        %v2294 = vpow.pop %v2293
        %v2295 = vadd.f32 %v2292, 1.0
        %v2296 = vadd.f32 %v2294, 1.0
        %v2297 = vrcp.pop %v2295
        %v2298 = vmul.f32 1.0, %v2297
        %v2299 = vrcp.pop %v2296
        %v2300 = vmul.f32 1.0, %v2299
        %v2301 = vadd.f32 %v2198, %v2240
        %v2302 = vadd.f32 %v2201, %v2244
        %v2303 = vxor.u32 %v2301, 2147483648
        %v2304 = vxor.u32 %v2302, 2147483648
        %v2305 = vmul.f32 %v2303, 1.442695
        %v2306 = vpow.pop %v2305
        %v2307 = vmul.f32 %v2304, 1.442695
        %v2308 = vpow.pop %v2307
        %v2309 = vadd.f32 %v2306, 1.0
        %v2310 = vadd.f32 %v2308, 1.0
        %v2311 = vrcp.pop %v2309
        %v2312 = vmul.f32 1.0, %v2311
        %v2313 = vrcp.pop %v2310
        %v2314 = vmul.f32 1.0, %v2313
        %v2315 = vmul.f32 %v2298, %v2281
        %v2316 = vmul.f32 %v2300, %v2284
        %v2317 = vadd.f32 %v2199, %v2315
        %v2318 = vadd.f32 %v2202, %v2316
        %v2319 = vtanh.pop %v2317
        %v2320 = vtanh.pop %v2318
        %v2321 = vsub.f32 1.0, %v2312
        %v2322 = vsub.f32 1.0, %v2314
        %v2323 = vmul.f32 %v2321, %v2319
        %v2324 = vmul.f32 %v2322, %v2320
        %v2325 = vmul.f32 %v2312, %v2177
        %v2326 = vmul.f32 %v2314, %v2178
        %v2327 = vadd.f32 %v2323, %v2325
        %v2328 = vadd.f32 %v2324, %v2326
        %v2329 = vpack.c.bf16 %v2328, %v2327
        %v2331 = vunpack.c.l.b16 %v2329
        %v2332 = vunpack.c.h.b16 %v2329
        %v2333 = vpack.c.b16 %v2331, %v2331
        %v2334 = vpack.c.b16 %v2332, %v2332
        %s2337 = smul.u32 %s2193, 2
        %s2338 = smul.addr %s2337, 4
        %s2339 = scalar_lea.vmem %s386, %s2338 [#allocation9]
        %2340 = vst [vmem:[%s2339] sm:$0xf] %v2333
        %2341 = vst [vmem:[%s2339 + $0x4] sm:$0xf] %v2334
        %2342 = vst [vmem:[#allocation2] sm:$0xff] %v2327
        %2343 = vst [vmem:[#allocation2 + $0x8] sm:$0xff] %v2328
        %s2344 = sand.u32 %s190, 1
        %s2345 = sand.u32 %s190, 1
        %s2346 = smul.addr %s2345, 64
        %s2347 = scalar_lea.vmem [#allocation9], %s2346
        // Predicated region
        $region57: #{rnn_forward.2} parent=39 // pred_check
          %p2348 = pneg %p200
        $region58: #{rnn_forward.2} parent=39 // pred_check_branch
          %2350 = sbr.rel (%p2348) target = $region60
        $region59: #{rnn_forward.2} parent=39 // pred_region
          %s2351 = smul.u32 %s27, 2
          %s2352 = ssub.s32 0, %s2351
          %s2353 = smul.u32 %s26, %s2352
          %s2354 = sadd.s32 %s27, %s2353
          %s2355 = smul.u32 8, %s2354
          %s2356 = smul.addr %s2355, 4
          %s2357 = sadd.s32 %s26, %s2356
          %s2358 = smul.addr %s2357, 4
          %s2359 = scalar_lea.vmem %s5, %s2358
          // Predicated region
          $region61: #{rnn_forward.2} parent=59 // pred_check
            _
          $region62: #{rnn_forward.2} parent=59 // pred_check_branch
            %2361 = sbr.rel (0) target = $region64
          $region63: #{rnn_forward.2} parent=59 // pred_region
            // Predicated region
            $region65: #{rnn_forward.2} parent=63 // pred_check
              _
            $region66: #{rnn_forward.2} parent=63 // pred_check_branch
              %2363 = sbr.rel target = $region68
            $region67: #{rnn_forward.2} parent=63 // pred_region
              // Predicated region
              $region80: #{rnn_forward.2} parent=67 // pred_check
                _
              $region81: #{rnn_forward.2} parent=67 // pred_check_branch
                %2408 = sbr.rel (0) target = $region83
              $region82: #{rnn_forward.2} parent=67 // pred_region
                loop: start=0, step=1, limit=1
                $region84: #{rnn_forward.2} parent=82 // loop_pre_header
                  _
                $region85: #{rnn_forward.2} parent=82 // loop_header
                  %s2410 = sphi 0, %s2414
                  %p2411 = scmp.ge.s32.totalorder %s2410, 1
                  %s2415 = sphi %s2347, %s2347
                  %s2416 = sphi %s2359, %s2359
                $region86: #{rnn_forward.2} parent=82 // loop_header_branch
                  %2413 = sbr.rel (%p2411) target = $region90
                $region87: #{rnn_forward.2} parent=82 // loop_body
                  _
                $region88: #{rnn_forward.2} parent=82 // loop_footer
                  %s2414 = sadd.s32 1, %s2410
                $region89: #{rnn_forward.2} parent=82 // loop_footer_branch
                  %2409 = sbr.rel target = $region85
                $region90: #{rnn_forward.2} parent=82 // loop_exit
                  _
                loop: start=0, step=1, limit=1
                $region91: #{rnn_forward.2} parent=82 // loop_pre_header
                  _
                $region92: #{rnn_forward.2} parent=82 // loop_header
                  %s2419 = sphi 0, %s2423
                  %p2420 = scmp.ge.s32.totalorder %s2419, 1
                  %s2424 = sphi %s2347, %s2347
                  %s2425 = sphi %s2359, %s2359
                $region93: #{rnn_forward.2} parent=82 // loop_header_branch
                  %2422 = sbr.rel (%p2420) target = $region97
                $region94: #{rnn_forward.2} parent=82 // loop_body
                  %v2426 = vld [vmem:[%s2424] sm:$0xf]
                  %2427 = vst [vmem:[%s2425] sm:$0xf] %v2426
                  %v2428 = vld [vmem:[%s2424 + $0x4] sm:$0xf]
                  %2429 = vst [vmem:[%s2425 + $0x8] sm:$0xf] %v2428
                  %v2430 = vld [vmem:[%s2424 + $0x8] sm:$0xf]
                  %2431 = vst [vmem:[%s2425 + $0x10] sm:$0xf] %v2430
                  %v2432 = vld [vmem:[%s2424 + $0xc] sm:$0xf]
                  %2433 = vst [vmem:[%s2425 + $0x18] sm:$0xf] %v2432
                  %v2434 = vld [vmem:[%s2424 + $0x10] sm:$0xf]
                  %2435 = vst [vmem:[%s2425 + $0x20] sm:$0xf] %v2434
                  %v2436 = vld [vmem:[%s2424 + $0x14] sm:$0xf]
                  %2437 = vst [vmem:[%s2425 + $0x28] sm:$0xf] %v2436
                  %v2438 = vld [vmem:[%s2424 + $0x18] sm:$0xf]
                  %2439 = vst [vmem:[%s2425 + $0x30] sm:$0xf] %v2438
                  %v2440 = vld [vmem:[%s2424 + $0x1c] sm:$0xf]
                  %2441 = vst [vmem:[%s2425 + $0x38] sm:$0xf] %v2440
                  %v2442 = vld [vmem:[%s2424 + $0x20] sm:$0xf]
                  %2443 = vst [vmem:[%s2425 + $0x40] sm:$0xf] %v2442
                  %v2444 = vld [vmem:[%s2424 + $0x24] sm:$0xf]
                  %2445 = vst [vmem:[%s2425 + $0x48] sm:$0xf] %v2444
                  %v2446 = vld [vmem:[%s2424 + $0x28] sm:$0xf]
                  %2447 = vst [vmem:[%s2425 + $0x50] sm:$0xf] %v2446
                  %v2448 = vld [vmem:[%s2424 + $0x2c] sm:$0xf]
                  %2449 = vst [vmem:[%s2425 + $0x58] sm:$0xf] %v2448
                  %v2450 = vld [vmem:[%s2424 + $0x30] sm:$0xf]
                  %2451 = vst [vmem:[%s2425 + $0x60] sm:$0xf] %v2450
                  %v2452 = vld [vmem:[%s2424 + $0x34] sm:$0xf]
                  %2453 = vst [vmem:[%s2425 + $0x68] sm:$0xf] %v2452
                  %v2454 = vld [vmem:[%s2424 + $0x38] sm:$0xf]
                  %2455 = vst [vmem:[%s2425 + $0x70] sm:$0xf] %v2454
                  %v2456 = vld [vmem:[%s2424 + $0x3c] sm:$0xf]
                  %2457 = vst [vmem:[%s2425 + $0x78] sm:$0xf] %v2456
                $region95: #{rnn_forward.2} parent=82 // loop_footer
                  %s2423 = sadd.s32 1, %s2419
                $region96: #{rnn_forward.2} parent=82 // loop_footer_branch
                  %2418 = sbr.rel target = $region92
                $region97: #{rnn_forward.2} parent=82 // loop_exit
                  _
              $region83: #{rnn_forward.2} parent=67 // pred_fallthru
                _
            $region68: #{rnn_forward.2} parent=63 // pred_fallthru
              _
            // Predicated region
            $region69: #{rnn_forward.2} parent=63 // pred_check
              _
            $region70: #{rnn_forward.2} parent=63 // pred_check_branch
              %2365 = sbr.rel (0) target = $region72
            $region71: #{rnn_forward.2} parent=63 // pred_region
              loop: start=0, step=1, limit=1
              $region73: #{rnn_forward.2} parent=71 // loop_pre_header
                _
              $region74: #{rnn_forward.2} parent=71 // loop_header
                %s2368 = sphi 0, %s2372
                %p2369 = scmp.ge.s32.totalorder %s2368, 1
                %s2373 = sphi %s2347, %s2347
                %s2374 = sphi %s2359, %s2359
              $region75: #{rnn_forward.2} parent=71 // loop_header_branch
                %2371 = sbr.rel (%p2369) target = $region79
              $region76: #{rnn_forward.2} parent=71 // loop_body
                %v2375 = vld [vmem:[%s2373] sm:$0xf]
                %2376 = vst [vmem:[%s2374] sm:$0xf] %v2375
                %v2377 = vld [vmem:[%s2373 + $0x4] sm:$0xf]
                %2378 = vst [vmem:[%s2374 + $0x8] sm:$0xf] %v2377
                %v2379 = vld [vmem:[%s2373 + $0x8] sm:$0xf]
                %2380 = vst [vmem:[%s2374 + $0x10] sm:$0xf] %v2379
                %v2381 = vld [vmem:[%s2373 + $0xc] sm:$0xf]
                %2382 = vst [vmem:[%s2374 + $0x18] sm:$0xf] %v2381
                %v2383 = vld [vmem:[%s2373 + $0x10] sm:$0xf]
                %2384 = vst [vmem:[%s2374 + $0x20] sm:$0xf] %v2383
                %v2385 = vld [vmem:[%s2373 + $0x14] sm:$0xf]
                %2386 = vst [vmem:[%s2374 + $0x28] sm:$0xf] %v2385
                %v2387 = vld [vmem:[%s2373 + $0x18] sm:$0xf]
                %2388 = vst [vmem:[%s2374 + $0x30] sm:$0xf] %v2387
                %v2389 = vld [vmem:[%s2373 + $0x1c] sm:$0xf]
                %2390 = vst [vmem:[%s2374 + $0x38] sm:$0xf] %v2389
                %v2391 = vld [vmem:[%s2373 + $0x20] sm:$0xf]
                %2392 = vst [vmem:[%s2374 + $0x40] sm:$0xf] %v2391
                %v2393 = vld [vmem:[%s2373 + $0x24] sm:$0xf]
                %2394 = vst [vmem:[%s2374 + $0x48] sm:$0xf] %v2393
                %v2395 = vld [vmem:[%s2373 + $0x28] sm:$0xf]
                %2396 = vst [vmem:[%s2374 + $0x50] sm:$0xf] %v2395
                %v2397 = vld [vmem:[%s2373 + $0x2c] sm:$0xf]
                %2398 = vst [vmem:[%s2374 + $0x58] sm:$0xf] %v2397
                %v2399 = vld [vmem:[%s2373 + $0x30] sm:$0xf]
                %2400 = vst [vmem:[%s2374 + $0x60] sm:$0xf] %v2399
                %v2401 = vld [vmem:[%s2373 + $0x34] sm:$0xf]
                %2402 = vst [vmem:[%s2374 + $0x68] sm:$0xf] %v2401
                %v2403 = vld [vmem:[%s2373 + $0x38] sm:$0xf]
                %2404 = vst [vmem:[%s2374 + $0x70] sm:$0xf] %v2403
                %v2405 = vld [vmem:[%s2373 + $0x3c] sm:$0xf]
                %2406 = vst [vmem:[%s2374 + $0x78] sm:$0xf] %v2405
              $region77: #{rnn_forward.2} parent=71 // loop_footer
                %s2372 = sadd.s32 1, %s2368
              $region78: #{rnn_forward.2} parent=71 // loop_footer_branch
                %2367 = sbr.rel target = $region74
              $region79: #{rnn_forward.2} parent=71 // loop_exit
                _
            $region72: #{rnn_forward.2} parent=63 // pred_fallthru
              _
          $region64: #{rnn_forward.2} parent=59 // pred_fallthru
            _
          %2458 = vnop
        $region60: #{rnn_forward.2} parent=39 // pred_fallthru
          _
      $region40: #{rnn_forward.2} parent=5 // pred_fallthru
        _
      %p2459 = scmp.le.s32.totalorder 2, %s17
      // Predicated region
      $region98: #{rnn_forward.2} parent=5 // pred_check
        %p2460 = pneg %p2459
      $region99: #{rnn_forward.2} parent=5 // pred_check_branch
        %2462 = sbr.rel (%p2460) target = $region101
      $region100: #{rnn_forward.2} parent=5 // pred_region
        %s2463 = ssub.s32 %s17, 2
        // Predicated region
        $region102: #{rnn_forward.2} parent=100 // pred_check
          %p2464 = pneg %p206
        $region103: #{rnn_forward.2} parent=100 // pred_check_branch
          %2466 = sbr.rel (%p2464) target = $region105
        $region104: #{rnn_forward.2} parent=100 // pred_region
          %s2467 = sand.u32 %s191, 1
          %s2468 = sand.u32 %s191, 1
          %s2469 = smul.addr %s2468, 64
          %s2470 = scalar_lea.vmem [#allocation9], %s2469
        $region105: #{rnn_forward.2} parent=100 // pred_fallthru
          _
      $region101: #{rnn_forward.2} parent=5 // pred_fallthru
        _
    $region6: #{rnn_forward.2} parent=1 // loop_footer
      %s21 = sadd.s32 1, %s17
    $region7: #{rnn_forward.2} parent=1 // loop_footer_branch
      %16 = sbr.rel target = $region3
    $region8: #{rnn_forward.2} parent=1 // loop_exit
      _
    %2471 = vsyncpa [#allocation5], 1
    %s2472 = scalar_lea.sflag [#allocation5], 1
    %2473 = vsyncpa %s2472, 1
    %2474 = vsyncpa [#allocation7], 1
    %s2475 = scalar_lea.sflag [#allocation7], 1
    %2476 = vsyncpa %s2475, 1

// kernel: rnn_forward.3
$region0: #{rnn_forward.3}
  #allocation0 [shape = 'u32[]', space=smem, size = 0x4, offset = 0x4, fixed_abs, tag = 'smem constant byte address 0x4 - core index']
  #allocation1 [shape = 'u32[144,128]{1,0:T(1,128)}', space=vmem, size = 0x12000, scoped, tag = 'internal scratch']
  #allocation2 [shape = 'f32[16,128]{1,0:T(8,128)}', space=vmem, size = 0x2000, scoped, tag = 'scratch operand']
  #allocation3 [shape = 'f32[16,128]{1,0:T(8,128)}', space=vmem, size = 0x2000, scoped, tag = 'scratch operand']
  #allocation4 [shape = 'f32[8,16,512]{2,1,0:T(8,128)}', space=vmem, size = 0x40000, scoped, tag = 'scratch operand']
  %s0 = inlined_call_operand.vmem [shape: bf16[8,16,256], index: 0, kind: input, shape index: {}]
  %s1 = inlined_call_operand.vmem [shape: bf16[2,256,512], index: 1, kind: input, shape index: {}]
  %s2 = inlined_call_operand.vmem [shape: bf16[2,128,512], index: 2, kind: input, shape index: {}]
  %s3 = inlined_call_operand.vmem [shape: f32[2,1,512], index: 3, kind: input, shape index: {}]
  %s4 = inlined_call_operand.vmem [shape: bf16[8,16,256], index: 4, kind: output, shape index: {}]
  %s5 = sld [smem:[#allocation0]]
  $region90: #{rnn_forward.3} parent=0
    _
  %s7 = ssub.s32 1, %s5
  %s8 = scalar_select 0, %s7, %s5
  $region1: #{rnn_forward.3} parent=0
    #allocation5 [shape = 'u8[65536]{0}', space=vmem, size = 0x10000, scoped, tag = 'output window, operand 0']
    loop: start=0, step=1, limit=4
    $region2: #{rnn_forward.3} parent=1 // loop_pre_header
      _
    $region3: #{rnn_forward.3} parent=1 // loop_header
      %s10 = sphi 0, %s14
      %p11 = scmp.ge.s32.totalorder %s10, 4
      %s17 = sphi 0, %s29
      %s18 = sphi 0, %s25
      %s19 = sphi 0, %s17
      %s20 = sphi 0, %s18
      %s21 = sphi 0, %s19
      %s22 = sphi 0, %s20
      %s40 = sphi 0, %s42
      %s43 = sphi 0, %s40
      %s44 = sphi 0, %s43
      %s60 = sphi 0, %s44
      %s66 = sphi 0, %s68
      %s69 = sphi 0, %s66
      %s70 = sphi 0, %s69
      %s86 = sphi 0, %s70
      %s92 = sphi 0, %s94
      %s95 = sphi 0, %s92
      %s96 = sphi 0, %s95
      %s112 = sphi 0, %s96
      %s118 = sphi 0, %s120
      %s121 = sphi 0, %s118
      %s122 = sphi 0, %s121
      %s138 = sphi 0, %s122
      %s154 = sphi 0, %s156
      %s157 = sphi 0, %s154
      %s158 = sphi 0, %s157
      %s174 = sphi 0, %s158
    $region4: #{rnn_forward.3} parent=1 // loop_header_branch
      %13 = sbr.rel (%p11) target = $region8
    $region5: #{rnn_forward.3} parent=1 // loop_body
      %s15 = ssub.s32 %s10, 1
      %s16 = ssub.s32 %s10, 2
      %s23 = sadd.s32 1, %s18
      %p24 = scmp.ge.s32.totalorder %s23, 1
      %s25 = scalar_select %p24, 0, %s23
      %s26 = sadd.s32 1, %s17
      %s27 = scalar_select %p24, %s26, %s17
      %p28 = scmp.ge.s32.totalorder %s27, 2
      %s29 = scalar_select %p28, 0, %s27
      %s30 = smul.u32 %s18, 2
      %s31 = ssub.s32 0, %s30
      %s32 = smul.u32 %s17, %s31
      %s33 = sadd.s32 %s18, %s32
      %s34 = smul.u32 %s25, 2
      %s35 = ssub.s32 0, %s34
      %s36 = smul.u32 %s29, %s35
      %s37 = sadd.s32 %s25, %s36
      %s38 = ssub.s32 %s33, %s37
      %p39 = scmp.eq.s32.totalorder %s38, 0
      %s41 = sadd.s32 %s40, 1
      %s42 = scalar_select %p39, %s40, %s41
      %p45 = pneg %p39
      %p46 = scmp.eq.s32.totalorder %s10, 1
      %p47 = por %p45, %p46
      %p48 = scmp.ne.s32.totalorder %s40, %s43
      %p49 = scmp.eq.s32.totalorder %s10, 0
      %p50 = por %p48, %p49
      %p51 = scmp.ne.s32.totalorder %s40, %s43
      %p52 = scmp.eq.s32.totalorder %s15, 1
      %p53 = por %p51, %p52
      %p54 = scmp.ne.s32.totalorder %s43, %s44
      %p55 = scmp.eq.s32.totalorder %s15, 0
      %p56 = por %p54, %p55
      %p57 = scmp.ne.s32.totalorder %s43, %s44
      %p58 = scmp.eq.s32.totalorder %s16, 1
      %p59 = por %p57, %p58
      %p61 = scmp.ne.s32.totalorder %s44, %s60
      %p62 = scmp.eq.s32.totalorder %s16, 0
      %p63 = por %p61, %p62
      %s64 = ssub.s32 %s17, %s29
      %p65 = scmp.eq.s32.totalorder %s64, 0
      %s67 = sadd.s32 %s66, 1
      %s68 = scalar_select %p65, %s66, %s67
      %p71 = pneg %p65
      %p72 = scmp.eq.s32.totalorder %s10, 1
      %p73 = por %p71, %p72
      %p74 = scmp.ne.s32.totalorder %s66, %s69
      %p75 = scmp.eq.s32.totalorder %s10, 0
      %p76 = por %p74, %p75
      %p77 = scmp.ne.s32.totalorder %s66, %s69
      %p78 = scmp.eq.s32.totalorder %s15, 1
      %p79 = por %p77, %p78
      %p80 = scmp.ne.s32.totalorder %s69, %s70
      %p81 = scmp.eq.s32.totalorder %s15, 0
      %p82 = por %p80, %p81
      %p83 = scmp.ne.s32.totalorder %s69, %s70
      %p84 = scmp.eq.s32.totalorder %s16, 1
      %p85 = por %p83, %p84
      %p87 = scmp.ne.s32.totalorder %s70, %s86
      %p88 = scmp.eq.s32.totalorder %s16, 0
      %p89 = por %p87, %p88
      %s90 = ssub.s32 %s17, %s29
      %p91 = scmp.eq.s32.totalorder %s90, 0
      %s93 = sadd.s32 %s92, 1
      %s94 = scalar_select %p91, %s92, %s93
      %p97 = pneg %p91
      %p98 = scmp.eq.s32.totalorder %s10, 1
      %p99 = por %p97, %p98
      %p100 = scmp.ne.s32.totalorder %s92, %s95
      %p101 = scmp.eq.s32.totalorder %s10, 0
      %p102 = por %p100, %p101
      %p103 = scmp.ne.s32.totalorder %s92, %s95
      %p104 = scmp.eq.s32.totalorder %s15, 1
      %p105 = por %p103, %p104
      %p106 = scmp.ne.s32.totalorder %s95, %s96
      %p107 = scmp.eq.s32.totalorder %s15, 0
      %p108 = por %p106, %p107
      %p109 = scmp.ne.s32.totalorder %s95, %s96
      %p110 = scmp.eq.s32.totalorder %s16, 1
      %p111 = por %p109, %p110
      %p113 = scmp.ne.s32.totalorder %s96, %s112
      %p114 = scmp.eq.s32.totalorder %s16, 0
      %p115 = por %p113, %p114
      %s116 = ssub.s32 %s17, %s29
      %p117 = scmp.eq.s32.totalorder %s116, 0
      %s119 = sadd.s32 %s118, 1
      %s120 = scalar_select %p117, %s118, %s119
      %p123 = pneg %p117
      %p124 = scmp.eq.s32.totalorder %s10, 1
      %p125 = por %p123, %p124
      %p126 = scmp.ne.s32.totalorder %s118, %s121
      %p127 = scmp.eq.s32.totalorder %s10, 0
      %p128 = por %p126, %p127
      %p129 = scmp.ne.s32.totalorder %s118, %s121
      %p130 = scmp.eq.s32.totalorder %s15, 1
      %p131 = por %p129, %p130
      %p132 = scmp.ne.s32.totalorder %s121, %s122
      %p133 = scmp.eq.s32.totalorder %s15, 0
      %p134 = por %p132, %p133
      %p135 = scmp.ne.s32.totalorder %s121, %s122
      %p136 = scmp.eq.s32.totalorder %s16, 1
      %p137 = por %p135, %p136
      %p139 = scmp.ne.s32.totalorder %s122, %s138
      %p140 = scmp.eq.s32.totalorder %s16, 0
      %p141 = por %p139, %p140
      %s142 = smul.u32 %s18, 2
      %s143 = ssub.s32 0, %s142
      %s144 = smul.u32 %s17, %s143
      %s145 = sadd.s32 %s18, %s144
      %s146 = smul.u32 %s25, 2
      %s147 = ssub.s32 0, %s146
      %s148 = smul.u32 %s29, %s147
      %s149 = sadd.s32 %s25, %s148
      %s150 = ssub.s32 %s145, %s149
      %s151 = ssub.s32 %s17, %s29
      %s152 = sor.u32 %s150, %s151
      %p153 = scmp.eq.s32.totalorder %s152, 0
      %s155 = sadd.s32 %s154, 1
      %s156 = scalar_select %p153, %s154, %s155
      %p159 = pneg %p153
      %p160 = scmp.eq.s32.totalorder %s10, 1
      %p161 = por %p159, %p160
      %p162 = scmp.ne.s32.totalorder %s154, %s157
      %p163 = scmp.eq.s32.totalorder %s10, 0
      %p164 = por %p162, %p163
      %p165 = scmp.ne.s32.totalorder %s154, %s157
      %p166 = scmp.eq.s32.totalorder %s15, 1
      %p167 = por %p165, %p166
      %p168 = scmp.ne.s32.totalorder %s157, %s158
      %p169 = scmp.eq.s32.totalorder %s15, 0
      %p170 = por %p168, %p169
      %p171 = scmp.ne.s32.totalorder %s157, %s158
      %p172 = scmp.eq.s32.totalorder %s16, 1
      %p173 = por %p171, %p172
      %p175 = scmp.ne.s32.totalorder %s158, %s174
      %p176 = scmp.eq.s32.totalorder %s16, 0
      %p177 = por %p175, %p176
      %p178 = scmp.le.s32.totalorder 1, %s10
      %p179 = scmp.lt.s32.totalorder %s10, 3
      %p180 = pnand %p178, %p179
      %p181 = pneg %p180
      // Predicated region
      $region9: #{rnn_forward.3} parent=5 // pred_check
        _
      $region10: #{rnn_forward.3} parent=5 // pred_check_branch
        %183 = sbr.rel (%p180) target = $region12
      $region11: #{rnn_forward.3} parent=5 // pred_region
        %s184 = ssub.s32 %s10, 1
      $region12: #{rnn_forward.3} parent=5 // pred_fallthru
        _
      %p185 = scmp.lt.s32.totalorder %s10, 2
      // Predicated region
      $region13: #{rnn_forward.3} parent=5 // pred_check
        %p186 = pneg %p185
      $region14: #{rnn_forward.3} parent=5 // pred_check_branch
        %188 = sbr.rel (%p186) target = $region16
      $region15: #{rnn_forward.3} parent=5 // pred_region
        // Predicated region
        $region17: #{rnn_forward.3} parent=15 // pred_check
          %p189 = pneg %p50
        $region18: #{rnn_forward.3} parent=15 // pred_check_branch
          %191 = sbr.rel (%p189) target = $region20
        $region19: #{rnn_forward.3} parent=15 // pred_region
          %s192 = smul.u32 %s18, 2
          %s193 = ssub.s32 0, %s192
          %s194 = smul.u32 %s17, %s193
          %s195 = sadd.s32 %s18, %s194
          %s196 = smul.u32 8, %s195
          %p197 = scmp.lt.s32.totalorder %s196, 7
          %s198 = scalar_select %p197, %s196, 7
          %s199 = smul.addr %s198, 4
          %s200 = smul.addr %s199, 4
          %s201 = scalar_lea.vmem %s0, %s200
          %s202 = smul.u32 %s18, 2
          %s203 = ssub.s32 0, %s202
          %s204 = smul.u32 %s17, %s203
          %s205 = sadd.s32 %s18, %s204
          %s206 = smul.u32 8, %s205
        $region20: #{rnn_forward.3} parent=15 // pred_fallthru
          _
        // Predicated region
        $region21: #{rnn_forward.3} parent=15 // pred_check
          %p207 = pneg %p76
        $region22: #{rnn_forward.3} parent=15 // pred_check_branch
          %209 = sbr.rel (%p207) target = $region24
        $region23: #{rnn_forward.3} parent=15 // pred_region
          %p210 = scmp.lt.s32.totalorder %s17, 1
          %s211 = scalar_select %p210, %s17, 1
          %s212 = smul.addr %s211, 128
          %s213 = smul.addr %s212, 4
          %s214 = scalar_lea.vmem %s1, %s213
        $region24: #{rnn_forward.3} parent=15 // pred_fallthru
          _
        // Predicated region
        $region25: #{rnn_forward.3} parent=15 // pred_check
          %p215 = pneg %p102
        $region26: #{rnn_forward.3} parent=15 // pred_check_branch
          %217 = sbr.rel (%p215) target = $region28
        $region27: #{rnn_forward.3} parent=15 // pred_region
          %p218 = scmp.lt.s32.totalorder %s17, 1
          %s219 = scalar_select %p218, %s17, 1
          %s220 = smul.addr %s219, 64
          %s221 = smul.addr %s220, 4
          %s222 = scalar_lea.vmem %s2, %s221
        $region28: #{rnn_forward.3} parent=15 // pred_fallthru
          _
        // Predicated region
        $region29: #{rnn_forward.3} parent=15 // pred_check
          %p223 = pneg %p128
        $region30: #{rnn_forward.3} parent=15 // pred_check_branch
          %225 = sbr.rel (%p223) target = $region32
        $region31: #{rnn_forward.3} parent=15 // pred_region
          %p226 = scmp.lt.s32.totalorder %s17, 1
          %s227 = scalar_select %p226, %s17, 1
          %s228 = smul.addr %s227, 4
          %s229 = scalar_lea.vmem %s3, %s228
        $region32: #{rnn_forward.3} parent=15 // pred_fallthru
          _
      $region16: #{rnn_forward.3} parent=5 // pred_fallthru
        _
      %p230 = scmp.le.s32.totalorder 1, %s10
      %p231 = scmp.lt.s32.totalorder %s10, 3
      %p232 = pnand %p230, %p231
      %p233 = pneg %p232
      // Predicated region
      $region33: #{rnn_forward.3} parent=5 // pred_check
        _
      $region34: #{rnn_forward.3} parent=5 // pred_check_branch
        %235 = sbr.rel (%p232) target = $region36
      $region35: #{rnn_forward.3} parent=5 // pred_region
        %s236 = ssub.s32 %s10, 1
        %s237 = smul.u32 %s20, 2
        %s238 = ssub.s32 0, %s237
        %s239 = smul.u32 %s19, %s238
        %s240 = sadd.s32 %s20, %s239
        %s241 = smul.u32 8, %s240
        %p242 = scmp.lt.s32.totalorder %s241, 7
        %s243 = scalar_select %p242, %s241, 7
        %s244 = smul.addr %s243, 4
        %s245 = smul.addr %s244, 4
        %s246 = scalar_lea.vmem %s0, %s245
        %p247 = pneg %p56
        %p248 = pneg %p53
        %p249 = scmp.lt.s32.totalorder %s19, 1
        %s250 = scalar_select %p249, %s19, 1
        %s251 = smul.addr %s250, 128
        %s252 = smul.addr %s251, 4
        %s253 = scalar_lea.vmem %s1, %s252
        %p254 = pneg %p82
        %p255 = pneg %p79
        %p256 = scmp.lt.s32.totalorder %s19, 1
        %s257 = scalar_select %p256, %s19, 1
        %s258 = smul.addr %s257, 64
        %s259 = smul.addr %s258, 4
        %s260 = scalar_lea.vmem %s2, %s259
        %p261 = pneg %p108
        %p262 = pneg %p105
        %p263 = scmp.lt.s32.totalorder %s19, 1
        %s264 = scalar_select %p263, %s19, 1
        %s265 = smul.addr %s264, 4
        %s266 = scalar_lea.vmem %s3, %s265
        %p267 = pneg %p134
        %p268 = pneg %p131
        %p269 = pneg %p170
        %p270 = pneg %p167
        %s271 = sand.u32 %s157, 1
        %s272 = sand.u32 %s157, 1
        %s273 = smul.addr %s272, 64
        %s274 = scalar_lea.vmem [#allocation5], %s273
        %s275 = smul.u32 %s20, 2
        %s276 = ssub.s32 0, %s275
        %s277 = smul.u32 %s19, %s276
        %s278 = sadd.s32 %s20, %s277
        %s279 = smul.u32 8, %s278
        %p280 = scmp.lt.s32.totalorder %s279, 7
        %s281 = scalar_select %p280, %s279, 7
        %s282 = smul.addr %s281, 4
        %s283 = smul.addr %s282, 4
        %s284 = scalar_lea.vmem %s0, %s283
        %s285 = smul.u32 %s20, 2
        %s286 = ssub.s32 0, %s285
        %s287 = smul.u32 %s19, %s286
        %s288 = sadd.s32 %s20, %s287
        %s289 = smul.u32 8, %s288
        %p290 = scmp.lt.s32.totalorder %s19, 1
        %s291 = scalar_select %p290, %s19, 1
        %s292 = smul.addr %s291, 128
        %s293 = smul.addr %s292, 4
        %s294 = scalar_lea.vmem %s1, %s293
        %p295 = scmp.lt.s32.totalorder %s19, 1
        %s296 = scalar_select %p295, %s19, 1
        %s297 = smul.addr %s296, 64
        %s298 = smul.addr %s297, 4
        %s299 = scalar_lea.vmem %s2, %s298
        %p300 = scmp.lt.s32.totalorder %s19, 1
        %s301 = scalar_select %p300, %s19, 1
        %s302 = smul.addr %s301, 4
        %s303 = scalar_lea.vmem %s3, %s302
        %s304 = smul.u32 %s20, 2
        %s305 = ssub.s32 0, %s304
        %s306 = smul.u32 %s19, %s305
        %s307 = sadd.s32 %s20, %s306
        %s308 = smul.u32 8, %s307
        %p310 = scmp.eq.s32.totalorder %s20, 0
        // Predicated region
        $region37: #{rnn_forward.3} parent=35 // pred_check
          %p311 = pneg %p310
        $region38: #{rnn_forward.3} parent=35 // pred_check_branch
          %313 = sbr.rel (%p311) target = $region40
        $region39: #{rnn_forward.3} parent=35 // pred_region
          %314 = vst [vmem:[#allocation2] sm:$0xff] 0.0
          %315 = vst [vmem:[#allocation2 + $0x8] sm:$0xff] 0.0
          %316 = vst [vmem:[#allocation3] sm:$0xff] 0.0
          %317 = vst [vmem:[#allocation3 + $0x8] sm:$0xff] 0.0
        $region40: #{rnn_forward.3} parent=35 // pred_fallthru
          _
        %v318 = vld [vmem:[%s284] sm:$0xff]
        %v319 = vld [vmem:[%s284 + $0x8] sm:$0xff]
        %v320 = vld [vmem:[%s284 + $0x10] sm:$0xff]
        %v321 = vld [vmem:[%s284 + $0x18] sm:$0xff]
        %v322 = vld [vmem:[%s284 + $0x20] sm:$0xff]
        %v323 = vld [vmem:[%s284 + $0x28] sm:$0xff]
        %v324 = vld [vmem:[%s284 + $0x30] sm:$0xff]
        %v325 = vld [vmem:[%s284 + $0x38] sm:$0xff]
        %v326 = vld [vmem:[%s284 + $0x40] sm:$0xff]
        %v327 = vld [vmem:[%s284 + $0x48] sm:$0xff]
        %v328 = vld [vmem:[%s284 + $0x50] sm:$0xff]
        %v329 = vld [vmem:[%s284 + $0x58] sm:$0xff]
        %v330 = vld [vmem:[%s284 + $0x60] sm:$0xff]
        %v331 = vld [vmem:[%s284 + $0x68] sm:$0xff]
        %v332 = vld [vmem:[%s284 + $0x70] sm:$0xff]
        %v333 = vld [vmem:[%s284 + $0x78] sm:$0xff]
        %v334 = vld [vmem:[%s294] sm:$0xff]
        %v335 = vld [vmem:[%s294 + $0x8] sm:$0xff]
        %v336 = vld [vmem:[%s294 + $0x10] sm:$0xff]
        %v337 = vld [vmem:[%s294 + $0x18] sm:$0xff]
        %v338 = vld [vmem:[%s294 + $0x20] sm:$0xff]
        %v339 = vld [vmem:[%s294 + $0x28] sm:$0xff]
        %v340 = vld [vmem:[%s294 + $0x30] sm:$0xff]
        %v341 = vld [vmem:[%s294 + $0x38] sm:$0xff]
        %v342 = vld [vmem:[%s294 + $0x40] sm:$0xff]
        %v343 = vld [vmem:[%s294 + $0x48] sm:$0xff]
        %v344 = vld [vmem:[%s294 + $0x50] sm:$0xff]
        %v345 = vld [vmem:[%s294 + $0x58] sm:$0xff]
        %v346 = vld [vmem:[%s294 + $0x60] sm:$0xff]
        %v347 = vld [vmem:[%s294 + $0x68] sm:$0xff]
        %v348 = vld [vmem:[%s294 + $0x70] sm:$0xff]
        %v349 = vld [vmem:[%s294 + $0x78] sm:$0xff]
        %v350 = vld [vmem:[%s294 + $0x80] sm:$0xff]
        %v351 = vld [vmem:[%s294 + $0x88] sm:$0xff]
        %v352 = vld [vmem:[%s294 + $0x90] sm:$0xff]
        %v353 = vld [vmem:[%s294 + $0x98] sm:$0xff]
        %v354 = vld [vmem:[%s294 + $0xa0] sm:$0xff]
        %v355 = vld [vmem:[%s294 + $0xa8] sm:$0xff]
        %v356 = vld [vmem:[%s294 + $0xb0] sm:$0xff]
        %v357 = vld [vmem:[%s294 + $0xb8] sm:$0xff]
        %v358 = vld [vmem:[%s294 + $0xc0] sm:$0xff]
        %v359 = vld [vmem:[%s294 + $0xc8] sm:$0xff]
        %v360 = vld [vmem:[%s294 + $0xd0] sm:$0xff]
        %v361 = vld [vmem:[%s294 + $0xd8] sm:$0xff]
        %v362 = vld [vmem:[%s294 + $0xe0] sm:$0xff]
        %v363 = vld [vmem:[%s294 + $0xe8] sm:$0xff]
        %v364 = vld [vmem:[%s294 + $0xf0] sm:$0xff]
        %v365 = vld [vmem:[%s294 + $0xf8] sm:$0xff]
        %v366 = vld [vmem:[%s294 + $0x100] sm:$0xff]
        %v367 = vld [vmem:[%s294 + $0x108] sm:$0xff]
        %v368 = vld [vmem:[%s294 + $0x110] sm:$0xff]
        %v369 = vld [vmem:[%s294 + $0x118] sm:$0xff]
        %v370 = vld [vmem:[%s294 + $0x120] sm:$0xff]
        %v371 = vld [vmem:[%s294 + $0x128] sm:$0xff]
        %v372 = vld [vmem:[%s294 + $0x130] sm:$0xff]
        %v373 = vld [vmem:[%s294 + $0x138] sm:$0xff]
        %v374 = vld [vmem:[%s294 + $0x140] sm:$0xff]
        %v375 = vld [vmem:[%s294 + $0x148] sm:$0xff]
        %v376 = vld [vmem:[%s294 + $0x150] sm:$0xff]
        %v377 = vld [vmem:[%s294 + $0x158] sm:$0xff]
        %v378 = vld [vmem:[%s294 + $0x160] sm:$0xff]
        %v379 = vld [vmem:[%s294 + $0x168] sm:$0xff]
        %v380 = vld [vmem:[%s294 + $0x170] sm:$0xff]
        %v381 = vld [vmem:[%s294 + $0x178] sm:$0xff]
        %v382 = vld [vmem:[%s294 + $0x180] sm:$0xff]
        %v383 = vld [vmem:[%s294 + $0x188] sm:$0xff]
        %v384 = vld [vmem:[%s294 + $0x190] sm:$0xff]
        %v385 = vld [vmem:[%s294 + $0x198] sm:$0xff]
        %v386 = vld [vmem:[%s294 + $0x1a0] sm:$0xff]
        %v387 = vld [vmem:[%s294 + $0x1a8] sm:$0xff]
        %v388 = vld [vmem:[%s294 + $0x1b0] sm:$0xff]
        %v389 = vld [vmem:[%s294 + $0x1b8] sm:$0xff]
        %v390 = vld [vmem:[%s294 + $0x1c0] sm:$0xff]
        %v391 = vld [vmem:[%s294 + $0x1c8] sm:$0xff]
        %v392 = vld [vmem:[%s294 + $0x1d0] sm:$0xff]
        %v393 = vld [vmem:[%s294 + $0x1d8] sm:$0xff]
        %v394 = vld [vmem:[%s294 + $0x1e0] sm:$0xff]
        %v395 = vld [vmem:[%s294 + $0x1e8] sm:$0xff]
        %v396 = vld [vmem:[%s294 + $0x1f0] sm:$0xff]
        %v397 = vld [vmem:[%s294 + $0x1f8] sm:$0xff]
        %v414 = vunpack.c.l.b16 %v318
        %v415 = vunpack.c.h.b16 %v318
        %v416 = vunpack.c.l.b16 %v319
        %v417 = vunpack.c.h.b16 %v319
        %v418 = vunpack.c.l.b16 %v320
        %v419 = vunpack.c.h.b16 %v320
        %v420 = vunpack.c.l.b16 %v321
        %v421 = vunpack.c.h.b16 %v321
        %v422 = vunpack.c.l.b16 %v322
        %v423 = vunpack.c.h.b16 %v322
        %v424 = vunpack.c.l.b16 %v323
        %v425 = vunpack.c.h.b16 %v323
        %v426 = vunpack.c.l.b16 %v324
        %v427 = vunpack.c.h.b16 %v324
        %v428 = vunpack.c.l.b16 %v325
        %v429 = vunpack.c.h.b16 %v325
        %v430 = vunpack.c.l.b16 %v326
        %v431 = vunpack.c.h.b16 %v326
        %v432 = vunpack.c.l.b16 %v327
        %v433 = vunpack.c.h.b16 %v327
        %v434 = vunpack.c.l.b16 %v328
        %v435 = vunpack.c.h.b16 %v328
        %v436 = vunpack.c.l.b16 %v329
        %v437 = vunpack.c.h.b16 %v329
        %v438 = vunpack.c.l.b16 %v330
        %v439 = vunpack.c.h.b16 %v330
        %v440 = vunpack.c.l.b16 %v331
        %v441 = vunpack.c.h.b16 %v331
        %v442 = vunpack.c.l.b16 %v332
        %v443 = vunpack.c.h.b16 %v332
        %v444 = vunpack.c.l.b16 %v333
        %v445 = vunpack.c.h.b16 %v333
        %v446 = vpack.c.b16 %v416, %v414
        %v447 = vpack.c.b16 %v417, %v415
        %v448 = vpack.c.b16 %v420, %v418
        %v449 = vpack.c.b16 %v421, %v419
        %v450 = vpack.c.b16 %v424, %v422
        %v451 = vpack.c.b16 %v425, %v423
        %v452 = vpack.c.b16 %v428, %v426
        %v453 = vpack.c.b16 %v429, %v427
        %v454 = vpack.c.b16 %v432, %v430
        %v455 = vpack.c.b16 %v433, %v431
        %v456 = vpack.c.b16 %v436, %v434
        %v457 = vpack.c.b16 %v437, %v435
        %v458 = vpack.c.b16 %v440, %v438
        %v459 = vpack.c.b16 %v441, %v439
        %v460 = vpack.c.b16 %v444, %v442
        %v461 = vpack.c.b16 %v445, %v443
        %v542 = vunpack.c.l.b16 %v334
        %v543 = vunpack.c.h.b16 %v334
        %v544 = vunpack.c.l.b16 %v335
        %v545 = vunpack.c.h.b16 %v335
        %v546 = vunpack.c.l.b16 %v336
        %v547 = vunpack.c.h.b16 %v336
        %v548 = vunpack.c.l.b16 %v337
        %v549 = vunpack.c.h.b16 %v337
        %v550 = vunpack.c.l.b16 %v338
        %v551 = vunpack.c.h.b16 %v338
        %v552 = vunpack.c.l.b16 %v339
        %v553 = vunpack.c.h.b16 %v339
        %v554 = vunpack.c.l.b16 %v340
        %v555 = vunpack.c.h.b16 %v340
        %v556 = vunpack.c.l.b16 %v341
        %v557 = vunpack.c.h.b16 %v341
        %v558 = vunpack.c.l.b16 %v342
        %v559 = vunpack.c.h.b16 %v342
        %v560 = vunpack.c.l.b16 %v343
        %v561 = vunpack.c.h.b16 %v343
        %v562 = vunpack.c.l.b16 %v344
        %v563 = vunpack.c.h.b16 %v344
        %v564 = vunpack.c.l.b16 %v345
        %v565 = vunpack.c.h.b16 %v345
        %v566 = vunpack.c.l.b16 %v346
        %v567 = vunpack.c.h.b16 %v346
        %v568 = vunpack.c.l.b16 %v347
        %v569 = vunpack.c.h.b16 %v347
        %v570 = vunpack.c.l.b16 %v348
        %v571 = vunpack.c.h.b16 %v348
        %v572 = vunpack.c.l.b16 %v349
        %v573 = vunpack.c.h.b16 %v349
        %v574 = vunpack.c.l.b16 %v350
        %v575 = vunpack.c.h.b16 %v350
        %v576 = vunpack.c.l.b16 %v351
        %v577 = vunpack.c.h.b16 %v351
        %v578 = vunpack.c.l.b16 %v352
        %v579 = vunpack.c.h.b16 %v352
        %v580 = vunpack.c.l.b16 %v353
        %v581 = vunpack.c.h.b16 %v353
        %v582 = vunpack.c.l.b16 %v354
        %v583 = vunpack.c.h.b16 %v354
        %v584 = vunpack.c.l.b16 %v355
        %v585 = vunpack.c.h.b16 %v355
        %v586 = vunpack.c.l.b16 %v356
        %v587 = vunpack.c.h.b16 %v356
        %v588 = vunpack.c.l.b16 %v357
        %v589 = vunpack.c.h.b16 %v357
        %v590 = vunpack.c.l.b16 %v358
        %v591 = vunpack.c.h.b16 %v358
        %v592 = vunpack.c.l.b16 %v359
        %v593 = vunpack.c.h.b16 %v359
        %v594 = vunpack.c.l.b16 %v360
        %v595 = vunpack.c.h.b16 %v360
        %v596 = vunpack.c.l.b16 %v361
        %v597 = vunpack.c.h.b16 %v361
        %v598 = vunpack.c.l.b16 %v362
        %v599 = vunpack.c.h.b16 %v362
        %v600 = vunpack.c.l.b16 %v363
        %v601 = vunpack.c.h.b16 %v363
        %v602 = vunpack.c.l.b16 %v364
        %v603 = vunpack.c.h.b16 %v364
        %v604 = vunpack.c.l.b16 %v365
        %v605 = vunpack.c.h.b16 %v365
        %v606 = vunpack.c.l.b16 %v366
        %v607 = vunpack.c.h.b16 %v366
        %v608 = vunpack.c.l.b16 %v367
        %v609 = vunpack.c.h.b16 %v367
        %v610 = vunpack.c.l.b16 %v368
        %v611 = vunpack.c.h.b16 %v368
        %v612 = vunpack.c.l.b16 %v369
        %v613 = vunpack.c.h.b16 %v369
        %v614 = vunpack.c.l.b16 %v370
        %v615 = vunpack.c.h.b16 %v370
        %v616 = vunpack.c.l.b16 %v371
        %v617 = vunpack.c.h.b16 %v371
        %v618 = vunpack.c.l.b16 %v372
        %v619 = vunpack.c.h.b16 %v372
        %v620 = vunpack.c.l.b16 %v373
        %v621 = vunpack.c.h.b16 %v373
        %v622 = vunpack.c.l.b16 %v374
        %v623 = vunpack.c.h.b16 %v374
        %v624 = vunpack.c.l.b16 %v375
        %v625 = vunpack.c.h.b16 %v375
        %v626 = vunpack.c.l.b16 %v376
        %v627 = vunpack.c.h.b16 %v376
        %v628 = vunpack.c.l.b16 %v377
        %v629 = vunpack.c.h.b16 %v377
        %v630 = vunpack.c.l.b16 %v378
        %v631 = vunpack.c.h.b16 %v378
        %v632 = vunpack.c.l.b16 %v379
        %v633 = vunpack.c.h.b16 %v379
        %v634 = vunpack.c.l.b16 %v380
        %v635 = vunpack.c.h.b16 %v380
        %v636 = vunpack.c.l.b16 %v381
        %v637 = vunpack.c.h.b16 %v381
        %v638 = vunpack.c.l.b16 %v382
        %v639 = vunpack.c.h.b16 %v382
        %v640 = vunpack.c.l.b16 %v383
        %v641 = vunpack.c.h.b16 %v383
        %v642 = vunpack.c.l.b16 %v384
        %v643 = vunpack.c.h.b16 %v384
        %v644 = vunpack.c.l.b16 %v385
        %v645 = vunpack.c.h.b16 %v385
        %v646 = vunpack.c.l.b16 %v386
        %v647 = vunpack.c.h.b16 %v386
        %v648 = vunpack.c.l.b16 %v387
        %v649 = vunpack.c.h.b16 %v387
        %v650 = vunpack.c.l.b16 %v388
        %v651 = vunpack.c.h.b16 %v388
        %v652 = vunpack.c.l.b16 %v389
        %v653 = vunpack.c.h.b16 %v389
        %v654 = vunpack.c.l.b16 %v390
        %v655 = vunpack.c.h.b16 %v390
        %v656 = vunpack.c.l.b16 %v391
        %v657 = vunpack.c.h.b16 %v391
        %v658 = vunpack.c.l.b16 %v392
        %v659 = vunpack.c.h.b16 %v392
        %v660 = vunpack.c.l.b16 %v393
        %v661 = vunpack.c.h.b16 %v393
        %v662 = vunpack.c.l.b16 %v394
        %v663 = vunpack.c.h.b16 %v394
        %v664 = vunpack.c.l.b16 %v395
        %v665 = vunpack.c.h.b16 %v395
        %v666 = vunpack.c.l.b16 %v396
        %v667 = vunpack.c.h.b16 %v396
        %v668 = vunpack.c.l.b16 %v397
        %v669 = vunpack.c.h.b16 %v397
        %v670 = vpack.c.b16 %v546, %v542
        %v671 = vpack.c.b16 %v547, %v543
        %v672 = vpack.c.b16 %v548, %v544
        %v673 = vpack.c.b16 %v549, %v545
        %v674 = vpack.c.b16 %v554, %v550
        %v675 = vpack.c.b16 %v555, %v551
        %v676 = vpack.c.b16 %v556, %v552
        %v677 = vpack.c.b16 %v557, %v553
        %v678 = vpack.c.b16 %v562, %v558
        %v679 = vpack.c.b16 %v563, %v559
        %v680 = vpack.c.b16 %v564, %v560
        %v681 = vpack.c.b16 %v565, %v561
        %v682 = vpack.c.b16 %v570, %v566
        %v683 = vpack.c.b16 %v571, %v567
        %v684 = vpack.c.b16 %v572, %v568
        %v685 = vpack.c.b16 %v573, %v569
        %v686 = vpack.c.b16 %v578, %v574
        %v687 = vpack.c.b16 %v579, %v575
        %v688 = vpack.c.b16 %v580, %v576
        %v689 = vpack.c.b16 %v581, %v577
        %v690 = vpack.c.b16 %v586, %v582
        %v691 = vpack.c.b16 %v587, %v583
        %v692 = vpack.c.b16 %v588, %v584
        %v693 = vpack.c.b16 %v589, %v585
        %v694 = vpack.c.b16 %v594, %v590
        %v695 = vpack.c.b16 %v595, %v591
        %v696 = vpack.c.b16 %v596, %v592
        %v697 = vpack.c.b16 %v597, %v593
        %v698 = vpack.c.b16 %v602, %v598
        %v699 = vpack.c.b16 %v603, %v599
        %v700 = vpack.c.b16 %v604, %v600
        %v701 = vpack.c.b16 %v605, %v601
        %v702 = vpack.c.b16 %v610, %v606
        %v703 = vpack.c.b16 %v611, %v607
        %v704 = vpack.c.b16 %v612, %v608
        %v705 = vpack.c.b16 %v613, %v609
        %v706 = vpack.c.b16 %v618, %v614
        %v707 = vpack.c.b16 %v619, %v615
        %v708 = vpack.c.b16 %v620, %v616
        %v709 = vpack.c.b16 %v621, %v617
        %v710 = vpack.c.b16 %v626, %v622
        %v711 = vpack.c.b16 %v627, %v623
        %v712 = vpack.c.b16 %v628, %v624
        %v713 = vpack.c.b16 %v629, %v625
        %v714 = vpack.c.b16 %v634, %v630
        %v715 = vpack.c.b16 %v635, %v631
        %v716 = vpack.c.b16 %v636, %v632
        %v717 = vpack.c.b16 %v637, %v633
        %v718 = vpack.c.b16 %v642, %v638
        %v719 = vpack.c.b16 %v643, %v639
        %v720 = vpack.c.b16 %v644, %v640
        %v721 = vpack.c.b16 %v645, %v641
        %v722 = vpack.c.b16 %v650, %v646
        %v723 = vpack.c.b16 %v651, %v647
        %v724 = vpack.c.b16 %v652, %v648
        %v725 = vpack.c.b16 %v653, %v649
        %v726 = vpack.c.b16 %v658, %v654
        %v727 = vpack.c.b16 %v659, %v655
        %v728 = vpack.c.b16 %v660, %v656
        %v729 = vpack.c.b16 %v661, %v657
        %v730 = vpack.c.b16 %v666, %v662
        %v731 = vpack.c.b16 %v667, %v663
        %v732 = vpack.c.b16 %v668, %v664
        %v733 = vpack.c.b16 %v669, %v665
        %798 = vmatprep.subr.bf16.mxu0 %v671
        %799 = vmatpush1.bf16.msra.mxu0 %v670
        %800 = vmatprep.subr.bf16.mxu0 %v675
        %801 = vmatpush1.bf16.msra.mxu0 %v674
        %802 = vmatprep.subr.bf16.mxu0 %v679
        %803 = vmatpush1.bf16.msra.mxu0 %v678
        %804 = vmatprep.subr.bf16.mxu0 %v683
        %805 = vmatpush1.bf16.msra.mxu0 %v682
        %806 = vmatprep.subr.bf16.mxu0 %v687
        %807 = vmatpush1.bf16.msra.mxu0 %v686
        %808 = vmatprep.subr.bf16.mxu0 %v691
        %809 = vmatpush1.bf16.msra.mxu0 %v690
        %810 = vmatprep.subr.bf16.mxu0 %v695
        %811 = vmatpush1.bf16.msra.mxu0 %v694
        %812 = vmatprep.subr.bf16.mxu0 %v699
        %813 = vmatpush1.bf16.msra.mxu0 %v698
        %814 = vmatprep.subr.bf16.mxu0 %v703
        %815 = vmatpush1.bf16.msra.mxu0 %v702
        %816 = vmatprep.subr.bf16.mxu0 %v707
        %817 = vmatpush1.bf16.msra.mxu0 %v706
        %818 = vmatprep.subr.bf16.mxu0 %v711
        %819 = vmatpush1.bf16.msra.mxu0 %v710
        %820 = vmatprep.subr.bf16.mxu0 %v715
        %821 = vmatpush1.bf16.msra.mxu0 %v714
        %822 = vmatprep.subr.bf16.mxu0 %v719
        %823 = vmatpush1.bf16.msra.mxu0 %v718
        %824 = vmatprep.subr.bf16.mxu0 %v723
        %825 = vmatpush1.bf16.msra.mxu0 %v722
        %826 = vmatprep.subr.bf16.mxu0 %v727
        %827 = vmatpush1.bf16.msra.mxu0 %v726
        %828 = vmatprep.subr.bf16.mxu0 %v731
        %829 = vmatpush1.bf16.msra.mxu0 %v730
        %830 = vmatprep.mubr.bf16.mxu0 %v447
        %831 = vmatmul.mubr.bf16.gmra.mrb[0].mxu0 %v446
        %v832 = vpop.f32.mrb[0].mxu0
        %v833 = vadd.f32 0.0, %v832
        %v834 = vpop.f32.mrb[0].mxu0
        %v835 = vadd.f32 0.0, %v834
        %v836 = vpop.f32.mrb[0].mxu0
        %v837 = vadd.f32 0.0, %v836
        %v838 = vpop.f32.mrb[0].mxu0
        %v839 = vadd.f32 0.0, %v838
        %840 = vmatprep.mubr.bf16.mxu0 %v449
        %841 = vmatmul.mubr.bf16.gmra.mrb[0].mxu0 %v448
        %v842 = vpop.f32.mrb[0].mxu0
        %v843 = vadd.f32 0.0, %v842
        %v844 = vpop.f32.mrb[0].mxu0
        %v845 = vadd.f32 0.0, %v844
        %v846 = vpop.f32.mrb[0].mxu0
        %v847 = vadd.f32 0.0, %v846
        %v848 = vpop.f32.mrb[0].mxu0
        %v849 = vadd.f32 0.0, %v848
        %850 = vmatprep.mubr.bf16.mxu0 %v451
        %851 = vmatmul.mubr.bf16.gmra.mrb[0].mxu0 %v450
        %v852 = vpop.f32.mrb[0].mxu0
        %v853 = vadd.f32 0.0, %v852
        %v854 = vpop.f32.mrb[0].mxu0
        %v855 = vadd.f32 0.0, %v854
        %v856 = vpop.f32.mrb[0].mxu0
        %v857 = vadd.f32 0.0, %v856
        %v858 = vpop.f32.mrb[0].mxu0
        %v859 = vadd.f32 0.0, %v858
        %860 = vmatprep.mubr.bf16.mxu0 %v453
        %861 = vmatmul.mubr.bf16.gmra.mrb[0].mxu0 %v452
        %v862 = vpop.f32.mrb[0].mxu0
        %v863 = vadd.f32 0.0, %v862
        %v864 = vpop.f32.mrb[0].mxu0
        %v865 = vadd.f32 0.0, %v864
        %v866 = vpop.f32.mrb[0].mxu0
        %v867 = vadd.f32 0.0, %v866
        %v868 = vpop.f32.mrb[0].mxu0
        %v869 = vadd.f32 0.0, %v868
        %870 = vmatprep.mubr.bf16.mxu0 %v455
        %871 = vmatmul.mubr.bf16.gmra.mrb[0].mxu0 %v454
        %v872 = vpop.f32.mrb[0].mxu0
        %v873 = vadd.f32 0.0, %v872
        %v874 = vpop.f32.mrb[0].mxu0
        %v875 = vadd.f32 0.0, %v874
        %v876 = vpop.f32.mrb[0].mxu0
        %v877 = vadd.f32 0.0, %v876
        %v878 = vpop.f32.mrb[0].mxu0
        %v879 = vadd.f32 0.0, %v878
        %880 = vmatprep.mubr.bf16.mxu0 %v457
        %881 = vmatmul.mubr.bf16.gmra.mrb[0].mxu0 %v456
        %v882 = vpop.f32.mrb[0].mxu0
        %v883 = vadd.f32 0.0, %v882
        %v884 = vpop.f32.mrb[0].mxu0
        %v885 = vadd.f32 0.0, %v884
        %v886 = vpop.f32.mrb[0].mxu0
        %v887 = vadd.f32 0.0, %v886
        %v888 = vpop.f32.mrb[0].mxu0
        %v889 = vadd.f32 0.0, %v888
        %890 = vmatprep.mubr.bf16.mxu0 %v459
        %891 = vmatmul.mubr.bf16.gmra.mrb[0].mxu0 %v458
        %v892 = vpop.f32.mrb[0].mxu0
        %v893 = vadd.f32 0.0, %v892
        %v894 = vpop.f32.mrb[0].mxu0
        %v895 = vadd.f32 0.0, %v894
        %v896 = vpop.f32.mrb[0].mxu0
        %v897 = vadd.f32 0.0, %v896
        %v898 = vpop.f32.mrb[0].mxu0
        %v899 = vadd.f32 0.0, %v898
        %900 = vmatprep.mubr.bf16.mxu0 %v461
        %901 = vmatmul.mubr.bf16.gmra.mrb[0].mxu0 %v460
        %v902 = vpop.f32.mrb[0].mxu0
        %v903 = vadd.f32 0.0, %v902
        %v904 = vpop.f32.mrb[0].mxu0
        %v905 = vadd.f32 0.0, %v904
        %v906 = vpop.f32.mrb[0].mxu0
        %v907 = vadd.f32 0.0, %v906
        %v908 = vpop.f32.mrb[0].mxu0
        %v909 = vadd.f32 0.0, %v908
        %910 = vdwg.mxu0
        %911 = vmatprep.subr.bf16.mxu0 %v673
        %912 = vmatpush1.bf16.msra.mxu0 %v672
        %913 = vmatprep.subr.bf16.mxu0 %v677
        %914 = vmatpush1.bf16.msra.mxu0 %v676
        %915 = vmatprep.subr.bf16.mxu0 %v681
        %916 = vmatpush1.bf16.msra.mxu0 %v680
        %917 = vmatprep.subr.bf16.mxu0 %v685
        %918 = vmatpush1.bf16.msra.mxu0 %v684
        %919 = vmatprep.subr.bf16.mxu0 %v689
        %920 = vmatpush1.bf16.msra.mxu0 %v688
        %921 = vmatprep.subr.bf16.mxu0 %v693
        %922 = vmatpush1.bf16.msra.mxu0 %v692
        %923 = vmatprep.subr.bf16.mxu0 %v697
        %924 = vmatpush1.bf16.msra.mxu0 %v696
        %925 = vmatprep.subr.bf16.mxu0 %v701
        %926 = vmatpush1.bf16.msra.mxu0 %v700
        %927 = vmatprep.subr.bf16.mxu0 %v705
        %928 = vmatpush1.bf16.msra.mxu0 %v704
        %929 = vmatprep.subr.bf16.mxu0 %v709
        %930 = vmatpush1.bf16.msra.mxu0 %v708
        %931 = vmatprep.subr.bf16.mxu0 %v713
        %932 = vmatpush1.bf16.msra.mxu0 %v712
        %933 = vmatprep.subr.bf16.mxu0 %v717
        %934 = vmatpush1.bf16.msra.mxu0 %v716
        %935 = vmatprep.subr.bf16.mxu0 %v721
        %936 = vmatpush1.bf16.msra.mxu0 %v720
        %937 = vmatprep.subr.bf16.mxu0 %v725
        %938 = vmatpush1.bf16.msra.mxu0 %v724
        %939 = vmatprep.subr.bf16.mxu0 %v729
        %940 = vmatpush1.bf16.msra.mxu0 %v728
        %941 = vmatprep.subr.bf16.mxu0 %v733
        %942 = vmatpush1.bf16.msra.mxu0 %v732
        %943 = vmatprep.mubr.bf16.mxu0 %v447
        %944 = vmatmul.mubr.bf16.gmra.mrb[0].mxu0 %v446
        %v945 = vpop.f32.mrb[0].mxu0
        %v946 = vadd.f32 0.0, %v945
        %v947 = vpop.f32.mrb[0].mxu0
        %v948 = vadd.f32 0.0, %v947
        %v949 = vpop.f32.mrb[0].mxu0
        %v950 = vadd.f32 0.0, %v949
        %v951 = vpop.f32.mrb[0].mxu0
        %v952 = vadd.f32 0.0, %v951
        %953 = vmatprep.mubr.bf16.mxu0 %v449
        %954 = vmatmul.mubr.bf16.gmra.mrb[0].mxu0 %v448
        %v955 = vpop.f32.mrb[0].mxu0
        %v956 = vadd.f32 0.0, %v955
        %v957 = vpop.f32.mrb[0].mxu0
        %v958 = vadd.f32 0.0, %v957
        %v959 = vpop.f32.mrb[0].mxu0
        %v960 = vadd.f32 0.0, %v959
        %v961 = vpop.f32.mrb[0].mxu0
        %v962 = vadd.f32 0.0, %v961
        %963 = vmatprep.mubr.bf16.mxu0 %v451
        %964 = vmatmul.mubr.bf16.gmra.mrb[0].mxu0 %v450
        %v965 = vpop.f32.mrb[0].mxu0
        %v966 = vadd.f32 0.0, %v965
        %v967 = vpop.f32.mrb[0].mxu0
        %v968 = vadd.f32 0.0, %v967
        %v969 = vpop.f32.mrb[0].mxu0
        %v970 = vadd.f32 0.0, %v969
        %v971 = vpop.f32.mrb[0].mxu0
        %v972 = vadd.f32 0.0, %v971
        %973 = vmatprep.mubr.bf16.mxu0 %v453
        %974 = vmatmul.mubr.bf16.gmra.mrb[0].mxu0 %v452
        %v975 = vpop.f32.mrb[0].mxu0
        %v976 = vadd.f32 0.0, %v975
        %v977 = vpop.f32.mrb[0].mxu0
        %v978 = vadd.f32 0.0, %v977
        %v979 = vpop.f32.mrb[0].mxu0
        %v980 = vadd.f32 0.0, %v979
        %v981 = vpop.f32.mrb[0].mxu0
        %v982 = vadd.f32 0.0, %v981
        %983 = vmatprep.mubr.bf16.mxu0 %v455
        %984 = vmatmul.mubr.bf16.gmra.mrb[0].mxu0 %v454
        %v985 = vpop.f32.mrb[0].mxu0
        %v986 = vadd.f32 0.0, %v985
        %v987 = vpop.f32.mrb[0].mxu0
        %v988 = vadd.f32 0.0, %v987
        %v989 = vpop.f32.mrb[0].mxu0
        %v990 = vadd.f32 0.0, %v989
        %v991 = vpop.f32.mrb[0].mxu0
        %v992 = vadd.f32 0.0, %v991
        %993 = vmatprep.mubr.bf16.mxu0 %v457
        %994 = vmatmul.mubr.bf16.gmra.mrb[0].mxu0 %v456
        %v995 = vpop.f32.mrb[0].mxu0
        %v996 = vadd.f32 0.0, %v995
        %v997 = vpop.f32.mrb[0].mxu0
        %v998 = vadd.f32 0.0, %v997
        %v999 = vpop.f32.mrb[0].mxu0
        %v1000 = vadd.f32 0.0, %v999
        %v1001 = vpop.f32.mrb[0].mxu0
        %v1002 = vadd.f32 0.0, %v1001
        %1003 = vmatprep.mubr.bf16.mxu0 %v459
        %1004 = vmatmul.mubr.bf16.gmra.mrb[0].mxu0 %v458
        %v1005 = vpop.f32.mrb[0].mxu0
        %v1006 = vadd.f32 0.0, %v1005
        %v1007 = vpop.f32.mrb[0].mxu0
        %v1008 = vadd.f32 0.0, %v1007
        %v1009 = vpop.f32.mrb[0].mxu0
        %v1010 = vadd.f32 0.0, %v1009
        %v1011 = vpop.f32.mrb[0].mxu0
        %v1012 = vadd.f32 0.0, %v1011
        %1013 = vmatprep.mubr.bf16.mxu0 %v461
        %1014 = vmatmul.mubr.bf16.gmra.mrb[0].mxu0 %v460
        %v1015 = vpop.f32.mrb[0].mxu0
        %v1016 = vadd.f32 0.0, %v1015
        %v1017 = vpop.f32.mrb[0].mxu0
        %v1018 = vadd.f32 0.0, %v1017
        %v1019 = vpop.f32.mrb[0].mxu0
        %v1020 = vadd.f32 0.0, %v1019
        %v1021 = vpop.f32.mrb[0].mxu0
        %v1022 = vadd.f32 0.0, %v1021
        %1023 = vdwg.mxu0
        %v1024 = vld [vmem:[%s303] sm:$0xf]
        %v1026 = vlaneseq
        %v1027 = vshrl.u32 %v1026, 7
        %v1028 = vsub.s32 0, %v1027
        %v1029 = vrot.slane %v1024, %v1028
        %v1030 = vlaneseq
        %v1031 = vshrl.u32 %v1030, 7
        %v1032 = vsub.s32 1, %v1031
        %v1033 = vrot.slane %v1024, %v1032
        %v1034 = vlaneseq
        %v1035 = vshrl.u32 %v1034, 7
        %v1036 = vsub.s32 2, %v1035
        %v1037 = vrot.slane %v1024, %v1036
        %v1038 = vlaneseq
        %v1039 = vshrl.u32 %v1038, 7
        %v1040 = vsub.s32 3, %v1039
        %v1041 = vrot.slane %v1024, %v1040
        %v1046 = vadd.f32 %v833, %v1029
        %v1047 = vadd.f32 %v835, %v1033
        %v1048 = vadd.f32 %v946, %v1037
        %v1049 = vadd.f32 %v948, %v1041
        %v1050 = vadd.f32 %v837, %v1029
        %v1051 = vadd.f32 %v839, %v1033
        %v1052 = vadd.f32 %v950, %v1037
        %v1053 = vadd.f32 %v952, %v1041
        %v1054 = vadd.f32 %v843, %v1029
        %v1055 = vadd.f32 %v845, %v1033
        %v1056 = vadd.f32 %v956, %v1037
        %v1057 = vadd.f32 %v958, %v1041
        %v1058 = vadd.f32 %v847, %v1029
        %v1059 = vadd.f32 %v849, %v1033
        %v1060 = vadd.f32 %v960, %v1037
        %v1061 = vadd.f32 %v962, %v1041
        %v1062 = vadd.f32 %v853, %v1029
        %v1063 = vadd.f32 %v855, %v1033
        %v1064 = vadd.f32 %v966, %v1037
        %v1065 = vadd.f32 %v968, %v1041
        %v1066 = vadd.f32 %v857, %v1029
        %v1067 = vadd.f32 %v859, %v1033
        %v1068 = vadd.f32 %v970, %v1037
        %v1069 = vadd.f32 %v972, %v1041
        %v1070 = vadd.f32 %v863, %v1029
        %v1071 = vadd.f32 %v865, %v1033
        %v1072 = vadd.f32 %v976, %v1037
        %v1073 = vadd.f32 %v978, %v1041
        %v1074 = vadd.f32 %v867, %v1029
        %v1075 = vadd.f32 %v869, %v1033
        %v1076 = vadd.f32 %v980, %v1037
        %v1077 = vadd.f32 %v982, %v1041
        %v1078 = vadd.f32 %v873, %v1029
        %v1079 = vadd.f32 %v875, %v1033
        %v1080 = vadd.f32 %v986, %v1037
        %v1081 = vadd.f32 %v988, %v1041
        %v1082 = vadd.f32 %v877, %v1029
        %v1083 = vadd.f32 %v879, %v1033
        %v1084 = vadd.f32 %v990, %v1037
        %v1085 = vadd.f32 %v992, %v1041
        %v1086 = vadd.f32 %v883, %v1029
        %v1087 = vadd.f32 %v885, %v1033
        %v1088 = vadd.f32 %v996, %v1037
        %v1089 = vadd.f32 %v998, %v1041
        %v1090 = vadd.f32 %v887, %v1029
        %v1091 = vadd.f32 %v889, %v1033
        %v1092 = vadd.f32 %v1000, %v1037
        %v1093 = vadd.f32 %v1002, %v1041
        %v1094 = vadd.f32 %v893, %v1029
        %v1095 = vadd.f32 %v895, %v1033
        %v1096 = vadd.f32 %v1006, %v1037
        %v1097 = vadd.f32 %v1008, %v1041
        %v1098 = vadd.f32 %v897, %v1029
        %v1099 = vadd.f32 %v899, %v1033
        %v1100 = vadd.f32 %v1010, %v1037
        %v1101 = vadd.f32 %v1012, %v1041
        %v1102 = vadd.f32 %v903, %v1029
        %v1103 = vadd.f32 %v905, %v1033
        %v1104 = vadd.f32 %v1016, %v1037
        %v1105 = vadd.f32 %v1018, %v1041
        %v1106 = vadd.f32 %v907, %v1029
        %v1107 = vadd.f32 %v909, %v1033
        %v1108 = vadd.f32 %v1020, %v1037
        %v1109 = vadd.f32 %v1022, %v1041
        %1110 = vst [vmem:[#allocation4] sm:$0xff] %v1046
        %1111 = vst [vmem:[#allocation4 + $0x8] sm:$0xff] %v1047
        %1112 = vst [vmem:[#allocation4 + $0x10] sm:$0xff] %v1048
        %1113 = vst [vmem:[#allocation4 + $0x18] sm:$0xff] %v1049
        %1114 = vst [vmem:[#allocation4 + $0x20] sm:$0xff] %v1050
        %1115 = vst [vmem:[#allocation4 + $0x28] sm:$0xff] %v1051
        %1116 = vst [vmem:[#allocation4 + $0x30] sm:$0xff] %v1052
        %1117 = vst [vmem:[#allocation4 + $0x38] sm:$0xff] %v1053
        %1118 = vst [vmem:[#allocation4 + $0x40] sm:$0xff] %v1054
        %1119 = vst [vmem:[#allocation4 + $0x48] sm:$0xff] %v1055
        %1120 = vst [vmem:[#allocation4 + $0x50] sm:$0xff] %v1056
        %1121 = vst [vmem:[#allocation4 + $0x58] sm:$0xff] %v1057
        %1122 = vst [vmem:[#allocation4 + $0x60] sm:$0xff] %v1058
        %1123 = vst [vmem:[#allocation4 + $0x68] sm:$0xff] %v1059
        %1124 = vst [vmem:[#allocation4 + $0x70] sm:$0xff] %v1060
        %1125 = vst [vmem:[#allocation4 + $0x78] sm:$0xff] %v1061
        %1126 = vst [vmem:[#allocation4 + $0x80] sm:$0xff] %v1062
        %1127 = vst [vmem:[#allocation4 + $0x88] sm:$0xff] %v1063
        %1128 = vst [vmem:[#allocation4 + $0x90] sm:$0xff] %v1064
        %1129 = vst [vmem:[#allocation4 + $0x98] sm:$0xff] %v1065
        %1130 = vst [vmem:[#allocation4 + $0xa0] sm:$0xff] %v1066
        %1131 = vst [vmem:[#allocation4 + $0xa8] sm:$0xff] %v1067
        %1132 = vst [vmem:[#allocation4 + $0xb0] sm:$0xff] %v1068
        %1133 = vst [vmem:[#allocation4 + $0xb8] sm:$0xff] %v1069
        %1134 = vst [vmem:[#allocation4 + $0xc0] sm:$0xff] %v1070
        %1135 = vst [vmem:[#allocation4 + $0xc8] sm:$0xff] %v1071
        %1136 = vst [vmem:[#allocation4 + $0xd0] sm:$0xff] %v1072
        %1137 = vst [vmem:[#allocation4 + $0xd8] sm:$0xff] %v1073
        %1138 = vst [vmem:[#allocation4 + $0xe0] sm:$0xff] %v1074
        %1139 = vst [vmem:[#allocation4 + $0xe8] sm:$0xff] %v1075
        %1140 = vst [vmem:[#allocation4 + $0xf0] sm:$0xff] %v1076
        %1141 = vst [vmem:[#allocation4 + $0xf8] sm:$0xff] %v1077
        %1142 = vst [vmem:[#allocation4 + $0x100] sm:$0xff] %v1078
        %1143 = vst [vmem:[#allocation4 + $0x108] sm:$0xff] %v1079
        %1144 = vst [vmem:[#allocation4 + $0x110] sm:$0xff] %v1080
        %1145 = vst [vmem:[#allocation4 + $0x118] sm:$0xff] %v1081
        %1146 = vst [vmem:[#allocation4 + $0x120] sm:$0xff] %v1082
        %1147 = vst [vmem:[#allocation4 + $0x128] sm:$0xff] %v1083
        %1148 = vst [vmem:[#allocation4 + $0x130] sm:$0xff] %v1084
        %1149 = vst [vmem:[#allocation4 + $0x138] sm:$0xff] %v1085
        %1150 = vst [vmem:[#allocation4 + $0x140] sm:$0xff] %v1086
        %1151 = vst [vmem:[#allocation4 + $0x148] sm:$0xff] %v1087
        %1152 = vst [vmem:[#allocation4 + $0x150] sm:$0xff] %v1088
        %1153 = vst [vmem:[#allocation4 + $0x158] sm:$0xff] %v1089
        %1154 = vst [vmem:[#allocation4 + $0x160] sm:$0xff] %v1090
        %1155 = vst [vmem:[#allocation4 + $0x168] sm:$0xff] %v1091
        %1156 = vst [vmem:[#allocation4 + $0x170] sm:$0xff] %v1092
        %1157 = vst [vmem:[#allocation4 + $0x178] sm:$0xff] %v1093
        %1158 = vst [vmem:[#allocation4 + $0x180] sm:$0xff] %v1094
        %1159 = vst [vmem:[#allocation4 + $0x188] sm:$0xff] %v1095
        %1160 = vst [vmem:[#allocation4 + $0x190] sm:$0xff] %v1096
        %1161 = vst [vmem:[#allocation4 + $0x198] sm:$0xff] %v1097
        %1162 = vst [vmem:[#allocation4 + $0x1a0] sm:$0xff] %v1098
        %1163 = vst [vmem:[#allocation4 + $0x1a8] sm:$0xff] %v1099
        %1164 = vst [vmem:[#allocation4 + $0x1b0] sm:$0xff] %v1100
        %1165 = vst [vmem:[#allocation4 + $0x1b8] sm:$0xff] %v1101
        %1166 = vst [vmem:[#allocation4 + $0x1c0] sm:$0xff] %v1102
        %1167 = vst [vmem:[#allocation4 + $0x1c8] sm:$0xff] %v1103
        %1168 = vst [vmem:[#allocation4 + $0x1d0] sm:$0xff] %v1104
        %1169 = vst [vmem:[#allocation4 + $0x1d8] sm:$0xff] %v1105
        %1170 = vst [vmem:[#allocation4 + $0x1e0] sm:$0xff] %v1106
        %1171 = vst [vmem:[#allocation4 + $0x1e8] sm:$0xff] %v1107
        %1172 = vst [vmem:[#allocation4 + $0x1f0] sm:$0xff] %v1108
        %1173 = vst [vmem:[#allocation4 + $0x1f8] sm:$0xff] %v1109
        %v1174 = vld [vmem:[%s299] sm:$0xff]
        %v1175 = vld [vmem:[%s299 + $0x8] sm:$0xff]
        %v1176 = vld [vmem:[%s299 + $0x10] sm:$0xff]
        %v1177 = vld [vmem:[%s299 + $0x18] sm:$0xff]
        %v1178 = vld [vmem:[%s299 + $0x20] sm:$0xff]
        %v1179 = vld [vmem:[%s299 + $0x28] sm:$0xff]
        %v1180 = vld [vmem:[%s299 + $0x30] sm:$0xff]
        %v1181 = vld [vmem:[%s299 + $0x38] sm:$0xff]
        %v1182 = vld [vmem:[%s299 + $0x40] sm:$0xff]
        %v1183 = vld [vmem:[%s299 + $0x48] sm:$0xff]
        %v1184 = vld [vmem:[%s299 + $0x50] sm:$0xff]
        %v1185 = vld [vmem:[%s299 + $0x58] sm:$0xff]
        %v1186 = vld [vmem:[%s299 + $0x60] sm:$0xff]
        %v1187 = vld [vmem:[%s299 + $0x68] sm:$0xff]
        %v1188 = vld [vmem:[%s299 + $0x70] sm:$0xff]
        %v1189 = vld [vmem:[%s299 + $0x78] sm:$0xff]
        %v1190 = vld [vmem:[%s299 + $0x80] sm:$0xff]
        %v1191 = vld [vmem:[%s299 + $0x88] sm:$0xff]
        %v1192 = vld [vmem:[%s299 + $0x90] sm:$0xff]
        %v1193 = vld [vmem:[%s299 + $0x98] sm:$0xff]
        %v1194 = vld [vmem:[%s299 + $0xa0] sm:$0xff]
        %v1195 = vld [vmem:[%s299 + $0xa8] sm:$0xff]
        %v1196 = vld [vmem:[%s299 + $0xb0] sm:$0xff]
        %v1197 = vld [vmem:[%s299 + $0xb8] sm:$0xff]
        %v1198 = vld [vmem:[%s299 + $0xc0] sm:$0xff]
        %v1199 = vld [vmem:[%s299 + $0xc8] sm:$0xff]
        %v1200 = vld [vmem:[%s299 + $0xd0] sm:$0xff]
        %v1201 = vld [vmem:[%s299 + $0xd8] sm:$0xff]
        %v1202 = vld [vmem:[%s299 + $0xe0] sm:$0xff]
        %v1203 = vld [vmem:[%s299 + $0xe8] sm:$0xff]
        %v1204 = vld [vmem:[%s299 + $0xf0] sm:$0xff]
        %v1205 = vld [vmem:[%s299 + $0xf8] sm:$0xff]
        %v1206 = vld [vmem:[#allocation2] sm:$0xff]
        %v1207 = vld [vmem:[#allocation2 + $0x8] sm:$0xff]
        %v1208 = vld [vmem:[#allocation3] sm:$0xff]
        %v1209 = vld [vmem:[#allocation3 + $0x8] sm:$0xff]
        %s1210 = smul.u32 %s19, 7
        %s1211 = smul.u32 %s1210, 8
        %s1212 = smul.addr %s1211, 8
        %s1213 = scalar_lea.vmem [#allocation4], %s1212
        %v1214 = vld [vmem:[%s1213] sm:$0xff]
        %v1215 = vld [vmem:[%s1213 + $0x8] sm:$0xff]
        %v1216 = vld [vmem:[%s1213 + $0x10] sm:$0xff]
        %v1217 = vld [vmem:[%s1213 + $0x18] sm:$0xff]
        %v1218 = vld [vmem:[%s1213 + $0x20] sm:$0xff]
        %v1219 = vld [vmem:[%s1213 + $0x28] sm:$0xff]
        %v1220 = vld [vmem:[%s1213 + $0x30] sm:$0xff]
        %v1221 = vld [vmem:[%s1213 + $0x38] sm:$0xff]
        %v1222 = vpack.c.bf16 %v1207, %v1206
        %v1255 = vunpack.c.l.b16 %v1174
        %v1256 = vunpack.c.h.b16 %v1174
        %v1257 = vunpack.c.l.b16 %v1175
        %v1258 = vunpack.c.h.b16 %v1175
        %v1259 = vunpack.c.l.b16 %v1176
        %v1260 = vunpack.c.h.b16 %v1176
        %v1261 = vunpack.c.l.b16 %v1177
        %v1262 = vunpack.c.h.b16 %v1177
        %v1263 = vunpack.c.l.b16 %v1178
        %v1264 = vunpack.c.h.b16 %v1178
        %v1265 = vunpack.c.l.b16 %v1179
        %v1266 = vunpack.c.h.b16 %v1179
        %v1267 = vunpack.c.l.b16 %v1180
        %v1268 = vunpack.c.h.b16 %v1180
        %v1269 = vunpack.c.l.b16 %v1181
        %v1270 = vunpack.c.h.b16 %v1181
        %v1271 = vunpack.c.l.b16 %v1182
        %v1272 = vunpack.c.h.b16 %v1182
        %v1273 = vunpack.c.l.b16 %v1183
        %v1274 = vunpack.c.h.b16 %v1183
        %v1275 = vunpack.c.l.b16 %v1184
        %v1276 = vunpack.c.h.b16 %v1184
        %v1277 = vunpack.c.l.b16 %v1185
        %v1278 = vunpack.c.h.b16 %v1185
        %v1279 = vunpack.c.l.b16 %v1186
        %v1280 = vunpack.c.h.b16 %v1186
        %v1281 = vunpack.c.l.b16 %v1187
        %v1282 = vunpack.c.h.b16 %v1187
        %v1283 = vunpack.c.l.b16 %v1188
        %v1284 = vunpack.c.h.b16 %v1188
        %v1285 = vunpack.c.l.b16 %v1189
        %v1286 = vunpack.c.h.b16 %v1189
        %v1287 = vunpack.c.l.b16 %v1190
        %v1288 = vunpack.c.h.b16 %v1190
        %v1289 = vunpack.c.l.b16 %v1191
        %v1290 = vunpack.c.h.b16 %v1191
        %v1291 = vunpack.c.l.b16 %v1192
        %v1292 = vunpack.c.h.b16 %v1192
        %v1293 = vunpack.c.l.b16 %v1193
        %v1294 = vunpack.c.h.b16 %v1193
        %v1295 = vunpack.c.l.b16 %v1194
        %v1296 = vunpack.c.h.b16 %v1194
        %v1297 = vunpack.c.l.b16 %v1195
        %v1298 = vunpack.c.h.b16 %v1195
        %v1299 = vunpack.c.l.b16 %v1196
        %v1300 = vunpack.c.h.b16 %v1196
        %v1301 = vunpack.c.l.b16 %v1197
        %v1302 = vunpack.c.h.b16 %v1197
        %v1303 = vunpack.c.l.b16 %v1198
        %v1304 = vunpack.c.h.b16 %v1198
        %v1305 = vunpack.c.l.b16 %v1199
        %v1306 = vunpack.c.h.b16 %v1199
        %v1307 = vunpack.c.l.b16 %v1200
        %v1308 = vunpack.c.h.b16 %v1200
        %v1309 = vunpack.c.l.b16 %v1201
        %v1310 = vunpack.c.h.b16 %v1201
        %v1311 = vunpack.c.l.b16 %v1202
        %v1312 = vunpack.c.h.b16 %v1202
        %v1313 = vunpack.c.l.b16 %v1203
        %v1314 = vunpack.c.h.b16 %v1203
        %v1315 = vunpack.c.l.b16 %v1204
        %v1316 = vunpack.c.h.b16 %v1204
        %v1317 = vunpack.c.l.b16 %v1205
        %v1318 = vunpack.c.h.b16 %v1205
        %v1319 = vpack.c.b16 %v1259, %v1255
        %v1320 = vpack.c.b16 %v1260, %v1256
        %v1321 = vpack.c.b16 %v1261, %v1257
        %v1322 = vpack.c.b16 %v1262, %v1258
        %v1323 = vpack.c.b16 %v1267, %v1263
        %v1324 = vpack.c.b16 %v1268, %v1264
        %v1325 = vpack.c.b16 %v1269, %v1265
        %v1326 = vpack.c.b16 %v1270, %v1266
        %v1327 = vpack.c.b16 %v1275, %v1271
        %v1328 = vpack.c.b16 %v1276, %v1272
        %v1329 = vpack.c.b16 %v1277, %v1273
        %v1330 = vpack.c.b16 %v1278, %v1274
        %v1331 = vpack.c.b16 %v1283, %v1279
        %v1332 = vpack.c.b16 %v1284, %v1280
        %v1333 = vpack.c.b16 %v1285, %v1281
        %v1334 = vpack.c.b16 %v1286, %v1282
        %v1335 = vpack.c.b16 %v1291, %v1287
        %v1336 = vpack.c.b16 %v1292, %v1288
        %v1337 = vpack.c.b16 %v1293, %v1289
        %v1338 = vpack.c.b16 %v1294, %v1290
        %v1339 = vpack.c.b16 %v1299, %v1295
        %v1340 = vpack.c.b16 %v1300, %v1296
        %v1341 = vpack.c.b16 %v1301, %v1297
        %v1342 = vpack.c.b16 %v1302, %v1298
        %v1343 = vpack.c.b16 %v1307, %v1303
        %v1344 = vpack.c.b16 %v1308, %v1304
        %v1345 = vpack.c.b16 %v1309, %v1305
        %v1346 = vpack.c.b16 %v1310, %v1306
        %v1347 = vpack.c.b16 %v1315, %v1311
        %v1348 = vpack.c.b16 %v1316, %v1312
        %v1349 = vpack.c.b16 %v1317, %v1313
        %v1350 = vpack.c.b16 %v1318, %v1314
        %1383 = vmatprep.subr.bf16.mxu0 %v1320
        %1384 = vmatpush1.bf16.msra.mxu0 %v1319
        %1385 = vmatprep.subr.bf16.mxu0 %v1324
        %1386 = vmatpush1.bf16.msra.mxu0 %v1323
        %1387 = vmatprep.subr.bf16.mxu0 %v1328
        %1388 = vmatpush1.bf16.msra.mxu0 %v1327
        %1389 = vmatprep.subr.bf16.mxu0 %v1332
        %1390 = vmatpush1.bf16.msra.mxu0 %v1331
        %1391 = vmatprep.subr.bf16.mxu0 %v1336
        %1392 = vmatpush1.bf16.msra.mxu0 %v1335
        %1393 = vmatprep.subr.bf16.mxu0 %v1340
        %1394 = vmatpush1.bf16.msra.mxu0 %v1339
        %1395 = vmatprep.subr.bf16.mxu0 %v1344
        %1396 = vmatpush1.bf16.msra.mxu0 %v1343
        %1397 = vmatprep.subr.bf16.mxu0 %v1348
        %1398 = vmatpush1.bf16.msra.mxu0 %v1347
        %1399 = vmatprep.subr.bf16.mxu0 0
        %1400 = vmatpush1.bf16.msra.mxu0 0
        %1401 = vmatprep.subr.bf16.mxu0 0
        %1402 = vmatpush1.bf16.msra.mxu0 0
        %1403 = vmatprep.subr.bf16.mxu0 0
        %1404 = vmatpush1.bf16.msra.mxu0 0
        %1405 = vmatprep.subr.bf16.mxu0 0
        %1406 = vmatpush1.bf16.msra.mxu0 0
        %1407 = vmatprep.subr.bf16.mxu0 0
        %1408 = vmatpush1.bf16.msra.mxu0 0
        %1409 = vmatprep.subr.bf16.mxu0 0
        %1410 = vmatpush1.bf16.msra.mxu0 0
        %1411 = vmatprep.subr.bf16.mxu0 0
        %1412 = vmatpush1.bf16.msra.mxu0 0
        %1413 = vmatprep.subr.bf16.mxu0 0
        %1414 = vmatpush1.bf16.msra.mxu0 0
        %1415 = vmatprep.mubr.bf16.mxu0 0
        %1416 = vmatmul.mubr.bf16.gmra.mrb[0].mxu0 %v1222
        %v1417 = vpop.f32.mrb[0].mxu0
        %v1418 = vadd.f32 0.0, %v1417
        %v1419 = vpop.f32.mrb[0].mxu0
        %v1420 = vadd.f32 0.0, %v1419
        %v1421 = vpop.f32.mrb[0].mxu0
        %v1422 = vadd.f32 0.0, %v1421
        %v1423 = vpop.f32.mrb[0].mxu0
        %v1424 = vadd.f32 0.0, %v1423
        %1425 = vdwg.mxu0
        %1426 = vmatprep.subr.bf16.mxu0 %v1322
        %1427 = vmatpush1.bf16.msra.mxu0 %v1321
        %1428 = vmatprep.subr.bf16.mxu0 %v1326
        %1429 = vmatpush1.bf16.msra.mxu0 %v1325
        %1430 = vmatprep.subr.bf16.mxu0 %v1330
        %1431 = vmatpush1.bf16.msra.mxu0 %v1329
        %1432 = vmatprep.subr.bf16.mxu0 %v1334
        %1433 = vmatpush1.bf16.msra.mxu0 %v1333
        %1434 = vmatprep.subr.bf16.mxu0 %v1338
        %1435 = vmatpush1.bf16.msra.mxu0 %v1337
        %1436 = vmatprep.subr.bf16.mxu0 %v1342
        %1437 = vmatpush1.bf16.msra.mxu0 %v1341
        %1438 = vmatprep.subr.bf16.mxu0 %v1346
        %1439 = vmatpush1.bf16.msra.mxu0 %v1345
        %1440 = vmatprep.subr.bf16.mxu0 %v1350
        %1441 = vmatpush1.bf16.msra.mxu0 %v1349
        %1442 = vmatprep.subr.bf16.mxu0 0
        %1443 = vmatpush1.bf16.msra.mxu0 0
        %1444 = vmatprep.subr.bf16.mxu0 0
        %1445 = vmatpush1.bf16.msra.mxu0 0
        %1446 = vmatprep.subr.bf16.mxu0 0
        %1447 = vmatpush1.bf16.msra.mxu0 0
        %1448 = vmatprep.subr.bf16.mxu0 0
        %1449 = vmatpush1.bf16.msra.mxu0 0
        %1450 = vmatprep.subr.bf16.mxu0 0
        %1451 = vmatpush1.bf16.msra.mxu0 0
        %1452 = vmatprep.subr.bf16.mxu0 0
        %1453 = vmatpush1.bf16.msra.mxu0 0
        %1454 = vmatprep.subr.bf16.mxu0 0
        %1455 = vmatpush1.bf16.msra.mxu0 0
        %1456 = vmatprep.subr.bf16.mxu0 0
        %1457 = vmatpush1.bf16.msra.mxu0 0
        %1458 = vmatprep.mubr.bf16.mxu0 0
        %1459 = vmatmul.mubr.bf16.gmra.mrb[0].mxu0 %v1222
        %v1460 = vpop.f32.mrb[0].mxu0
        %v1461 = vadd.f32 0.0, %v1460
        %v1462 = vpop.f32.mrb[0].mxu0
        %v1463 = vadd.f32 0.0, %v1462
        %v1464 = vpop.f32.mrb[0].mxu0
        %v1465 = vadd.f32 0.0, %v1464
        %v1466 = vpop.f32.mrb[0].mxu0
        %v1467 = vadd.f32 0.0, %v1466
        %1468 = vdwg.mxu0
        %v1469 = vadd.f32 %v1214, %v1418
        %v1470 = vadd.f32 %v1215, %v1420
        %v1471 = vadd.f32 %v1216, %v1461
        %v1472 = vadd.f32 %v1217, %v1463
        %v1473 = vadd.f32 %v1218, %v1422
        %v1474 = vadd.f32 %v1219, %v1424
        %v1475 = vadd.f32 %v1220, %v1465
        %v1476 = vadd.f32 %v1221, %v1467
        %v1477 = vxor.u32 %v1469, 2147483648
        %v1478 = vxor.u32 %v1473, 2147483648
        %v1479 = vmul.f32 %v1477, 1.442695
        %v1480 = vpow.pop %v1479
        %v1481 = vmul.f32 %v1478, 1.442695
        %v1482 = vpow.pop %v1481
        %v1483 = vadd.f32 %v1480, 1.0
        %v1484 = vadd.f32 %v1482, 1.0
        %v1485 = vrcp.pop %v1483
        %v1486 = vmul.f32 1.0, %v1485
        %v1487 = vrcp.pop %v1484
        %v1488 = vmul.f32 1.0, %v1487
        %v1489 = vxor.u32 %v1470, 2147483648
        %v1490 = vxor.u32 %v1474, 2147483648
        %v1491 = vmul.f32 %v1489, 1.442695
        %v1492 = vpow.pop %v1491
        %v1493 = vmul.f32 %v1490, 1.442695
        %v1494 = vpow.pop %v1493
        %v1495 = vadd.f32 %v1492, 1.0
        %v1496 = vadd.f32 %v1494, 1.0
        %v1497 = vrcp.pop %v1495
        %v1498 = vmul.f32 1.0, %v1497
        %v1499 = vrcp.pop %v1496
        %v1500 = vmul.f32 1.0, %v1499
        %v1501 = vtanh.pop %v1471
        %v1502 = vtanh.pop %v1475
        %v1503 = vxor.u32 %v1472, 2147483648
        %v1504 = vxor.u32 %v1476, 2147483648
        %v1505 = vmul.f32 %v1503, 1.442695
        %v1506 = vpow.pop %v1505
        %v1507 = vmul.f32 %v1504, 1.442695
        %v1508 = vpow.pop %v1507
        %v1509 = vadd.f32 %v1506, 1.0
        %v1510 = vadd.f32 %v1508, 1.0
        %v1511 = vrcp.pop %v1509
        %v1512 = vmul.f32 1.0, %v1511
        %v1513 = vrcp.pop %v1510
        %v1514 = vmul.f32 1.0, %v1513
        %v1515 = vmul.f32 %v1498, %v1208
        %v1516 = vmul.f32 %v1500, %v1209
        %v1517 = vmul.f32 %v1486, %v1501
        %v1518 = vmul.f32 %v1488, %v1502
        %v1519 = vadd.f32 %v1515, %v1517
        %v1520 = vadd.f32 %v1516, %v1518
        %v1521 = vtanh.pop %v1519
        %v1522 = vtanh.pop %v1520
        %v1523 = vmul.f32 %v1512, %v1521
        %v1524 = vmul.f32 %v1514, %v1522
        %v1525 = vpack.c.bf16 %v1524, %v1523
        %v1527 = vunpack.c.l.b16 %v1525
        %v1528 = vunpack.c.h.b16 %v1525
        %v1529 = vpack.c.b16 %v1527, %v1527
        %v1530 = vpack.c.b16 %v1528, %v1528
        %s1533 = smul.u32 %s1210, 2
        %s1534 = smul.addr %s1533, 4
        %s1535 = scalar_lea.vmem %s274, %s1534 [#allocation5]
        %1536 = vst [vmem:[%s1535] sm:$0xf] %v1529
        %1537 = vst [vmem:[%s1535 + $0x4] sm:$0xf] %v1530
        %s1538 = smul.u32 %s19, 5
        %s1539 = sadd.s32 %s1538, 1
        %s1540 = smul.u32 %s1539, 8
        %s1541 = smul.addr %s1540, 8
        %s1542 = scalar_lea.vmem [#allocation4], %s1541
        %v1543 = vld [vmem:[%s1542] sm:$0xff]
        %v1544 = vld [vmem:[%s1542 + $0x8] sm:$0xff]
        %v1545 = vld [vmem:[%s1542 + $0x10] sm:$0xff]
        %v1546 = vld [vmem:[%s1542 + $0x18] sm:$0xff]
        %v1547 = vld [vmem:[%s1542 + $0x20] sm:$0xff]
        %v1548 = vld [vmem:[%s1542 + $0x28] sm:$0xff]
        %v1549 = vld [vmem:[%s1542 + $0x30] sm:$0xff]
        %v1550 = vld [vmem:[%s1542 + $0x38] sm:$0xff]
        %1551 = vmatprep.subr.bf16.mxu0 %v1320
        %1552 = vmatpush1.bf16.msra.mxu0 %v1319
        %1553 = vmatprep.subr.bf16.mxu0 %v1324
        %1554 = vmatpush1.bf16.msra.mxu0 %v1323
        %1555 = vmatprep.subr.bf16.mxu0 %v1328
        %1556 = vmatpush1.bf16.msra.mxu0 %v1327
        %1557 = vmatprep.subr.bf16.mxu0 %v1332
        %1558 = vmatpush1.bf16.msra.mxu0 %v1331
        %1559 = vmatprep.subr.bf16.mxu0 %v1336
        %1560 = vmatpush1.bf16.msra.mxu0 %v1335
        %1561 = vmatprep.subr.bf16.mxu0 %v1340
        %1562 = vmatpush1.bf16.msra.mxu0 %v1339
        %1563 = vmatprep.subr.bf16.mxu0 %v1344
        %1564 = vmatpush1.bf16.msra.mxu0 %v1343
        %1565 = vmatprep.subr.bf16.mxu0 %v1348
        %1566 = vmatpush1.bf16.msra.mxu0 %v1347
        %1567 = vmatprep.subr.bf16.mxu0 0
        %1568 = vmatpush1.bf16.msra.mxu0 0
        %1569 = vmatprep.subr.bf16.mxu0 0
        %1570 = vmatpush1.bf16.msra.mxu0 0
        %1571 = vmatprep.subr.bf16.mxu0 0
        %1572 = vmatpush1.bf16.msra.mxu0 0
        %1573 = vmatprep.subr.bf16.mxu0 0
        %1574 = vmatpush1.bf16.msra.mxu0 0
        %1575 = vmatprep.subr.bf16.mxu0 0
        %1576 = vmatpush1.bf16.msra.mxu0 0
        %1577 = vmatprep.subr.bf16.mxu0 0
        %1578 = vmatpush1.bf16.msra.mxu0 0
        %1579 = vmatprep.subr.bf16.mxu0 0
        %1580 = vmatpush1.bf16.msra.mxu0 0
        %1581 = vmatprep.subr.bf16.mxu0 0
        %1582 = vmatpush1.bf16.msra.mxu0 0
        %1583 = vmatprep.mubr.bf16.mxu0 0
        %1584 = vmatmul.mubr.bf16.gmra.mrb[0].mxu0 %v1525
        %v1585 = vpop.f32.mrb[0].mxu0
        %v1586 = vadd.f32 0.0, %v1585
        %v1587 = vpop.f32.mrb[0].mxu0
        %v1588 = vadd.f32 0.0, %v1587
        %v1589 = vpop.f32.mrb[0].mxu0
        %v1590 = vadd.f32 0.0, %v1589
        %v1591 = vpop.f32.mrb[0].mxu0
        %v1592 = vadd.f32 0.0, %v1591
        %1593 = vdwg.mxu0
        %1594 = vmatprep.subr.bf16.mxu0 %v1322
        %1595 = vmatpush1.bf16.msra.mxu0 %v1321
        %1596 = vmatprep.subr.bf16.mxu0 %v1326
        %1597 = vmatpush1.bf16.msra.mxu0 %v1325
        %1598 = vmatprep.subr.bf16.mxu0 %v1330
        %1599 = vmatpush1.bf16.msra.mxu0 %v1329
        %1600 = vmatprep.subr.bf16.mxu0 %v1334
        %1601 = vmatpush1.bf16.msra.mxu0 %v1333
        %1602 = vmatprep.subr.bf16.mxu0 %v1338
        %1603 = vmatpush1.bf16.msra.mxu0 %v1337
        %1604 = vmatprep.subr.bf16.mxu0 %v1342
        %1605 = vmatpush1.bf16.msra.mxu0 %v1341
        %1606 = vmatprep.subr.bf16.mxu0 %v1346
        %1607 = vmatpush1.bf16.msra.mxu0 %v1345
        %1608 = vmatprep.subr.bf16.mxu0 %v1350
        %1609 = vmatpush1.bf16.msra.mxu0 %v1349
        %1610 = vmatprep.subr.bf16.mxu0 0
        %1611 = vmatpush1.bf16.msra.mxu0 0
        %1612 = vmatprep.subr.bf16.mxu0 0
        %1613 = vmatpush1.bf16.msra.mxu0 0
        %1614 = vmatprep.subr.bf16.mxu0 0
        %1615 = vmatpush1.bf16.msra.mxu0 0
        %1616 = vmatprep.subr.bf16.mxu0 0
        %1617 = vmatpush1.bf16.msra.mxu0 0
        %1618 = vmatprep.subr.bf16.mxu0 0
        %1619 = vmatpush1.bf16.msra.mxu0 0
        %1620 = vmatprep.subr.bf16.mxu0 0
        %1621 = vmatpush1.bf16.msra.mxu0 0
        %1622 = vmatprep.subr.bf16.mxu0 0
        %1623 = vmatpush1.bf16.msra.mxu0 0
        %1624 = vmatprep.subr.bf16.mxu0 0
        %1625 = vmatpush1.bf16.msra.mxu0 0
        %1626 = vmatprep.mubr.bf16.mxu0 0
        %1627 = vmatmul.mubr.bf16.gmra.mrb[0].mxu0 %v1525
        %v1628 = vpop.f32.mrb[0].mxu0
        %v1629 = vadd.f32 0.0, %v1628
        %v1630 = vpop.f32.mrb[0].mxu0
        %v1631 = vadd.f32 0.0, %v1630
        %v1632 = vpop.f32.mrb[0].mxu0
        %v1633 = vadd.f32 0.0, %v1632
        %v1634 = vpop.f32.mrb[0].mxu0
        %v1635 = vadd.f32 0.0, %v1634
        %1636 = vdwg.mxu0
        %v1637 = vadd.f32 %v1543, %v1586
        %v1638 = vadd.f32 %v1544, %v1588
        %v1639 = vadd.f32 %v1545, %v1629
        %v1640 = vadd.f32 %v1546, %v1631
        %v1641 = vadd.f32 %v1547, %v1590
        %v1642 = vadd.f32 %v1548, %v1592
        %v1643 = vadd.f32 %v1549, %v1633
        %v1644 = vadd.f32 %v1550, %v1635
        %v1645 = vxor.u32 %v1637, 2147483648
        %v1646 = vxor.u32 %v1641, 2147483648
        %v1647 = vmul.f32 %v1645, 1.442695
        %v1648 = vpow.pop %v1647
        %v1649 = vmul.f32 %v1646, 1.442695
        %v1650 = vpow.pop %v1649
        %v1651 = vadd.f32 %v1648, 1.0
        %v1652 = vadd.f32 %v1650, 1.0
        %v1653 = vrcp.pop %v1651
        %v1654 = vmul.f32 1.0, %v1653
        %v1655 = vrcp.pop %v1652
        %v1656 = vmul.f32 1.0, %v1655
        %v1657 = vxor.u32 %v1638, 2147483648
        %v1658 = vxor.u32 %v1642, 2147483648
        %v1659 = vmul.f32 %v1657, 1.442695
        %v1660 = vpow.pop %v1659
        %v1661 = vmul.f32 %v1658, 1.442695
        %v1662 = vpow.pop %v1661
        %v1663 = vadd.f32 %v1660, 1.0
        %v1664 = vadd.f32 %v1662, 1.0
        %v1665 = vrcp.pop %v1663
        %v1666 = vmul.f32 1.0, %v1665
        %v1667 = vrcp.pop %v1664
        %v1668 = vmul.f32 1.0, %v1667
        %v1669 = vtanh.pop %v1639
        %v1670 = vtanh.pop %v1643
        %v1671 = vxor.u32 %v1640, 2147483648
        %v1672 = vxor.u32 %v1644, 2147483648
        %v1673 = vmul.f32 %v1671, 1.442695
        %v1674 = vpow.pop %v1673
        %v1675 = vmul.f32 %v1672, 1.442695
        %v1676 = vpow.pop %v1675
        %v1677 = vadd.f32 %v1674, 1.0
        %v1678 = vadd.f32 %v1676, 1.0
        %v1679 = vrcp.pop %v1677
        %v1680 = vmul.f32 1.0, %v1679
        %v1681 = vrcp.pop %v1678
        %v1682 = vmul.f32 1.0, %v1681
        %v1683 = vmul.f32 %v1666, %v1519
        %v1684 = vmul.f32 %v1668, %v1520
        %v1685 = vmul.f32 %v1654, %v1669
        %v1686 = vmul.f32 %v1656, %v1670
        %v1687 = vadd.f32 %v1683, %v1685
        %v1688 = vadd.f32 %v1684, %v1686
        %v1689 = vtanh.pop %v1687
        %v1690 = vtanh.pop %v1688
        %v1691 = vmul.f32 %v1680, %v1689
        %v1692 = vmul.f32 %v1682, %v1690
        %v1693 = vpack.c.bf16 %v1692, %v1691
        %v1695 = vunpack.c.l.b16 %v1693
        %v1696 = vunpack.c.h.b16 %v1693
        %v1697 = vpack.c.b16 %v1695, %v1695
        %v1698 = vpack.c.b16 %v1696, %v1696
        %s1701 = smul.u32 %s1539, 2
        %s1702 = smul.addr %s1701, 4
        %s1703 = scalar_lea.vmem %s274, %s1702 [#allocation5]
        %1704 = vst [vmem:[%s1703] sm:$0xf] %v1697
        %1705 = vst [vmem:[%s1703 + $0x4] sm:$0xf] %v1698
        %s1706 = smul.u32 %s19, 3
        %s1707 = sadd.s32 %s1706, 2
        %s1708 = smul.u32 %s1707, 8
        %s1709 = smul.addr %s1708, 8
        %s1710 = scalar_lea.vmem [#allocation4], %s1709
        %v1711 = vld [vmem:[%s1710] sm:$0xff]
        %v1712 = vld [vmem:[%s1710 + $0x8] sm:$0xff]
        %v1713 = vld [vmem:[%s1710 + $0x10] sm:$0xff]
        %v1714 = vld [vmem:[%s1710 + $0x18] sm:$0xff]
        %v1715 = vld [vmem:[%s1710 + $0x20] sm:$0xff]
        %v1716 = vld [vmem:[%s1710 + $0x28] sm:$0xff]
        %v1717 = vld [vmem:[%s1710 + $0x30] sm:$0xff]
        %v1718 = vld [vmem:[%s1710 + $0x38] sm:$0xff]
        %1719 = vmatprep.subr.bf16.mxu0 %v1320
        %1720 = vmatpush1.bf16.msra.mxu0 %v1319
        %1721 = vmatprep.subr.bf16.mxu0 %v1324
        %1722 = vmatpush1.bf16.msra.mxu0 %v1323
        %1723 = vmatprep.subr.bf16.mxu0 %v1328
        %1724 = vmatpush1.bf16.msra.mxu0 %v1327
        %1725 = vmatprep.subr.bf16.mxu0 %v1332
        %1726 = vmatpush1.bf16.msra.mxu0 %v1331
        %1727 = vmatprep.subr.bf16.mxu0 %v1336
        %1728 = vmatpush1.bf16.msra.mxu0 %v1335
        %1729 = vmatprep.subr.bf16.mxu0 %v1340
        %1730 = vmatpush1.bf16.msra.mxu0 %v1339
        %1731 = vmatprep.subr.bf16.mxu0 %v1344
        %1732 = vmatpush1.bf16.msra.mxu0 %v1343
        %1733 = vmatprep.subr.bf16.mxu0 %v1348
        %1734 = vmatpush1.bf16.msra.mxu0 %v1347
        %1735 = vmatprep.subr.bf16.mxu0 0
        %1736 = vmatpush1.bf16.msra.mxu0 0
        %1737 = vmatprep.subr.bf16.mxu0 0
        %1738 = vmatpush1.bf16.msra.mxu0 0
        %1739 = vmatprep.subr.bf16.mxu0 0
        %1740 = vmatpush1.bf16.msra.mxu0 0
        %1741 = vmatprep.subr.bf16.mxu0 0
        %1742 = vmatpush1.bf16.msra.mxu0 0
        %1743 = vmatprep.subr.bf16.mxu0 0
        %1744 = vmatpush1.bf16.msra.mxu0 0
        %1745 = vmatprep.subr.bf16.mxu0 0
        %1746 = vmatpush1.bf16.msra.mxu0 0
        %1747 = vmatprep.subr.bf16.mxu0 0
        %1748 = vmatpush1.bf16.msra.mxu0 0
        %1749 = vmatprep.subr.bf16.mxu0 0
        %1750 = vmatpush1.bf16.msra.mxu0 0
        %1751 = vmatprep.mubr.bf16.mxu0 0
        %1752 = vmatmul.mubr.bf16.gmra.mrb[0].mxu0 %v1693
        %v1753 = vpop.f32.mrb[0].mxu0
        %v1754 = vadd.f32 0.0, %v1753
        %v1755 = vpop.f32.mrb[0].mxu0
        %v1756 = vadd.f32 0.0, %v1755
        %v1757 = vpop.f32.mrb[0].mxu0
        %v1758 = vadd.f32 0.0, %v1757
        %v1759 = vpop.f32.mrb[0].mxu0
        %v1760 = vadd.f32 0.0, %v1759
        %1761 = vdwg.mxu0
        %1762 = vmatprep.subr.bf16.mxu0 %v1322
        %1763 = vmatpush1.bf16.msra.mxu0 %v1321
        %1764 = vmatprep.subr.bf16.mxu0 %v1326
        %1765 = vmatpush1.bf16.msra.mxu0 %v1325
        %1766 = vmatprep.subr.bf16.mxu0 %v1330
        %1767 = vmatpush1.bf16.msra.mxu0 %v1329
        %1768 = vmatprep.subr.bf16.mxu0 %v1334
        %1769 = vmatpush1.bf16.msra.mxu0 %v1333
        %1770 = vmatprep.subr.bf16.mxu0 %v1338
        %1771 = vmatpush1.bf16.msra.mxu0 %v1337
        %1772 = vmatprep.subr.bf16.mxu0 %v1342
        %1773 = vmatpush1.bf16.msra.mxu0 %v1341
        %1774 = vmatprep.subr.bf16.mxu0 %v1346
        %1775 = vmatpush1.bf16.msra.mxu0 %v1345
        %1776 = vmatprep.subr.bf16.mxu0 %v1350
        %1777 = vmatpush1.bf16.msra.mxu0 %v1349
        %1778 = vmatprep.subr.bf16.mxu0 0
        %1779 = vmatpush1.bf16.msra.mxu0 0
        %1780 = vmatprep.subr.bf16.mxu0 0
        %1781 = vmatpush1.bf16.msra.mxu0 0
        %1782 = vmatprep.subr.bf16.mxu0 0
        %1783 = vmatpush1.bf16.msra.mxu0 0
        %1784 = vmatprep.subr.bf16.mxu0 0
        %1785 = vmatpush1.bf16.msra.mxu0 0
        %1786 = vmatprep.subr.bf16.mxu0 0
        %1787 = vmatpush1.bf16.msra.mxu0 0
        %1788 = vmatprep.subr.bf16.mxu0 0
        %1789 = vmatpush1.bf16.msra.mxu0 0
        %1790 = vmatprep.subr.bf16.mxu0 0
        %1791 = vmatpush1.bf16.msra.mxu0 0
        %1792 = vmatprep.subr.bf16.mxu0 0
        %1793 = vmatpush1.bf16.msra.mxu0 0
        %1794 = vmatprep.mubr.bf16.mxu0 0
        %1795 = vmatmul.mubr.bf16.gmra.mrb[0].mxu0 %v1693
        %v1796 = vpop.f32.mrb[0].mxu0
        %v1797 = vadd.f32 0.0, %v1796
        %v1798 = vpop.f32.mrb[0].mxu0
        %v1799 = vadd.f32 0.0, %v1798
        %v1800 = vpop.f32.mrb[0].mxu0
        %v1801 = vadd.f32 0.0, %v1800
        %v1802 = vpop.f32.mrb[0].mxu0
        %v1803 = vadd.f32 0.0, %v1802
        %1804 = vdwg.mxu0
        %v1805 = vadd.f32 %v1711, %v1754
        %v1806 = vadd.f32 %v1712, %v1756
        %v1807 = vadd.f32 %v1713, %v1797
        %v1808 = vadd.f32 %v1714, %v1799
        %v1809 = vadd.f32 %v1715, %v1758
        %v1810 = vadd.f32 %v1716, %v1760
        %v1811 = vadd.f32 %v1717, %v1801
        %v1812 = vadd.f32 %v1718, %v1803
        %v1813 = vxor.u32 %v1805, 2147483648
        %v1814 = vxor.u32 %v1809, 2147483648
        %v1815 = vmul.f32 %v1813, 1.442695
        %v1816 = vpow.pop %v1815
        %v1817 = vmul.f32 %v1814, 1.442695
        %v1818 = vpow.pop %v1817
        %v1819 = vadd.f32 %v1816, 1.0
        %v1820 = vadd.f32 %v1818, 1.0
        %v1821 = vrcp.pop %v1819
        %v1822 = vmul.f32 1.0, %v1821
        %v1823 = vrcp.pop %v1820
        %v1824 = vmul.f32 1.0, %v1823
        %v1825 = vxor.u32 %v1806, 2147483648
        %v1826 = vxor.u32 %v1810, 2147483648
        %v1827 = vmul.f32 %v1825, 1.442695
        %v1828 = vpow.pop %v1827
        %v1829 = vmul.f32 %v1826, 1.442695
        %v1830 = vpow.pop %v1829
        %v1831 = vadd.f32 %v1828, 1.0
        %v1832 = vadd.f32 %v1830, 1.0
        %v1833 = vrcp.pop %v1831
        %v1834 = vmul.f32 1.0, %v1833
        %v1835 = vrcp.pop %v1832
        %v1836 = vmul.f32 1.0, %v1835
        %v1837 = vtanh.pop %v1807
        %v1838 = vtanh.pop %v1811
        %v1839 = vxor.u32 %v1808, 2147483648
        %v1840 = vxor.u32 %v1812, 2147483648
        %v1841 = vmul.f32 %v1839, 1.442695
        %v1842 = vpow.pop %v1841
        %v1843 = vmul.f32 %v1840, 1.442695
        %v1844 = vpow.pop %v1843
        %v1845 = vadd.f32 %v1842, 1.0
        %v1846 = vadd.f32 %v1844, 1.0
        %v1847 = vrcp.pop %v1845
        %v1848 = vmul.f32 1.0, %v1847
        %v1849 = vrcp.pop %v1846
        %v1850 = vmul.f32 1.0, %v1849
        %v1851 = vmul.f32 %v1834, %v1687
        %v1852 = vmul.f32 %v1836, %v1688
        %v1853 = vmul.f32 %v1822, %v1837
        %v1854 = vmul.f32 %v1824, %v1838
        %v1855 = vadd.f32 %v1851, %v1853
        %v1856 = vadd.f32 %v1852, %v1854
        %v1857 = vtanh.pop %v1855
        %v1858 = vtanh.pop %v1856
        %v1859 = vmul.f32 %v1848, %v1857
        %v1860 = vmul.f32 %v1850, %v1858
        %v1861 = vpack.c.bf16 %v1860, %v1859
        %v1863 = vunpack.c.l.b16 %v1861
        %v1864 = vunpack.c.h.b16 %v1861
        %v1865 = vpack.c.b16 %v1863, %v1863
        %v1866 = vpack.c.b16 %v1864, %v1864
        %s1869 = smul.u32 %s1707, 2
        %s1870 = smul.addr %s1869, 4
        %s1871 = scalar_lea.vmem %s274, %s1870 [#allocation5]
        %1872 = vst [vmem:[%s1871] sm:$0xf] %v1865
        %1873 = vst [vmem:[%s1871 + $0x4] sm:$0xf] %v1866
        %s1874 = sadd.s32 %s19, 3
        %s1875 = smul.u32 %s1874, 8
        %s1876 = smul.addr %s1875, 8
        %s1877 = scalar_lea.vmem [#allocation4], %s1876
        %v1878 = vld [vmem:[%s1877] sm:$0xff]
        %v1879 = vld [vmem:[%s1877 + $0x8] sm:$0xff]
        %v1880 = vld [vmem:[%s1877 + $0x10] sm:$0xff]
        %v1881 = vld [vmem:[%s1877 + $0x18] sm:$0xff]
        %v1882 = vld [vmem:[%s1877 + $0x20] sm:$0xff]
        %v1883 = vld [vmem:[%s1877 + $0x28] sm:$0xff]
        %v1884 = vld [vmem:[%s1877 + $0x30] sm:$0xff]
        %v1885 = vld [vmem:[%s1877 + $0x38] sm:$0xff]
        %1886 = vmatprep.subr.bf16.mxu0 %v1320
        %1887 = vmatpush1.bf16.msra.mxu0 %v1319
        %1888 = vmatprep.subr.bf16.mxu0 %v1324
        %1889 = vmatpush1.bf16.msra.mxu0 %v1323
        %1890 = vmatprep.subr.bf16.mxu0 %v1328
        %1891 = vmatpush1.bf16.msra.mxu0 %v1327
        %1892 = vmatprep.subr.bf16.mxu0 %v1332
        %1893 = vmatpush1.bf16.msra.mxu0 %v1331
        %1894 = vmatprep.subr.bf16.mxu0 %v1336
        %1895 = vmatpush1.bf16.msra.mxu0 %v1335
        %1896 = vmatprep.subr.bf16.mxu0 %v1340
        %1897 = vmatpush1.bf16.msra.mxu0 %v1339
        %1898 = vmatprep.subr.bf16.mxu0 %v1344
        %1899 = vmatpush1.bf16.msra.mxu0 %v1343
        %1900 = vmatprep.subr.bf16.mxu0 %v1348
        %1901 = vmatpush1.bf16.msra.mxu0 %v1347
        %1902 = vmatprep.subr.bf16.mxu0 0
        %1903 = vmatpush1.bf16.msra.mxu0 0
        %1904 = vmatprep.subr.bf16.mxu0 0
        %1905 = vmatpush1.bf16.msra.mxu0 0
        %1906 = vmatprep.subr.bf16.mxu0 0
        %1907 = vmatpush1.bf16.msra.mxu0 0
        %1908 = vmatprep.subr.bf16.mxu0 0
        %1909 = vmatpush1.bf16.msra.mxu0 0
        %1910 = vmatprep.subr.bf16.mxu0 0
        %1911 = vmatpush1.bf16.msra.mxu0 0
        %1912 = vmatprep.subr.bf16.mxu0 0
        %1913 = vmatpush1.bf16.msra.mxu0 0
        %1914 = vmatprep.subr.bf16.mxu0 0
        %1915 = vmatpush1.bf16.msra.mxu0 0
        %1916 = vmatprep.subr.bf16.mxu0 0
        %1917 = vmatpush1.bf16.msra.mxu0 0
        %1918 = vmatprep.mubr.bf16.mxu0 0
        %1919 = vmatmul.mubr.bf16.gmra.mrb[0].mxu0 %v1861
        %v1920 = vpop.f32.mrb[0].mxu0
        %v1921 = vadd.f32 0.0, %v1920
        %v1922 = vpop.f32.mrb[0].mxu0
        %v1923 = vadd.f32 0.0, %v1922
        %v1924 = vpop.f32.mrb[0].mxu0
        %v1925 = vadd.f32 0.0, %v1924
        %v1926 = vpop.f32.mrb[0].mxu0
        %v1927 = vadd.f32 0.0, %v1926
        %1928 = vdwg.mxu0
        %1929 = vmatprep.subr.bf16.mxu0 %v1322
        %1930 = vmatpush1.bf16.msra.mxu0 %v1321
        %1931 = vmatprep.subr.bf16.mxu0 %v1326
        %1932 = vmatpush1.bf16.msra.mxu0 %v1325
        %1933 = vmatprep.subr.bf16.mxu0 %v1330
        %1934 = vmatpush1.bf16.msra.mxu0 %v1329
        %1935 = vmatprep.subr.bf16.mxu0 %v1334
        %1936 = vmatpush1.bf16.msra.mxu0 %v1333
        %1937 = vmatprep.subr.bf16.mxu0 %v1338
        %1938 = vmatpush1.bf16.msra.mxu0 %v1337
        %1939 = vmatprep.subr.bf16.mxu0 %v1342
        %1940 = vmatpush1.bf16.msra.mxu0 %v1341
        %1941 = vmatprep.subr.bf16.mxu0 %v1346
        %1942 = vmatpush1.bf16.msra.mxu0 %v1345
        %1943 = vmatprep.subr.bf16.mxu0 %v1350
        %1944 = vmatpush1.bf16.msra.mxu0 %v1349
        %1945 = vmatprep.subr.bf16.mxu0 0
        %1946 = vmatpush1.bf16.msra.mxu0 0
        %1947 = vmatprep.subr.bf16.mxu0 0
        %1948 = vmatpush1.bf16.msra.mxu0 0
        %1949 = vmatprep.subr.bf16.mxu0 0
        %1950 = vmatpush1.bf16.msra.mxu0 0
        %1951 = vmatprep.subr.bf16.mxu0 0
        %1952 = vmatpush1.bf16.msra.mxu0 0
        %1953 = vmatprep.subr.bf16.mxu0 0
        %1954 = vmatpush1.bf16.msra.mxu0 0
        %1955 = vmatprep.subr.bf16.mxu0 0
        %1956 = vmatpush1.bf16.msra.mxu0 0
        %1957 = vmatprep.subr.bf16.mxu0 0
        %1958 = vmatpush1.bf16.msra.mxu0 0
        %1959 = vmatprep.subr.bf16.mxu0 0
        %1960 = vmatpush1.bf16.msra.mxu0 0
        %1961 = vmatprep.mubr.bf16.mxu0 0
        %1962 = vmatmul.mubr.bf16.gmra.mrb[0].mxu0 %v1861
        %v1963 = vpop.f32.mrb[0].mxu0
        %v1964 = vadd.f32 0.0, %v1963
        %v1965 = vpop.f32.mrb[0].mxu0
        %v1966 = vadd.f32 0.0, %v1965
        %v1967 = vpop.f32.mrb[0].mxu0
        %v1968 = vadd.f32 0.0, %v1967
        %v1969 = vpop.f32.mrb[0].mxu0
        %v1970 = vadd.f32 0.0, %v1969
        %1971 = vdwg.mxu0
        %v1972 = vadd.f32 %v1878, %v1921
        %v1973 = vadd.f32 %v1879, %v1923
        %v1974 = vadd.f32 %v1880, %v1964
        %v1975 = vadd.f32 %v1881, %v1966
        %v1976 = vadd.f32 %v1882, %v1925
        %v1977 = vadd.f32 %v1883, %v1927
        %v1978 = vadd.f32 %v1884, %v1968
        %v1979 = vadd.f32 %v1885, %v1970
        %v1980 = vxor.u32 %v1972, 2147483648
        %v1981 = vxor.u32 %v1976, 2147483648
        %v1982 = vmul.f32 %v1980, 1.442695
        %v1983 = vpow.pop %v1982
        %v1984 = vmul.f32 %v1981, 1.442695
        %v1985 = vpow.pop %v1984
        %v1986 = vadd.f32 %v1983, 1.0
        %v1987 = vadd.f32 %v1985, 1.0
        %v1988 = vrcp.pop %v1986
        %v1989 = vmul.f32 1.0, %v1988
        %v1990 = vrcp.pop %v1987
        %v1991 = vmul.f32 1.0, %v1990
        %v1992 = vxor.u32 %v1973, 2147483648
        %v1993 = vxor.u32 %v1977, 2147483648
        %v1994 = vmul.f32 %v1992, 1.442695
        %v1995 = vpow.pop %v1994
        %v1996 = vmul.f32 %v1993, 1.442695
        %v1997 = vpow.pop %v1996
        %v1998 = vadd.f32 %v1995, 1.0
        %v1999 = vadd.f32 %v1997, 1.0
        %v2000 = vrcp.pop %v1998
        %v2001 = vmul.f32 1.0, %v2000
        %v2002 = vrcp.pop %v1999
        %v2003 = vmul.f32 1.0, %v2002
        %v2004 = vtanh.pop %v1974
        %v2005 = vtanh.pop %v1978
        %v2006 = vxor.u32 %v1975, 2147483648
        %v2007 = vxor.u32 %v1979, 2147483648
        %v2008 = vmul.f32 %v2006, 1.442695
        %v2009 = vpow.pop %v2008
        %v2010 = vmul.f32 %v2007, 1.442695
        %v2011 = vpow.pop %v2010
        %v2012 = vadd.f32 %v2009, 1.0
        %v2013 = vadd.f32 %v2011, 1.0
        %v2014 = vrcp.pop %v2012
        %v2015 = vmul.f32 1.0, %v2014
        %v2016 = vrcp.pop %v2013
        %v2017 = vmul.f32 1.0, %v2016
        %v2018 = vmul.f32 %v2001, %v1855
        %v2019 = vmul.f32 %v2003, %v1856
        %v2020 = vmul.f32 %v1989, %v2004
        %v2021 = vmul.f32 %v1991, %v2005
        %v2022 = vadd.f32 %v2018, %v2020
        %v2023 = vadd.f32 %v2019, %v2021
        %v2024 = vtanh.pop %v2022
        %v2025 = vtanh.pop %v2023
        %v2026 = vmul.f32 %v2015, %v2024
        %v2027 = vmul.f32 %v2017, %v2025
        %v2028 = vpack.c.bf16 %v2027, %v2026
        %v2030 = vunpack.c.l.b16 %v2028
        %v2031 = vunpack.c.h.b16 %v2028
        %v2032 = vpack.c.b16 %v2030, %v2030
        %v2033 = vpack.c.b16 %v2031, %v2031
        %s2036 = smul.u32 %s1874, 2
        %s2037 = smul.addr %s2036, 4
        %s2038 = scalar_lea.vmem %s274, %s2037 [#allocation5]
        %2039 = vst [vmem:[%s2038] sm:$0xf] %v2032
        %2040 = vst [vmem:[%s2038 + $0x4] sm:$0xf] %v2033
        %s2041 = ssub.s32 4, %s19
        %s2042 = smul.u32 %s2041, 8
        %s2043 = smul.addr %s2042, 8
        %s2044 = scalar_lea.vmem [#allocation4], %s2043
        %v2045 = vld [vmem:[%s2044] sm:$0xff]
        %v2046 = vld [vmem:[%s2044 + $0x8] sm:$0xff]
        %v2047 = vld [vmem:[%s2044 + $0x10] sm:$0xff]
        %v2048 = vld [vmem:[%s2044 + $0x18] sm:$0xff]
        %v2049 = vld [vmem:[%s2044 + $0x20] sm:$0xff]
        %v2050 = vld [vmem:[%s2044 + $0x28] sm:$0xff]
        %v2051 = vld [vmem:[%s2044 + $0x30] sm:$0xff]
        %v2052 = vld [vmem:[%s2044 + $0x38] sm:$0xff]
        %2053 = vmatprep.subr.bf16.mxu0 %v1320
        %2054 = vmatpush1.bf16.msra.mxu0 %v1319
        %2055 = vmatprep.subr.bf16.mxu0 %v1324
        %2056 = vmatpush1.bf16.msra.mxu0 %v1323
        %2057 = vmatprep.subr.bf16.mxu0 %v1328
        %2058 = vmatpush1.bf16.msra.mxu0 %v1327
        %2059 = vmatprep.subr.bf16.mxu0 %v1332
        %2060 = vmatpush1.bf16.msra.mxu0 %v1331
        %2061 = vmatprep.subr.bf16.mxu0 %v1336
        %2062 = vmatpush1.bf16.msra.mxu0 %v1335
        %2063 = vmatprep.subr.bf16.mxu0 %v1340
        %2064 = vmatpush1.bf16.msra.mxu0 %v1339
        %2065 = vmatprep.subr.bf16.mxu0 %v1344
        %2066 = vmatpush1.bf16.msra.mxu0 %v1343
        %2067 = vmatprep.subr.bf16.mxu0 %v1348
        %2068 = vmatpush1.bf16.msra.mxu0 %v1347
        %2069 = vmatprep.subr.bf16.mxu0 0
        %2070 = vmatpush1.bf16.msra.mxu0 0
        %2071 = vmatprep.subr.bf16.mxu0 0
        %2072 = vmatpush1.bf16.msra.mxu0 0
        %2073 = vmatprep.subr.bf16.mxu0 0
        %2074 = vmatpush1.bf16.msra.mxu0 0
        %2075 = vmatprep.subr.bf16.mxu0 0
        %2076 = vmatpush1.bf16.msra.mxu0 0
        %2077 = vmatprep.subr.bf16.mxu0 0
        %2078 = vmatpush1.bf16.msra.mxu0 0
        %2079 = vmatprep.subr.bf16.mxu0 0
        %2080 = vmatpush1.bf16.msra.mxu0 0
        %2081 = vmatprep.subr.bf16.mxu0 0
        %2082 = vmatpush1.bf16.msra.mxu0 0
        %2083 = vmatprep.subr.bf16.mxu0 0
        %2084 = vmatpush1.bf16.msra.mxu0 0
        %2085 = vmatprep.mubr.bf16.mxu0 0
        %2086 = vmatmul.mubr.bf16.gmra.mrb[0].mxu0 %v2028
        %v2087 = vpop.f32.mrb[0].mxu0
        %v2088 = vadd.f32 0.0, %v2087
        %v2089 = vpop.f32.mrb[0].mxu0
        %v2090 = vadd.f32 0.0, %v2089
        %v2091 = vpop.f32.mrb[0].mxu0
        %v2092 = vadd.f32 0.0, %v2091
        %v2093 = vpop.f32.mrb[0].mxu0
        %v2094 = vadd.f32 0.0, %v2093
        %2095 = vdwg.mxu0
        %2096 = vmatprep.subr.bf16.mxu0 %v1322
        %2097 = vmatpush1.bf16.msra.mxu0 %v1321
        %2098 = vmatprep.subr.bf16.mxu0 %v1326
        %2099 = vmatpush1.bf16.msra.mxu0 %v1325
        %2100 = vmatprep.subr.bf16.mxu0 %v1330
        %2101 = vmatpush1.bf16.msra.mxu0 %v1329
        %2102 = vmatprep.subr.bf16.mxu0 %v1334
        %2103 = vmatpush1.bf16.msra.mxu0 %v1333
        %2104 = vmatprep.subr.bf16.mxu0 %v1338
        %2105 = vmatpush1.bf16.msra.mxu0 %v1337
        %2106 = vmatprep.subr.bf16.mxu0 %v1342
        %2107 = vmatpush1.bf16.msra.mxu0 %v1341
        %2108 = vmatprep.subr.bf16.mxu0 %v1346
        %2109 = vmatpush1.bf16.msra.mxu0 %v1345
        %2110 = vmatprep.subr.bf16.mxu0 %v1350
        %2111 = vmatpush1.bf16.msra.mxu0 %v1349
        %2112 = vmatprep.subr.bf16.mxu0 0
        %2113 = vmatpush1.bf16.msra.mxu0 0
        %2114 = vmatprep.subr.bf16.mxu0 0
        %2115 = vmatpush1.bf16.msra.mxu0 0
        %2116 = vmatprep.subr.bf16.mxu0 0
        %2117 = vmatpush1.bf16.msra.mxu0 0
        %2118 = vmatprep.subr.bf16.mxu0 0
        %2119 = vmatpush1.bf16.msra.mxu0 0
        %2120 = vmatprep.subr.bf16.mxu0 0
        %2121 = vmatpush1.bf16.msra.mxu0 0
        %2122 = vmatprep.subr.bf16.mxu0 0
        %2123 = vmatpush1.bf16.msra.mxu0 0
        %2124 = vmatprep.subr.bf16.mxu0 0
        %2125 = vmatpush1.bf16.msra.mxu0 0
        %2126 = vmatprep.subr.bf16.mxu0 0
        %2127 = vmatpush1.bf16.msra.mxu0 0
        %2128 = vmatprep.mubr.bf16.mxu0 0
        %2129 = vmatmul.mubr.bf16.gmra.mrb[0].mxu0 %v2028
        %v2130 = vpop.f32.mrb[0].mxu0
        %v2131 = vadd.f32 0.0, %v2130
        %v2132 = vpop.f32.mrb[0].mxu0
        %v2133 = vadd.f32 0.0, %v2132
        %v2134 = vpop.f32.mrb[0].mxu0
        %v2135 = vadd.f32 0.0, %v2134
        %v2136 = vpop.f32.mrb[0].mxu0
        %v2137 = vadd.f32 0.0, %v2136
        %2138 = vdwg.mxu0
        %v2139 = vadd.f32 %v2045, %v2088
        %v2140 = vadd.f32 %v2046, %v2090
        %v2141 = vadd.f32 %v2047, %v2131
        %v2142 = vadd.f32 %v2048, %v2133
        %v2143 = vadd.f32 %v2049, %v2092
        %v2144 = vadd.f32 %v2050, %v2094
        %v2145 = vadd.f32 %v2051, %v2135
        %v2146 = vadd.f32 %v2052, %v2137
        %v2147 = vxor.u32 %v2139, 2147483648
        %v2148 = vxor.u32 %v2143, 2147483648
        %v2149 = vmul.f32 %v2147, 1.442695
        %v2150 = vpow.pop %v2149
        %v2151 = vmul.f32 %v2148, 1.442695
        %v2152 = vpow.pop %v2151
        %v2153 = vadd.f32 %v2150, 1.0
        %v2154 = vadd.f32 %v2152, 1.0
        %v2155 = vrcp.pop %v2153
        %v2156 = vmul.f32 1.0, %v2155
        %v2157 = vrcp.pop %v2154
        %v2158 = vmul.f32 1.0, %v2157
        %v2159 = vxor.u32 %v2140, 2147483648
        %v2160 = vxor.u32 %v2144, 2147483648
        %v2161 = vmul.f32 %v2159, 1.442695
        %v2162 = vpow.pop %v2161
        %v2163 = vmul.f32 %v2160, 1.442695
        %v2164 = vpow.pop %v2163
        %v2165 = vadd.f32 %v2162, 1.0
        %v2166 = vadd.f32 %v2164, 1.0
        %v2167 = vrcp.pop %v2165
        %v2168 = vmul.f32 1.0, %v2167
        %v2169 = vrcp.pop %v2166
        %v2170 = vmul.f32 1.0, %v2169
        %v2171 = vtanh.pop %v2141
        %v2172 = vtanh.pop %v2145
        %v2173 = vxor.u32 %v2142, 2147483648
        %v2174 = vxor.u32 %v2146, 2147483648
        %v2175 = vmul.f32 %v2173, 1.442695
        %v2176 = vpow.pop %v2175
        %v2177 = vmul.f32 %v2174, 1.442695
        %v2178 = vpow.pop %v2177
        %v2179 = vadd.f32 %v2176, 1.0
        %v2180 = vadd.f32 %v2178, 1.0
        %v2181 = vrcp.pop %v2179
        %v2182 = vmul.f32 1.0, %v2181
        %v2183 = vrcp.pop %v2180
        %v2184 = vmul.f32 1.0, %v2183
        %v2185 = vmul.f32 %v2168, %v2022
        %v2186 = vmul.f32 %v2170, %v2023
        %v2187 = vmul.f32 %v2156, %v2171
        %v2188 = vmul.f32 %v2158, %v2172
        %v2189 = vadd.f32 %v2185, %v2187
        %v2190 = vadd.f32 %v2186, %v2188
        %v2191 = vtanh.pop %v2189
        %v2192 = vtanh.pop %v2190
        %v2193 = vmul.f32 %v2182, %v2191
        %v2194 = vmul.f32 %v2184, %v2192
        %v2195 = vpack.c.bf16 %v2194, %v2193
        %v2197 = vunpack.c.l.b16 %v2195
        %v2198 = vunpack.c.h.b16 %v2195
        %v2199 = vpack.c.b16 %v2197, %v2197
        %v2200 = vpack.c.b16 %v2198, %v2198
        %s2203 = smul.u32 %s2041, 2
        %s2204 = smul.addr %s2203, 4
        %s2205 = scalar_lea.vmem %s274, %s2204 [#allocation5]
        %2206 = vst [vmem:[%s2205] sm:$0xf] %v2199
        %2207 = vst [vmem:[%s2205 + $0x4] sm:$0xf] %v2200
        %s2208 = smul.u32 %s19, 4294967293
        %s2209 = sadd.s32 %s2208, 5
        %s2210 = smul.u32 %s2209, 8
        %s2211 = smul.addr %s2210, 8
        %s2212 = scalar_lea.vmem [#allocation4], %s2211
        %v2213 = vld [vmem:[%s2212] sm:$0xff]
        %v2214 = vld [vmem:[%s2212 + $0x8] sm:$0xff]
        %v2215 = vld [vmem:[%s2212 + $0x10] sm:$0xff]
        %v2216 = vld [vmem:[%s2212 + $0x18] sm:$0xff]
        %v2217 = vld [vmem:[%s2212 + $0x20] sm:$0xff]
        %v2218 = vld [vmem:[%s2212 + $0x28] sm:$0xff]
        %v2219 = vld [vmem:[%s2212 + $0x30] sm:$0xff]
        %v2220 = vld [vmem:[%s2212 + $0x38] sm:$0xff]
        %2221 = vmatprep.subr.bf16.mxu0 %v1320
        %2222 = vmatpush1.bf16.msra.mxu0 %v1319
        %2223 = vmatprep.subr.bf16.mxu0 %v1324
        %2224 = vmatpush1.bf16.msra.mxu0 %v1323
        %2225 = vmatprep.subr.bf16.mxu0 %v1328
        %2226 = vmatpush1.bf16.msra.mxu0 %v1327
        %2227 = vmatprep.subr.bf16.mxu0 %v1332
        %2228 = vmatpush1.bf16.msra.mxu0 %v1331
        %2229 = vmatprep.subr.bf16.mxu0 %v1336
        %2230 = vmatpush1.bf16.msra.mxu0 %v1335
        %2231 = vmatprep.subr.bf16.mxu0 %v1340
        %2232 = vmatpush1.bf16.msra.mxu0 %v1339
        %2233 = vmatprep.subr.bf16.mxu0 %v1344
        %2234 = vmatpush1.bf16.msra.mxu0 %v1343
        %2235 = vmatprep.subr.bf16.mxu0 %v1348
        %2236 = vmatpush1.bf16.msra.mxu0 %v1347
        %2237 = vmatprep.subr.bf16.mxu0 0
        %2238 = vmatpush1.bf16.msra.mxu0 0
        %2239 = vmatprep.subr.bf16.mxu0 0
        %2240 = vmatpush1.bf16.msra.mxu0 0
        %2241 = vmatprep.subr.bf16.mxu0 0
        %2242 = vmatpush1.bf16.msra.mxu0 0
        %2243 = vmatprep.subr.bf16.mxu0 0
        %2244 = vmatpush1.bf16.msra.mxu0 0
        %2245 = vmatprep.subr.bf16.mxu0 0
        %2246 = vmatpush1.bf16.msra.mxu0 0
        %2247 = vmatprep.subr.bf16.mxu0 0
        %2248 = vmatpush1.bf16.msra.mxu0 0
        %2249 = vmatprep.subr.bf16.mxu0 0
        %2250 = vmatpush1.bf16.msra.mxu0 0
        %2251 = vmatprep.subr.bf16.mxu0 0
        %2252 = vmatpush1.bf16.msra.mxu0 0
        %2253 = vmatprep.mubr.bf16.mxu0 0
        %2254 = vmatmul.mubr.bf16.gmra.mrb[0].mxu0 %v2195
        %v2255 = vpop.f32.mrb[0].mxu0
        %v2256 = vadd.f32 0.0, %v2255
        %v2257 = vpop.f32.mrb[0].mxu0
        %v2258 = vadd.f32 0.0, %v2257
        %v2259 = vpop.f32.mrb[0].mxu0
        %v2260 = vadd.f32 0.0, %v2259
        %v2261 = vpop.f32.mrb[0].mxu0
        %v2262 = vadd.f32 0.0, %v2261
        %2263 = vdwg.mxu0
        %2264 = vmatprep.subr.bf16.mxu0 %v1322
        %2265 = vmatpush1.bf16.msra.mxu0 %v1321
        %2266 = vmatprep.subr.bf16.mxu0 %v1326
        %2267 = vmatpush1.bf16.msra.mxu0 %v1325
        %2268 = vmatprep.subr.bf16.mxu0 %v1330
        %2269 = vmatpush1.bf16.msra.mxu0 %v1329
        %2270 = vmatprep.subr.bf16.mxu0 %v1334
        %2271 = vmatpush1.bf16.msra.mxu0 %v1333
        %2272 = vmatprep.subr.bf16.mxu0 %v1338
        %2273 = vmatpush1.bf16.msra.mxu0 %v1337
        %2274 = vmatprep.subr.bf16.mxu0 %v1342
        %2275 = vmatpush1.bf16.msra.mxu0 %v1341
        %2276 = vmatprep.subr.bf16.mxu0 %v1346
        %2277 = vmatpush1.bf16.msra.mxu0 %v1345
        %2278 = vmatprep.subr.bf16.mxu0 %v1350
        %2279 = vmatpush1.bf16.msra.mxu0 %v1349
        %2280 = vmatprep.subr.bf16.mxu0 0
        %2281 = vmatpush1.bf16.msra.mxu0 0
        %2282 = vmatprep.subr.bf16.mxu0 0
        %2283 = vmatpush1.bf16.msra.mxu0 0
        %2284 = vmatprep.subr.bf16.mxu0 0
        %2285 = vmatpush1.bf16.msra.mxu0 0
        %2286 = vmatprep.subr.bf16.mxu0 0
        %2287 = vmatpush1.bf16.msra.mxu0 0
        %2288 = vmatprep.subr.bf16.mxu0 0
        %2289 = vmatpush1.bf16.msra.mxu0 0
        %2290 = vmatprep.subr.bf16.mxu0 0
        %2291 = vmatpush1.bf16.msra.mxu0 0
        %2292 = vmatprep.subr.bf16.mxu0 0
        %2293 = vmatpush1.bf16.msra.mxu0 0
        %2294 = vmatprep.subr.bf16.mxu0 0
        %2295 = vmatpush1.bf16.msra.mxu0 0
        %2296 = vmatprep.mubr.bf16.mxu0 0
        %2297 = vmatmul.mubr.bf16.gmra.mrb[0].mxu0 %v2195
        %v2298 = vpop.f32.mrb[0].mxu0
        %v2299 = vadd.f32 0.0, %v2298
        %v2300 = vpop.f32.mrb[0].mxu0
        %v2301 = vadd.f32 0.0, %v2300
        %v2302 = vpop.f32.mrb[0].mxu0
        %v2303 = vadd.f32 0.0, %v2302
        %v2304 = vpop.f32.mrb[0].mxu0
        %v2305 = vadd.f32 0.0, %v2304
        %2306 = vdwg.mxu0
        %v2307 = vadd.f32 %v2213, %v2256
        %v2308 = vadd.f32 %v2214, %v2258
        %v2309 = vadd.f32 %v2215, %v2299
        %v2310 = vadd.f32 %v2216, %v2301
        %v2311 = vadd.f32 %v2217, %v2260
        %v2312 = vadd.f32 %v2218, %v2262
        %v2313 = vadd.f32 %v2219, %v2303
        %v2314 = vadd.f32 %v2220, %v2305
        %v2315 = vxor.u32 %v2307, 2147483648
        %v2316 = vxor.u32 %v2311, 2147483648
        %v2317 = vmul.f32 %v2315, 1.442695
        %v2318 = vpow.pop %v2317
        %v2319 = vmul.f32 %v2316, 1.442695
        %v2320 = vpow.pop %v2319
        %v2321 = vadd.f32 %v2318, 1.0
        %v2322 = vadd.f32 %v2320, 1.0
        %v2323 = vrcp.pop %v2321
        %v2324 = vmul.f32 1.0, %v2323
        %v2325 = vrcp.pop %v2322
        %v2326 = vmul.f32 1.0, %v2325
        %v2327 = vxor.u32 %v2308, 2147483648
        %v2328 = vxor.u32 %v2312, 2147483648
        %v2329 = vmul.f32 %v2327, 1.442695
        %v2330 = vpow.pop %v2329
        %v2331 = vmul.f32 %v2328, 1.442695
        %v2332 = vpow.pop %v2331
        %v2333 = vadd.f32 %v2330, 1.0
        %v2334 = vadd.f32 %v2332, 1.0
        %v2335 = vrcp.pop %v2333
        %v2336 = vmul.f32 1.0, %v2335
        %v2337 = vrcp.pop %v2334
        %v2338 = vmul.f32 1.0, %v2337
        %v2339 = vtanh.pop %v2309
        %v2340 = vtanh.pop %v2313
        %v2341 = vxor.u32 %v2310, 2147483648
        %v2342 = vxor.u32 %v2314, 2147483648
        %v2343 = vmul.f32 %v2341, 1.442695
        %v2344 = vpow.pop %v2343
        %v2345 = vmul.f32 %v2342, 1.442695
        %v2346 = vpow.pop %v2345
        %v2347 = vadd.f32 %v2344, 1.0
        %v2348 = vadd.f32 %v2346, 1.0
        %v2349 = vrcp.pop %v2347
        %v2350 = vmul.f32 1.0, %v2349
        %v2351 = vrcp.pop %v2348
        %v2352 = vmul.f32 1.0, %v2351
        %v2353 = vmul.f32 %v2336, %v2189
        %v2354 = vmul.f32 %v2338, %v2190
        %v2355 = vmul.f32 %v2324, %v2339
        %v2356 = vmul.f32 %v2326, %v2340
        %v2357 = vadd.f32 %v2353, %v2355
        %v2358 = vadd.f32 %v2354, %v2356
        %v2359 = vtanh.pop %v2357
        %v2360 = vtanh.pop %v2358
        %v2361 = vmul.f32 %v2350, %v2359
        %v2362 = vmul.f32 %v2352, %v2360
        %v2363 = vpack.c.bf16 %v2362, %v2361
        %v2365 = vunpack.c.l.b16 %v2363
        %v2366 = vunpack.c.h.b16 %v2363
        %v2367 = vpack.c.b16 %v2365, %v2365
        %v2368 = vpack.c.b16 %v2366, %v2366
        %s2371 = smul.u32 %s2209, 2
        %s2372 = smul.addr %s2371, 4
        %s2373 = scalar_lea.vmem %s274, %s2372 [#allocation5]
        %2374 = vst [vmem:[%s2373] sm:$0xf] %v2367
        %2375 = vst [vmem:[%s2373 + $0x4] sm:$0xf] %v2368
        %s2376 = smul.u32 %s19, 4294967291
        %s2377 = sadd.s32 %s2376, 6
        %s2378 = smul.u32 %s2377, 8
        %s2379 = smul.addr %s2378, 8
        %s2380 = scalar_lea.vmem [#allocation4], %s2379
        %v2381 = vld [vmem:[%s2380] sm:$0xff]
        %v2382 = vld [vmem:[%s2380 + $0x8] sm:$0xff]
        %v2383 = vld [vmem:[%s2380 + $0x10] sm:$0xff]
        %v2384 = vld [vmem:[%s2380 + $0x18] sm:$0xff]
        %v2385 = vld [vmem:[%s2380 + $0x20] sm:$0xff]
        %v2386 = vld [vmem:[%s2380 + $0x28] sm:$0xff]
        %v2387 = vld [vmem:[%s2380 + $0x30] sm:$0xff]
        %v2388 = vld [vmem:[%s2380 + $0x38] sm:$0xff]
        %2389 = vmatprep.subr.bf16.mxu0 %v1320
        %2390 = vmatpush1.bf16.msra.mxu0 %v1319
        %2391 = vmatprep.subr.bf16.mxu0 %v1324
        %2392 = vmatpush1.bf16.msra.mxu0 %v1323
        %2393 = vmatprep.subr.bf16.mxu0 %v1328
        %2394 = vmatpush1.bf16.msra.mxu0 %v1327
        %2395 = vmatprep.subr.bf16.mxu0 %v1332
        %2396 = vmatpush1.bf16.msra.mxu0 %v1331
        %2397 = vmatprep.subr.bf16.mxu0 %v1336
        %2398 = vmatpush1.bf16.msra.mxu0 %v1335
        %2399 = vmatprep.subr.bf16.mxu0 %v1340
        %2400 = vmatpush1.bf16.msra.mxu0 %v1339
        %2401 = vmatprep.subr.bf16.mxu0 %v1344
        %2402 = vmatpush1.bf16.msra.mxu0 %v1343
        %2403 = vmatprep.subr.bf16.mxu0 %v1348
        %2404 = vmatpush1.bf16.msra.mxu0 %v1347
        %2405 = vmatprep.subr.bf16.mxu0 0
        %2406 = vmatpush1.bf16.msra.mxu0 0
        %2407 = vmatprep.subr.bf16.mxu0 0
        %2408 = vmatpush1.bf16.msra.mxu0 0
        %2409 = vmatprep.subr.bf16.mxu0 0
        %2410 = vmatpush1.bf16.msra.mxu0 0
        %2411 = vmatprep.subr.bf16.mxu0 0
        %2412 = vmatpush1.bf16.msra.mxu0 0
        %2413 = vmatprep.subr.bf16.mxu0 0
        %2414 = vmatpush1.bf16.msra.mxu0 0
        %2415 = vmatprep.subr.bf16.mxu0 0
        %2416 = vmatpush1.bf16.msra.mxu0 0
        %2417 = vmatprep.subr.bf16.mxu0 0
        %2418 = vmatpush1.bf16.msra.mxu0 0
        %2419 = vmatprep.subr.bf16.mxu0 0
        %2420 = vmatpush1.bf16.msra.mxu0 0
        %2421 = vmatprep.mubr.bf16.mxu0 0
        %2422 = vmatmul.mubr.bf16.gmra.mrb[0].mxu0 %v2363
        %v2423 = vpop.f32.mrb[0].mxu0
        %v2424 = vadd.f32 0.0, %v2423
        %v2425 = vpop.f32.mrb[0].mxu0
        %v2426 = vadd.f32 0.0, %v2425
        %v2427 = vpop.f32.mrb[0].mxu0
        %v2428 = vadd.f32 0.0, %v2427
        %v2429 = vpop.f32.mrb[0].mxu0
        %v2430 = vadd.f32 0.0, %v2429
        %2431 = vdwg.mxu0
        %2432 = vmatprep.subr.bf16.mxu0 %v1322
        %2433 = vmatpush1.bf16.msra.mxu0 %v1321
        %2434 = vmatprep.subr.bf16.mxu0 %v1326
        %2435 = vmatpush1.bf16.msra.mxu0 %v1325
        %2436 = vmatprep.subr.bf16.mxu0 %v1330
        %2437 = vmatpush1.bf16.msra.mxu0 %v1329
        %2438 = vmatprep.subr.bf16.mxu0 %v1334
        %2439 = vmatpush1.bf16.msra.mxu0 %v1333
        %2440 = vmatprep.subr.bf16.mxu0 %v1338
        %2441 = vmatpush1.bf16.msra.mxu0 %v1337
        %2442 = vmatprep.subr.bf16.mxu0 %v1342
        %2443 = vmatpush1.bf16.msra.mxu0 %v1341
        %2444 = vmatprep.subr.bf16.mxu0 %v1346
        %2445 = vmatpush1.bf16.msra.mxu0 %v1345
        %2446 = vmatprep.subr.bf16.mxu0 %v1350
        %2447 = vmatpush1.bf16.msra.mxu0 %v1349
        %2448 = vmatprep.subr.bf16.mxu0 0
        %2449 = vmatpush1.bf16.msra.mxu0 0
        %2450 = vmatprep.subr.bf16.mxu0 0
        %2451 = vmatpush1.bf16.msra.mxu0 0
        %2452 = vmatprep.subr.bf16.mxu0 0
        %2453 = vmatpush1.bf16.msra.mxu0 0
        %2454 = vmatprep.subr.bf16.mxu0 0
        %2455 = vmatpush1.bf16.msra.mxu0 0
        %2456 = vmatprep.subr.bf16.mxu0 0
        %2457 = vmatpush1.bf16.msra.mxu0 0
        %2458 = vmatprep.subr.bf16.mxu0 0
        %2459 = vmatpush1.bf16.msra.mxu0 0
        %2460 = vmatprep.subr.bf16.mxu0 0
        %2461 = vmatpush1.bf16.msra.mxu0 0
        %2462 = vmatprep.subr.bf16.mxu0 0
        %2463 = vmatpush1.bf16.msra.mxu0 0
        %2464 = vmatprep.mubr.bf16.mxu0 0
        %2465 = vmatmul.mubr.bf16.gmra.mrb[0].mxu0 %v2363
        %v2466 = vpop.f32.mrb[0].mxu0
        %v2467 = vadd.f32 0.0, %v2466
        %v2468 = vpop.f32.mrb[0].mxu0
        %v2469 = vadd.f32 0.0, %v2468
        %v2470 = vpop.f32.mrb[0].mxu0
        %v2471 = vadd.f32 0.0, %v2470
        %v2472 = vpop.f32.mrb[0].mxu0
        %v2473 = vadd.f32 0.0, %v2472
        %2474 = vdwg.mxu0
        %v2475 = vadd.f32 %v2381, %v2424
        %v2476 = vadd.f32 %v2382, %v2426
        %v2477 = vadd.f32 %v2383, %v2467
        %v2478 = vadd.f32 %v2384, %v2469
        %v2479 = vadd.f32 %v2385, %v2428
        %v2480 = vadd.f32 %v2386, %v2430
        %v2481 = vadd.f32 %v2387, %v2471
        %v2482 = vadd.f32 %v2388, %v2473
        %v2483 = vxor.u32 %v2475, 2147483648
        %v2484 = vxor.u32 %v2479, 2147483648
        %v2485 = vmul.f32 %v2483, 1.442695
        %v2486 = vpow.pop %v2485
        %v2487 = vmul.f32 %v2484, 1.442695
        %v2488 = vpow.pop %v2487
        %v2489 = vadd.f32 %v2486, 1.0
        %v2490 = vadd.f32 %v2488, 1.0
        %v2491 = vrcp.pop %v2489
        %v2492 = vmul.f32 1.0, %v2491
        %v2493 = vrcp.pop %v2490
        %v2494 = vmul.f32 1.0, %v2493
        %v2495 = vxor.u32 %v2476, 2147483648
        %v2496 = vxor.u32 %v2480, 2147483648
        %v2497 = vmul.f32 %v2495, 1.442695
        %v2498 = vpow.pop %v2497
        %v2499 = vmul.f32 %v2496, 1.442695
        %v2500 = vpow.pop %v2499
        %v2501 = vadd.f32 %v2498, 1.0
        %v2502 = vadd.f32 %v2500, 1.0
        %v2503 = vrcp.pop %v2501
        %v2504 = vmul.f32 1.0, %v2503
        %v2505 = vrcp.pop %v2502
        %v2506 = vmul.f32 1.0, %v2505
        %v2507 = vtanh.pop %v2477
        %v2508 = vtanh.pop %v2481
        %v2509 = vxor.u32 %v2478, 2147483648
        %v2510 = vxor.u32 %v2482, 2147483648
        %v2511 = vmul.f32 %v2509, 1.442695
        %v2512 = vpow.pop %v2511
        %v2513 = vmul.f32 %v2510, 1.442695
        %v2514 = vpow.pop %v2513
        %v2515 = vadd.f32 %v2512, 1.0
        %v2516 = vadd.f32 %v2514, 1.0
        %v2517 = vrcp.pop %v2515
        %v2518 = vmul.f32 1.0, %v2517
        %v2519 = vrcp.pop %v2516
        %v2520 = vmul.f32 1.0, %v2519
        %v2521 = vmul.f32 %v2504, %v2357
        %v2522 = vmul.f32 %v2506, %v2358
        %v2523 = vmul.f32 %v2492, %v2507
        %v2524 = vmul.f32 %v2494, %v2508
        %v2525 = vadd.f32 %v2521, %v2523
        %v2526 = vadd.f32 %v2522, %v2524
        %v2527 = vtanh.pop %v2525
        %v2528 = vtanh.pop %v2526
        %v2529 = vmul.f32 %v2518, %v2527
        %v2530 = vmul.f32 %v2520, %v2528
        %v2531 = vpack.c.bf16 %v2530, %v2529
        %v2533 = vunpack.c.l.b16 %v2531
        %v2534 = vunpack.c.h.b16 %v2531
        %v2535 = vpack.c.b16 %v2533, %v2533
        %v2536 = vpack.c.b16 %v2534, %v2534
        %s2539 = smul.u32 %s2377, 2
        %s2540 = smul.addr %s2539, 4
        %s2541 = scalar_lea.vmem %s274, %s2540 [#allocation5]
        %2542 = vst [vmem:[%s2541] sm:$0xf] %v2535
        %2543 = vst [vmem:[%s2541 + $0x4] sm:$0xf] %v2536
        %s2544 = smul.u32 %s19, 4294967289
        %s2545 = sadd.s32 %s2544, 7
        %s2546 = smul.u32 %s2545, 8
        %s2547 = smul.addr %s2546, 8
        %s2548 = scalar_lea.vmem [#allocation4], %s2547
        %v2549 = vld [vmem:[%s2548] sm:$0xff]
        %v2550 = vld [vmem:[%s2548 + $0x8] sm:$0xff]
        %v2551 = vld [vmem:[%s2548 + $0x10] sm:$0xff]
        %v2552 = vld [vmem:[%s2548 + $0x18] sm:$0xff]
        %v2553 = vld [vmem:[%s2548 + $0x20] sm:$0xff]
        %v2554 = vld [vmem:[%s2548 + $0x28] sm:$0xff]
        %v2555 = vld [vmem:[%s2548 + $0x30] sm:$0xff]
        %v2556 = vld [vmem:[%s2548 + $0x38] sm:$0xff]
        %2557 = vmatprep.subr.bf16.mxu0 %v1320
        %2558 = vmatpush1.bf16.msra.mxu0 %v1319
        %2559 = vmatprep.subr.bf16.mxu0 %v1324
        %2560 = vmatpush1.bf16.msra.mxu0 %v1323
        %2561 = vmatprep.subr.bf16.mxu0 %v1328
        %2562 = vmatpush1.bf16.msra.mxu0 %v1327
        %2563 = vmatprep.subr.bf16.mxu0 %v1332
        %2564 = vmatpush1.bf16.msra.mxu0 %v1331
        %2565 = vmatprep.subr.bf16.mxu0 %v1336
        %2566 = vmatpush1.bf16.msra.mxu0 %v1335
        %2567 = vmatprep.subr.bf16.mxu0 %v1340
        %2568 = vmatpush1.bf16.msra.mxu0 %v1339
        %2569 = vmatprep.subr.bf16.mxu0 %v1344
        %2570 = vmatpush1.bf16.msra.mxu0 %v1343
        %2571 = vmatprep.subr.bf16.mxu0 %v1348
        %2572 = vmatpush1.bf16.msra.mxu0 %v1347
        %2573 = vmatprep.subr.bf16.mxu0 0
        %2574 = vmatpush1.bf16.msra.mxu0 0
        %2575 = vmatprep.subr.bf16.mxu0 0
        %2576 = vmatpush1.bf16.msra.mxu0 0
        %2577 = vmatprep.subr.bf16.mxu0 0
        %2578 = vmatpush1.bf16.msra.mxu0 0
        %2579 = vmatprep.subr.bf16.mxu0 0
        %2580 = vmatpush1.bf16.msra.mxu0 0
        %2581 = vmatprep.subr.bf16.mxu0 0
        %2582 = vmatpush1.bf16.msra.mxu0 0
        %2583 = vmatprep.subr.bf16.mxu0 0
        %2584 = vmatpush1.bf16.msra.mxu0 0
        %2585 = vmatprep.subr.bf16.mxu0 0
        %2586 = vmatpush1.bf16.msra.mxu0 0
        %2587 = vmatprep.subr.bf16.mxu0 0
        %2588 = vmatpush1.bf16.msra.mxu0 0
        %2589 = vmatprep.mubr.bf16.mxu0 0
        %2590 = vmatmul.mubr.bf16.gmra.mrb[0].mxu0 %v2531
        %v2591 = vpop.f32.mrb[0].mxu0
        %v2592 = vadd.f32 0.0, %v2591
        %v2593 = vpop.f32.mrb[0].mxu0
        %v2594 = vadd.f32 0.0, %v2593
        %v2595 = vpop.f32.mrb[0].mxu0
        %v2596 = vadd.f32 0.0, %v2595
        %v2597 = vpop.f32.mrb[0].mxu0
        %v2598 = vadd.f32 0.0, %v2597
        %2599 = vdwg.mxu0
        %2600 = vmatprep.subr.bf16.mxu0 %v1322
        %2601 = vmatpush1.bf16.msra.mxu0 %v1321
        %2602 = vmatprep.subr.bf16.mxu0 %v1326
        %2603 = vmatpush1.bf16.msra.mxu0 %v1325
        %2604 = vmatprep.subr.bf16.mxu0 %v1330
        %2605 = vmatpush1.bf16.msra.mxu0 %v1329
        %2606 = vmatprep.subr.bf16.mxu0 %v1334
        %2607 = vmatpush1.bf16.msra.mxu0 %v1333
        %2608 = vmatprep.subr.bf16.mxu0 %v1338
        %2609 = vmatpush1.bf16.msra.mxu0 %v1337
        %2610 = vmatprep.subr.bf16.mxu0 %v1342
        %2611 = vmatpush1.bf16.msra.mxu0 %v1341
        %2612 = vmatprep.subr.bf16.mxu0 %v1346
        %2613 = vmatpush1.bf16.msra.mxu0 %v1345
        %2614 = vmatprep.subr.bf16.mxu0 %v1350
        %2615 = vmatpush1.bf16.msra.mxu0 %v1349
        %2616 = vmatprep.subr.bf16.mxu0 0
        %2617 = vmatpush1.bf16.msra.mxu0 0
        %2618 = vmatprep.subr.bf16.mxu0 0
        %2619 = vmatpush1.bf16.msra.mxu0 0
        %2620 = vmatprep.subr.bf16.mxu0 0
        %2621 = vmatpush1.bf16.msra.mxu0 0
        %2622 = vmatprep.subr.bf16.mxu0 0
        %2623 = vmatpush1.bf16.msra.mxu0 0
        %2624 = vmatprep.subr.bf16.mxu0 0
        %2625 = vmatpush1.bf16.msra.mxu0 0
        %2626 = vmatprep.subr.bf16.mxu0 0
        %2627 = vmatpush1.bf16.msra.mxu0 0
        %2628 = vmatprep.subr.bf16.mxu0 0
        %2629 = vmatpush1.bf16.msra.mxu0 0
        %2630 = vmatprep.subr.bf16.mxu0 0
        %2631 = vmatpush1.bf16.msra.mxu0 0
        %2632 = vmatprep.mubr.bf16.mxu0 0
        %2633 = vmatmul.mubr.bf16.gmra.mrb[0].mxu0 %v2531
        %v2634 = vpop.f32.mrb[0].mxu0
        %v2635 = vadd.f32 0.0, %v2634
        %v2636 = vpop.f32.mrb[0].mxu0
        %v2637 = vadd.f32 0.0, %v2636
        %v2638 = vpop.f32.mrb[0].mxu0
        %v2639 = vadd.f32 0.0, %v2638
        %v2640 = vpop.f32.mrb[0].mxu0
        %v2641 = vadd.f32 0.0, %v2640
        %2642 = vdwg.mxu0
        %v2643 = vadd.f32 %v2549, %v2592
        %v2644 = vadd.f32 %v2550, %v2594
        %v2645 = vadd.f32 %v2551, %v2635
        %v2646 = vadd.f32 %v2552, %v2637
        %v2647 = vadd.f32 %v2553, %v2596
        %v2648 = vadd.f32 %v2554, %v2598
        %v2649 = vadd.f32 %v2555, %v2639
        %v2650 = vadd.f32 %v2556, %v2641
        %v2651 = vxor.u32 %v2643, 2147483648
        %v2652 = vxor.u32 %v2647, 2147483648
        %v2653 = vmul.f32 %v2651, 1.442695
        %v2654 = vpow.pop %v2653
        %v2655 = vmul.f32 %v2652, 1.442695
        %v2656 = vpow.pop %v2655
        %v2657 = vadd.f32 %v2654, 1.0
        %v2658 = vadd.f32 %v2656, 1.0
        %v2659 = vrcp.pop %v2657
        %v2660 = vmul.f32 1.0, %v2659
        %v2661 = vrcp.pop %v2658
        %v2662 = vmul.f32 1.0, %v2661
        %v2663 = vxor.u32 %v2644, 2147483648
        %v2664 = vxor.u32 %v2648, 2147483648
        %v2665 = vmul.f32 %v2663, 1.442695
        %v2666 = vpow.pop %v2665
        %v2667 = vmul.f32 %v2664, 1.442695
        %v2668 = vpow.pop %v2667
        %v2669 = vadd.f32 %v2666, 1.0
        %v2670 = vadd.f32 %v2668, 1.0
        %v2671 = vrcp.pop %v2669
        %v2672 = vmul.f32 1.0, %v2671
        %v2673 = vrcp.pop %v2670
        %v2674 = vmul.f32 1.0, %v2673
        %v2675 = vtanh.pop %v2645
        %v2676 = vtanh.pop %v2649
        %v2677 = vxor.u32 %v2646, 2147483648
        %v2678 = vxor.u32 %v2650, 2147483648
        %v2679 = vmul.f32 %v2677, 1.442695
        %v2680 = vpow.pop %v2679
        %v2681 = vmul.f32 %v2678, 1.442695
        %v2682 = vpow.pop %v2681
        %v2683 = vadd.f32 %v2680, 1.0
        %v2684 = vadd.f32 %v2682, 1.0
        %v2685 = vrcp.pop %v2683
        %v2686 = vmul.f32 1.0, %v2685
        %v2687 = vrcp.pop %v2684
        %v2688 = vmul.f32 1.0, %v2687
        %v2689 = vmul.f32 %v2672, %v2525
        %v2690 = vmul.f32 %v2674, %v2526
        %v2691 = vmul.f32 %v2660, %v2675
        %v2692 = vmul.f32 %v2662, %v2676
        %v2693 = vadd.f32 %v2689, %v2691
        %v2694 = vadd.f32 %v2690, %v2692
        %v2695 = vtanh.pop %v2693
        %v2696 = vtanh.pop %v2694
        %v2697 = vmul.f32 %v2686, %v2695
        %v2698 = vmul.f32 %v2688, %v2696
        %v2699 = vpack.c.bf16 %v2698, %v2697
        %v2701 = vunpack.c.l.b16 %v2699
        %v2702 = vunpack.c.h.b16 %v2699
        %v2703 = vpack.c.b16 %v2701, %v2701
        %v2704 = vpack.c.b16 %v2702, %v2702
        %s2707 = smul.u32 %s2545, 2
        %s2708 = smul.addr %s2707, 4
        %s2709 = scalar_lea.vmem %s274, %s2708 [#allocation5]
        %2710 = vst [vmem:[%s2709] sm:$0xf] %v2703
        %2711 = vst [vmem:[%s2709 + $0x4] sm:$0xf] %v2704
        %2712 = vst [vmem:[#allocation2] sm:$0xff] %v2697
        %2713 = vst [vmem:[#allocation2 + $0x8] sm:$0xff] %v2698
        %2714 = vst [vmem:[#allocation3] sm:$0xff] %v2693
        %2715 = vst [vmem:[#allocation3 + $0x8] sm:$0xff] %v2694
        %s2716 = sand.u32 %s157, 1
        %s2717 = sand.u32 %s157, 1
        %s2718 = smul.addr %s2717, 64
        %s2719 = scalar_lea.vmem [#allocation5], %s2718
        // Predicated region
        $region41: #{rnn_forward.3} parent=35 // pred_check
          %p2720 = pneg %p167
        $region42: #{rnn_forward.3} parent=35 // pred_check_branch
          %2722 = sbr.rel (%p2720) target = $region44
        $region43: #{rnn_forward.3} parent=35 // pred_region
          %s2723 = smul.u32 %s20, 2
          %s2724 = ssub.s32 0, %s2723
          %s2725 = smul.u32 %s19, %s2724
          %s2726 = sadd.s32 %s20, %s2725
          %s2727 = smul.u32 8, %s2726
          %s2728 = smul.addr %s2727, 4
          %s2729 = sadd.s32 %s19, %s2728
          %s2730 = smul.addr %s2729, 4
          %s2731 = scalar_lea.vmem %s4, %s2730
          // Predicated region
          $region45: #{rnn_forward.3} parent=43 // pred_check
            _
          $region46: #{rnn_forward.3} parent=43 // pred_check_branch
            %2733 = sbr.rel (0) target = $region48
          $region47: #{rnn_forward.3} parent=43 // pred_region
            // Predicated region
            $region49: #{rnn_forward.3} parent=47 // pred_check
              _
            $region50: #{rnn_forward.3} parent=47 // pred_check_branch
              %2735 = sbr.rel target = $region52
            $region51: #{rnn_forward.3} parent=47 // pred_region
              // Predicated region
              $region64: #{rnn_forward.3} parent=51 // pred_check
                _
              $region65: #{rnn_forward.3} parent=51 // pred_check_branch
                %2780 = sbr.rel (0) target = $region67
              $region66: #{rnn_forward.3} parent=51 // pred_region
                loop: start=0, step=1, limit=1
                $region68: #{rnn_forward.3} parent=66 // loop_pre_header
                  _
                $region69: #{rnn_forward.3} parent=66 // loop_header
                  %s2782 = sphi 0, %s2786
                  %p2783 = scmp.ge.s32.totalorder %s2782, 1
                  %s2787 = sphi %s2719, %s2719
                  %s2788 = sphi %s2731, %s2731
                $region70: #{rnn_forward.3} parent=66 // loop_header_branch
                  %2785 = sbr.rel (%p2783) target = $region74
                $region71: #{rnn_forward.3} parent=66 // loop_body
                  _
                $region72: #{rnn_forward.3} parent=66 // loop_footer
                  %s2786 = sadd.s32 1, %s2782
                $region73: #{rnn_forward.3} parent=66 // loop_footer_branch
                  %2781 = sbr.rel target = $region69
                $region74: #{rnn_forward.3} parent=66 // loop_exit
                  _
                loop: start=0, step=1, limit=1
                $region75: #{rnn_forward.3} parent=66 // loop_pre_header
                  _
                $region76: #{rnn_forward.3} parent=66 // loop_header
                  %s2791 = sphi 0, %s2795
                  %p2792 = scmp.ge.s32.totalorder %s2791, 1
                  %s2796 = sphi %s2719, %s2719
                  %s2797 = sphi %s2731, %s2731
                $region77: #{rnn_forward.3} parent=66 // loop_header_branch
                  %2794 = sbr.rel (%p2792) target = $region81
                $region78: #{rnn_forward.3} parent=66 // loop_body
                  %v2798 = vld [vmem:[%s2796] sm:$0xf]
                  %2799 = vst [vmem:[%s2797] sm:$0xf] %v2798
                  %v2800 = vld [vmem:[%s2796 + $0x4] sm:$0xf]
                  %2801 = vst [vmem:[%s2797 + $0x8] sm:$0xf] %v2800
                  %v2802 = vld [vmem:[%s2796 + $0x8] sm:$0xf]
                  %2803 = vst [vmem:[%s2797 + $0x10] sm:$0xf] %v2802
                  %v2804 = vld [vmem:[%s2796 + $0xc] sm:$0xf]
                  %2805 = vst [vmem:[%s2797 + $0x18] sm:$0xf] %v2804
                  %v2806 = vld [vmem:[%s2796 + $0x10] sm:$0xf]
                  %2807 = vst [vmem:[%s2797 + $0x20] sm:$0xf] %v2806
                  %v2808 = vld [vmem:[%s2796 + $0x14] sm:$0xf]
                  %2809 = vst [vmem:[%s2797 + $0x28] sm:$0xf] %v2808
                  %v2810 = vld [vmem:[%s2796 + $0x18] sm:$0xf]
                  %2811 = vst [vmem:[%s2797 + $0x30] sm:$0xf] %v2810
                  %v2812 = vld [vmem:[%s2796 + $0x1c] sm:$0xf]
                  %2813 = vst [vmem:[%s2797 + $0x38] sm:$0xf] %v2812
                  %v2814 = vld [vmem:[%s2796 + $0x20] sm:$0xf]
                  %2815 = vst [vmem:[%s2797 + $0x40] sm:$0xf] %v2814
                  %v2816 = vld [vmem:[%s2796 + $0x24] sm:$0xf]
                  %2817 = vst [vmem:[%s2797 + $0x48] sm:$0xf] %v2816
                  %v2818 = vld [vmem:[%s2796 + $0x28] sm:$0xf]
                  %2819 = vst [vmem:[%s2797 + $0x50] sm:$0xf] %v2818
                  %v2820 = vld [vmem:[%s2796 + $0x2c] sm:$0xf]
                  %2821 = vst [vmem:[%s2797 + $0x58] sm:$0xf] %v2820
                  %v2822 = vld [vmem:[%s2796 + $0x30] sm:$0xf]
                  %2823 = vst [vmem:[%s2797 + $0x60] sm:$0xf] %v2822
                  %v2824 = vld [vmem:[%s2796 + $0x34] sm:$0xf]
                  %2825 = vst [vmem:[%s2797 + $0x68] sm:$0xf] %v2824
                  %v2826 = vld [vmem:[%s2796 + $0x38] sm:$0xf]
                  %2827 = vst [vmem:[%s2797 + $0x70] sm:$0xf] %v2826
                  %v2828 = vld [vmem:[%s2796 + $0x3c] sm:$0xf]
                  %2829 = vst [vmem:[%s2797 + $0x78] sm:$0xf] %v2828
                $region79: #{rnn_forward.3} parent=66 // loop_footer
                  %s2795 = sadd.s32 1, %s2791
                $region80: #{rnn_forward.3} parent=66 // loop_footer_branch
                  %2790 = sbr.rel target = $region76
                $region81: #{rnn_forward.3} parent=66 // loop_exit
                  _
              $region67: #{rnn_forward.3} parent=51 // pred_fallthru
                _
            $region52: #{rnn_forward.3} parent=47 // pred_fallthru
              _
            // Predicated region
            $region53: #{rnn_forward.3} parent=47 // pred_check
              _
            $region54: #{rnn_forward.3} parent=47 // pred_check_branch
              %2737 = sbr.rel (0) target = $region56
            $region55: #{rnn_forward.3} parent=47 // pred_region
              loop: start=0, step=1, limit=1
              $region57: #{rnn_forward.3} parent=55 // loop_pre_header
                _
              $region58: #{rnn_forward.3} parent=55 // loop_header
                %s2740 = sphi 0, %s2744
                %p2741 = scmp.ge.s32.totalorder %s2740, 1
                %s2745 = sphi %s2719, %s2719
                %s2746 = sphi %s2731, %s2731
              $region59: #{rnn_forward.3} parent=55 // loop_header_branch
                %2743 = sbr.rel (%p2741) target = $region63
              $region60: #{rnn_forward.3} parent=55 // loop_body
                %v2747 = vld [vmem:[%s2745] sm:$0xf]
                %2748 = vst [vmem:[%s2746] sm:$0xf] %v2747
                %v2749 = vld [vmem:[%s2745 + $0x4] sm:$0xf]
                %2750 = vst [vmem:[%s2746 + $0x8] sm:$0xf] %v2749
                %v2751 = vld [vmem:[%s2745 + $0x8] sm:$0xf]
                %2752 = vst [vmem:[%s2746 + $0x10] sm:$0xf] %v2751
                %v2753 = vld [vmem:[%s2745 + $0xc] sm:$0xf]
                %2754 = vst [vmem:[%s2746 + $0x18] sm:$0xf] %v2753
                %v2755 = vld [vmem:[%s2745 + $0x10] sm:$0xf]
                %2756 = vst [vmem:[%s2746 + $0x20] sm:$0xf] %v2755
                %v2757 = vld [vmem:[%s2745 + $0x14] sm:$0xf]
                %2758 = vst [vmem:[%s2746 + $0x28] sm:$0xf] %v2757
                %v2759 = vld [vmem:[%s2745 + $0x18] sm:$0xf]
                %2760 = vst [vmem:[%s2746 + $0x30] sm:$0xf] %v2759
                %v2761 = vld [vmem:[%s2745 + $0x1c] sm:$0xf]
                %2762 = vst [vmem:[%s2746 + $0x38] sm:$0xf] %v2761
                %v2763 = vld [vmem:[%s2745 + $0x20] sm:$0xf]
                %2764 = vst [vmem:[%s2746 + $0x40] sm:$0xf] %v2763
                %v2765 = vld [vmem:[%s2745 + $0x24] sm:$0xf]
                %2766 = vst [vmem:[%s2746 + $0x48] sm:$0xf] %v2765
                %v2767 = vld [vmem:[%s2745 + $0x28] sm:$0xf]
                %2768 = vst [vmem:[%s2746 + $0x50] sm:$0xf] %v2767
                %v2769 = vld [vmem:[%s2745 + $0x2c] sm:$0xf]
                %2770 = vst [vmem:[%s2746 + $0x58] sm:$0xf] %v2769
                %v2771 = vld [vmem:[%s2745 + $0x30] sm:$0xf]
                %2772 = vst [vmem:[%s2746 + $0x60] sm:$0xf] %v2771
                %v2773 = vld [vmem:[%s2745 + $0x34] sm:$0xf]
                %2774 = vst [vmem:[%s2746 + $0x68] sm:$0xf] %v2773
                %v2775 = vld [vmem:[%s2745 + $0x38] sm:$0xf]
                %2776 = vst [vmem:[%s2746 + $0x70] sm:$0xf] %v2775
                %v2777 = vld [vmem:[%s2745 + $0x3c] sm:$0xf]
                %2778 = vst [vmem:[%s2746 + $0x78] sm:$0xf] %v2777
              $region61: #{rnn_forward.3} parent=55 // loop_footer
                %s2744 = sadd.s32 1, %s2740
              $region62: #{rnn_forward.3} parent=55 // loop_footer_branch
                %2739 = sbr.rel target = $region58
              $region63: #{rnn_forward.3} parent=55 // loop_exit
                _
            $region56: #{rnn_forward.3} parent=47 // pred_fallthru
              _
          $region48: #{rnn_forward.3} parent=43 // pred_fallthru
            _
          %2830 = vnop
        $region44: #{rnn_forward.3} parent=35 // pred_fallthru
          _
      $region36: #{rnn_forward.3} parent=5 // pred_fallthru
        _
      %p2831 = scmp.le.s32.totalorder 2, %s10
      // Predicated region
      $region82: #{rnn_forward.3} parent=5 // pred_check
        %p2832 = pneg %p2831
      $region83: #{rnn_forward.3} parent=5 // pred_check_branch
        %2834 = sbr.rel (%p2832) target = $region85
      $region84: #{rnn_forward.3} parent=5 // pred_region
        %s2835 = ssub.s32 %s10, 2
        // Predicated region
        $region86: #{rnn_forward.3} parent=84 // pred_check
          %p2836 = pneg %p173
        $region87: #{rnn_forward.3} parent=84 // pred_check_branch
          %2838 = sbr.rel (%p2836) target = $region89
        $region88: #{rnn_forward.3} parent=84 // pred_region
          %s2839 = sand.u32 %s158, 1
          %s2840 = sand.u32 %s158, 1
          %s2841 = smul.addr %s2840, 64
          %s2842 = scalar_lea.vmem [#allocation5], %s2841
        $region89: #{rnn_forward.3} parent=84 // pred_fallthru
          _
      $region85: #{rnn_forward.3} parent=5 // pred_fallthru
        _
    $region6: #{rnn_forward.3} parent=1 // loop_footer
      %s14 = sadd.s32 1, %s10
    $region7: #{rnn_forward.3} parent=1 // loop_footer_branch
      %9 = sbr.rel target = $region3
    $region8: #{rnn_forward.3} parent=1 // loop_exit
      _

</llo_original>
